<compile_context>
chip_gen: v7x
topology: tpu7x:2x2x1
jax: 0.10.0
libtpu: 0.0.40
codegen_flags: <defaults>
</compile_context>

<pallas_src>
import functools

import jax
import jax.numpy as jnp
from jax import lax
from jax.experimental import pallas as pl
from jax.experimental.pallas import tpu as pltpu

# v6e/v7x knob (off so the f32 numerical cross-check stays tight): cast x_pad /
# w_km to bfloat16 to halve kernel-1 HBM traffic; accumulation is f32 either way.
USE_BF16_INPUTS = False


# ----------------------------------------------------------------------------
# Kernel 1: one image per grid step -- transposed conv as a single K=kH*kW*C_in
# contraction over shifted windows of the dilated/padded input, channels-major
# lane-dense output, plus per-image BN partial statistics.
# ----------------------------------------------------------------------------
def _deconv_stats_kernel(x_ref, w_ref, y_ref, sum_ref, sq_ref,
                         *, kh, kw, h_out, w_out):
    c_in = x_ref.shape[-1]
    m = h_out * w_out

    # Stage the im2col patch slab once in VMEM: (m, kh*kw*c_in), tap-major columns.
    taps = []
    for i in range(kh):
        for j in range(kw):
            win = x_ref[i:i + h_out, j:j + w_out, :]          # (h_out, w_out, c_in)
            taps.append(win.reshape(m, c_in))                 # leading-dim merge only
    patches = jnp.concatenate(taps, axis=1)                   # (m, K)

    # Single MXU contraction over K.
    y_mc = jnp.dot(patches, w_ref[...],
                   preferred_element_type=jnp.float32)        # (m, c_out)

    # Per-image BN partial statistics (combined across images in XLA afterwards).
    sum_ref[...] = jnp.sum(y_mc, axis=0, keepdims=True)       # (1, c_out)
    sq_ref[...] = jnp.sum(y_mc * y_mc, axis=0, keepdims=True)

    # Channels-major, lane-dense store (m = H_out*W_out is the lane axis).
    y_ref[...] = y_mc.T.astype(y_ref.dtype)                   # (c_out, m)


# ----------------------------------------------------------------------------
# Kernel 2: lane-dense fused BN affine (folded scale/shift) + ReLU + dropout.
# ----------------------------------------------------------------------------
def _bn_relu_dropout_kernel(seed_ref, y_ref, scale_ref, shift_ref, o_ref,
                            *, c_out, m, drop_threshold, inv_keep):
    y = y_ref[...].astype(jnp.float32)                        # (c_out, m)
    out = jnp.maximum(y * scale_ref[...] + shift_ref[...], 0.0)

    if drop_threshold > 0:
        # Counter-based fmix32-style hash of the global element index + seed:
        # lowers on Mosaic and in interpret mode, tiling-independent stream.
        # TODO(synk): stream differs from torch.nn.Dropout (keep-prob and 1/(1-p)
        #             scaling semantics are identical). On v7x prefer the HW PRNG
        #             (pltpu.prng_seed + prng_random_bits) to stay on the HBM roofline.
        # NOTE: int32 global index; guard if N*C_out*H_out*W_out ever exceeds 2^31.
        rows = lax.broadcasted_iota(jnp.int32, y.shape, 0)
        cols = lax.broadcasted_iota(jnp.int32, y.shape, 1)
        idx = (pl.program_id(0) * c_out + rows) * m + cols    # unique, non-negative
        h = idx.astype(jnp.uint32) + seed_ref[0].astype(jnp.uint32)
        h = h * jnp.uint32(0x9E3779B1)
        h = h ^ (h >> 16)
        h = h * jnp.uint32(0x85EBCA6B)
        h = h ^ (h >> 13)
        h = h * jnp.uint32(0xC2B2AE35)
        h = h ^ (h >> 16)
        bits = ((h >> 8) & jnp.uint32(0x00FFFFFF)).astype(jnp.int32)  # [0, 2^24)
        keep = bits >= drop_threshold
        out = jnp.where(keep, out * jnp.float32(inv_keep), 0.0)

    o_ref[...] = out


# ----------------------------------------------------------------------------
# Wrapper
# ----------------------------------------------------------------------------
def deconv_block_forward(x, weight, bias, gamma, beta, *, stride, padding,
                         output_padding, dropout_rate, seed=0, eps=1e-5):
    """x: (N, C_in, H, W); weight: (C_in, C_out, kH, kW) (PyTorch ConvTranspose2d)."""
    # A per-channel bias before train-mode BatchNorm cancels exactly in (y - mean),
    # so it is dropped entirely (forward activation is unchanged).
    del bias
    N, C_in, H, W = x.shape
    C_in_w, C_out, kH, kW = weight.shape
    assert C_in == C_in_w
    s, p, op = stride, padding, output_padding
    H_out = (H - 1) * s - 2 * p + kH + op
    W_out = (W - 1) * s - 2 * p + kW + op
    M_img = H_out * W_out
    M_total = N * M_img
    K = kH * kW * C_in

    in_dtype = jnp.bfloat16 if USE_BF16_INPUTS else jnp.float32
    itemsize = 2 if USE_BF16_INPUTS else 4

    # ---- light XLA glue on the (small) input only: NHWC + stride-dilation +
    #      edge padding in one lax.pad.  The big activation never gets an extra
    #      transpose/pad pass. ----
    x_nhwc = jnp.transpose(x, (0, 2, 3, 1)).astype(jnp.float32)
    pb_h, pa_h = kH - 1 - p, kH - 1 - p + op
    pb_w, pa_w = kW - 1 - p, kW - 1 - p + op
    x_pad = lax.pad(x_nhwc, jnp.float32(0),
                    ((0, 0, 0), (pb_h, pa_h, s - 1), (pb_w, pa_w, s - 1), (0, 0, 0)))
    x_pad = x_pad.astype(in_dtype)
    H_pad, W_pad = x_pad.shape[1], x_pad.shape[2]

    # Equivalent forward-conv weights as one (K, C_out) matrix, tap-major rows
    # (matches the column order of the in-kernel patch slab).
    w_flip = weight[:, :, ::-1, ::-1]                                  # (C_in, C_out, kH, kW)
    w_km = jnp.transpose(w_flip, (2, 3, 0, 1)).reshape(K, C_out).astype(in_dtype)

    # ---- Kernel 1: fused transposed conv + per-image BN partial stats ----
    kernel1 = functools.partial(_deconv_stats_kernel, kh=kH, kw=kW,
                                h_out=H_out, w_out=W_out)
    blk_bytes = (itemsize * (H_pad * W_pad * C_in + K * C_out)
                 + 4 * (C_out * M_img + 2 * C_out))
    interm_bytes = 4 * (M_img * K + 2 * M_img * C_out)
    vmem1 = int(min(max(4 * (2 * blk_bytes + interm_bytes), 8 << 20), 64 << 20))

    y, sums, sqs = pl.pallas_call(
        kernel1,
        out_shape=(jax.ShapeDtypeStruct((N, C_out, M_img), jnp.float32),
                   jax.ShapeDtypeStruct((N, 1, C_out), jnp.float32),
                   jax.ShapeDtypeStruct((N, 1, C_out), jnp.float32)),
        grid=(N,),
        in_specs=[pl.BlockSpec((None, H_pad, W_pad, C_in), lambda n: (n, 0, 0, 0)),
                  pl.BlockSpec((K, C_out), lambda n: (0, 0))],
        out_specs=(pl.BlockSpec((None, C_out, M_img), lambda n: (n, 0, 0)),
                   pl.BlockSpec((None, 1, C_out), lambda n: (n, 0, 0)),
                   pl.BlockSpec((None, 1, C_out), lambda n: (n, 0, 0))),
        compiler_params=pltpu.CompilerParams(
            dimension_semantics=("parallel",), vmem_limit_bytes=vmem1),
    )(x_pad, w_km)

    # ---- BN train-mode batch stats folded into per-channel scale/shift (tiny XLA) ----
    # TODO(synk): running_mean / running_var buffers are not updated (forward only).
    sum_all = jnp.sum(sums[:, 0, :], axis=0)                           # (C_out,)
    sq_all = jnp.sum(sqs[:, 0, :], axis=0)
    mean = sum_all / M_total
    # Clamp: E[x^2]-mean^2 can go slightly negative from f32 cancellation.
    var = jnp.maximum(sq_all / M_total - mean * mean, 0.0)
    inv = lax.rsqrt(var + eps)
    scale_c = gamma.astype(jnp.float32) * inv
    shift_c = beta.astype(jnp.float32) - mean * scale_c
    scale = scale_c.reshape(C_out, 1)
    shift = shift_c.reshape(C_out, 1)

    # ---- Kernel 2: lane-dense BN affine + ReLU + dropout on the (N, C_out, M) slab ----
    drop_threshold = int(round(float(dropout_rate) * (1 << 24)))
    inv_keep = 1.0 / (1.0 - float(dropout_rate)) if dropout_rate < 1.0 else 0.0
    kernel2 = functools.partial(_bn_relu_dropout_kernel, c_out=C_out, m=M_img,
                                drop_threshold=drop_threshold, inv_keep=inv_keep)
    seed_arr = jnp.array([seed], dtype=jnp.int32)

    out = pl.pallas_call(
        kernel2,
        out_shape=jax.ShapeDtypeStruct((N, C_out, M_img), jnp.float32),
        grid=(N,),
        in_specs=[pl.BlockSpec(memory_space=pltpu.MemorySpace.SMEM),
                  pl.BlockSpec((None, C_out, M_img), lambda n: (n, 0, 0)),
                  pl.BlockSpec((C_out, 1), lambda n: (0, 0)),
                  pl.BlockSpec((C_out, 1), lambda n: (0, 0))],
        out_specs=pl.BlockSpec((None, C_out, M_img), lambda n: (n, 0, 0)),
        compiler_params=pltpu.CompilerParams(dimension_semantics=("parallel",)),
    )(seed_arr, y, scale, shift)

    # Channels-major already matches NCHW: the final "transpose" is a free reshape.
    return out.reshape(N, C_out, H_out, W_out)


# ----------------------------------------------------------------------------
# Pure-JAX reference (no dropout) for a numerical cross-check.
# ----------------------------------------------------------------------------
def _reference_forward(x, weight, bias, gamma, beta, *, stride, padding,
                       output_padding, eps=1e-5):
    C_in, C_out, kH, kW = weight.shape
    s, p, op = stride, padding, output_padding
    rhs = jnp.transpose(weight[:, :, ::-1, ::-1], (1, 0, 2, 3))   # (C_out, C_in, kH, kW)
    y = lax.conv_general_dilated(
        x, rhs, window_strides=(1, 1),
        padding=((kH - 1 - p, kH - 1 - p + op), (kW - 1 - p, kW - 1 - p + op)),
        lhs_dilation=(s, s), rhs_dilation=(1, 1),
        dimension_numbers=("NCHW", "OIHW", "NCHW"),
        precision=lax.Precision.HIGHEST)
    y = y + bias.reshape(1, C_out, 1, 1)
    mean = jnp.mean(y, axis=(0, 2, 3), keepdims=True)
    var = jnp.var(y, axis=(0, 2, 3), keepdims=True)               # biased, as BN uses
    yn = (y - mean) * lax.rsqrt(var + eps)
    yn = yn * gamma.reshape(1, C_out, 1, 1) + beta.reshape(1, C_out, 1, 1)
    return jnp.maximum(yn, 0.0)


if __name__ == "__main__":
    key = jax.random.PRNGKey(0)
    k1, k2, k3 = jax.random.split(key, 3)

    # deconv_block(in_channels=4, out_channels=8, kernel_size=4, stride=2,
    #              padding=1, output_padding=0, dropout=0.1)
    N, C_in, H, W = 2, 4, 16, 16
    C_out, ksize, stride, padding, out_pad, drop = 8, 4, 2, 1, 0, 0.1

    x = jax.random.normal(k1, (N, C_in, H, W), jnp.float32)
    weight = 0.1 * jax.random.normal(k2, (C_in, C_out, ksize, ksize), jnp.float32)
    bias = 0.1 * jax.random.normal(k3, (C_out,), jnp.float32)
    gamma = jnp.ones((C_out,), jnp.float32)   # BatchNorm2d default affine init
    beta = jnp.zeros((C_out,), jnp.float32)

    # numerical cross-check with dropout disabled (deterministic path)
    out_nodrop = deconv_block_forward(x, weight, bias, gamma, beta,
                                      stride=stride, padding=padding,
                                      output_padding=out_pad,
                                      dropout_rate=0.0, seed=0)
    ref = _reference_forward(x, weight, bias, gamma, beta, stride=stride,
                             padding=padding, output_padding=out_pad)
    assert out_nodrop.shape == (N, C_out, 32, 32), out_nodrop.shape
    max_err = float(jnp.max(jnp.abs(out_nodrop - ref)))
    assert max_err < 2e-2, max_err

    # full forward with dropout enabled
    out = deconv_block_forward(x, weight, bias, gamma, beta,
                               stride=stride, padding=padding,
                               output_padding=out_pad,
                               dropout_rate=drop, seed=0)
    out = jax.block_until_ready(out)
    assert out.shape == (N, C_out, 32, 32), out.shape
    assert bool(jnp.all(jnp.isfinite(out)))
    print("KERNEL_OK")
</pallas_src>

<mosaic_0001>
module attributes {stable_mosaic.version = 11 : i64} {
  func.func @_deconv_stats_kernel(%arg0: i32, %arg1: memref<1x35x35x4xf32, #tpu.memory_space<vmem>>, %arg2: memref<64x8xf32, #tpu.memory_space<vmem>>, %arg3: memref<1x8x1024xf32, #tpu.memory_space<vmem>>, %arg4: memref<1x1x8xf32, #tpu.memory_space<vmem>>, %arg5: memref<1x1x8xf32, #tpu.memory_space<vmem>>) attributes {dimension_semantics = [#tpu.dimension_semantics<parallel>], iteration_bounds = array<i64: 2>, scalar_prefetch = 0 : i64, scratch_operands = 0 : i64, tpu.core_type = #tpu.core_type<tc>, window_params = [{transform_indices = @transform_0, window_bounds = array<i64: 1, 35, 35, 4>}, {pipeline_mode = #tpu.pipeline_mode<synchronous>, transform_indices = @transform_1, window_bounds = array<i64: 64, 8>}, {transform_indices = @transform_2, window_bounds = array<i64: 1, 8, 1024>}, {transform_indices = @transform_3, window_bounds = array<i64: 1, 1, 8>}, {transform_indices = @transform_4, window_bounds = array<i64: 1, 1, 8>}]} {
    %c0 = arith.constant 0 : index
    %c0_0 = arith.constant 0 : index
    %c0_1 = arith.constant 0 : index
    %c0_2 = arith.constant 0 : index
    %0 = vector.load %arg1[%c0, %c0_0, %c0_1, %c0_2] : memref<1x35x35x4xf32, #tpu.memory_space<vmem>>, vector<1x32x32x4xf32>
    %1 = vector.shape_cast %0 : vector<1x32x32x4xf32> to vector<32x32x4xf32>
    %2 = vector.shape_cast %1 : vector<32x32x4xf32> to vector<1024x4xf32>
    %c0_3 = arith.constant 0 : index
    %c0_4 = arith.constant 0 : index
    %c1 = arith.constant 1 : index
    %c0_5 = arith.constant 0 : index
    %3 = vector.load %arg1[%c0_3, %c0_4, %c1, %c0_5] : memref<1x35x35x4xf32, #tpu.memory_space<vmem>>, vector<1x32x32x4xf32>
    %4 = vector.shape_cast %3 : vector<1x32x32x4xf32> to vector<32x32x4xf32>
    %5 = vector.shape_cast %4 : vector<32x32x4xf32> to vector<1024x4xf32>
    %c0_6 = arith.constant 0 : index
    %c0_7 = arith.constant 0 : index
    %c2 = arith.constant 2 : index
    %c0_8 = arith.constant 0 : index
    %6 = vector.load %arg1[%c0_6, %c0_7, %c2, %c0_8] : memref<1x35x35x4xf32, #tpu.memory_space<vmem>>, vector<1x32x32x4xf32>
    %7 = vector.shape_cast %6 : vector<1x32x32x4xf32> to vector<32x32x4xf32>
    %8 = vector.shape_cast %7 : vector<32x32x4xf32> to vector<1024x4xf32>
    %c0_9 = arith.constant 0 : index
    %c0_10 = arith.constant 0 : index
    %c3 = arith.constant 3 : index
    %c0_11 = arith.constant 0 : index
    %9 = vector.load %arg1[%c0_9, %c0_10, %c3, %c0_11] : memref<1x35x35x4xf32, #tpu.memory_space<vmem>>, vector<1x32x32x4xf32>
    %10 = vector.shape_cast %9 : vector<1x32x32x4xf32> to vector<32x32x4xf32>
    %11 = vector.shape_cast %10 : vector<32x32x4xf32> to vector<1024x4xf32>
    %c0_12 = arith.constant 0 : index
    %c1_13 = arith.constant 1 : index
    %c0_14 = arith.constant 0 : index
    %c0_15 = arith.constant 0 : index
    %12 = vector.load %arg1[%c0_12, %c1_13, %c0_14, %c0_15] : memref<1x35x35x4xf32, #tpu.memory_space<vmem>>, vector<1x32x32x4xf32>
    %13 = vector.shape_cast %12 : vector<1x32x32x4xf32> to vector<32x32x4xf32>
    %14 = vector.shape_cast %13 : vector<32x32x4xf32> to vector<1024x4xf32>
    %c0_16 = arith.constant 0 : index
    %c1_17 = arith.constant 1 : index
    %c1_18 = arith.constant 1 : index
    %c0_19 = arith.constant 0 : index
    %15 = vector.load %arg1[%c0_16, %c1_17, %c1_18, %c0_19] : memref<1x35x35x4xf32, #tpu.memory_space<vmem>>, vector<1x32x32x4xf32>
    %16 = vector.shape_cast %15 : vector<1x32x32x4xf32> to vector<32x32x4xf32>
    %17 = vector.shape_cast %16 : vector<32x32x4xf32> to vector<1024x4xf32>
    %c0_20 = arith.constant 0 : index
    %c1_21 = arith.constant 1 : index
    %c2_22 = arith.constant 2 : index
    %c0_23 = arith.constant 0 : index
    %18 = vector.load %arg1[%c0_20, %c1_21, %c2_22, %c0_23] : memref<1x35x35x4xf32, #tpu.memory_space<vmem>>, vector<1x32x32x4xf32>
    %19 = vector.shape_cast %18 : vector<1x32x32x4xf32> to vector<32x32x4xf32>
    %20 = vector.shape_cast %19 : vector<32x32x4xf32> to vector<1024x4xf32>
    %c0_24 = arith.constant 0 : index
    %c1_25 = arith.constant 1 : index
    %c3_26 = arith.constant 3 : index
    %c0_27 = arith.constant 0 : index
    %21 = vector.load %arg1[%c0_24, %c1_25, %c3_26, %c0_27] : memref<1x35x35x4xf32, #tpu.memory_space<vmem>>, vector<1x32x32x4xf32>
    %22 = vector.shape_cast %21 : vector<1x32x32x4xf32> to vector<32x32x4xf32>
    %23 = vector.shape_cast %22 : vector<32x32x4xf32> to vector<1024x4xf32>
    %c0_28 = arith.constant 0 : index
    %c2_29 = arith.constant 2 : index
    %c0_30 = arith.constant 0 : index
    %c0_31 = arith.constant 0 : index
    %24 = vector.load %arg1[%c0_28, %c2_29, %c0_30, %c0_31] : memref<1x35x35x4xf32, #tpu.memory_space<vmem>>, vector<1x32x32x4xf32>
    %25 = vector.shape_cast %24 : vector<1x32x32x4xf32> to vector<32x32x4xf32>
    %26 = vector.shape_cast %25 : vector<32x32x4xf32> to vector<1024x4xf32>
    %c0_32 = arith.constant 0 : index
    %c2_33 = arith.constant 2 : index
    %c1_34 = arith.constant 1 : index
    %c0_35 = arith.constant 0 : index
    %27 = vector.load %arg1[%c0_32, %c2_33, %c1_34, %c0_35] : memref<1x35x35x4xf32, #tpu.memory_space<vmem>>, vector<1x32x32x4xf32>
    %28 = vector.shape_cast %27 : vector<1x32x32x4xf32> to vector<32x32x4xf32>
    %29 = vector.shape_cast %28 : vector<32x32x4xf32> to vector<1024x4xf32>
    %c0_36 = arith.constant 0 : index
    %c2_37 = arith.constant 2 : index
    %c2_38 = arith.constant 2 : index
    %c0_39 = arith.constant 0 : index
    %30 = vector.load %arg1[%c0_36, %c2_37, %c2_38, %c0_39] : memref<1x35x35x4xf32, #tpu.memory_space<vmem>>, vector<1x32x32x4xf32>
    %31 = vector.shape_cast %30 : vector<1x32x32x4xf32> to vector<32x32x4xf32>
    %32 = vector.shape_cast %31 : vector<32x32x4xf32> to vector<1024x4xf32>
    %c0_40 = arith.constant 0 : index
    %c2_41 = arith.constant 2 : index
    %c3_42 = arith.constant 3 : index
    %c0_43 = arith.constant 0 : index
    %33 = vector.load %arg1[%c0_40, %c2_41, %c3_42, %c0_43] : memref<1x35x35x4xf32, #tpu.memory_space<vmem>>, vector<1x32x32x4xf32>
    %34 = vector.shape_cast %33 : vector<1x32x32x4xf32> to vector<32x32x4xf32>
    %35 = vector.shape_cast %34 : vector<32x32x4xf32> to vector<1024x4xf32>
    %c0_44 = arith.constant 0 : index
    %c3_45 = arith.constant 3 : index
    %c0_46 = arith.constant 0 : index
    %c0_47 = arith.constant 0 : index
    %36 = vector.load %arg1[%c0_44, %c3_45, %c0_46, %c0_47] : memref<1x35x35x4xf32, #tpu.memory_space<vmem>>, vector<1x32x32x4xf32>
    %37 = vector.shape_cast %36 : vector<1x32x32x4xf32> to vector<32x32x4xf32>
    %38 = vector.shape_cast %37 : vector<32x32x4xf32> to vector<1024x4xf32>
    %c0_48 = arith.constant 0 : index
    %c3_49 = arith.constant 3 : index
    %c1_50 = arith.constant 1 : index
    %c0_51 = arith.constant 0 : index
    %39 = vector.load %arg1[%c0_48, %c3_49, %c1_50, %c0_51] : memref<1x35x35x4xf32, #tpu.memory_space<vmem>>, vector<1x32x32x4xf32>
    %40 = vector.shape_cast %39 : vector<1x32x32x4xf32> to vector<32x32x4xf32>
    %41 = vector.shape_cast %40 : vector<32x32x4xf32> to vector<1024x4xf32>
    %c0_52 = arith.constant 0 : index
    %c3_53 = arith.constant 3 : index
    %c2_54 = arith.constant 2 : index
    %c0_55 = arith.constant 0 : index
    %42 = vector.load %arg1[%c0_52, %c3_53, %c2_54, %c0_55] : memref<1x35x35x4xf32, #tpu.memory_space<vmem>>, vector<1x32x32x4xf32>
    %43 = vector.shape_cast %42 : vector<1x32x32x4xf32> to vector<32x32x4xf32>
    %44 = vector.shape_cast %43 : vector<32x32x4xf32> to vector<1024x4xf32>
    %c0_56 = arith.constant 0 : index
    %c3_57 = arith.constant 3 : index
    %c3_58 = arith.constant 3 : index
    %c0_59 = arith.constant 0 : index
    %45 = vector.load %arg1[%c0_56, %c3_57, %c3_58, %c0_59] : memref<1x35x35x4xf32, #tpu.memory_space<vmem>>, vector<1x32x32x4xf32>
    %46 = vector.shape_cast %45 : vector<1x32x32x4xf32> to vector<32x32x4xf32>
    %47 = vector.shape_cast %46 : vector<32x32x4xf32> to vector<1024x4xf32>
    %48 = tpu.concatenate %2, %5, %8, %11, %14, %17, %20, %23, %26, %29, %32, %35, %38, %41, %44, %47 in 1 : vector<1024x4xf32>, vector<1024x4xf32>, vector<1024x4xf32>, vector<1024x4xf32>, vector<1024x4xf32>, vector<1024x4xf32>, vector<1024x4xf32>, vector<1024x4xf32>, vector<1024x4xf32>, vector<1024x4xf32>, vector<1024x4xf32>, vector<1024x4xf32>, vector<1024x4xf32>, vector<1024x4xf32>, vector<1024x4xf32>, vector<1024x4xf32> -> vector<1024x64xf32>
    %c0_60 = arith.constant 0 : index
    %c0_61 = arith.constant 0 : index
    %49 = vector.load %arg2[%c0_60, %c0_61] : memref<64x8xf32, #tpu.memory_space<vmem>>, vector<64x8xf32>
    %cst = arith.constant dense<0.000000e+00> : vector<1024x8xf32>
    %50 = tpu.matmul %48, %49, %cst {dimension_numbers = #tpu.dot_dimension_numbers<[1], [0], [0], [1], [0, 0, 1, 1], [], []>} : vector<1024x64xf32>, vector<64x8xf32>, vector<1024x8xf32> -> vector<1024x8xf32>
    %cst_62 = arith.constant dense<0.000000e+00> : vector<8xf32>
    %51 = vector.multi_reduction <add>, %50, %cst_62 [0] : vector<1024x8xf32> to vector<8xf32>
    %52 = vector.shape_cast %51 : vector<8xf32> to vector<1x8xf32>
    %c0_63 = arith.constant 0 : index
    %c0_64 = arith.constant 0 : index
    %c0_65 = arith.constant 0 : index
    %53 = vector.load %arg4[%c0_63, %c0_64, %c0_65] : memref<1x1x8xf32, #tpu.memory_space<vmem>>, vector<1x1x8xf32>
    %54 = vector.shape_cast %53 : vector<1x1x8xf32> to vector<1x8xf32>
    %55 = vector.shape_cast %52 : vector<1x8xf32> to vector<1x1x8xf32>
    tpu.vector_store %arg4[%c0_63, %c0_64, %c0_65], %55 {strides = array<i32>} : memref<1x1x8xf32, #tpu.memory_space<vmem>>, vector<1x1x8xf32>,
    %56 = arith.mulf %50, %50 : vector<1024x8xf32>
    %cst_66 = arith.constant dense<0.000000e+00> : vector<8xf32>
    %57 = vector.multi_reduction <add>, %56, %cst_66 [0] : vector<1024x8xf32> to vector<8xf32>
    %58 = vector.shape_cast %57 : vector<8xf32> to vector<1x8xf32>
    %c0_67 = arith.constant 0 : index
    %c0_68 = arith.constant 0 : index
    %c0_69 = arith.constant 0 : index
    %59 = vector.load %arg5[%c0_67, %c0_68, %c0_69] : memref<1x1x8xf32, #tpu.memory_space<vmem>>, vector<1x1x8xf32>
    %60 = vector.shape_cast %59 : vector<1x1x8xf32> to vector<1x8xf32>
    %61 = vector.shape_cast %58 : vector<1x8xf32> to vector<1x1x8xf32>
    tpu.vector_store %arg5[%c0_67, %c0_68, %c0_69], %61 {strides = array<i32>} : memref<1x1x8xf32, #tpu.memory_space<vmem>>, vector<1x1x8xf32>,
    %62 = tpu.transpose %50, [1, 0] : vector<1024x8xf32> -> vector<8x1024xf32>
    %c0_70 = arith.constant 0 : index
    %c0_71 = arith.constant 0 : index
    %c0_72 = arith.constant 0 : index
    %63 = vector.load %arg3[%c0_70, %c0_71, %c0_72] : memref<1x8x1024xf32, #tpu.memory_space<vmem>>, vector<1x8x1024xf32>
    %64 = vector.shape_cast %63 : vector<1x8x1024xf32> to vector<8x1024xf32>
    %65 = vector.shape_cast %62 : vector<8x1024xf32> to vector<1x8x1024xf32>
    tpu.vector_store %arg3[%c0_70, %c0_71, %c0_72], %65 {strides = array<i32>} : memref<1x8x1024xf32, #tpu.memory_space<vmem>>, vector<1x8x1024xf32>,
    return
  }
  func.func @transform_0(%arg0: i32) -> (i32, i32, i32, i32) {
    %c0_i32 = arith.constant 0 : i32
    %c0_i32_0 = arith.constant 0 : i32
    %c0_i32_1 = arith.constant 0 : i32
    %c0_i32_2 = arith.constant 0 : i32
    return %arg0, %c0_i32, %c0_i32_0, %c0_i32_1 : i32, i32, i32, i32
  }
  func.func @transform_1(%arg0: i32) -> (i32, i32) {
    %c0_i32 = arith.constant 0 : i32
    %c0_i32_0 = arith.constant 0 : i32
    %c0_i32_1 = arith.constant 0 : i32
    return %c0_i32, %c0_i32_0 : i32, i32
  }
  func.func @transform_2(%arg0: i32) -> (i32, i32, i32) {
    %c0_i32 = arith.constant 0 : i32
    %c0_i32_0 = arith.constant 0 : i32
    %c0_i32_1 = arith.constant 0 : i32
    return %arg0, %c0_i32, %c0_i32_0 : i32, i32, i32
  }
  func.func @transform_3(%arg0: i32) -> (i32, i32, i32) {
    %c0_i32 = arith.constant 0 : i32
    %c0_i32_0 = arith.constant 0 : i32
    %c0_i32_1 = arith.constant 0 : i32
    return %arg0, %c0_i32, %c0_i32_0 : i32, i32, i32
  }
  func.func @transform_4(%arg0: i32) -> (i32, i32, i32) {
    %c0_i32 = arith.constant 0 : i32
    %c0_i32_0 = arith.constant 0 : i32
    %c0_i32_1 = arith.constant 0 : i32
    return %arg0, %c0_i32, %c0_i32_0 : i32, i32, i32
  }
}

</mosaic_0001>

<llo_original>
// kernel: tpu_custom_call.1
$region0: #{tpu_custom_call.1}
  #allocation0 [shape = 'u32[]', space=smem, size = 0x4, offset = 0x4, fixed_abs, tag = 'smem constant byte address 0x4 - core index']
  #allocation1 [shape = 'u32[144,128]{1,0:T(1,128)}', space=vmem, size = 0x12000, scoped, tag = 'internal scratch']
  %s0 = inlined_call_operand.vmem [shape: f32[2,35,35,4], index: 0, kind: input, shape index: {}]
  %s1 = inlined_call_operand.vmem [shape: f32[64,8], index: 1, kind: input, shape index: {}]
  %s2 = inlined_call_operand.hbm [shape: f32[2,8,1024], index: 2, kind: output, shape index: {0}]
  %s3 = inlined_call_operand.hbm [shape: f32[2,1,8], index: 3, kind: output, shape index: {1}]
  %s4 = inlined_call_operand.hbm [shape: f32[2,1,8], index: 4, kind: output, shape index: {2}]
  %5 = xla_tuple %s2, %s3, %s4
  %s6 = sld [smem:[#allocation0]]
  $region57: #{tpu_custom_call.1} parent=0
    _
  %s8 = ssub.s32 1, %s6
  %s9 = scalar_select 0, %s8, %s6
  $region1: #{tpu_custom_call.1} parent=0
    #allocation2 [shape = 'u8[65536]{0}', space=vmem, size = 0x10000, scoped, tag = 'output window, operand 0']
    #allocation3 [shape = 's32[2]{0}', space=sflag, size = 0x8, scoped, tag = 'scoped memory for tpu_custom_call.1']
    #allocation4 [shape = 'u8[1024]{0}', space=vmem, size = 0x400, scoped, tag = 'output window, operand 1']
    #allocation5 [shape = 's32[2]{0}', space=sflag, size = 0x8, scoped, tag = 'scoped memory for tpu_custom_call.1']
    #allocation6 [shape = 'u8[1024]{0}', space=vmem, size = 0x400, scoped, tag = 'output window, operand 2']
    %10 = vsyncpa [#allocation3], 0
    %s11 = scalar_lea.sflag [#allocation3], 1
    %12 = vsyncpa %s11, 0
    %13 = vsyncpa [#allocation5], 0
    %s14 = scalar_lea.sflag [#allocation5], 1
    %15 = vsyncpa %s14, 0
    loop: start=0, step=1, limit=4
    $region2: #{tpu_custom_call.1} parent=1 // loop_pre_header
      _
    $region3: #{tpu_custom_call.1} parent=1 // loop_header
      %s17 = sphi 0, %s21
      %p18 = scmp.ge.s32.totalorder %s17, 4
      %s27 = sphi 0, %s29
      %s30 = sphi 0, %s27
      %s31 = sphi 0, %s30
      %s47 = sphi 0, %s31
      %s51 = sphi 0, %s51
      %s53 = sphi 0, %s51
      %s54 = sphi 0, %s53
      %s68 = sphi 0, %s54
      %s74 = sphi 0, %s76
      %s77 = sphi 0, %s74
      %s78 = sphi 0, %s77
      %s94 = sphi 0, %s78
      %s100 = sphi 0, %s102
      %s103 = sphi 0, %s100
      %s104 = sphi 0, %s103
      %s120 = sphi 0, %s104
      %s126 = sphi 0, %s128
      %s129 = sphi 0, %s126
      %s130 = sphi 0, %s129
      %s146 = sphi 0, %s130
    $region4: #{tpu_custom_call.1} parent=1 // loop_header_branch
      %20 = sbr.rel (%p18) target = $region8
    $region5: #{tpu_custom_call.1} parent=1 // loop_body
      %s22 = ssub.s32 %s17, 1
      %s23 = ssub.s32 %s17, 2
      %s24 = sadd.s32 %s17, 1
      %s25 = ssub.s32 %s17, %s24
      %p26 = scmp.eq.s32.totalorder %s25, 0
      %s28 = sadd.s32 %s27, 1
      %s29 = scalar_select %p26, %s27, %s28
      %p32 = pneg %p26
      %p33 = scmp.eq.s32.totalorder %s17, 1
      %p34 = por %p32, %p33
      %p35 = scmp.ne.s32.totalorder %s27, %s30
      %p36 = scmp.eq.s32.totalorder %s17, 0
      %p37 = por %p35, %p36
      %p38 = scmp.ne.s32.totalorder %s27, %s30
      %p39 = scmp.eq.s32.totalorder %s22, 1
      %p40 = por %p38, %p39
      %p41 = scmp.ne.s32.totalorder %s30, %s31
      %p42 = scmp.eq.s32.totalorder %s22, 0
      %p43 = por %p41, %p42
      %p44 = scmp.ne.s32.totalorder %s30, %s31
      %p45 = scmp.eq.s32.totalorder %s23, 1
      %p46 = por %p44, %p45
      %p48 = scmp.ne.s32.totalorder %s31, %s47
      %p49 = scmp.eq.s32.totalorder %s23, 0
      %p50 = por %p48, %p49
      %s52 = sadd.s32 %s51, 1
      %p55 = scmp.eq.s32.totalorder %s17, 1
      %p56 = scmp.ne.s32.totalorder %s51, %s53
      %p57 = scmp.eq.s32.totalorder %s17, 0
      %p58 = por %p56, %p57
      %p59 = scmp.ne.s32.totalorder %s51, %s53
      %p60 = scmp.eq.s32.totalorder %s22, 1
      %p61 = por %p59, %p60
      %p62 = scmp.ne.s32.totalorder %s53, %s54
      %p63 = scmp.eq.s32.totalorder %s22, 0
      %p64 = por %p62, %p63
      %p65 = scmp.ne.s32.totalorder %s53, %s54
      %p66 = scmp.eq.s32.totalorder %s23, 1
      %p67 = por %p65, %p66
      %p69 = scmp.ne.s32.totalorder %s54, %s68
      %p70 = scmp.eq.s32.totalorder %s23, 0
      %p71 = por %p69, %p70
      %s72 = ssub.s32 %s17, %s24
      %p73 = scmp.eq.s32.totalorder %s72, 0
      %s75 = sadd.s32 %s74, 1
      %s76 = scalar_select %p73, %s74, %s75
      %p79 = pneg %p73
      %p80 = scmp.eq.s32.totalorder %s17, 1
      %p81 = por %p79, %p80
      %p82 = scmp.ne.s32.totalorder %s74, %s77
      %p83 = scmp.eq.s32.totalorder %s17, 0
      %p84 = por %p82, %p83
      %p85 = scmp.ne.s32.totalorder %s74, %s77
      %p86 = scmp.eq.s32.totalorder %s22, 1
      %p87 = por %p85, %p86
      %p88 = scmp.ne.s32.totalorder %s77, %s78
      %p89 = scmp.eq.s32.totalorder %s22, 0
      %p90 = por %p88, %p89
      %p91 = scmp.ne.s32.totalorder %s77, %s78
      %p92 = scmp.eq.s32.totalorder %s23, 1
      %p93 = por %p91, %p92
      %p95 = scmp.ne.s32.totalorder %s78, %s94
      %p96 = scmp.eq.s32.totalorder %s23, 0
      %p97 = por %p95, %p96
      %s98 = ssub.s32 %s17, %s24
      %p99 = scmp.eq.s32.totalorder %s98, 0
      %s101 = sadd.s32 %s100, 1
      %s102 = scalar_select %p99, %s100, %s101
      %p105 = pneg %p99
      %p106 = scmp.eq.s32.totalorder %s17, 1
      %p107 = por %p105, %p106
      %p108 = scmp.ne.s32.totalorder %s100, %s103
      %p109 = scmp.eq.s32.totalorder %s17, 0
      %p110 = por %p108, %p109
      %p111 = scmp.ne.s32.totalorder %s100, %s103
      %p112 = scmp.eq.s32.totalorder %s22, 1
      %p113 = por %p111, %p112
      %p114 = scmp.ne.s32.totalorder %s103, %s104
      %p115 = scmp.eq.s32.totalorder %s22, 0
      %p116 = por %p114, %p115
      %p117 = scmp.ne.s32.totalorder %s103, %s104
      %p118 = scmp.eq.s32.totalorder %s23, 1
      %p119 = por %p117, %p118
      %p121 = scmp.ne.s32.totalorder %s104, %s120
      %p122 = scmp.eq.s32.totalorder %s23, 0
      %p123 = por %p121, %p122
      %s124 = ssub.s32 %s17, %s24
      %p125 = scmp.eq.s32.totalorder %s124, 0
      %s127 = sadd.s32 %s126, 1
      %s128 = scalar_select %p125, %s126, %s127
      %p131 = pneg %p125
      %p132 = scmp.eq.s32.totalorder %s17, 1
      %p133 = por %p131, %p132
      %p134 = scmp.ne.s32.totalorder %s126, %s129
      %p135 = scmp.eq.s32.totalorder %s17, 0
      %p136 = por %p134, %p135
      %p137 = scmp.ne.s32.totalorder %s126, %s129
      %p138 = scmp.eq.s32.totalorder %s22, 1
      %p139 = por %p137, %p138
      %p140 = scmp.ne.s32.totalorder %s129, %s130
      %p141 = scmp.eq.s32.totalorder %s22, 0
      %p142 = por %p140, %p141
      %p143 = scmp.ne.s32.totalorder %s129, %s130
      %p144 = scmp.eq.s32.totalorder %s23, 1
      %p145 = por %p143, %p144
      %p147 = scmp.ne.s32.totalorder %s130, %s146
      %p148 = scmp.eq.s32.totalorder %s23, 0
      %p149 = por %p147, %p148
      %p150 = scmp.le.s32.totalorder 1, %s17
      %p151 = scmp.lt.s32.totalorder %s17, 3
      %p152 = pnand %p150, %p151
      %p153 = pneg %p152
      // Predicated region
      $region9: #{tpu_custom_call.1} parent=5 // pred_check
        _
      $region10: #{tpu_custom_call.1} parent=5 // pred_check_branch
        %155 = sbr.rel (%p152) target = $region12
      $region11: #{tpu_custom_call.1} parent=5 // pred_region
        %s156 = ssub.s32 %s17, 1
        // Predicated region
        $region13: #{tpu_custom_call.1} parent=11 // pred_check
          %p157 = pneg %p64
        $region14: #{tpu_custom_call.1} parent=11 // pred_check_branch
          %159 = sbr.rel (%p157) target = $region16
        $region15: #{tpu_custom_call.1} parent=11 // pred_region
          _
        $region16: #{tpu_custom_call.1} parent=11 // pred_fallthru
          _
      $region12: #{tpu_custom_call.1} parent=5 // pred_fallthru
        _
      %p160 = scmp.lt.s32.totalorder %s17, 2
      // Predicated region
      $region17: #{tpu_custom_call.1} parent=5 // pred_check
        %p161 = pneg %p160
      $region18: #{tpu_custom_call.1} parent=5 // pred_check_branch
        %163 = sbr.rel (%p161) target = $region20
      $region19: #{tpu_custom_call.1} parent=5 // pred_region
        // Predicated region
        $region21: #{tpu_custom_call.1} parent=19 // pred_check
          %p164 = pneg %p37
        $region22: #{tpu_custom_call.1} parent=19 // pred_check_branch
          %166 = sbr.rel (%p164) target = $region24
        $region23: #{tpu_custom_call.1} parent=19 // pred_region
          %p167 = scmp.lt.s32.totalorder %s17, 1
          %s168 = scalar_select %p167, %s17, 1
          %s169 = smul.addr %s168, 175
          %s170 = smul.addr %s169, 8
          %s171 = scalar_lea.vmem %s0, %s170
        $region24: #{tpu_custom_call.1} parent=19 // pred_fallthru
          _
      $region20: #{tpu_custom_call.1} parent=5 // pred_fallthru
        _
      %p172 = scmp.le.s32.totalorder 1, %s17
      %p173 = scmp.lt.s32.totalorder %s17, 3
      %p174 = pnand %p172, %p173
      %p175 = pneg %p174
      // Predicated region
      $region25: #{tpu_custom_call.1} parent=5 // pred_check
        _
      $region26: #{tpu_custom_call.1} parent=5 // pred_check_branch
        %177 = sbr.rel (%p174) target = $region28
      $region27: #{tpu_custom_call.1} parent=5 // pred_region
        %s178 = ssub.s32 %s17, 1
        %p179 = scmp.lt.s32.totalorder %s22, 1
        %s180 = scalar_select %p179, %s22, 1
        %s181 = smul.addr %s180, 175
        %s182 = smul.addr %s181, 8
        %s183 = scalar_lea.vmem %s0, %s182
        %p184 = pneg %p43
        %p185 = pneg %p40
        %p186 = pneg %p64
        %p187 = pneg %p61
        %p188 = pneg %p90
        %p189 = pneg %p87
        %s190 = sand.u32 %s77, 1
        %s191 = scalar_lea.sflag [#allocation3], %s190
        %s192 = sand.u32 %s77, 1
        %s193 = smul.addr %s192, 64
        %s194 = scalar_lea.vmem [#allocation2], %s193
        %p195 = pneg %p116
        %p196 = pneg %p113
        %s197 = sand.u32 %s22, 1
        %s198 = scalar_lea.sflag [#allocation5], %s197
        %s199 = sand.u32 %s103, 1
        %s200 = scalar_lea.vmem [#allocation4], %s199
        %p201 = pneg %p142
        %p202 = pneg %p139
        %s203 = sand.u32 %s22, 1
        %s204 = scalar_lea.sflag [#allocation5], %s203
        %s205 = sand.u32 %s129, 1
        %s206 = scalar_lea.vmem [#allocation6], %s205
        %p207 = scmp.lt.s32.totalorder %s22, 1
        %s208 = scalar_select %p207, %s22, 1
        %s209 = smul.addr %s208, 175
        %s210 = smul.addr %s209, 8
        %s211 = scalar_lea.vmem %s0, %s210
        %v212 = vld [vmem:[%s211] sm:$0xff]
        %v213 = vld [vmem:[%s211 + $0x8] sm:$0xff]
        %v214 = vld [vmem:[%s211 + $0x10] sm:$0xff]
        %v215 = vld [vmem:[%s211 + $0x18] sm:$0xff]
        %v216 = vld [vmem:[%s211 + $0x28] sm:$0xff]
        %v217 = vld [vmem:[%s211 + $0x30] sm:$0xff]
        %v218 = vld [vmem:[%s211 + $0x38] sm:$0xff]
        %v219 = vld [vmem:[%s211 + $0x40] sm:$0xff]
        %v220 = vld [vmem:[%s211 + $0x50] sm:$0xff]
        %v221 = vld [vmem:[%s211 + $0x58] sm:$0xff]
        %v222 = vld [vmem:[%s211 + $0x60] sm:$0xff]
        %v223 = vld [vmem:[%s211 + $0x68] sm:$0xff]
        %v224 = vld [vmem:[%s211 + $0x78] sm:$0xff]
        %v225 = vld [vmem:[%s211 + $0x80] sm:$0xff]
        %v226 = vld [vmem:[%s211 + $0x88] sm:$0xff]
        %v227 = vld [vmem:[%s211 + $0x90] sm:$0xff]
        %v228 = vld [vmem:[%s211 + $0xa0] sm:$0xff]
        %v229 = vld [vmem:[%s211 + $0xa8] sm:$0xff]
        %v230 = vld [vmem:[%s211 + $0xb0] sm:$0xff]
        %v231 = vld [vmem:[%s211 + $0xb8] sm:$0xff]
        %v232 = vld [vmem:[%s211 + $0xc8] sm:$0xff]
        %v233 = vld [vmem:[%s211 + $0xd0] sm:$0xff]
        %v234 = vld [vmem:[%s211 + $0xd8] sm:$0xff]
        %v235 = vld [vmem:[%s211 + $0xe0] sm:$0xff]
        %v236 = vld [vmem:[%s211 + $0xf0] sm:$0xff]
        %v237 = vld [vmem:[%s211 + $0xf8] sm:$0xff]
        %v238 = vld [vmem:[%s211 + $0x100] sm:$0xff]
        %v239 = vld [vmem:[%s211 + $0x108] sm:$0xff]
        %v240 = vld [vmem:[%s211 + $0x118] sm:$0xff]
        %v241 = vld [vmem:[%s211 + $0x120] sm:$0xff]
        %v242 = vld [vmem:[%s211 + $0x128] sm:$0xff]
        %v243 = vld [vmem:[%s211 + $0x130] sm:$0xff]
        %v244 = vld [vmem:[%s211 + $0x140] sm:$0xff]
        %v245 = vld [vmem:[%s211 + $0x148] sm:$0xff]
        %v246 = vld [vmem:[%s211 + $0x150] sm:$0xff]
        %v247 = vld [vmem:[%s211 + $0x158] sm:$0xff]
        %v248 = vld [vmem:[%s211 + $0x168] sm:$0xff]
        %v249 = vld [vmem:[%s211 + $0x170] sm:$0xff]
        %v250 = vld [vmem:[%s211 + $0x178] sm:$0xff]
        %v251 = vld [vmem:[%s211 + $0x180] sm:$0xff]
        %v252 = vld [vmem:[%s211 + $0x190] sm:$0xff]
        %v253 = vld [vmem:[%s211 + $0x198] sm:$0xff]
        %v254 = vld [vmem:[%s211 + $0x1a0] sm:$0xff]
        %v255 = vld [vmem:[%s211 + $0x1a8] sm:$0xff]
        %v256 = vld [vmem:[%s211 + $0x1b8] sm:$0xff]
        %v257 = vld [vmem:[%s211 + $0x1c0] sm:$0xff]
        %v258 = vld [vmem:[%s211 + $0x1c8] sm:$0xff]
        %v259 = vld [vmem:[%s211 + $0x1d0] sm:$0xff]
        %v260 = vld [vmem:[%s211 + $0x1e0] sm:$0xff]
        %v261 = vld [vmem:[%s211 + $0x1e8] sm:$0xff]
        %v262 = vld [vmem:[%s211 + $0x1f0] sm:$0xff]
        %v263 = vld [vmem:[%s211 + $0x1f8] sm:$0xff]
        %v264 = vld [vmem:[%s211 + $0x208] sm:$0xff]
        %v265 = vld [vmem:[%s211 + $0x210] sm:$0xff]
        %v266 = vld [vmem:[%s211 + $0x218] sm:$0xff]
        %v267 = vld [vmem:[%s211 + $0x220] sm:$0xff]
        %v268 = vld [vmem:[%s211 + $0x230] sm:$0xff]
        %v269 = vld [vmem:[%s211 + $0x238] sm:$0xff]
        %v270 = vld [vmem:[%s211 + $0x240] sm:$0xff]
        %v271 = vld [vmem:[%s211 + $0x248] sm:$0xff]
        %v272 = vld [vmem:[%s211 + $0x258] sm:$0xff]
        %v273 = vld [vmem:[%s211 + $0x260] sm:$0xff]
        %v274 = vld [vmem:[%s211 + $0x268] sm:$0xff]
        %v275 = vld [vmem:[%s211 + $0x270] sm:$0xff]
        %v276 = vld [vmem:[%s211 + $0x280] sm:$0xff]
        %v277 = vld [vmem:[%s211 + $0x288] sm:$0xff]
        %v278 = vld [vmem:[%s211 + $0x290] sm:$0xff]
        %v279 = vld [vmem:[%s211 + $0x298] sm:$0xff]
        %v280 = vld [vmem:[%s211 + $0x2a8] sm:$0xff]
        %v281 = vld [vmem:[%s211 + $0x2b0] sm:$0xff]
        %v282 = vld [vmem:[%s211 + $0x2b8] sm:$0xff]
        %v283 = vld [vmem:[%s211 + $0x2c0] sm:$0xff]
        %v284 = vld [vmem:[%s211 + $0x2d0] sm:$0xff]
        %v285 = vld [vmem:[%s211 + $0x2d8] sm:$0xff]
        %v286 = vld [vmem:[%s211 + $0x2e0] sm:$0xff]
        %v287 = vld [vmem:[%s211 + $0x2e8] sm:$0xff]
        %v288 = vld [vmem:[%s211 + $0x2f8] sm:$0xff]
        %v289 = vld [vmem:[%s211 + $0x300] sm:$0xff]
        %v290 = vld [vmem:[%s211 + $0x308] sm:$0xff]
        %v291 = vld [vmem:[%s211 + $0x310] sm:$0xff]
        %v292 = vld [vmem:[%s211 + $0x320] sm:$0xff]
        %v293 = vld [vmem:[%s211 + $0x328] sm:$0xff]
        %v294 = vld [vmem:[%s211 + $0x330] sm:$0xff]
        %v295 = vld [vmem:[%s211 + $0x338] sm:$0xff]
        %v296 = vld [vmem:[%s211 + $0x348] sm:$0xff]
        %v297 = vld [vmem:[%s211 + $0x350] sm:$0xff]
        %v298 = vld [vmem:[%s211 + $0x358] sm:$0xff]
        %v299 = vld [vmem:[%s211 + $0x360] sm:$0xff]
        %v300 = vld [vmem:[%s211 + $0x370] sm:$0xff]
        %v301 = vld [vmem:[%s211 + $0x378] sm:$0xff]
        %v302 = vld [vmem:[%s211 + $0x380] sm:$0xff]
        %v303 = vld [vmem:[%s211 + $0x388] sm:$0xff]
        %v304 = vld [vmem:[%s211 + $0x398] sm:$0xff]
        %v305 = vld [vmem:[%s211 + $0x3a0] sm:$0xff]
        %v306 = vld [vmem:[%s211 + $0x3a8] sm:$0xff]
        %v307 = vld [vmem:[%s211 + $0x3b0] sm:$0xff]
        %v308 = vld [vmem:[%s211 + $0x3c0] sm:$0xff]
        %v309 = vld [vmem:[%s211 + $0x3c8] sm:$0xff]
        %v310 = vld [vmem:[%s211 + $0x3d0] sm:$0xff]
        %v311 = vld [vmem:[%s211 + $0x3d8] sm:$0xff]
        %v312 = vld [vmem:[%s211 + $0x3e8] sm:$0xff]
        %v313 = vld [vmem:[%s211 + $0x3f0] sm:$0xff]
        %v314 = vld [vmem:[%s211 + $0x3f8] sm:$0xff]
        %v315 = vld [vmem:[%s211 + $0x400] sm:$0xff]
        %v316 = vld [vmem:[%s211 + $0x410] sm:$0xff]
        %v317 = vld [vmem:[%s211 + $0x418] sm:$0xff]
        %v318 = vld [vmem:[%s211 + $0x420] sm:$0xff]
        %v319 = vld [vmem:[%s211 + $0x428] sm:$0xff]
        %v320 = vld [vmem:[%s211 + $0x438] sm:$0xff]
        %v321 = vld [vmem:[%s211 + $0x440] sm:$0xff]
        %v322 = vld [vmem:[%s211 + $0x448] sm:$0xff]
        %v323 = vld [vmem:[%s211 + $0x450] sm:$0xff]
        %v324 = vld [vmem:[%s211 + $0x460] sm:$0xff]
        %v325 = vld [vmem:[%s211 + $0x468] sm:$0xff]
        %v326 = vld [vmem:[%s211 + $0x470] sm:$0xff]
        %v327 = vld [vmem:[%s211 + $0x478] sm:$0xff]
        %v328 = vld [vmem:[%s211 + $0x488] sm:$0xff]
        %v329 = vld [vmem:[%s211 + $0x490] sm:$0xff]
        %v330 = vld [vmem:[%s211 + $0x498] sm:$0xff]
        %v331 = vld [vmem:[%s211 + $0x4a0] sm:$0xff]
        %v332 = vld [vmem:[%s211 + $0x4b0] sm:$0xff]
        %v333 = vld [vmem:[%s211 + $0x4b8] sm:$0xff]
        %v334 = vld [vmem:[%s211 + $0x4c0] sm:$0xff]
        %v335 = vld [vmem:[%s211 + $0x4c8] sm:$0xff]
        %v336 = vld [vmem:[%s211 + $0x4d8] sm:$0xff]
        %v337 = vld [vmem:[%s211 + $0x4e0] sm:$0xff]
        %v338 = vld [vmem:[%s211 + $0x4e8] sm:$0xff]
        %v339 = vld [vmem:[%s211 + $0x4f0] sm:$0xff]
        %v340 = vld [vmem:[%s211 + $0x1] sm:$0xff]
        %v341 = vld [vmem:[%s211 + $0x9] sm:$0xff]
        %v342 = vld [vmem:[%s211 + $0x11] sm:$0xff]
        %v343 = vld [vmem:[%s211 + $0x19] sm:$0xff]
        %v344 = vld [vmem:[%s211 + $0x29] sm:$0xff]
        %v345 = vld [vmem:[%s211 + $0x31] sm:$0xff]
        %v346 = vld [vmem:[%s211 + $0x39] sm:$0xff]
        %v347 = vld [vmem:[%s211 + $0x41] sm:$0xff]
        %v348 = vld [vmem:[%s211 + $0x51] sm:$0xff]
        %v349 = vld [vmem:[%s211 + $0x59] sm:$0xff]
        %v350 = vld [vmem:[%s211 + $0x61] sm:$0xff]
        %v351 = vld [vmem:[%s211 + $0x69] sm:$0xff]
        %v352 = vld [vmem:[%s211 + $0x79] sm:$0xff]
        %v353 = vld [vmem:[%s211 + $0x81] sm:$0xff]
        %v354 = vld [vmem:[%s211 + $0x89] sm:$0xff]
        %v355 = vld [vmem:[%s211 + $0x91] sm:$0xff]
        %v356 = vld [vmem:[%s211 + $0xa1] sm:$0xff]
        %v357 = vld [vmem:[%s211 + $0xa9] sm:$0xff]
        %v358 = vld [vmem:[%s211 + $0xb1] sm:$0xff]
        %v359 = vld [vmem:[%s211 + $0xb9] sm:$0xff]
        %v360 = vld [vmem:[%s211 + $0xc9] sm:$0xff]
        %v361 = vld [vmem:[%s211 + $0xd1] sm:$0xff]
        %v362 = vld [vmem:[%s211 + $0xd9] sm:$0xff]
        %v363 = vld [vmem:[%s211 + $0xe1] sm:$0xff]
        %v364 = vld [vmem:[%s211 + $0xf1] sm:$0xff]
        %v365 = vld [vmem:[%s211 + $0xf9] sm:$0xff]
        %v366 = vld [vmem:[%s211 + $0x101] sm:$0xff]
        %v367 = vld [vmem:[%s211 + $0x109] sm:$0xff]
        %v368 = vld [vmem:[%s211 + $0x119] sm:$0xff]
        %v369 = vld [vmem:[%s211 + $0x121] sm:$0xff]
        %v370 = vld [vmem:[%s211 + $0x129] sm:$0xff]
        %v371 = vld [vmem:[%s211 + $0x131] sm:$0xff]
        %v372 = vld [vmem:[%s211 + $0x141] sm:$0xff]
        %v373 = vld [vmem:[%s211 + $0x149] sm:$0xff]
        %v374 = vld [vmem:[%s211 + $0x151] sm:$0xff]
        %v375 = vld [vmem:[%s211 + $0x159] sm:$0xff]
        %v376 = vld [vmem:[%s211 + $0x169] sm:$0xff]
        %v377 = vld [vmem:[%s211 + $0x171] sm:$0xff]
        %v378 = vld [vmem:[%s211 + $0x179] sm:$0xff]
        %v379 = vld [vmem:[%s211 + $0x181] sm:$0xff]
        %v380 = vld [vmem:[%s211 + $0x191] sm:$0xff]
        %v381 = vld [vmem:[%s211 + $0x199] sm:$0xff]
        %v382 = vld [vmem:[%s211 + $0x1a1] sm:$0xff]
        %v383 = vld [vmem:[%s211 + $0x1a9] sm:$0xff]
        %v384 = vld [vmem:[%s211 + $0x1b9] sm:$0xff]
        %v385 = vld [vmem:[%s211 + $0x1c1] sm:$0xff]
        %v386 = vld [vmem:[%s211 + $0x1c9] sm:$0xff]
        %v387 = vld [vmem:[%s211 + $0x1d1] sm:$0xff]
        %v388 = vld [vmem:[%s211 + $0x1e1] sm:$0xff]
        %v389 = vld [vmem:[%s211 + $0x1e9] sm:$0xff]
        %v390 = vld [vmem:[%s211 + $0x1f1] sm:$0xff]
        %v391 = vld [vmem:[%s211 + $0x1f9] sm:$0xff]
        %v392 = vld [vmem:[%s211 + $0x209] sm:$0xff]
        %v393 = vld [vmem:[%s211 + $0x211] sm:$0xff]
        %v394 = vld [vmem:[%s211 + $0x219] sm:$0xff]
        %v395 = vld [vmem:[%s211 + $0x221] sm:$0xff]
        %v396 = vld [vmem:[%s211 + $0x231] sm:$0xff]
        %v397 = vld [vmem:[%s211 + $0x239] sm:$0xff]
        %v398 = vld [vmem:[%s211 + $0x241] sm:$0xff]
        %v399 = vld [vmem:[%s211 + $0x249] sm:$0xff]
        %v400 = vld [vmem:[%s211 + $0x259] sm:$0xff]
        %v401 = vld [vmem:[%s211 + $0x261] sm:$0xff]
        %v402 = vld [vmem:[%s211 + $0x269] sm:$0xff]
        %v403 = vld [vmem:[%s211 + $0x271] sm:$0xff]
        %v404 = vld [vmem:[%s211 + $0x281] sm:$0xff]
        %v405 = vld [vmem:[%s211 + $0x289] sm:$0xff]
        %v406 = vld [vmem:[%s211 + $0x291] sm:$0xff]
        %v407 = vld [vmem:[%s211 + $0x299] sm:$0xff]
        %v408 = vld [vmem:[%s211 + $0x2a9] sm:$0xff]
        %v409 = vld [vmem:[%s211 + $0x2b1] sm:$0xff]
        %v410 = vld [vmem:[%s211 + $0x2b9] sm:$0xff]
        %v411 = vld [vmem:[%s211 + $0x2c1] sm:$0xff]
        %v412 = vld [vmem:[%s211 + $0x2d1] sm:$0xff]
        %v413 = vld [vmem:[%s211 + $0x2d9] sm:$0xff]
        %v414 = vld [vmem:[%s211 + $0x2e1] sm:$0xff]
        %v415 = vld [vmem:[%s211 + $0x2e9] sm:$0xff]
        %v416 = vld [vmem:[%s211 + $0x2f9] sm:$0xff]
        %v417 = vld [vmem:[%s211 + $0x301] sm:$0xff]
        %v418 = vld [vmem:[%s211 + $0x309] sm:$0xff]
        %v419 = vld [vmem:[%s211 + $0x311] sm:$0xff]
        %v420 = vld [vmem:[%s211 + $0x321] sm:$0xff]
        %v421 = vld [vmem:[%s211 + $0x329] sm:$0xff]
        %v422 = vld [vmem:[%s211 + $0x331] sm:$0xff]
        %v423 = vld [vmem:[%s211 + $0x339] sm:$0xff]
        %v424 = vld [vmem:[%s211 + $0x349] sm:$0xff]
        %v425 = vld [vmem:[%s211 + $0x351] sm:$0xff]
        %v426 = vld [vmem:[%s211 + $0x359] sm:$0xff]
        %v427 = vld [vmem:[%s211 + $0x361] sm:$0xff]
        %v428 = vld [vmem:[%s211 + $0x371] sm:$0xff]
        %v429 = vld [vmem:[%s211 + $0x379] sm:$0xff]
        %v430 = vld [vmem:[%s211 + $0x381] sm:$0xff]
        %v431 = vld [vmem:[%s211 + $0x389] sm:$0xff]
        %v432 = vld [vmem:[%s211 + $0x399] sm:$0xff]
        %v433 = vld [vmem:[%s211 + $0x3a1] sm:$0xff]
        %v434 = vld [vmem:[%s211 + $0x3a9] sm:$0xff]
        %v435 = vld [vmem:[%s211 + $0x3b1] sm:$0xff]
        %v436 = vld [vmem:[%s211 + $0x3c1] sm:$0xff]
        %v437 = vld [vmem:[%s211 + $0x3c9] sm:$0xff]
        %v438 = vld [vmem:[%s211 + $0x3d1] sm:$0xff]
        %v439 = vld [vmem:[%s211 + $0x3d9] sm:$0xff]
        %v440 = vld [vmem:[%s211 + $0x3e9] sm:$0xff]
        %v441 = vld [vmem:[%s211 + $0x3f1] sm:$0xff]
        %v442 = vld [vmem:[%s211 + $0x3f9] sm:$0xff]
        %v443 = vld [vmem:[%s211 + $0x401] sm:$0xff]
        %v444 = vld [vmem:[%s211 + $0x411] sm:$0xff]
        %v445 = vld [vmem:[%s211 + $0x419] sm:$0xff]
        %v446 = vld [vmem:[%s211 + $0x421] sm:$0xff]
        %v447 = vld [vmem:[%s211 + $0x429] sm:$0xff]
        %v448 = vld [vmem:[%s211 + $0x439] sm:$0xff]
        %v449 = vld [vmem:[%s211 + $0x441] sm:$0xff]
        %v450 = vld [vmem:[%s211 + $0x449] sm:$0xff]
        %v451 = vld [vmem:[%s211 + $0x451] sm:$0xff]
        %v452 = vld [vmem:[%s211 + $0x461] sm:$0xff]
        %v453 = vld [vmem:[%s211 + $0x469] sm:$0xff]
        %v454 = vld [vmem:[%s211 + $0x471] sm:$0xff]
        %v455 = vld [vmem:[%s211 + $0x479] sm:$0xff]
        %v456 = vld [vmem:[%s211 + $0x489] sm:$0xff]
        %v457 = vld [vmem:[%s211 + $0x491] sm:$0xff]
        %v458 = vld [vmem:[%s211 + $0x499] sm:$0xff]
        %v459 = vld [vmem:[%s211 + $0x4a1] sm:$0xff]
        %v460 = vld [vmem:[%s211 + $0x4b1] sm:$0xff]
        %v461 = vld [vmem:[%s211 + $0x4b9] sm:$0xff]
        %v462 = vld [vmem:[%s211 + $0x4c1] sm:$0xff]
        %v463 = vld [vmem:[%s211 + $0x4c9] sm:$0xff]
        %v464 = vld [vmem:[%s211 + $0x4d9] sm:$0xff]
        %v465 = vld [vmem:[%s211 + $0x4e1] sm:$0xff]
        %v466 = vld [vmem:[%s211 + $0x4e9] sm:$0xff]
        %v467 = vld [vmem:[%s211 + $0x4f1] sm:$0xff]
        %v468 = vld [vmem:[%s211 + $0x2] sm:$0xff]
        %v469 = vld [vmem:[%s211 + $0xa] sm:$0xff]
        %v470 = vld [vmem:[%s211 + $0x12] sm:$0xff]
        %v471 = vld [vmem:[%s211 + $0x1a] sm:$0xff]
        %v472 = vld [vmem:[%s211 + $0x2a] sm:$0xff]
        %v473 = vld [vmem:[%s211 + $0x32] sm:$0xff]
        %v474 = vld [vmem:[%s211 + $0x3a] sm:$0xff]
        %v475 = vld [vmem:[%s211 + $0x42] sm:$0xff]
        %v476 = vld [vmem:[%s211 + $0x52] sm:$0xff]
        %v477 = vld [vmem:[%s211 + $0x5a] sm:$0xff]
        %v478 = vld [vmem:[%s211 + $0x62] sm:$0xff]
        %v479 = vld [vmem:[%s211 + $0x6a] sm:$0xff]
        %v480 = vld [vmem:[%s211 + $0x7a] sm:$0xff]
        %v481 = vld [vmem:[%s211 + $0x82] sm:$0xff]
        %v482 = vld [vmem:[%s211 + $0x8a] sm:$0xff]
        %v483 = vld [vmem:[%s211 + $0x92] sm:$0xff]
        %v484 = vld [vmem:[%s211 + $0xa2] sm:$0xff]
        %v485 = vld [vmem:[%s211 + $0xaa] sm:$0xff]
        %v486 = vld [vmem:[%s211 + $0xb2] sm:$0xff]
        %v487 = vld [vmem:[%s211 + $0xba] sm:$0xff]
        %v488 = vld [vmem:[%s211 + $0xca] sm:$0xff]
        %v489 = vld [vmem:[%s211 + $0xd2] sm:$0xff]
        %v490 = vld [vmem:[%s211 + $0xda] sm:$0xff]
        %v491 = vld [vmem:[%s211 + $0xe2] sm:$0xff]
        %v492 = vld [vmem:[%s211 + $0xf2] sm:$0xff]
        %v493 = vld [vmem:[%s211 + $0xfa] sm:$0xff]
        %v494 = vld [vmem:[%s211 + $0x102] sm:$0xff]
        %v495 = vld [vmem:[%s211 + $0x10a] sm:$0xff]
        %v496 = vld [vmem:[%s211 + $0x11a] sm:$0xff]
        %v497 = vld [vmem:[%s211 + $0x122] sm:$0xff]
        %v498 = vld [vmem:[%s211 + $0x12a] sm:$0xff]
        %v499 = vld [vmem:[%s211 + $0x132] sm:$0xff]
        %v500 = vld [vmem:[%s211 + $0x142] sm:$0xff]
        %v501 = vld [vmem:[%s211 + $0x14a] sm:$0xff]
        %v502 = vld [vmem:[%s211 + $0x152] sm:$0xff]
        %v503 = vld [vmem:[%s211 + $0x15a] sm:$0xff]
        %v504 = vld [vmem:[%s211 + $0x16a] sm:$0xff]
        %v505 = vld [vmem:[%s211 + $0x172] sm:$0xff]
        %v506 = vld [vmem:[%s211 + $0x17a] sm:$0xff]
        %v507 = vld [vmem:[%s211 + $0x182] sm:$0xff]
        %v508 = vld [vmem:[%s211 + $0x192] sm:$0xff]
        %v509 = vld [vmem:[%s211 + $0x19a] sm:$0xff]
        %v510 = vld [vmem:[%s211 + $0x1a2] sm:$0xff]
        %v511 = vld [vmem:[%s211 + $0x1aa] sm:$0xff]
        %v512 = vld [vmem:[%s211 + $0x1ba] sm:$0xff]
        %v513 = vld [vmem:[%s211 + $0x1c2] sm:$0xff]
        %v514 = vld [vmem:[%s211 + $0x1ca] sm:$0xff]
        %v515 = vld [vmem:[%s211 + $0x1d2] sm:$0xff]
        %v516 = vld [vmem:[%s211 + $0x1e2] sm:$0xff]
        %v517 = vld [vmem:[%s211 + $0x1ea] sm:$0xff]
        %v518 = vld [vmem:[%s211 + $0x1f2] sm:$0xff]
        %v519 = vld [vmem:[%s211 + $0x1fa] sm:$0xff]
        %v520 = vld [vmem:[%s211 + $0x20a] sm:$0xff]
        %v521 = vld [vmem:[%s211 + $0x212] sm:$0xff]
        %v522 = vld [vmem:[%s211 + $0x21a] sm:$0xff]
        %v523 = vld [vmem:[%s211 + $0x222] sm:$0xff]
        %v524 = vld [vmem:[%s211 + $0x232] sm:$0xff]
        %v525 = vld [vmem:[%s211 + $0x23a] sm:$0xff]
        %v526 = vld [vmem:[%s211 + $0x242] sm:$0xff]
        %v527 = vld [vmem:[%s211 + $0x24a] sm:$0xff]
        %v528 = vld [vmem:[%s211 + $0x25a] sm:$0xff]
        %v529 = vld [vmem:[%s211 + $0x262] sm:$0xff]
        %v530 = vld [vmem:[%s211 + $0x26a] sm:$0xff]
        %v531 = vld [vmem:[%s211 + $0x272] sm:$0xff]
        %v532 = vld [vmem:[%s211 + $0x282] sm:$0xff]
        %v533 = vld [vmem:[%s211 + $0x28a] sm:$0xff]
        %v534 = vld [vmem:[%s211 + $0x292] sm:$0xff]
        %v535 = vld [vmem:[%s211 + $0x29a] sm:$0xff]
        %v536 = vld [vmem:[%s211 + $0x2aa] sm:$0xff]
        %v537 = vld [vmem:[%s211 + $0x2b2] sm:$0xff]
        %v538 = vld [vmem:[%s211 + $0x2ba] sm:$0xff]
        %v539 = vld [vmem:[%s211 + $0x2c2] sm:$0xff]
        %v540 = vld [vmem:[%s211 + $0x2d2] sm:$0xff]
        %v541 = vld [vmem:[%s211 + $0x2da] sm:$0xff]
        %v542 = vld [vmem:[%s211 + $0x2e2] sm:$0xff]
        %v543 = vld [vmem:[%s211 + $0x2ea] sm:$0xff]
        %v544 = vld [vmem:[%s211 + $0x2fa] sm:$0xff]
        %v545 = vld [vmem:[%s211 + $0x302] sm:$0xff]
        %v546 = vld [vmem:[%s211 + $0x30a] sm:$0xff]
        %v547 = vld [vmem:[%s211 + $0x312] sm:$0xff]
        %v548 = vld [vmem:[%s211 + $0x322] sm:$0xff]
        %v549 = vld [vmem:[%s211 + $0x32a] sm:$0xff]
        %v550 = vld [vmem:[%s211 + $0x332] sm:$0xff]
        %v551 = vld [vmem:[%s211 + $0x33a] sm:$0xff]
        %v552 = vld [vmem:[%s211 + $0x34a] sm:$0xff]
        %v553 = vld [vmem:[%s211 + $0x352] sm:$0xff]
        %v554 = vld [vmem:[%s211 + $0x35a] sm:$0xff]
        %v555 = vld [vmem:[%s211 + $0x362] sm:$0xff]
        %v556 = vld [vmem:[%s211 + $0x372] sm:$0xff]
        %v557 = vld [vmem:[%s211 + $0x37a] sm:$0xff]
        %v558 = vld [vmem:[%s211 + $0x382] sm:$0xff]
        %v559 = vld [vmem:[%s211 + $0x38a] sm:$0xff]
        %v560 = vld [vmem:[%s211 + $0x39a] sm:$0xff]
        %v561 = vld [vmem:[%s211 + $0x3a2] sm:$0xff]
        %v562 = vld [vmem:[%s211 + $0x3aa] sm:$0xff]
        %v563 = vld [vmem:[%s211 + $0x3b2] sm:$0xff]
        %v564 = vld [vmem:[%s211 + $0x3c2] sm:$0xff]
        %v565 = vld [vmem:[%s211 + $0x3ca] sm:$0xff]
        %v566 = vld [vmem:[%s211 + $0x3d2] sm:$0xff]
        %v567 = vld [vmem:[%s211 + $0x3da] sm:$0xff]
        %v568 = vld [vmem:[%s211 + $0x3ea] sm:$0xff]
        %v569 = vld [vmem:[%s211 + $0x3f2] sm:$0xff]
        %v570 = vld [vmem:[%s211 + $0x3fa] sm:$0xff]
        %v571 = vld [vmem:[%s211 + $0x402] sm:$0xff]
        %v572 = vld [vmem:[%s211 + $0x412] sm:$0xff]
        %v573 = vld [vmem:[%s211 + $0x41a] sm:$0xff]
        %v574 = vld [vmem:[%s211 + $0x422] sm:$0xff]
        %v575 = vld [vmem:[%s211 + $0x42a] sm:$0xff]
        %v576 = vld [vmem:[%s211 + $0x43a] sm:$0xff]
        %v577 = vld [vmem:[%s211 + $0x442] sm:$0xff]
        %v578 = vld [vmem:[%s211 + $0x44a] sm:$0xff]
        %v579 = vld [vmem:[%s211 + $0x452] sm:$0xff]
        %v580 = vld [vmem:[%s211 + $0x462] sm:$0xff]
        %v581 = vld [vmem:[%s211 + $0x46a] sm:$0xff]
        %v582 = vld [vmem:[%s211 + $0x472] sm:$0xff]
        %v583 = vld [vmem:[%s211 + $0x47a] sm:$0xff]
        %v584 = vld [vmem:[%s211 + $0x48a] sm:$0xff]
        %v585 = vld [vmem:[%s211 + $0x492] sm:$0xff]
        %v586 = vld [vmem:[%s211 + $0x49a] sm:$0xff]
        %v587 = vld [vmem:[%s211 + $0x4a2] sm:$0xff]
        %v588 = vld [vmem:[%s211 + $0x4b2] sm:$0xff]
        %v589 = vld [vmem:[%s211 + $0x4ba] sm:$0xff]
        %v590 = vld [vmem:[%s211 + $0x4c2] sm:$0xff]
        %v591 = vld [vmem:[%s211 + $0x4ca] sm:$0xff]
        %v592 = vld [vmem:[%s211 + $0x4da] sm:$0xff]
        %v593 = vld [vmem:[%s211 + $0x4e2] sm:$0xff]
        %v594 = vld [vmem:[%s211 + $0x4ea] sm:$0xff]
        %v595 = vld [vmem:[%s211 + $0x4f2] sm:$0xff]
        %v596 = vld [vmem:[%s211 + $0x3] sm:$0xff]
        %v597 = vld [vmem:[%s211 + $0xb] sm:$0xff]
        %v598 = vld [vmem:[%s211 + $0x13] sm:$0xff]
        %v599 = vld [vmem:[%s211 + $0x1b] sm:$0xff]
        %v600 = vld [vmem:[%s211 + $0x2b] sm:$0xff]
        %v601 = vld [vmem:[%s211 + $0x33] sm:$0xff]
        %v602 = vld [vmem:[%s211 + $0x3b] sm:$0xff]
        %v603 = vld [vmem:[%s211 + $0x43] sm:$0xff]
        %v604 = vld [vmem:[%s211 + $0x53] sm:$0xff]
        %v605 = vld [vmem:[%s211 + $0x5b] sm:$0xff]
        %v606 = vld [vmem:[%s211 + $0x63] sm:$0xff]
        %v607 = vld [vmem:[%s211 + $0x6b] sm:$0xff]
        %v608 = vld [vmem:[%s211 + $0x7b] sm:$0xff]
        %v609 = vld [vmem:[%s211 + $0x83] sm:$0xff]
        %v610 = vld [vmem:[%s211 + $0x8b] sm:$0xff]
        %v611 = vld [vmem:[%s211 + $0x93] sm:$0xff]
        %v612 = vld [vmem:[%s211 + $0xa3] sm:$0xff]
        %v613 = vld [vmem:[%s211 + $0xab] sm:$0xff]
        %v614 = vld [vmem:[%s211 + $0xb3] sm:$0xff]
        %v615 = vld [vmem:[%s211 + $0xbb] sm:$0xff]
        %v616 = vld [vmem:[%s211 + $0xcb] sm:$0xff]
        %v617 = vld [vmem:[%s211 + $0xd3] sm:$0xff]
        %v618 = vld [vmem:[%s211 + $0xdb] sm:$0xff]
        %v619 = vld [vmem:[%s211 + $0xe3] sm:$0xff]
        %v620 = vld [vmem:[%s211 + $0xf3] sm:$0xff]
        %v621 = vld [vmem:[%s211 + $0xfb] sm:$0xff]
        %v622 = vld [vmem:[%s211 + $0x103] sm:$0xff]
        %v623 = vld [vmem:[%s211 + $0x10b] sm:$0xff]
        %v624 = vld [vmem:[%s211 + $0x11b] sm:$0xff]
        %v625 = vld [vmem:[%s211 + $0x123] sm:$0xff]
        %v626 = vld [vmem:[%s211 + $0x12b] sm:$0xff]
        %v627 = vld [vmem:[%s211 + $0x133] sm:$0xff]
        %v628 = vld [vmem:[%s211 + $0x143] sm:$0xff]
        %v629 = vld [vmem:[%s211 + $0x14b] sm:$0xff]
        %v630 = vld [vmem:[%s211 + $0x153] sm:$0xff]
        %v631 = vld [vmem:[%s211 + $0x15b] sm:$0xff]
        %v632 = vld [vmem:[%s211 + $0x16b] sm:$0xff]
        %v633 = vld [vmem:[%s211 + $0x173] sm:$0xff]
        %v634 = vld [vmem:[%s211 + $0x17b] sm:$0xff]
        %v635 = vld [vmem:[%s211 + $0x183] sm:$0xff]
        %v636 = vld [vmem:[%s211 + $0x193] sm:$0xff]
        %v637 = vld [vmem:[%s211 + $0x19b] sm:$0xff]
        %v638 = vld [vmem:[%s211 + $0x1a3] sm:$0xff]
        %v639 = vld [vmem:[%s211 + $0x1ab] sm:$0xff]
        %v640 = vld [vmem:[%s211 + $0x1bb] sm:$0xff]
        %v641 = vld [vmem:[%s211 + $0x1c3] sm:$0xff]
        %v642 = vld [vmem:[%s211 + $0x1cb] sm:$0xff]
        %v643 = vld [vmem:[%s211 + $0x1d3] sm:$0xff]
        %v644 = vld [vmem:[%s211 + $0x1e3] sm:$0xff]
        %v645 = vld [vmem:[%s211 + $0x1eb] sm:$0xff]
        %v646 = vld [vmem:[%s211 + $0x1f3] sm:$0xff]
        %v647 = vld [vmem:[%s211 + $0x1fb] sm:$0xff]
        %v648 = vld [vmem:[%s211 + $0x20b] sm:$0xff]
        %v649 = vld [vmem:[%s211 + $0x213] sm:$0xff]
        %v650 = vld [vmem:[%s211 + $0x21b] sm:$0xff]
        %v651 = vld [vmem:[%s211 + $0x223] sm:$0xff]
        %v652 = vld [vmem:[%s211 + $0x233] sm:$0xff]
        %v653 = vld [vmem:[%s211 + $0x23b] sm:$0xff]
        %v654 = vld [vmem:[%s211 + $0x243] sm:$0xff]
        %v655 = vld [vmem:[%s211 + $0x24b] sm:$0xff]
        %v656 = vld [vmem:[%s211 + $0x25b] sm:$0xff]
        %v657 = vld [vmem:[%s211 + $0x263] sm:$0xff]
        %v658 = vld [vmem:[%s211 + $0x26b] sm:$0xff]
        %v659 = vld [vmem:[%s211 + $0x273] sm:$0xff]
        %v660 = vld [vmem:[%s211 + $0x283] sm:$0xff]
        %v661 = vld [vmem:[%s211 + $0x28b] sm:$0xff]
        %v662 = vld [vmem:[%s211 + $0x293] sm:$0xff]
        %v663 = vld [vmem:[%s211 + $0x29b] sm:$0xff]
        %v664 = vld [vmem:[%s211 + $0x2ab] sm:$0xff]
        %v665 = vld [vmem:[%s211 + $0x2b3] sm:$0xff]
        %v666 = vld [vmem:[%s211 + $0x2bb] sm:$0xff]
        %v667 = vld [vmem:[%s211 + $0x2c3] sm:$0xff]
        %v668 = vld [vmem:[%s211 + $0x2d3] sm:$0xff]
        %v669 = vld [vmem:[%s211 + $0x2db] sm:$0xff]
        %v670 = vld [vmem:[%s211 + $0x2e3] sm:$0xff]
        %v671 = vld [vmem:[%s211 + $0x2eb] sm:$0xff]
        %v672 = vld [vmem:[%s211 + $0x2fb] sm:$0xff]
        %v673 = vld [vmem:[%s211 + $0x303] sm:$0xff]
        %v674 = vld [vmem:[%s211 + $0x30b] sm:$0xff]
        %v675 = vld [vmem:[%s211 + $0x313] sm:$0xff]
        %v676 = vld [vmem:[%s211 + $0x323] sm:$0xff]
        %v677 = vld [vmem:[%s211 + $0x32b] sm:$0xff]
        %v678 = vld [vmem:[%s211 + $0x333] sm:$0xff]
        %v679 = vld [vmem:[%s211 + $0x33b] sm:$0xff]
        %v680 = vld [vmem:[%s211 + $0x34b] sm:$0xff]
        %v681 = vld [vmem:[%s211 + $0x353] sm:$0xff]
        %v682 = vld [vmem:[%s211 + $0x35b] sm:$0xff]
        %v683 = vld [vmem:[%s211 + $0x363] sm:$0xff]
        %v684 = vld [vmem:[%s211 + $0x373] sm:$0xff]
        %v685 = vld [vmem:[%s211 + $0x37b] sm:$0xff]
        %v686 = vld [vmem:[%s211 + $0x383] sm:$0xff]
        %v687 = vld [vmem:[%s211 + $0x38b] sm:$0xff]
        %v688 = vld [vmem:[%s211 + $0x39b] sm:$0xff]
        %v689 = vld [vmem:[%s211 + $0x3a3] sm:$0xff]
        %v690 = vld [vmem:[%s211 + $0x3ab] sm:$0xff]
        %v691 = vld [vmem:[%s211 + $0x3b3] sm:$0xff]
        %v692 = vld [vmem:[%s211 + $0x3c3] sm:$0xff]
        %v693 = vld [vmem:[%s211 + $0x3cb] sm:$0xff]
        %v694 = vld [vmem:[%s211 + $0x3d3] sm:$0xff]
        %v695 = vld [vmem:[%s211 + $0x3db] sm:$0xff]
        %v696 = vld [vmem:[%s211 + $0x3eb] sm:$0xff]
        %v697 = vld [vmem:[%s211 + $0x3f3] sm:$0xff]
        %v698 = vld [vmem:[%s211 + $0x3fb] sm:$0xff]
        %v699 = vld [vmem:[%s211 + $0x403] sm:$0xff]
        %v700 = vld [vmem:[%s211 + $0x413] sm:$0xff]
        %v701 = vld [vmem:[%s211 + $0x41b] sm:$0xff]
        %v702 = vld [vmem:[%s211 + $0x423] sm:$0xff]
        %v703 = vld [vmem:[%s211 + $0x42b] sm:$0xff]
        %v704 = vld [vmem:[%s211 + $0x43b] sm:$0xff]
        %v705 = vld [vmem:[%s211 + $0x443] sm:$0xff]
        %v706 = vld [vmem:[%s211 + $0x44b] sm:$0xff]
        %v707 = vld [vmem:[%s211 + $0x453] sm:$0xff]
        %v708 = vld [vmem:[%s211 + $0x463] sm:$0xff]
        %v709 = vld [vmem:[%s211 + $0x46b] sm:$0xff]
        %v710 = vld [vmem:[%s211 + $0x473] sm:$0xff]
        %v711 = vld [vmem:[%s211 + $0x47b] sm:$0xff]
        %v712 = vld [vmem:[%s211 + $0x48b] sm:$0xff]
        %v713 = vld [vmem:[%s211 + $0x493] sm:$0xff]
        %v714 = vld [vmem:[%s211 + $0x49b] sm:$0xff]
        %v715 = vld [vmem:[%s211 + $0x4a3] sm:$0xff]
        %v716 = vld [vmem:[%s211 + $0x4b3] sm:$0xff]
        %v717 = vld [vmem:[%s211 + $0x4bb] sm:$0xff]
        %v718 = vld [vmem:[%s211 + $0x4c3] sm:$0xff]
        %v719 = vld [vmem:[%s211 + $0x4cb] sm:$0xff]
        %v720 = vld [vmem:[%s211 + $0x4db] sm:$0xff]
        %v721 = vld [vmem:[%s211 + $0x4e3] sm:$0xff]
        %v722 = vld [vmem:[%s211 + $0x4eb] sm:$0xff]
        %v723 = vld [vmem:[%s211 + $0x4f3] sm:$0xff]
        %s724 = scalar_lea.vmem %s211, 40
        %v725 = vld [vmem:[%s724] sm:$0xff]
        %v726 = vld [vmem:[%s724 + $0x8] sm:$0xff]
        %v727 = vld [vmem:[%s724 + $0x10] sm:$0xff]
        %v728 = vld [vmem:[%s724 + $0x18] sm:$0xff]
        %v729 = vld [vmem:[%s724 + $0x28] sm:$0xff]
        %v730 = vld [vmem:[%s724 + $0x30] sm:$0xff]
        %v731 = vld [vmem:[%s724 + $0x38] sm:$0xff]
        %v732 = vld [vmem:[%s724 + $0x40] sm:$0xff]
        %v733 = vld [vmem:[%s724 + $0x50] sm:$0xff]
        %v734 = vld [vmem:[%s724 + $0x58] sm:$0xff]
        %v735 = vld [vmem:[%s724 + $0x60] sm:$0xff]
        %v736 = vld [vmem:[%s724 + $0x68] sm:$0xff]
        %v737 = vld [vmem:[%s724 + $0x78] sm:$0xff]
        %v738 = vld [vmem:[%s724 + $0x80] sm:$0xff]
        %v739 = vld [vmem:[%s724 + $0x88] sm:$0xff]
        %v740 = vld [vmem:[%s724 + $0x90] sm:$0xff]
        %v741 = vld [vmem:[%s724 + $0xa0] sm:$0xff]
        %v742 = vld [vmem:[%s724 + $0xa8] sm:$0xff]
        %v743 = vld [vmem:[%s724 + $0xb0] sm:$0xff]
        %v744 = vld [vmem:[%s724 + $0xb8] sm:$0xff]
        %v745 = vld [vmem:[%s724 + $0xc8] sm:$0xff]
        %v746 = vld [vmem:[%s724 + $0xd0] sm:$0xff]
        %v747 = vld [vmem:[%s724 + $0xd8] sm:$0xff]
        %v748 = vld [vmem:[%s724 + $0xe0] sm:$0xff]
        %v749 = vld [vmem:[%s724 + $0xf0] sm:$0xff]
        %v750 = vld [vmem:[%s724 + $0xf8] sm:$0xff]
        %v751 = vld [vmem:[%s724 + $0x100] sm:$0xff]
        %v752 = vld [vmem:[%s724 + $0x108] sm:$0xff]
        %v753 = vld [vmem:[%s724 + $0x118] sm:$0xff]
        %v754 = vld [vmem:[%s724 + $0x120] sm:$0xff]
        %v755 = vld [vmem:[%s724 + $0x128] sm:$0xff]
        %v756 = vld [vmem:[%s724 + $0x130] sm:$0xff]
        %v757 = vld [vmem:[%s724 + $0x140] sm:$0xff]
        %v758 = vld [vmem:[%s724 + $0x148] sm:$0xff]
        %v759 = vld [vmem:[%s724 + $0x150] sm:$0xff]
        %v760 = vld [vmem:[%s724 + $0x158] sm:$0xff]
        %v761 = vld [vmem:[%s724 + $0x168] sm:$0xff]
        %v762 = vld [vmem:[%s724 + $0x170] sm:$0xff]
        %v763 = vld [vmem:[%s724 + $0x178] sm:$0xff]
        %v764 = vld [vmem:[%s724 + $0x180] sm:$0xff]
        %v765 = vld [vmem:[%s724 + $0x190] sm:$0xff]
        %v766 = vld [vmem:[%s724 + $0x198] sm:$0xff]
        %v767 = vld [vmem:[%s724 + $0x1a0] sm:$0xff]
        %v768 = vld [vmem:[%s724 + $0x1a8] sm:$0xff]
        %v769 = vld [vmem:[%s724 + $0x1b8] sm:$0xff]
        %v770 = vld [vmem:[%s724 + $0x1c0] sm:$0xff]
        %v771 = vld [vmem:[%s724 + $0x1c8] sm:$0xff]
        %v772 = vld [vmem:[%s724 + $0x1d0] sm:$0xff]
        %v773 = vld [vmem:[%s724 + $0x1e0] sm:$0xff]
        %v774 = vld [vmem:[%s724 + $0x1e8] sm:$0xff]
        %v775 = vld [vmem:[%s724 + $0x1f0] sm:$0xff]
        %v776 = vld [vmem:[%s724 + $0x1f8] sm:$0xff]
        %v777 = vld [vmem:[%s724 + $0x208] sm:$0xff]
        %v778 = vld [vmem:[%s724 + $0x210] sm:$0xff]
        %v779 = vld [vmem:[%s724 + $0x218] sm:$0xff]
        %v780 = vld [vmem:[%s724 + $0x220] sm:$0xff]
        %v781 = vld [vmem:[%s724 + $0x230] sm:$0xff]
        %v782 = vld [vmem:[%s724 + $0x238] sm:$0xff]
        %v783 = vld [vmem:[%s724 + $0x240] sm:$0xff]
        %v784 = vld [vmem:[%s724 + $0x248] sm:$0xff]
        %v785 = vld [vmem:[%s724 + $0x258] sm:$0xff]
        %v786 = vld [vmem:[%s724 + $0x260] sm:$0xff]
        %v787 = vld [vmem:[%s724 + $0x268] sm:$0xff]
        %v788 = vld [vmem:[%s724 + $0x270] sm:$0xff]
        %v789 = vld [vmem:[%s724 + $0x280] sm:$0xff]
        %v790 = vld [vmem:[%s724 + $0x288] sm:$0xff]
        %v791 = vld [vmem:[%s724 + $0x290] sm:$0xff]
        %v792 = vld [vmem:[%s724 + $0x298] sm:$0xff]
        %v793 = vld [vmem:[%s724 + $0x2a8] sm:$0xff]
        %v794 = vld [vmem:[%s724 + $0x2b0] sm:$0xff]
        %v795 = vld [vmem:[%s724 + $0x2b8] sm:$0xff]
        %v796 = vld [vmem:[%s724 + $0x2c0] sm:$0xff]
        %v797 = vld [vmem:[%s724 + $0x2d0] sm:$0xff]
        %v798 = vld [vmem:[%s724 + $0x2d8] sm:$0xff]
        %v799 = vld [vmem:[%s724 + $0x2e0] sm:$0xff]
        %v800 = vld [vmem:[%s724 + $0x2e8] sm:$0xff]
        %v801 = vld [vmem:[%s724 + $0x2f8] sm:$0xff]
        %v802 = vld [vmem:[%s724 + $0x300] sm:$0xff]
        %v803 = vld [vmem:[%s724 + $0x308] sm:$0xff]
        %v804 = vld [vmem:[%s724 + $0x310] sm:$0xff]
        %v805 = vld [vmem:[%s724 + $0x320] sm:$0xff]
        %v806 = vld [vmem:[%s724 + $0x328] sm:$0xff]
        %v807 = vld [vmem:[%s724 + $0x330] sm:$0xff]
        %v808 = vld [vmem:[%s724 + $0x338] sm:$0xff]
        %v809 = vld [vmem:[%s724 + $0x348] sm:$0xff]
        %v810 = vld [vmem:[%s724 + $0x350] sm:$0xff]
        %v811 = vld [vmem:[%s724 + $0x358] sm:$0xff]
        %v812 = vld [vmem:[%s724 + $0x360] sm:$0xff]
        %v813 = vld [vmem:[%s724 + $0x370] sm:$0xff]
        %v814 = vld [vmem:[%s724 + $0x378] sm:$0xff]
        %v815 = vld [vmem:[%s724 + $0x380] sm:$0xff]
        %v816 = vld [vmem:[%s724 + $0x388] sm:$0xff]
        %v817 = vld [vmem:[%s724 + $0x398] sm:$0xff]
        %v818 = vld [vmem:[%s724 + $0x3a0] sm:$0xff]
        %v819 = vld [vmem:[%s724 + $0x3a8] sm:$0xff]
        %v820 = vld [vmem:[%s724 + $0x3b0] sm:$0xff]
        %v821 = vld [vmem:[%s724 + $0x3c0] sm:$0xff]
        %v822 = vld [vmem:[%s724 + $0x3c8] sm:$0xff]
        %v823 = vld [vmem:[%s724 + $0x3d0] sm:$0xff]
        %v824 = vld [vmem:[%s724 + $0x3d8] sm:$0xff]
        %v825 = vld [vmem:[%s724 + $0x3e8] sm:$0xff]
        %v826 = vld [vmem:[%s724 + $0x3f0] sm:$0xff]
        %v827 = vld [vmem:[%s724 + $0x3f8] sm:$0xff]
        %v828 = vld [vmem:[%s724 + $0x400] sm:$0xff]
        %v829 = vld [vmem:[%s724 + $0x410] sm:$0xff]
        %v830 = vld [vmem:[%s724 + $0x418] sm:$0xff]
        %v831 = vld [vmem:[%s724 + $0x420] sm:$0xff]
        %v832 = vld [vmem:[%s724 + $0x428] sm:$0xff]
        %v833 = vld [vmem:[%s724 + $0x438] sm:$0xff]
        %v834 = vld [vmem:[%s724 + $0x440] sm:$0xff]
        %v835 = vld [vmem:[%s724 + $0x448] sm:$0xff]
        %v836 = vld [vmem:[%s724 + $0x450] sm:$0xff]
        %v837 = vld [vmem:[%s724 + $0x460] sm:$0xff]
        %v838 = vld [vmem:[%s724 + $0x468] sm:$0xff]
        %v839 = vld [vmem:[%s724 + $0x470] sm:$0xff]
        %v840 = vld [vmem:[%s724 + $0x478] sm:$0xff]
        %v841 = vld [vmem:[%s724 + $0x488] sm:$0xff]
        %v842 = vld [vmem:[%s724 + $0x490] sm:$0xff]
        %v843 = vld [vmem:[%s724 + $0x498] sm:$0xff]
        %v844 = vld [vmem:[%s724 + $0x4a0] sm:$0xff]
        %v845 = vld [vmem:[%s724 + $0x4b0] sm:$0xff]
        %v846 = vld [vmem:[%s724 + $0x4b8] sm:$0xff]
        %v847 = vld [vmem:[%s724 + $0x4c0] sm:$0xff]
        %v848 = vld [vmem:[%s724 + $0x4c8] sm:$0xff]
        %v849 = vld [vmem:[%s724 + $0x4d8] sm:$0xff]
        %v850 = vld [vmem:[%s724 + $0x4e0] sm:$0xff]
        %v851 = vld [vmem:[%s724 + $0x4e8] sm:$0xff]
        %v852 = vld [vmem:[%s724 + $0x4f0] sm:$0xff]
        %v853 = vld [vmem:[%s724 + $0x1] sm:$0xff]
        %v854 = vld [vmem:[%s724 + $0x9] sm:$0xff]
        %v855 = vld [vmem:[%s724 + $0x11] sm:$0xff]
        %v856 = vld [vmem:[%s724 + $0x19] sm:$0xff]
        %v857 = vld [vmem:[%s724 + $0x29] sm:$0xff]
        %v858 = vld [vmem:[%s724 + $0x31] sm:$0xff]
        %v859 = vld [vmem:[%s724 + $0x39] sm:$0xff]
        %v860 = vld [vmem:[%s724 + $0x41] sm:$0xff]
        %v861 = vld [vmem:[%s724 + $0x51] sm:$0xff]
        %v862 = vld [vmem:[%s724 + $0x59] sm:$0xff]
        %v863 = vld [vmem:[%s724 + $0x61] sm:$0xff]
        %v864 = vld [vmem:[%s724 + $0x69] sm:$0xff]
        %v865 = vld [vmem:[%s724 + $0x79] sm:$0xff]
        %v866 = vld [vmem:[%s724 + $0x81] sm:$0xff]
        %v867 = vld [vmem:[%s724 + $0x89] sm:$0xff]
        %v868 = vld [vmem:[%s724 + $0x91] sm:$0xff]
        %v869 = vld [vmem:[%s724 + $0xa1] sm:$0xff]
        %v870 = vld [vmem:[%s724 + $0xa9] sm:$0xff]
        %v871 = vld [vmem:[%s724 + $0xb1] sm:$0xff]
        %v872 = vld [vmem:[%s724 + $0xb9] sm:$0xff]
        %v873 = vld [vmem:[%s724 + $0xc9] sm:$0xff]
        %v874 = vld [vmem:[%s724 + $0xd1] sm:$0xff]
        %v875 = vld [vmem:[%s724 + $0xd9] sm:$0xff]
        %v876 = vld [vmem:[%s724 + $0xe1] sm:$0xff]
        %v877 = vld [vmem:[%s724 + $0xf1] sm:$0xff]
        %v878 = vld [vmem:[%s724 + $0xf9] sm:$0xff]
        %v879 = vld [vmem:[%s724 + $0x101] sm:$0xff]
        %v880 = vld [vmem:[%s724 + $0x109] sm:$0xff]
        %v881 = vld [vmem:[%s724 + $0x119] sm:$0xff]
        %v882 = vld [vmem:[%s724 + $0x121] sm:$0xff]
        %v883 = vld [vmem:[%s724 + $0x129] sm:$0xff]
        %v884 = vld [vmem:[%s724 + $0x131] sm:$0xff]
        %v885 = vld [vmem:[%s724 + $0x141] sm:$0xff]
        %v886 = vld [vmem:[%s724 + $0x149] sm:$0xff]
        %v887 = vld [vmem:[%s724 + $0x151] sm:$0xff]
        %v888 = vld [vmem:[%s724 + $0x159] sm:$0xff]
        %v889 = vld [vmem:[%s724 + $0x169] sm:$0xff]
        %v890 = vld [vmem:[%s724 + $0x171] sm:$0xff]
        %v891 = vld [vmem:[%s724 + $0x179] sm:$0xff]
        %v892 = vld [vmem:[%s724 + $0x181] sm:$0xff]
        %v893 = vld [vmem:[%s724 + $0x191] sm:$0xff]
        %v894 = vld [vmem:[%s724 + $0x199] sm:$0xff]
        %v895 = vld [vmem:[%s724 + $0x1a1] sm:$0xff]
        %v896 = vld [vmem:[%s724 + $0x1a9] sm:$0xff]
        %v897 = vld [vmem:[%s724 + $0x1b9] sm:$0xff]
        %v898 = vld [vmem:[%s724 + $0x1c1] sm:$0xff]
        %v899 = vld [vmem:[%s724 + $0x1c9] sm:$0xff]
        %v900 = vld [vmem:[%s724 + $0x1d1] sm:$0xff]
        %v901 = vld [vmem:[%s724 + $0x1e1] sm:$0xff]
        %v902 = vld [vmem:[%s724 + $0x1e9] sm:$0xff]
        %v903 = vld [vmem:[%s724 + $0x1f1] sm:$0xff]
        %v904 = vld [vmem:[%s724 + $0x1f9] sm:$0xff]
        %v905 = vld [vmem:[%s724 + $0x209] sm:$0xff]
        %v906 = vld [vmem:[%s724 + $0x211] sm:$0xff]
        %v907 = vld [vmem:[%s724 + $0x219] sm:$0xff]
        %v908 = vld [vmem:[%s724 + $0x221] sm:$0xff]
        %v909 = vld [vmem:[%s724 + $0x231] sm:$0xff]
        %v910 = vld [vmem:[%s724 + $0x239] sm:$0xff]
        %v911 = vld [vmem:[%s724 + $0x241] sm:$0xff]
        %v912 = vld [vmem:[%s724 + $0x249] sm:$0xff]
        %v913 = vld [vmem:[%s724 + $0x259] sm:$0xff]
        %v914 = vld [vmem:[%s724 + $0x261] sm:$0xff]
        %v915 = vld [vmem:[%s724 + $0x269] sm:$0xff]
        %v916 = vld [vmem:[%s724 + $0x271] sm:$0xff]
        %v917 = vld [vmem:[%s724 + $0x281] sm:$0xff]
        %v918 = vld [vmem:[%s724 + $0x289] sm:$0xff]
        %v919 = vld [vmem:[%s724 + $0x291] sm:$0xff]
        %v920 = vld [vmem:[%s724 + $0x299] sm:$0xff]
        %v921 = vld [vmem:[%s724 + $0x2a9] sm:$0xff]
        %v922 = vld [vmem:[%s724 + $0x2b1] sm:$0xff]
        %v923 = vld [vmem:[%s724 + $0x2b9] sm:$0xff]
        %v924 = vld [vmem:[%s724 + $0x2c1] sm:$0xff]
        %v925 = vld [vmem:[%s724 + $0x2d1] sm:$0xff]
        %v926 = vld [vmem:[%s724 + $0x2d9] sm:$0xff]
        %v927 = vld [vmem:[%s724 + $0x2e1] sm:$0xff]
        %v928 = vld [vmem:[%s724 + $0x2e9] sm:$0xff]
        %v929 = vld [vmem:[%s724 + $0x2f9] sm:$0xff]
        %v930 = vld [vmem:[%s724 + $0x301] sm:$0xff]
        %v931 = vld [vmem:[%s724 + $0x309] sm:$0xff]
        %v932 = vld [vmem:[%s724 + $0x311] sm:$0xff]
        %v933 = vld [vmem:[%s724 + $0x321] sm:$0xff]
        %v934 = vld [vmem:[%s724 + $0x329] sm:$0xff]
        %v935 = vld [vmem:[%s724 + $0x331] sm:$0xff]
        %v936 = vld [vmem:[%s724 + $0x339] sm:$0xff]
        %v937 = vld [vmem:[%s724 + $0x349] sm:$0xff]
        %v938 = vld [vmem:[%s724 + $0x351] sm:$0xff]
        %v939 = vld [vmem:[%s724 + $0x359] sm:$0xff]
        %v940 = vld [vmem:[%s724 + $0x361] sm:$0xff]
        %v941 = vld [vmem:[%s724 + $0x371] sm:$0xff]
        %v942 = vld [vmem:[%s724 + $0x379] sm:$0xff]
        %v943 = vld [vmem:[%s724 + $0x381] sm:$0xff]
        %v944 = vld [vmem:[%s724 + $0x389] sm:$0xff]
        %v945 = vld [vmem:[%s724 + $0x399] sm:$0xff]
        %v946 = vld [vmem:[%s724 + $0x3a1] sm:$0xff]
        %v947 = vld [vmem:[%s724 + $0x3a9] sm:$0xff]
        %v948 = vld [vmem:[%s724 + $0x3b1] sm:$0xff]
        %v949 = vld [vmem:[%s724 + $0x3c1] sm:$0xff]
        %v950 = vld [vmem:[%s724 + $0x3c9] sm:$0xff]
        %v951 = vld [vmem:[%s724 + $0x3d1] sm:$0xff]
        %v952 = vld [vmem:[%s724 + $0x3d9] sm:$0xff]
        %v953 = vld [vmem:[%s724 + $0x3e9] sm:$0xff]
        %v954 = vld [vmem:[%s724 + $0x3f1] sm:$0xff]
        %v955 = vld [vmem:[%s724 + $0x3f9] sm:$0xff]
        %v956 = vld [vmem:[%s724 + $0x401] sm:$0xff]
        %v957 = vld [vmem:[%s724 + $0x411] sm:$0xff]
        %v958 = vld [vmem:[%s724 + $0x419] sm:$0xff]
        %v959 = vld [vmem:[%s724 + $0x421] sm:$0xff]
        %v960 = vld [vmem:[%s724 + $0x429] sm:$0xff]
        %v961 = vld [vmem:[%s724 + $0x439] sm:$0xff]
        %v962 = vld [vmem:[%s724 + $0x441] sm:$0xff]
        %v963 = vld [vmem:[%s724 + $0x449] sm:$0xff]
        %v964 = vld [vmem:[%s724 + $0x451] sm:$0xff]
        %v965 = vld [vmem:[%s724 + $0x461] sm:$0xff]
        %v966 = vld [vmem:[%s724 + $0x469] sm:$0xff]
        %v967 = vld [vmem:[%s724 + $0x471] sm:$0xff]
        %v968 = vld [vmem:[%s724 + $0x479] sm:$0xff]
        %v969 = vld [vmem:[%s724 + $0x489] sm:$0xff]
        %v970 = vld [vmem:[%s724 + $0x491] sm:$0xff]
        %v971 = vld [vmem:[%s724 + $0x499] sm:$0xff]
        %v972 = vld [vmem:[%s724 + $0x4a1] sm:$0xff]
        %v973 = vld [vmem:[%s724 + $0x4b1] sm:$0xff]
        %v974 = vld [vmem:[%s724 + $0x4b9] sm:$0xff]
        %v975 = vld [vmem:[%s724 + $0x4c1] sm:$0xff]
        %v976 = vld [vmem:[%s724 + $0x4c9] sm:$0xff]
        %v977 = vld [vmem:[%s724 + $0x4d9] sm:$0xff]
        %v978 = vld [vmem:[%s724 + $0x4e1] sm:$0xff]
        %v979 = vld [vmem:[%s724 + $0x4e9] sm:$0xff]
        %v980 = vld [vmem:[%s724 + $0x4f1] sm:$0xff]
        %v981 = vld [vmem:[%s724 + $0x2] sm:$0xff]
        %v982 = vld [vmem:[%s724 + $0xa] sm:$0xff]
        %v983 = vld [vmem:[%s724 + $0x12] sm:$0xff]
        %v984 = vld [vmem:[%s724 + $0x1a] sm:$0xff]
        %v985 = vld [vmem:[%s724 + $0x2a] sm:$0xff]
        %v986 = vld [vmem:[%s724 + $0x32] sm:$0xff]
        %v987 = vld [vmem:[%s724 + $0x3a] sm:$0xff]
        %v988 = vld [vmem:[%s724 + $0x42] sm:$0xff]
        %v989 = vld [vmem:[%s724 + $0x52] sm:$0xff]
        %v990 = vld [vmem:[%s724 + $0x5a] sm:$0xff]
        %v991 = vld [vmem:[%s724 + $0x62] sm:$0xff]
        %v992 = vld [vmem:[%s724 + $0x6a] sm:$0xff]
        %v993 = vld [vmem:[%s724 + $0x7a] sm:$0xff]
        %v994 = vld [vmem:[%s724 + $0x82] sm:$0xff]
        %v995 = vld [vmem:[%s724 + $0x8a] sm:$0xff]
        %v996 = vld [vmem:[%s724 + $0x92] sm:$0xff]
        %v997 = vld [vmem:[%s724 + $0xa2] sm:$0xff]
        %v998 = vld [vmem:[%s724 + $0xaa] sm:$0xff]
        %v999 = vld [vmem:[%s724 + $0xb2] sm:$0xff]
        %v1000 = vld [vmem:[%s724 + $0xba] sm:$0xff]
        %v1001 = vld [vmem:[%s724 + $0xca] sm:$0xff]
        %v1002 = vld [vmem:[%s724 + $0xd2] sm:$0xff]
        %v1003 = vld [vmem:[%s724 + $0xda] sm:$0xff]
        %v1004 = vld [vmem:[%s724 + $0xe2] sm:$0xff]
        %v1005 = vld [vmem:[%s724 + $0xf2] sm:$0xff]
        %v1006 = vld [vmem:[%s724 + $0xfa] sm:$0xff]
        %v1007 = vld [vmem:[%s724 + $0x102] sm:$0xff]
        %v1008 = vld [vmem:[%s724 + $0x10a] sm:$0xff]
        %v1009 = vld [vmem:[%s724 + $0x11a] sm:$0xff]
        %v1010 = vld [vmem:[%s724 + $0x122] sm:$0xff]
        %v1011 = vld [vmem:[%s724 + $0x12a] sm:$0xff]
        %v1012 = vld [vmem:[%s724 + $0x132] sm:$0xff]
        %v1013 = vld [vmem:[%s724 + $0x142] sm:$0xff]
        %v1014 = vld [vmem:[%s724 + $0x14a] sm:$0xff]
        %v1015 = vld [vmem:[%s724 + $0x152] sm:$0xff]
        %v1016 = vld [vmem:[%s724 + $0x15a] sm:$0xff]
        %v1017 = vld [vmem:[%s724 + $0x16a] sm:$0xff]
        %v1018 = vld [vmem:[%s724 + $0x172] sm:$0xff]
        %v1019 = vld [vmem:[%s724 + $0x17a] sm:$0xff]
        %v1020 = vld [vmem:[%s724 + $0x182] sm:$0xff]
        %v1021 = vld [vmem:[%s724 + $0x192] sm:$0xff]
        %v1022 = vld [vmem:[%s724 + $0x19a] sm:$0xff]
        %v1023 = vld [vmem:[%s724 + $0x1a2] sm:$0xff]
        %v1024 = vld [vmem:[%s724 + $0x1aa] sm:$0xff]
        %v1025 = vld [vmem:[%s724 + $0x1ba] sm:$0xff]
        %v1026 = vld [vmem:[%s724 + $0x1c2] sm:$0xff]
        %v1027 = vld [vmem:[%s724 + $0x1ca] sm:$0xff]
        %v1028 = vld [vmem:[%s724 + $0x1d2] sm:$0xff]
        %v1029 = vld [vmem:[%s724 + $0x1e2] sm:$0xff]
        %v1030 = vld [vmem:[%s724 + $0x1ea] sm:$0xff]
        %v1031 = vld [vmem:[%s724 + $0x1f2] sm:$0xff]
        %v1032 = vld [vmem:[%s724 + $0x1fa] sm:$0xff]
        %v1033 = vld [vmem:[%s724 + $0x20a] sm:$0xff]
        %v1034 = vld [vmem:[%s724 + $0x212] sm:$0xff]
        %v1035 = vld [vmem:[%s724 + $0x21a] sm:$0xff]
        %v1036 = vld [vmem:[%s724 + $0x222] sm:$0xff]
        %v1037 = vld [vmem:[%s724 + $0x232] sm:$0xff]
        %v1038 = vld [vmem:[%s724 + $0x23a] sm:$0xff]
        %v1039 = vld [vmem:[%s724 + $0x242] sm:$0xff]
        %v1040 = vld [vmem:[%s724 + $0x24a] sm:$0xff]
        %v1041 = vld [vmem:[%s724 + $0x25a] sm:$0xff]
        %v1042 = vld [vmem:[%s724 + $0x262] sm:$0xff]
        %v1043 = vld [vmem:[%s724 + $0x26a] sm:$0xff]
        %v1044 = vld [vmem:[%s724 + $0x272] sm:$0xff]
        %v1045 = vld [vmem:[%s724 + $0x282] sm:$0xff]
        %v1046 = vld [vmem:[%s724 + $0x28a] sm:$0xff]
        %v1047 = vld [vmem:[%s724 + $0x292] sm:$0xff]
        %v1048 = vld [vmem:[%s724 + $0x29a] sm:$0xff]
        %v1049 = vld [vmem:[%s724 + $0x2aa] sm:$0xff]
        %v1050 = vld [vmem:[%s724 + $0x2b2] sm:$0xff]
        %v1051 = vld [vmem:[%s724 + $0x2ba] sm:$0xff]
        %v1052 = vld [vmem:[%s724 + $0x2c2] sm:$0xff]
        %v1053 = vld [vmem:[%s724 + $0x2d2] sm:$0xff]
        %v1054 = vld [vmem:[%s724 + $0x2da] sm:$0xff]
        %v1055 = vld [vmem:[%s724 + $0x2e2] sm:$0xff]
        %v1056 = vld [vmem:[%s724 + $0x2ea] sm:$0xff]
        %v1057 = vld [vmem:[%s724 + $0x2fa] sm:$0xff]
        %v1058 = vld [vmem:[%s724 + $0x302] sm:$0xff]
        %v1059 = vld [vmem:[%s724 + $0x30a] sm:$0xff]
        %v1060 = vld [vmem:[%s724 + $0x312] sm:$0xff]
        %v1061 = vld [vmem:[%s724 + $0x322] sm:$0xff]
        %v1062 = vld [vmem:[%s724 + $0x32a] sm:$0xff]
        %v1063 = vld [vmem:[%s724 + $0x332] sm:$0xff]
        %v1064 = vld [vmem:[%s724 + $0x33a] sm:$0xff]
        %v1065 = vld [vmem:[%s724 + $0x34a] sm:$0xff]
        %v1066 = vld [vmem:[%s724 + $0x352] sm:$0xff]
        %v1067 = vld [vmem:[%s724 + $0x35a] sm:$0xff]
        %v1068 = vld [vmem:[%s724 + $0x362] sm:$0xff]
        %v1069 = vld [vmem:[%s724 + $0x372] sm:$0xff]
        %v1070 = vld [vmem:[%s724 + $0x37a] sm:$0xff]
        %v1071 = vld [vmem:[%s724 + $0x382] sm:$0xff]
        %v1072 = vld [vmem:[%s724 + $0x38a] sm:$0xff]
        %v1073 = vld [vmem:[%s724 + $0x39a] sm:$0xff]
        %v1074 = vld [vmem:[%s724 + $0x3a2] sm:$0xff]
        %v1075 = vld [vmem:[%s724 + $0x3aa] sm:$0xff]
        %v1076 = vld [vmem:[%s724 + $0x3b2] sm:$0xff]
        %v1077 = vld [vmem:[%s724 + $0x3c2] sm:$0xff]
        %v1078 = vld [vmem:[%s724 + $0x3ca] sm:$0xff]
        %v1079 = vld [vmem:[%s724 + $0x3d2] sm:$0xff]
        %v1080 = vld [vmem:[%s724 + $0x3da] sm:$0xff]
        %v1081 = vld [vmem:[%s724 + $0x3ea] sm:$0xff]
        %v1082 = vld [vmem:[%s724 + $0x3f2] sm:$0xff]
        %v1083 = vld [vmem:[%s724 + $0x3fa] sm:$0xff]
        %v1084 = vld [vmem:[%s724 + $0x402] sm:$0xff]
        %v1085 = vld [vmem:[%s724 + $0x412] sm:$0xff]
        %v1086 = vld [vmem:[%s724 + $0x41a] sm:$0xff]
        %v1087 = vld [vmem:[%s724 + $0x422] sm:$0xff]
        %v1088 = vld [vmem:[%s724 + $0x42a] sm:$0xff]
        %v1089 = vld [vmem:[%s724 + $0x43a] sm:$0xff]
        %v1090 = vld [vmem:[%s724 + $0x442] sm:$0xff]
        %v1091 = vld [vmem:[%s724 + $0x44a] sm:$0xff]
        %v1092 = vld [vmem:[%s724 + $0x452] sm:$0xff]
        %v1093 = vld [vmem:[%s724 + $0x462] sm:$0xff]
        %v1094 = vld [vmem:[%s724 + $0x46a] sm:$0xff]
        %v1095 = vld [vmem:[%s724 + $0x472] sm:$0xff]
        %v1096 = vld [vmem:[%s724 + $0x47a] sm:$0xff]
        %v1097 = vld [vmem:[%s724 + $0x48a] sm:$0xff]
        %v1098 = vld [vmem:[%s724 + $0x492] sm:$0xff]
        %v1099 = vld [vmem:[%s724 + $0x49a] sm:$0xff]
        %v1100 = vld [vmem:[%s724 + $0x4a2] sm:$0xff]
        %v1101 = vld [vmem:[%s724 + $0x4b2] sm:$0xff]
        %v1102 = vld [vmem:[%s724 + $0x4ba] sm:$0xff]
        %v1103 = vld [vmem:[%s724 + $0x4c2] sm:$0xff]
        %v1104 = vld [vmem:[%s724 + $0x4ca] sm:$0xff]
        %v1105 = vld [vmem:[%s724 + $0x4da] sm:$0xff]
        %v1106 = vld [vmem:[%s724 + $0x4e2] sm:$0xff]
        %v1107 = vld [vmem:[%s724 + $0x4ea] sm:$0xff]
        %v1108 = vld [vmem:[%s724 + $0x4f2] sm:$0xff]
        %v1109 = vld [vmem:[%s724 + $0x3] sm:$0xff]
        %v1110 = vld [vmem:[%s724 + $0xb] sm:$0xff]
        %v1111 = vld [vmem:[%s724 + $0x13] sm:$0xff]
        %v1112 = vld [vmem:[%s724 + $0x1b] sm:$0xff]
        %v1113 = vld [vmem:[%s724 + $0x2b] sm:$0xff]
        %v1114 = vld [vmem:[%s724 + $0x33] sm:$0xff]
        %v1115 = vld [vmem:[%s724 + $0x3b] sm:$0xff]
        %v1116 = vld [vmem:[%s724 + $0x43] sm:$0xff]
        %v1117 = vld [vmem:[%s724 + $0x53] sm:$0xff]
        %v1118 = vld [vmem:[%s724 + $0x5b] sm:$0xff]
        %v1119 = vld [vmem:[%s724 + $0x63] sm:$0xff]
        %v1120 = vld [vmem:[%s724 + $0x6b] sm:$0xff]
        %v1121 = vld [vmem:[%s724 + $0x7b] sm:$0xff]
        %v1122 = vld [vmem:[%s724 + $0x83] sm:$0xff]
        %v1123 = vld [vmem:[%s724 + $0x8b] sm:$0xff]
        %v1124 = vld [vmem:[%s724 + $0x93] sm:$0xff]
        %v1125 = vld [vmem:[%s724 + $0xa3] sm:$0xff]
        %v1126 = vld [vmem:[%s724 + $0xab] sm:$0xff]
        %v1127 = vld [vmem:[%s724 + $0xb3] sm:$0xff]
        %v1128 = vld [vmem:[%s724 + $0xbb] sm:$0xff]
        %v1129 = vld [vmem:[%s724 + $0xcb] sm:$0xff]
        %v1130 = vld [vmem:[%s724 + $0xd3] sm:$0xff]
        %v1131 = vld [vmem:[%s724 + $0xdb] sm:$0xff]
        %v1132 = vld [vmem:[%s724 + $0xe3] sm:$0xff]
        %v1133 = vld [vmem:[%s724 + $0xf3] sm:$0xff]
        %v1134 = vld [vmem:[%s724 + $0xfb] sm:$0xff]
        %v1135 = vld [vmem:[%s724 + $0x103] sm:$0xff]
        %v1136 = vld [vmem:[%s724 + $0x10b] sm:$0xff]
        %v1137 = vld [vmem:[%s724 + $0x11b] sm:$0xff]
        %v1138 = vld [vmem:[%s724 + $0x123] sm:$0xff]
        %v1139 = vld [vmem:[%s724 + $0x12b] sm:$0xff]
        %v1140 = vld [vmem:[%s724 + $0x133] sm:$0xff]
        %v1141 = vld [vmem:[%s724 + $0x143] sm:$0xff]
        %v1142 = vld [vmem:[%s724 + $0x14b] sm:$0xff]
        %v1143 = vld [vmem:[%s724 + $0x153] sm:$0xff]
        %v1144 = vld [vmem:[%s724 + $0x15b] sm:$0xff]
        %v1145 = vld [vmem:[%s724 + $0x16b] sm:$0xff]
        %v1146 = vld [vmem:[%s724 + $0x173] sm:$0xff]
        %v1147 = vld [vmem:[%s724 + $0x17b] sm:$0xff]
        %v1148 = vld [vmem:[%s724 + $0x183] sm:$0xff]
        %v1149 = vld [vmem:[%s724 + $0x193] sm:$0xff]
        %v1150 = vld [vmem:[%s724 + $0x19b] sm:$0xff]
        %v1151 = vld [vmem:[%s724 + $0x1a3] sm:$0xff]
        %v1152 = vld [vmem:[%s724 + $0x1ab] sm:$0xff]
        %v1153 = vld [vmem:[%s724 + $0x1bb] sm:$0xff]
        %v1154 = vld [vmem:[%s724 + $0x1c3] sm:$0xff]
        %v1155 = vld [vmem:[%s724 + $0x1cb] sm:$0xff]
        %v1156 = vld [vmem:[%s724 + $0x1d3] sm:$0xff]
        %v1157 = vld [vmem:[%s724 + $0x1e3] sm:$0xff]
        %v1158 = vld [vmem:[%s724 + $0x1eb] sm:$0xff]
        %v1159 = vld [vmem:[%s724 + $0x1f3] sm:$0xff]
        %v1160 = vld [vmem:[%s724 + $0x1fb] sm:$0xff]
        %v1161 = vld [vmem:[%s724 + $0x20b] sm:$0xff]
        %v1162 = vld [vmem:[%s724 + $0x213] sm:$0xff]
        %v1163 = vld [vmem:[%s724 + $0x21b] sm:$0xff]
        %v1164 = vld [vmem:[%s724 + $0x223] sm:$0xff]
        %v1165 = vld [vmem:[%s724 + $0x233] sm:$0xff]
        %v1166 = vld [vmem:[%s724 + $0x23b] sm:$0xff]
        %v1167 = vld [vmem:[%s724 + $0x243] sm:$0xff]
        %v1168 = vld [vmem:[%s724 + $0x24b] sm:$0xff]
        %v1169 = vld [vmem:[%s724 + $0x25b] sm:$0xff]
        %v1170 = vld [vmem:[%s724 + $0x263] sm:$0xff]
        %v1171 = vld [vmem:[%s724 + $0x26b] sm:$0xff]
        %v1172 = vld [vmem:[%s724 + $0x273] sm:$0xff]
        %v1173 = vld [vmem:[%s724 + $0x283] sm:$0xff]
        %v1174 = vld [vmem:[%s724 + $0x28b] sm:$0xff]
        %v1175 = vld [vmem:[%s724 + $0x293] sm:$0xff]
        %v1176 = vld [vmem:[%s724 + $0x29b] sm:$0xff]
        %v1177 = vld [vmem:[%s724 + $0x2ab] sm:$0xff]
        %v1178 = vld [vmem:[%s724 + $0x2b3] sm:$0xff]
        %v1179 = vld [vmem:[%s724 + $0x2bb] sm:$0xff]
        %v1180 = vld [vmem:[%s724 + $0x2c3] sm:$0xff]
        %v1181 = vld [vmem:[%s724 + $0x2d3] sm:$0xff]
        %v1182 = vld [vmem:[%s724 + $0x2db] sm:$0xff]
        %v1183 = vld [vmem:[%s724 + $0x2e3] sm:$0xff]
        %v1184 = vld [vmem:[%s724 + $0x2eb] sm:$0xff]
        %v1185 = vld [vmem:[%s724 + $0x2fb] sm:$0xff]
        %v1186 = vld [vmem:[%s724 + $0x303] sm:$0xff]
        %v1187 = vld [vmem:[%s724 + $0x30b] sm:$0xff]
        %v1188 = vld [vmem:[%s724 + $0x313] sm:$0xff]
        %v1189 = vld [vmem:[%s724 + $0x323] sm:$0xff]
        %v1190 = vld [vmem:[%s724 + $0x32b] sm:$0xff]
        %v1191 = vld [vmem:[%s724 + $0x333] sm:$0xff]
        %v1192 = vld [vmem:[%s724 + $0x33b] sm:$0xff]
        %v1193 = vld [vmem:[%s724 + $0x34b] sm:$0xff]
        %v1194 = vld [vmem:[%s724 + $0x353] sm:$0xff]
        %v1195 = vld [vmem:[%s724 + $0x35b] sm:$0xff]
        %v1196 = vld [vmem:[%s724 + $0x363] sm:$0xff]
        %v1197 = vld [vmem:[%s724 + $0x373] sm:$0xff]
        %v1198 = vld [vmem:[%s724 + $0x37b] sm:$0xff]
        %v1199 = vld [vmem:[%s724 + $0x383] sm:$0xff]
        %v1200 = vld [vmem:[%s724 + $0x38b] sm:$0xff]
        %v1201 = vld [vmem:[%s724 + $0x39b] sm:$0xff]
        %v1202 = vld [vmem:[%s724 + $0x3a3] sm:$0xff]
        %v1203 = vld [vmem:[%s724 + $0x3ab] sm:$0xff]
        %v1204 = vld [vmem:[%s724 + $0x3b3] sm:$0xff]
        %v1205 = vld [vmem:[%s724 + $0x3c3] sm:$0xff]
        %v1206 = vld [vmem:[%s724 + $0x3cb] sm:$0xff]
        %v1207 = vld [vmem:[%s724 + $0x3d3] sm:$0xff]
        %v1208 = vld [vmem:[%s724 + $0x3db] sm:$0xff]
        %v1209 = vld [vmem:[%s724 + $0x3eb] sm:$0xff]
        %v1210 = vld [vmem:[%s724 + $0x3f3] sm:$0xff]
        %v1211 = vld [vmem:[%s724 + $0x3fb] sm:$0xff]
        %v1212 = vld [vmem:[%s724 + $0x403] sm:$0xff]
        %v1213 = vld [vmem:[%s724 + $0x413] sm:$0xff]
        %v1214 = vld [vmem:[%s724 + $0x41b] sm:$0xff]
        %v1215 = vld [vmem:[%s724 + $0x423] sm:$0xff]
        %v1216 = vld [vmem:[%s724 + $0x42b] sm:$0xff]
        %v1217 = vld [vmem:[%s724 + $0x43b] sm:$0xff]
        %v1218 = vld [vmem:[%s724 + $0x443] sm:$0xff]
        %v1219 = vld [vmem:[%s724 + $0x44b] sm:$0xff]
        %v1220 = vld [vmem:[%s724 + $0x453] sm:$0xff]
        %v1221 = vld [vmem:[%s724 + $0x463] sm:$0xff]
        %v1222 = vld [vmem:[%s724 + $0x46b] sm:$0xff]
        %v1223 = vld [vmem:[%s724 + $0x473] sm:$0xff]
        %v1224 = vld [vmem:[%s724 + $0x47b] sm:$0xff]
        %v1225 = vld [vmem:[%s724 + $0x48b] sm:$0xff]
        %v1226 = vld [vmem:[%s724 + $0x493] sm:$0xff]
        %v1227 = vld [vmem:[%s724 + $0x49b] sm:$0xff]
        %v1228 = vld [vmem:[%s724 + $0x4a3] sm:$0xff]
        %v1229 = vld [vmem:[%s724 + $0x4b3] sm:$0xff]
        %v1230 = vld [vmem:[%s724 + $0x4bb] sm:$0xff]
        %v1231 = vld [vmem:[%s724 + $0x4c3] sm:$0xff]
        %v1232 = vld [vmem:[%s724 + $0x4cb] sm:$0xff]
        %v1233 = vld [vmem:[%s724 + $0x4db] sm:$0xff]
        %v1234 = vld [vmem:[%s724 + $0x4e3] sm:$0xff]
        %v1235 = vld [vmem:[%s724 + $0x4eb] sm:$0xff]
        %v1236 = vld [vmem:[%s724 + $0x4f3] sm:$0xff]
        %s1237 = scalar_lea.vmem %s211, 80
        %v1238 = vld [vmem:[%s1237] sm:$0xff]
        %v1239 = vld [vmem:[%s1237 + $0x8] sm:$0xff]
        %v1240 = vld [vmem:[%s1237 + $0x10] sm:$0xff]
        %v1241 = vld [vmem:[%s1237 + $0x18] sm:$0xff]
        %v1242 = vld [vmem:[%s1237 + $0x28] sm:$0xff]
        %v1243 = vld [vmem:[%s1237 + $0x30] sm:$0xff]
        %v1244 = vld [vmem:[%s1237 + $0x38] sm:$0xff]
        %v1245 = vld [vmem:[%s1237 + $0x40] sm:$0xff]
        %v1246 = vld [vmem:[%s1237 + $0x50] sm:$0xff]
        %v1247 = vld [vmem:[%s1237 + $0x58] sm:$0xff]
        %v1248 = vld [vmem:[%s1237 + $0x60] sm:$0xff]
        %v1249 = vld [vmem:[%s1237 + $0x68] sm:$0xff]
        %v1250 = vld [vmem:[%s1237 + $0x78] sm:$0xff]
        %v1251 = vld [vmem:[%s1237 + $0x80] sm:$0xff]
        %v1252 = vld [vmem:[%s1237 + $0x88] sm:$0xff]
        %v1253 = vld [vmem:[%s1237 + $0x90] sm:$0xff]
        %v1254 = vld [vmem:[%s1237 + $0xa0] sm:$0xff]
        %v1255 = vld [vmem:[%s1237 + $0xa8] sm:$0xff]
        %v1256 = vld [vmem:[%s1237 + $0xb0] sm:$0xff]
        %v1257 = vld [vmem:[%s1237 + $0xb8] sm:$0xff]
        %v1258 = vld [vmem:[%s1237 + $0xc8] sm:$0xff]
        %v1259 = vld [vmem:[%s1237 + $0xd0] sm:$0xff]
        %v1260 = vld [vmem:[%s1237 + $0xd8] sm:$0xff]
        %v1261 = vld [vmem:[%s1237 + $0xe0] sm:$0xff]
        %v1262 = vld [vmem:[%s1237 + $0xf0] sm:$0xff]
        %v1263 = vld [vmem:[%s1237 + $0xf8] sm:$0xff]
        %v1264 = vld [vmem:[%s1237 + $0x100] sm:$0xff]
        %v1265 = vld [vmem:[%s1237 + $0x108] sm:$0xff]
        %v1266 = vld [vmem:[%s1237 + $0x118] sm:$0xff]
        %v1267 = vld [vmem:[%s1237 + $0x120] sm:$0xff]
        %v1268 = vld [vmem:[%s1237 + $0x128] sm:$0xff]
        %v1269 = vld [vmem:[%s1237 + $0x130] sm:$0xff]
        %v1270 = vld [vmem:[%s1237 + $0x140] sm:$0xff]
        %v1271 = vld [vmem:[%s1237 + $0x148] sm:$0xff]
        %v1272 = vld [vmem:[%s1237 + $0x150] sm:$0xff]
        %v1273 = vld [vmem:[%s1237 + $0x158] sm:$0xff]
        %v1274 = vld [vmem:[%s1237 + $0x168] sm:$0xff]
        %v1275 = vld [vmem:[%s1237 + $0x170] sm:$0xff]
        %v1276 = vld [vmem:[%s1237 + $0x178] sm:$0xff]
        %v1277 = vld [vmem:[%s1237 + $0x180] sm:$0xff]
        %v1278 = vld [vmem:[%s1237 + $0x190] sm:$0xff]
        %v1279 = vld [vmem:[%s1237 + $0x198] sm:$0xff]
        %v1280 = vld [vmem:[%s1237 + $0x1a0] sm:$0xff]
        %v1281 = vld [vmem:[%s1237 + $0x1a8] sm:$0xff]
        %v1282 = vld [vmem:[%s1237 + $0x1b8] sm:$0xff]
        %v1283 = vld [vmem:[%s1237 + $0x1c0] sm:$0xff]
        %v1284 = vld [vmem:[%s1237 + $0x1c8] sm:$0xff]
        %v1285 = vld [vmem:[%s1237 + $0x1d0] sm:$0xff]
        %v1286 = vld [vmem:[%s1237 + $0x1e0] sm:$0xff]
        %v1287 = vld [vmem:[%s1237 + $0x1e8] sm:$0xff]
        %v1288 = vld [vmem:[%s1237 + $0x1f0] sm:$0xff]
        %v1289 = vld [vmem:[%s1237 + $0x1f8] sm:$0xff]
        %v1290 = vld [vmem:[%s1237 + $0x208] sm:$0xff]
        %v1291 = vld [vmem:[%s1237 + $0x210] sm:$0xff]
        %v1292 = vld [vmem:[%s1237 + $0x218] sm:$0xff]
        %v1293 = vld [vmem:[%s1237 + $0x220] sm:$0xff]
        %v1294 = vld [vmem:[%s1237 + $0x230] sm:$0xff]
        %v1295 = vld [vmem:[%s1237 + $0x238] sm:$0xff]
        %v1296 = vld [vmem:[%s1237 + $0x240] sm:$0xff]
        %v1297 = vld [vmem:[%s1237 + $0x248] sm:$0xff]
        %v1298 = vld [vmem:[%s1237 + $0x258] sm:$0xff]
        %v1299 = vld [vmem:[%s1237 + $0x260] sm:$0xff]
        %v1300 = vld [vmem:[%s1237 + $0x268] sm:$0xff]
        %v1301 = vld [vmem:[%s1237 + $0x270] sm:$0xff]
        %v1302 = vld [vmem:[%s1237 + $0x280] sm:$0xff]
        %v1303 = vld [vmem:[%s1237 + $0x288] sm:$0xff]
        %v1304 = vld [vmem:[%s1237 + $0x290] sm:$0xff]
        %v1305 = vld [vmem:[%s1237 + $0x298] sm:$0xff]
        %v1306 = vld [vmem:[%s1237 + $0x2a8] sm:$0xff]
        %v1307 = vld [vmem:[%s1237 + $0x2b0] sm:$0xff]
        %v1308 = vld [vmem:[%s1237 + $0x2b8] sm:$0xff]
        %v1309 = vld [vmem:[%s1237 + $0x2c0] sm:$0xff]
        %v1310 = vld [vmem:[%s1237 + $0x2d0] sm:$0xff]
        %v1311 = vld [vmem:[%s1237 + $0x2d8] sm:$0xff]
        %v1312 = vld [vmem:[%s1237 + $0x2e0] sm:$0xff]
        %v1313 = vld [vmem:[%s1237 + $0x2e8] sm:$0xff]
        %v1314 = vld [vmem:[%s1237 + $0x2f8] sm:$0xff]
        %v1315 = vld [vmem:[%s1237 + $0x300] sm:$0xff]
        %v1316 = vld [vmem:[%s1237 + $0x308] sm:$0xff]
        %v1317 = vld [vmem:[%s1237 + $0x310] sm:$0xff]
        %v1318 = vld [vmem:[%s1237 + $0x320] sm:$0xff]
        %v1319 = vld [vmem:[%s1237 + $0x328] sm:$0xff]
        %v1320 = vld [vmem:[%s1237 + $0x330] sm:$0xff]
        %v1321 = vld [vmem:[%s1237 + $0x338] sm:$0xff]
        %v1322 = vld [vmem:[%s1237 + $0x348] sm:$0xff]
        %v1323 = vld [vmem:[%s1237 + $0x350] sm:$0xff]
        %v1324 = vld [vmem:[%s1237 + $0x358] sm:$0xff]
        %v1325 = vld [vmem:[%s1237 + $0x360] sm:$0xff]
        %v1326 = vld [vmem:[%s1237 + $0x370] sm:$0xff]
        %v1327 = vld [vmem:[%s1237 + $0x378] sm:$0xff]
        %v1328 = vld [vmem:[%s1237 + $0x380] sm:$0xff]
        %v1329 = vld [vmem:[%s1237 + $0x388] sm:$0xff]
        %v1330 = vld [vmem:[%s1237 + $0x398] sm:$0xff]
        %v1331 = vld [vmem:[%s1237 + $0x3a0] sm:$0xff]
        %v1332 = vld [vmem:[%s1237 + $0x3a8] sm:$0xff]
        %v1333 = vld [vmem:[%s1237 + $0x3b0] sm:$0xff]
        %v1334 = vld [vmem:[%s1237 + $0x3c0] sm:$0xff]
        %v1335 = vld [vmem:[%s1237 + $0x3c8] sm:$0xff]
        %v1336 = vld [vmem:[%s1237 + $0x3d0] sm:$0xff]
        %v1337 = vld [vmem:[%s1237 + $0x3d8] sm:$0xff]
        %v1338 = vld [vmem:[%s1237 + $0x3e8] sm:$0xff]
        %v1339 = vld [vmem:[%s1237 + $0x3f0] sm:$0xff]
        %v1340 = vld [vmem:[%s1237 + $0x3f8] sm:$0xff]
        %v1341 = vld [vmem:[%s1237 + $0x400] sm:$0xff]
        %v1342 = vld [vmem:[%s1237 + $0x410] sm:$0xff]
        %v1343 = vld [vmem:[%s1237 + $0x418] sm:$0xff]
        %v1344 = vld [vmem:[%s1237 + $0x420] sm:$0xff]
        %v1345 = vld [vmem:[%s1237 + $0x428] sm:$0xff]
        %v1346 = vld [vmem:[%s1237 + $0x438] sm:$0xff]
        %v1347 = vld [vmem:[%s1237 + $0x440] sm:$0xff]
        %v1348 = vld [vmem:[%s1237 + $0x448] sm:$0xff]
        %v1349 = vld [vmem:[%s1237 + $0x450] sm:$0xff]
        %v1350 = vld [vmem:[%s1237 + $0x460] sm:$0xff]
        %v1351 = vld [vmem:[%s1237 + $0x468] sm:$0xff]
        %v1352 = vld [vmem:[%s1237 + $0x470] sm:$0xff]
        %v1353 = vld [vmem:[%s1237 + $0x478] sm:$0xff]
        %v1354 = vld [vmem:[%s1237 + $0x488] sm:$0xff]
        %v1355 = vld [vmem:[%s1237 + $0x490] sm:$0xff]
        %v1356 = vld [vmem:[%s1237 + $0x498] sm:$0xff]
        %v1357 = vld [vmem:[%s1237 + $0x4a0] sm:$0xff]
        %v1358 = vld [vmem:[%s1237 + $0x4b0] sm:$0xff]
        %v1359 = vld [vmem:[%s1237 + $0x4b8] sm:$0xff]
        %v1360 = vld [vmem:[%s1237 + $0x4c0] sm:$0xff]
        %v1361 = vld [vmem:[%s1237 + $0x4c8] sm:$0xff]
        %v1362 = vld [vmem:[%s1237 + $0x4d8] sm:$0xff]
        %v1363 = vld [vmem:[%s1237 + $0x4e0] sm:$0xff]
        %v1364 = vld [vmem:[%s1237 + $0x4e8] sm:$0xff]
        %v1365 = vld [vmem:[%s1237 + $0x4f0] sm:$0xff]
        %v1366 = vld [vmem:[%s1237 + $0x1] sm:$0xff]
        %v1367 = vld [vmem:[%s1237 + $0x9] sm:$0xff]
        %v1368 = vld [vmem:[%s1237 + $0x11] sm:$0xff]
        %v1369 = vld [vmem:[%s1237 + $0x19] sm:$0xff]
        %v1370 = vld [vmem:[%s1237 + $0x29] sm:$0xff]
        %v1371 = vld [vmem:[%s1237 + $0x31] sm:$0xff]
        %v1372 = vld [vmem:[%s1237 + $0x39] sm:$0xff]
        %v1373 = vld [vmem:[%s1237 + $0x41] sm:$0xff]
        %v1374 = vld [vmem:[%s1237 + $0x51] sm:$0xff]
        %v1375 = vld [vmem:[%s1237 + $0x59] sm:$0xff]
        %v1376 = vld [vmem:[%s1237 + $0x61] sm:$0xff]
        %v1377 = vld [vmem:[%s1237 + $0x69] sm:$0xff]
        %v1378 = vld [vmem:[%s1237 + $0x79] sm:$0xff]
        %v1379 = vld [vmem:[%s1237 + $0x81] sm:$0xff]
        %v1380 = vld [vmem:[%s1237 + $0x89] sm:$0xff]
        %v1381 = vld [vmem:[%s1237 + $0x91] sm:$0xff]
        %v1382 = vld [vmem:[%s1237 + $0xa1] sm:$0xff]
        %v1383 = vld [vmem:[%s1237 + $0xa9] sm:$0xff]
        %v1384 = vld [vmem:[%s1237 + $0xb1] sm:$0xff]
        %v1385 = vld [vmem:[%s1237 + $0xb9] sm:$0xff]
        %v1386 = vld [vmem:[%s1237 + $0xc9] sm:$0xff]
        %v1387 = vld [vmem:[%s1237 + $0xd1] sm:$0xff]
        %v1388 = vld [vmem:[%s1237 + $0xd9] sm:$0xff]
        %v1389 = vld [vmem:[%s1237 + $0xe1] sm:$0xff]
        %v1390 = vld [vmem:[%s1237 + $0xf1] sm:$0xff]
        %v1391 = vld [vmem:[%s1237 + $0xf9] sm:$0xff]
        %v1392 = vld [vmem:[%s1237 + $0x101] sm:$0xff]
        %v1393 = vld [vmem:[%s1237 + $0x109] sm:$0xff]
        %v1394 = vld [vmem:[%s1237 + $0x119] sm:$0xff]
        %v1395 = vld [vmem:[%s1237 + $0x121] sm:$0xff]
        %v1396 = vld [vmem:[%s1237 + $0x129] sm:$0xff]
        %v1397 = vld [vmem:[%s1237 + $0x131] sm:$0xff]
        %v1398 = vld [vmem:[%s1237 + $0x141] sm:$0xff]
        %v1399 = vld [vmem:[%s1237 + $0x149] sm:$0xff]
        %v1400 = vld [vmem:[%s1237 + $0x151] sm:$0xff]
        %v1401 = vld [vmem:[%s1237 + $0x159] sm:$0xff]
        %v1402 = vld [vmem:[%s1237 + $0x169] sm:$0xff]
        %v1403 = vld [vmem:[%s1237 + $0x171] sm:$0xff]
        %v1404 = vld [vmem:[%s1237 + $0x179] sm:$0xff]
        %v1405 = vld [vmem:[%s1237 + $0x181] sm:$0xff]
        %v1406 = vld [vmem:[%s1237 + $0x191] sm:$0xff]
        %v1407 = vld [vmem:[%s1237 + $0x199] sm:$0xff]
        %v1408 = vld [vmem:[%s1237 + $0x1a1] sm:$0xff]
        %v1409 = vld [vmem:[%s1237 + $0x1a9] sm:$0xff]
        %v1410 = vld [vmem:[%s1237 + $0x1b9] sm:$0xff]
        %v1411 = vld [vmem:[%s1237 + $0x1c1] sm:$0xff]
        %v1412 = vld [vmem:[%s1237 + $0x1c9] sm:$0xff]
        %v1413 = vld [vmem:[%s1237 + $0x1d1] sm:$0xff]
        %v1414 = vld [vmem:[%s1237 + $0x1e1] sm:$0xff]
        %v1415 = vld [vmem:[%s1237 + $0x1e9] sm:$0xff]
        %v1416 = vld [vmem:[%s1237 + $0x1f1] sm:$0xff]
        %v1417 = vld [vmem:[%s1237 + $0x1f9] sm:$0xff]
        %v1418 = vld [vmem:[%s1237 + $0x209] sm:$0xff]
        %v1419 = vld [vmem:[%s1237 + $0x211] sm:$0xff]
        %v1420 = vld [vmem:[%s1237 + $0x219] sm:$0xff]
        %v1421 = vld [vmem:[%s1237 + $0x221] sm:$0xff]
        %v1422 = vld [vmem:[%s1237 + $0x231] sm:$0xff]
        %v1423 = vld [vmem:[%s1237 + $0x239] sm:$0xff]
        %v1424 = vld [vmem:[%s1237 + $0x241] sm:$0xff]
        %v1425 = vld [vmem:[%s1237 + $0x249] sm:$0xff]
        %v1426 = vld [vmem:[%s1237 + $0x259] sm:$0xff]
        %v1427 = vld [vmem:[%s1237 + $0x261] sm:$0xff]
        %v1428 = vld [vmem:[%s1237 + $0x269] sm:$0xff]
        %v1429 = vld [vmem:[%s1237 + $0x271] sm:$0xff]
        %v1430 = vld [vmem:[%s1237 + $0x281] sm:$0xff]
        %v1431 = vld [vmem:[%s1237 + $0x289] sm:$0xff]
        %v1432 = vld [vmem:[%s1237 + $0x291] sm:$0xff]
        %v1433 = vld [vmem:[%s1237 + $0x299] sm:$0xff]
        %v1434 = vld [vmem:[%s1237 + $0x2a9] sm:$0xff]
        %v1435 = vld [vmem:[%s1237 + $0x2b1] sm:$0xff]
        %v1436 = vld [vmem:[%s1237 + $0x2b9] sm:$0xff]
        %v1437 = vld [vmem:[%s1237 + $0x2c1] sm:$0xff]
        %v1438 = vld [vmem:[%s1237 + $0x2d1] sm:$0xff]
        %v1439 = vld [vmem:[%s1237 + $0x2d9] sm:$0xff]
        %v1440 = vld [vmem:[%s1237 + $0x2e1] sm:$0xff]
        %v1441 = vld [vmem:[%s1237 + $0x2e9] sm:$0xff]
        %v1442 = vld [vmem:[%s1237 + $0x2f9] sm:$0xff]
        %v1443 = vld [vmem:[%s1237 + $0x301] sm:$0xff]
        %v1444 = vld [vmem:[%s1237 + $0x309] sm:$0xff]
        %v1445 = vld [vmem:[%s1237 + $0x311] sm:$0xff]
        %v1446 = vld [vmem:[%s1237 + $0x321] sm:$0xff]
        %v1447 = vld [vmem:[%s1237 + $0x329] sm:$0xff]
        %v1448 = vld [vmem:[%s1237 + $0x331] sm:$0xff]
        %v1449 = vld [vmem:[%s1237 + $0x339] sm:$0xff]
        %v1450 = vld [vmem:[%s1237 + $0x349] sm:$0xff]
        %v1451 = vld [vmem:[%s1237 + $0x351] sm:$0xff]
        %v1452 = vld [vmem:[%s1237 + $0x359] sm:$0xff]
        %v1453 = vld [vmem:[%s1237 + $0x361] sm:$0xff]
        %v1454 = vld [vmem:[%s1237 + $0x371] sm:$0xff]
        %v1455 = vld [vmem:[%s1237 + $0x379] sm:$0xff]
        %v1456 = vld [vmem:[%s1237 + $0x381] sm:$0xff]
        %v1457 = vld [vmem:[%s1237 + $0x389] sm:$0xff]
        %v1458 = vld [vmem:[%s1237 + $0x399] sm:$0xff]
        %v1459 = vld [vmem:[%s1237 + $0x3a1] sm:$0xff]
        %v1460 = vld [vmem:[%s1237 + $0x3a9] sm:$0xff]
        %v1461 = vld [vmem:[%s1237 + $0x3b1] sm:$0xff]
        %v1462 = vld [vmem:[%s1237 + $0x3c1] sm:$0xff]
        %v1463 = vld [vmem:[%s1237 + $0x3c9] sm:$0xff]
        %v1464 = vld [vmem:[%s1237 + $0x3d1] sm:$0xff]
        %v1465 = vld [vmem:[%s1237 + $0x3d9] sm:$0xff]
        %v1466 = vld [vmem:[%s1237 + $0x3e9] sm:$0xff]
        %v1467 = vld [vmem:[%s1237 + $0x3f1] sm:$0xff]
        %v1468 = vld [vmem:[%s1237 + $0x3f9] sm:$0xff]
        %v1469 = vld [vmem:[%s1237 + $0x401] sm:$0xff]
        %v1470 = vld [vmem:[%s1237 + $0x411] sm:$0xff]
        %v1471 = vld [vmem:[%s1237 + $0x419] sm:$0xff]
        %v1472 = vld [vmem:[%s1237 + $0x421] sm:$0xff]
        %v1473 = vld [vmem:[%s1237 + $0x429] sm:$0xff]
        %v1474 = vld [vmem:[%s1237 + $0x439] sm:$0xff]
        %v1475 = vld [vmem:[%s1237 + $0x441] sm:$0xff]
        %v1476 = vld [vmem:[%s1237 + $0x449] sm:$0xff]
        %v1477 = vld [vmem:[%s1237 + $0x451] sm:$0xff]
        %v1478 = vld [vmem:[%s1237 + $0x461] sm:$0xff]
        %v1479 = vld [vmem:[%s1237 + $0x469] sm:$0xff]
        %v1480 = vld [vmem:[%s1237 + $0x471] sm:$0xff]
        %v1481 = vld [vmem:[%s1237 + $0x479] sm:$0xff]
        %v1482 = vld [vmem:[%s1237 + $0x489] sm:$0xff]
        %v1483 = vld [vmem:[%s1237 + $0x491] sm:$0xff]
        %v1484 = vld [vmem:[%s1237 + $0x499] sm:$0xff]
        %v1485 = vld [vmem:[%s1237 + $0x4a1] sm:$0xff]
        %v1486 = vld [vmem:[%s1237 + $0x4b1] sm:$0xff]
        %v1487 = vld [vmem:[%s1237 + $0x4b9] sm:$0xff]
        %v1488 = vld [vmem:[%s1237 + $0x4c1] sm:$0xff]
        %v1489 = vld [vmem:[%s1237 + $0x4c9] sm:$0xff]
        %v1490 = vld [vmem:[%s1237 + $0x4d9] sm:$0xff]
        %v1491 = vld [vmem:[%s1237 + $0x4e1] sm:$0xff]
        %v1492 = vld [vmem:[%s1237 + $0x4e9] sm:$0xff]
        %v1493 = vld [vmem:[%s1237 + $0x4f1] sm:$0xff]
        %v1494 = vld [vmem:[%s1237 + $0x2] sm:$0xff]
        %v1495 = vld [vmem:[%s1237 + $0xa] sm:$0xff]
        %v1496 = vld [vmem:[%s1237 + $0x12] sm:$0xff]
        %v1497 = vld [vmem:[%s1237 + $0x1a] sm:$0xff]
        %v1498 = vld [vmem:[%s1237 + $0x2a] sm:$0xff]
        %v1499 = vld [vmem:[%s1237 + $0x32] sm:$0xff]
        %v1500 = vld [vmem:[%s1237 + $0x3a] sm:$0xff]
        %v1501 = vld [vmem:[%s1237 + $0x42] sm:$0xff]
        %v1502 = vld [vmem:[%s1237 + $0x52] sm:$0xff]
        %v1503 = vld [vmem:[%s1237 + $0x5a] sm:$0xff]
        %v1504 = vld [vmem:[%s1237 + $0x62] sm:$0xff]
        %v1505 = vld [vmem:[%s1237 + $0x6a] sm:$0xff]
        %v1506 = vld [vmem:[%s1237 + $0x7a] sm:$0xff]
        %v1507 = vld [vmem:[%s1237 + $0x82] sm:$0xff]
        %v1508 = vld [vmem:[%s1237 + $0x8a] sm:$0xff]
        %v1509 = vld [vmem:[%s1237 + $0x92] sm:$0xff]
        %v1510 = vld [vmem:[%s1237 + $0xa2] sm:$0xff]
        %v1511 = vld [vmem:[%s1237 + $0xaa] sm:$0xff]
        %v1512 = vld [vmem:[%s1237 + $0xb2] sm:$0xff]
        %v1513 = vld [vmem:[%s1237 + $0xba] sm:$0xff]
        %v1514 = vld [vmem:[%s1237 + $0xca] sm:$0xff]
        %v1515 = vld [vmem:[%s1237 + $0xd2] sm:$0xff]
        %v1516 = vld [vmem:[%s1237 + $0xda] sm:$0xff]
        %v1517 = vld [vmem:[%s1237 + $0xe2] sm:$0xff]
        %v1518 = vld [vmem:[%s1237 + $0xf2] sm:$0xff]
        %v1519 = vld [vmem:[%s1237 + $0xfa] sm:$0xff]
        %v1520 = vld [vmem:[%s1237 + $0x102] sm:$0xff]
        %v1521 = vld [vmem:[%s1237 + $0x10a] sm:$0xff]
        %v1522 = vld [vmem:[%s1237 + $0x11a] sm:$0xff]
        %v1523 = vld [vmem:[%s1237 + $0x122] sm:$0xff]
        %v1524 = vld [vmem:[%s1237 + $0x12a] sm:$0xff]
        %v1525 = vld [vmem:[%s1237 + $0x132] sm:$0xff]
        %v1526 = vld [vmem:[%s1237 + $0x142] sm:$0xff]
        %v1527 = vld [vmem:[%s1237 + $0x14a] sm:$0xff]
        %v1528 = vld [vmem:[%s1237 + $0x152] sm:$0xff]
        %v1529 = vld [vmem:[%s1237 + $0x15a] sm:$0xff]
        %v1530 = vld [vmem:[%s1237 + $0x16a] sm:$0xff]
        %v1531 = vld [vmem:[%s1237 + $0x172] sm:$0xff]
        %v1532 = vld [vmem:[%s1237 + $0x17a] sm:$0xff]
        %v1533 = vld [vmem:[%s1237 + $0x182] sm:$0xff]
        %v1534 = vld [vmem:[%s1237 + $0x192] sm:$0xff]
        %v1535 = vld [vmem:[%s1237 + $0x19a] sm:$0xff]
        %v1536 = vld [vmem:[%s1237 + $0x1a2] sm:$0xff]
        %v1537 = vld [vmem:[%s1237 + $0x1aa] sm:$0xff]
        %v1538 = vld [vmem:[%s1237 + $0x1ba] sm:$0xff]
        %v1539 = vld [vmem:[%s1237 + $0x1c2] sm:$0xff]
        %v1540 = vld [vmem:[%s1237 + $0x1ca] sm:$0xff]
        %v1541 = vld [vmem:[%s1237 + $0x1d2] sm:$0xff]
        %v1542 = vld [vmem:[%s1237 + $0x1e2] sm:$0xff]
        %v1543 = vld [vmem:[%s1237 + $0x1ea] sm:$0xff]
        %v1544 = vld [vmem:[%s1237 + $0x1f2] sm:$0xff]
        %v1545 = vld [vmem:[%s1237 + $0x1fa] sm:$0xff]
        %v1546 = vld [vmem:[%s1237 + $0x20a] sm:$0xff]
        %v1547 = vld [vmem:[%s1237 + $0x212] sm:$0xff]
        %v1548 = vld [vmem:[%s1237 + $0x21a] sm:$0xff]
        %v1549 = vld [vmem:[%s1237 + $0x222] sm:$0xff]
        %v1550 = vld [vmem:[%s1237 + $0x232] sm:$0xff]
        %v1551 = vld [vmem:[%s1237 + $0x23a] sm:$0xff]
        %v1552 = vld [vmem:[%s1237 + $0x242] sm:$0xff]
        %v1553 = vld [vmem:[%s1237 + $0x24a] sm:$0xff]
        %v1554 = vld [vmem:[%s1237 + $0x25a] sm:$0xff]
        %v1555 = vld [vmem:[%s1237 + $0x262] sm:$0xff]
        %v1556 = vld [vmem:[%s1237 + $0x26a] sm:$0xff]
        %v1557 = vld [vmem:[%s1237 + $0x272] sm:$0xff]
        %v1558 = vld [vmem:[%s1237 + $0x282] sm:$0xff]
        %v1559 = vld [vmem:[%s1237 + $0x28a] sm:$0xff]
        %v1560 = vld [vmem:[%s1237 + $0x292] sm:$0xff]
        %v1561 = vld [vmem:[%s1237 + $0x29a] sm:$0xff]
        %v1562 = vld [vmem:[%s1237 + $0x2aa] sm:$0xff]
        %v1563 = vld [vmem:[%s1237 + $0x2b2] sm:$0xff]
        %v1564 = vld [vmem:[%s1237 + $0x2ba] sm:$0xff]
        %v1565 = vld [vmem:[%s1237 + $0x2c2] sm:$0xff]
        %v1566 = vld [vmem:[%s1237 + $0x2d2] sm:$0xff]
        %v1567 = vld [vmem:[%s1237 + $0x2da] sm:$0xff]
        %v1568 = vld [vmem:[%s1237 + $0x2e2] sm:$0xff]
        %v1569 = vld [vmem:[%s1237 + $0x2ea] sm:$0xff]
        %v1570 = vld [vmem:[%s1237 + $0x2fa] sm:$0xff]
        %v1571 = vld [vmem:[%s1237 + $0x302] sm:$0xff]
        %v1572 = vld [vmem:[%s1237 + $0x30a] sm:$0xff]
        %v1573 = vld [vmem:[%s1237 + $0x312] sm:$0xff]
        %v1574 = vld [vmem:[%s1237 + $0x322] sm:$0xff]
        %v1575 = vld [vmem:[%s1237 + $0x32a] sm:$0xff]
        %v1576 = vld [vmem:[%s1237 + $0x332] sm:$0xff]
        %v1577 = vld [vmem:[%s1237 + $0x33a] sm:$0xff]
        %v1578 = vld [vmem:[%s1237 + $0x34a] sm:$0xff]
        %v1579 = vld [vmem:[%s1237 + $0x352] sm:$0xff]
        %v1580 = vld [vmem:[%s1237 + $0x35a] sm:$0xff]
        %v1581 = vld [vmem:[%s1237 + $0x362] sm:$0xff]
        %v1582 = vld [vmem:[%s1237 + $0x372] sm:$0xff]
        %v1583 = vld [vmem:[%s1237 + $0x37a] sm:$0xff]
        %v1584 = vld [vmem:[%s1237 + $0x382] sm:$0xff]
        %v1585 = vld [vmem:[%s1237 + $0x38a] sm:$0xff]
        %v1586 = vld [vmem:[%s1237 + $0x39a] sm:$0xff]
        %v1587 = vld [vmem:[%s1237 + $0x3a2] sm:$0xff]
        %v1588 = vld [vmem:[%s1237 + $0x3aa] sm:$0xff]
        %v1589 = vld [vmem:[%s1237 + $0x3b2] sm:$0xff]
        %v1590 = vld [vmem:[%s1237 + $0x3c2] sm:$0xff]
        %v1591 = vld [vmem:[%s1237 + $0x3ca] sm:$0xff]
        %v1592 = vld [vmem:[%s1237 + $0x3d2] sm:$0xff]
        %v1593 = vld [vmem:[%s1237 + $0x3da] sm:$0xff]
        %v1594 = vld [vmem:[%s1237 + $0x3ea] sm:$0xff]
        %v1595 = vld [vmem:[%s1237 + $0x3f2] sm:$0xff]
        %v1596 = vld [vmem:[%s1237 + $0x3fa] sm:$0xff]
        %v1597 = vld [vmem:[%s1237 + $0x402] sm:$0xff]
        %v1598 = vld [vmem:[%s1237 + $0x412] sm:$0xff]
        %v1599 = vld [vmem:[%s1237 + $0x41a] sm:$0xff]
        %v1600 = vld [vmem:[%s1237 + $0x422] sm:$0xff]
        %v1601 = vld [vmem:[%s1237 + $0x42a] sm:$0xff]
        %v1602 = vld [vmem:[%s1237 + $0x43a] sm:$0xff]
        %v1603 = vld [vmem:[%s1237 + $0x442] sm:$0xff]
        %v1604 = vld [vmem:[%s1237 + $0x44a] sm:$0xff]
        %v1605 = vld [vmem:[%s1237 + $0x452] sm:$0xff]
        %v1606 = vld [vmem:[%s1237 + $0x462] sm:$0xff]
        %v1607 = vld [vmem:[%s1237 + $0x46a] sm:$0xff]
        %v1608 = vld [vmem:[%s1237 + $0x472] sm:$0xff]
        %v1609 = vld [vmem:[%s1237 + $0x47a] sm:$0xff]
        %v1610 = vld [vmem:[%s1237 + $0x48a] sm:$0xff]
        %v1611 = vld [vmem:[%s1237 + $0x492] sm:$0xff]
        %v1612 = vld [vmem:[%s1237 + $0x49a] sm:$0xff]
        %v1613 = vld [vmem:[%s1237 + $0x4a2] sm:$0xff]
        %v1614 = vld [vmem:[%s1237 + $0x4b2] sm:$0xff]
        %v1615 = vld [vmem:[%s1237 + $0x4ba] sm:$0xff]
        %v1616 = vld [vmem:[%s1237 + $0x4c2] sm:$0xff]
        %v1617 = vld [vmem:[%s1237 + $0x4ca] sm:$0xff]
        %v1618 = vld [vmem:[%s1237 + $0x4da] sm:$0xff]
        %v1619 = vld [vmem:[%s1237 + $0x4e2] sm:$0xff]
        %v1620 = vld [vmem:[%s1237 + $0x4ea] sm:$0xff]
        %v1621 = vld [vmem:[%s1237 + $0x4f2] sm:$0xff]
        %v1622 = vld [vmem:[%s1237 + $0x3] sm:$0xff]
        %v1623 = vld [vmem:[%s1237 + $0xb] sm:$0xff]
        %v1624 = vld [vmem:[%s1237 + $0x13] sm:$0xff]
        %v1625 = vld [vmem:[%s1237 + $0x1b] sm:$0xff]
        %v1626 = vld [vmem:[%s1237 + $0x2b] sm:$0xff]
        %v1627 = vld [vmem:[%s1237 + $0x33] sm:$0xff]
        %v1628 = vld [vmem:[%s1237 + $0x3b] sm:$0xff]
        %v1629 = vld [vmem:[%s1237 + $0x43] sm:$0xff]
        %v1630 = vld [vmem:[%s1237 + $0x53] sm:$0xff]
        %v1631 = vld [vmem:[%s1237 + $0x5b] sm:$0xff]
        %v1632 = vld [vmem:[%s1237 + $0x63] sm:$0xff]
        %v1633 = vld [vmem:[%s1237 + $0x6b] sm:$0xff]
        %v1634 = vld [vmem:[%s1237 + $0x7b] sm:$0xff]
        %v1635 = vld [vmem:[%s1237 + $0x83] sm:$0xff]
        %v1636 = vld [vmem:[%s1237 + $0x8b] sm:$0xff]
        %v1637 = vld [vmem:[%s1237 + $0x93] sm:$0xff]
        %v1638 = vld [vmem:[%s1237 + $0xa3] sm:$0xff]
        %v1639 = vld [vmem:[%s1237 + $0xab] sm:$0xff]
        %v1640 = vld [vmem:[%s1237 + $0xb3] sm:$0xff]
        %v1641 = vld [vmem:[%s1237 + $0xbb] sm:$0xff]
        %v1642 = vld [vmem:[%s1237 + $0xcb] sm:$0xff]
        %v1643 = vld [vmem:[%s1237 + $0xd3] sm:$0xff]
        %v1644 = vld [vmem:[%s1237 + $0xdb] sm:$0xff]
        %v1645 = vld [vmem:[%s1237 + $0xe3] sm:$0xff]
        %v1646 = vld [vmem:[%s1237 + $0xf3] sm:$0xff]
        %v1647 = vld [vmem:[%s1237 + $0xfb] sm:$0xff]
        %v1648 = vld [vmem:[%s1237 + $0x103] sm:$0xff]
        %v1649 = vld [vmem:[%s1237 + $0x10b] sm:$0xff]
        %v1650 = vld [vmem:[%s1237 + $0x11b] sm:$0xff]
        %v1651 = vld [vmem:[%s1237 + $0x123] sm:$0xff]
        %v1652 = vld [vmem:[%s1237 + $0x12b] sm:$0xff]
        %v1653 = vld [vmem:[%s1237 + $0x133] sm:$0xff]
        %v1654 = vld [vmem:[%s1237 + $0x143] sm:$0xff]
        %v1655 = vld [vmem:[%s1237 + $0x14b] sm:$0xff]
        %v1656 = vld [vmem:[%s1237 + $0x153] sm:$0xff]
        %v1657 = vld [vmem:[%s1237 + $0x15b] sm:$0xff]
        %v1658 = vld [vmem:[%s1237 + $0x16b] sm:$0xff]
        %v1659 = vld [vmem:[%s1237 + $0x173] sm:$0xff]
        %v1660 = vld [vmem:[%s1237 + $0x17b] sm:$0xff]
        %v1661 = vld [vmem:[%s1237 + $0x183] sm:$0xff]
        %v1662 = vld [vmem:[%s1237 + $0x193] sm:$0xff]
        %v1663 = vld [vmem:[%s1237 + $0x19b] sm:$0xff]
        %v1664 = vld [vmem:[%s1237 + $0x1a3] sm:$0xff]
        %v1665 = vld [vmem:[%s1237 + $0x1ab] sm:$0xff]
        %v1666 = vld [vmem:[%s1237 + $0x1bb] sm:$0xff]
        %v1667 = vld [vmem:[%s1237 + $0x1c3] sm:$0xff]
        %v1668 = vld [vmem:[%s1237 + $0x1cb] sm:$0xff]
        %v1669 = vld [vmem:[%s1237 + $0x1d3] sm:$0xff]
        %v1670 = vld [vmem:[%s1237 + $0x1e3] sm:$0xff]
        %v1671 = vld [vmem:[%s1237 + $0x1eb] sm:$0xff]
        %v1672 = vld [vmem:[%s1237 + $0x1f3] sm:$0xff]
        %v1673 = vld [vmem:[%s1237 + $0x1fb] sm:$0xff]
        %v1674 = vld [vmem:[%s1237 + $0x20b] sm:$0xff]
        %v1675 = vld [vmem:[%s1237 + $0x213] sm:$0xff]
        %v1676 = vld [vmem:[%s1237 + $0x21b] sm:$0xff]
        %v1677 = vld [vmem:[%s1237 + $0x223] sm:$0xff]
        %v1678 = vld [vmem:[%s1237 + $0x233] sm:$0xff]
        %v1679 = vld [vmem:[%s1237 + $0x23b] sm:$0xff]
        %v1680 = vld [vmem:[%s1237 + $0x243] sm:$0xff]
        %v1681 = vld [vmem:[%s1237 + $0x24b] sm:$0xff]
        %v1682 = vld [vmem:[%s1237 + $0x25b] sm:$0xff]
        %v1683 = vld [vmem:[%s1237 + $0x263] sm:$0xff]
        %v1684 = vld [vmem:[%s1237 + $0x26b] sm:$0xff]
        %v1685 = vld [vmem:[%s1237 + $0x273] sm:$0xff]
        %v1686 = vld [vmem:[%s1237 + $0x283] sm:$0xff]
        %v1687 = vld [vmem:[%s1237 + $0x28b] sm:$0xff]
        %v1688 = vld [vmem:[%s1237 + $0x293] sm:$0xff]
        %v1689 = vld [vmem:[%s1237 + $0x29b] sm:$0xff]
        %v1690 = vld [vmem:[%s1237 + $0x2ab] sm:$0xff]
        %v1691 = vld [vmem:[%s1237 + $0x2b3] sm:$0xff]
        %v1692 = vld [vmem:[%s1237 + $0x2bb] sm:$0xff]
        %v1693 = vld [vmem:[%s1237 + $0x2c3] sm:$0xff]
        %v1694 = vld [vmem:[%s1237 + $0x2d3] sm:$0xff]
        %v1695 = vld [vmem:[%s1237 + $0x2db] sm:$0xff]
        %v1696 = vld [vmem:[%s1237 + $0x2e3] sm:$0xff]
        %v1697 = vld [vmem:[%s1237 + $0x2eb] sm:$0xff]
        %v1698 = vld [vmem:[%s1237 + $0x2fb] sm:$0xff]
        %v1699 = vld [vmem:[%s1237 + $0x303] sm:$0xff]
        %v1700 = vld [vmem:[%s1237 + $0x30b] sm:$0xff]
        %v1701 = vld [vmem:[%s1237 + $0x313] sm:$0xff]
        %v1702 = vld [vmem:[%s1237 + $0x323] sm:$0xff]
        %v1703 = vld [vmem:[%s1237 + $0x32b] sm:$0xff]
        %v1704 = vld [vmem:[%s1237 + $0x333] sm:$0xff]
        %v1705 = vld [vmem:[%s1237 + $0x33b] sm:$0xff]
        %v1706 = vld [vmem:[%s1237 + $0x34b] sm:$0xff]
        %v1707 = vld [vmem:[%s1237 + $0x353] sm:$0xff]
        %v1708 = vld [vmem:[%s1237 + $0x35b] sm:$0xff]
        %v1709 = vld [vmem:[%s1237 + $0x363] sm:$0xff]
        %v1710 = vld [vmem:[%s1237 + $0x373] sm:$0xff]
        %v1711 = vld [vmem:[%s1237 + $0x37b] sm:$0xff]
        %v1712 = vld [vmem:[%s1237 + $0x383] sm:$0xff]
        %v1713 = vld [vmem:[%s1237 + $0x38b] sm:$0xff]
        %v1714 = vld [vmem:[%s1237 + $0x39b] sm:$0xff]
        %v1715 = vld [vmem:[%s1237 + $0x3a3] sm:$0xff]
        %v1716 = vld [vmem:[%s1237 + $0x3ab] sm:$0xff]
        %v1717 = vld [vmem:[%s1237 + $0x3b3] sm:$0xff]
        %v1718 = vld [vmem:[%s1237 + $0x3c3] sm:$0xff]
        %v1719 = vld [vmem:[%s1237 + $0x3cb] sm:$0xff]
        %v1720 = vld [vmem:[%s1237 + $0x3d3] sm:$0xff]
        %v1721 = vld [vmem:[%s1237 + $0x3db] sm:$0xff]
        %v1722 = vld [vmem:[%s1237 + $0x3eb] sm:$0xff]
        %v1723 = vld [vmem:[%s1237 + $0x3f3] sm:$0xff]
        %v1724 = vld [vmem:[%s1237 + $0x3fb] sm:$0xff]
        %v1725 = vld [vmem:[%s1237 + $0x403] sm:$0xff]
        %v1726 = vld [vmem:[%s1237 + $0x413] sm:$0xff]
        %v1727 = vld [vmem:[%s1237 + $0x41b] sm:$0xff]
        %v1728 = vld [vmem:[%s1237 + $0x423] sm:$0xff]
        %v1729 = vld [vmem:[%s1237 + $0x42b] sm:$0xff]
        %v1730 = vld [vmem:[%s1237 + $0x43b] sm:$0xff]
        %v1731 = vld [vmem:[%s1237 + $0x443] sm:$0xff]
        %v1732 = vld [vmem:[%s1237 + $0x44b] sm:$0xff]
        %v1733 = vld [vmem:[%s1237 + $0x453] sm:$0xff]
        %v1734 = vld [vmem:[%s1237 + $0x463] sm:$0xff]
        %v1735 = vld [vmem:[%s1237 + $0x46b] sm:$0xff]
        %v1736 = vld [vmem:[%s1237 + $0x473] sm:$0xff]
        %v1737 = vld [vmem:[%s1237 + $0x47b] sm:$0xff]
        %v1738 = vld [vmem:[%s1237 + $0x48b] sm:$0xff]
        %v1739 = vld [vmem:[%s1237 + $0x493] sm:$0xff]
        %v1740 = vld [vmem:[%s1237 + $0x49b] sm:$0xff]
        %v1741 = vld [vmem:[%s1237 + $0x4a3] sm:$0xff]
        %v1742 = vld [vmem:[%s1237 + $0x4b3] sm:$0xff]
        %v1743 = vld [vmem:[%s1237 + $0x4bb] sm:$0xff]
        %v1744 = vld [vmem:[%s1237 + $0x4c3] sm:$0xff]
        %v1745 = vld [vmem:[%s1237 + $0x4cb] sm:$0xff]
        %v1746 = vld [vmem:[%s1237 + $0x4db] sm:$0xff]
        %v1747 = vld [vmem:[%s1237 + $0x4e3] sm:$0xff]
        %v1748 = vld [vmem:[%s1237 + $0x4eb] sm:$0xff]
        %v1749 = vld [vmem:[%s1237 + $0x4f3] sm:$0xff]
        %s1750 = scalar_lea.vmem %s211, 120
        %v1751 = vld [vmem:[%s1750] sm:$0xff]
        %v1752 = vld [vmem:[%s1750 + $0x8] sm:$0xff]
        %v1753 = vld [vmem:[%s1750 + $0x10] sm:$0xff]
        %v1754 = vld [vmem:[%s1750 + $0x18] sm:$0xff]
        %v1755 = vld [vmem:[%s1750 + $0x28] sm:$0xff]
        %v1756 = vld [vmem:[%s1750 + $0x30] sm:$0xff]
        %v1757 = vld [vmem:[%s1750 + $0x38] sm:$0xff]
        %v1758 = vld [vmem:[%s1750 + $0x40] sm:$0xff]
        %v1759 = vld [vmem:[%s1750 + $0x50] sm:$0xff]
        %v1760 = vld [vmem:[%s1750 + $0x58] sm:$0xff]
        %v1761 = vld [vmem:[%s1750 + $0x60] sm:$0xff]
        %v1762 = vld [vmem:[%s1750 + $0x68] sm:$0xff]
        %v1763 = vld [vmem:[%s1750 + $0x78] sm:$0xff]
        %v1764 = vld [vmem:[%s1750 + $0x80] sm:$0xff]
        %v1765 = vld [vmem:[%s1750 + $0x88] sm:$0xff]
        %v1766 = vld [vmem:[%s1750 + $0x90] sm:$0xff]
        %v1767 = vld [vmem:[%s1750 + $0xa0] sm:$0xff]
        %v1768 = vld [vmem:[%s1750 + $0xa8] sm:$0xff]
        %v1769 = vld [vmem:[%s1750 + $0xb0] sm:$0xff]
        %v1770 = vld [vmem:[%s1750 + $0xb8] sm:$0xff]
        %v1771 = vld [vmem:[%s1750 + $0xc8] sm:$0xff]
        %v1772 = vld [vmem:[%s1750 + $0xd0] sm:$0xff]
        %v1773 = vld [vmem:[%s1750 + $0xd8] sm:$0xff]
        %v1774 = vld [vmem:[%s1750 + $0xe0] sm:$0xff]
        %v1775 = vld [vmem:[%s1750 + $0xf0] sm:$0xff]
        %v1776 = vld [vmem:[%s1750 + $0xf8] sm:$0xff]
        %v1777 = vld [vmem:[%s1750 + $0x100] sm:$0xff]
        %v1778 = vld [vmem:[%s1750 + $0x108] sm:$0xff]
        %v1779 = vld [vmem:[%s1750 + $0x118] sm:$0xff]
        %v1780 = vld [vmem:[%s1750 + $0x120] sm:$0xff]
        %v1781 = vld [vmem:[%s1750 + $0x128] sm:$0xff]
        %v1782 = vld [vmem:[%s1750 + $0x130] sm:$0xff]
        %v1783 = vld [vmem:[%s1750 + $0x140] sm:$0xff]
        %v1784 = vld [vmem:[%s1750 + $0x148] sm:$0xff]
        %v1785 = vld [vmem:[%s1750 + $0x150] sm:$0xff]
        %v1786 = vld [vmem:[%s1750 + $0x158] sm:$0xff]
        %v1787 = vld [vmem:[%s1750 + $0x168] sm:$0xff]
        %v1788 = vld [vmem:[%s1750 + $0x170] sm:$0xff]
        %v1789 = vld [vmem:[%s1750 + $0x178] sm:$0xff]
        %v1790 = vld [vmem:[%s1750 + $0x180] sm:$0xff]
        %v1791 = vld [vmem:[%s1750 + $0x190] sm:$0xff]
        %v1792 = vld [vmem:[%s1750 + $0x198] sm:$0xff]
        %v1793 = vld [vmem:[%s1750 + $0x1a0] sm:$0xff]
        %v1794 = vld [vmem:[%s1750 + $0x1a8] sm:$0xff]
        %v1795 = vld [vmem:[%s1750 + $0x1b8] sm:$0xff]
        %v1796 = vld [vmem:[%s1750 + $0x1c0] sm:$0xff]
        %v1797 = vld [vmem:[%s1750 + $0x1c8] sm:$0xff]
        %v1798 = vld [vmem:[%s1750 + $0x1d0] sm:$0xff]
        %v1799 = vld [vmem:[%s1750 + $0x1e0] sm:$0xff]
        %v1800 = vld [vmem:[%s1750 + $0x1e8] sm:$0xff]
        %v1801 = vld [vmem:[%s1750 + $0x1f0] sm:$0xff]
        %v1802 = vld [vmem:[%s1750 + $0x1f8] sm:$0xff]
        %v1803 = vld [vmem:[%s1750 + $0x208] sm:$0xff]
        %v1804 = vld [vmem:[%s1750 + $0x210] sm:$0xff]
        %v1805 = vld [vmem:[%s1750 + $0x218] sm:$0xff]
        %v1806 = vld [vmem:[%s1750 + $0x220] sm:$0xff]
        %v1807 = vld [vmem:[%s1750 + $0x230] sm:$0xff]
        %v1808 = vld [vmem:[%s1750 + $0x238] sm:$0xff]
        %v1809 = vld [vmem:[%s1750 + $0x240] sm:$0xff]
        %v1810 = vld [vmem:[%s1750 + $0x248] sm:$0xff]
        %v1811 = vld [vmem:[%s1750 + $0x258] sm:$0xff]
        %v1812 = vld [vmem:[%s1750 + $0x260] sm:$0xff]
        %v1813 = vld [vmem:[%s1750 + $0x268] sm:$0xff]
        %v1814 = vld [vmem:[%s1750 + $0x270] sm:$0xff]
        %v1815 = vld [vmem:[%s1750 + $0x280] sm:$0xff]
        %v1816 = vld [vmem:[%s1750 + $0x288] sm:$0xff]
        %v1817 = vld [vmem:[%s1750 + $0x290] sm:$0xff]
        %v1818 = vld [vmem:[%s1750 + $0x298] sm:$0xff]
        %v1819 = vld [vmem:[%s1750 + $0x2a8] sm:$0xff]
        %v1820 = vld [vmem:[%s1750 + $0x2b0] sm:$0xff]
        %v1821 = vld [vmem:[%s1750 + $0x2b8] sm:$0xff]
        %v1822 = vld [vmem:[%s1750 + $0x2c0] sm:$0xff]
        %v1823 = vld [vmem:[%s1750 + $0x2d0] sm:$0xff]
        %v1824 = vld [vmem:[%s1750 + $0x2d8] sm:$0xff]
        %v1825 = vld [vmem:[%s1750 + $0x2e0] sm:$0xff]
        %v1826 = vld [vmem:[%s1750 + $0x2e8] sm:$0xff]
        %v1827 = vld [vmem:[%s1750 + $0x2f8] sm:$0xff]
        %v1828 = vld [vmem:[%s1750 + $0x300] sm:$0xff]
        %v1829 = vld [vmem:[%s1750 + $0x308] sm:$0xff]
        %v1830 = vld [vmem:[%s1750 + $0x310] sm:$0xff]
        %v1831 = vld [vmem:[%s1750 + $0x320] sm:$0xff]
        %v1832 = vld [vmem:[%s1750 + $0x328] sm:$0xff]
        %v1833 = vld [vmem:[%s1750 + $0x330] sm:$0xff]
        %v1834 = vld [vmem:[%s1750 + $0x338] sm:$0xff]
        %v1835 = vld [vmem:[%s1750 + $0x348] sm:$0xff]
        %v1836 = vld [vmem:[%s1750 + $0x350] sm:$0xff]
        %v1837 = vld [vmem:[%s1750 + $0x358] sm:$0xff]
        %v1838 = vld [vmem:[%s1750 + $0x360] sm:$0xff]
        %v1839 = vld [vmem:[%s1750 + $0x370] sm:$0xff]
        %v1840 = vld [vmem:[%s1750 + $0x378] sm:$0xff]
        %v1841 = vld [vmem:[%s1750 + $0x380] sm:$0xff]
        %v1842 = vld [vmem:[%s1750 + $0x388] sm:$0xff]
        %v1843 = vld [vmem:[%s1750 + $0x398] sm:$0xff]
        %v1844 = vld [vmem:[%s1750 + $0x3a0] sm:$0xff]
        %v1845 = vld [vmem:[%s1750 + $0x3a8] sm:$0xff]
        %v1846 = vld [vmem:[%s1750 + $0x3b0] sm:$0xff]
        %v1847 = vld [vmem:[%s1750 + $0x3c0] sm:$0xff]
        %v1848 = vld [vmem:[%s1750 + $0x3c8] sm:$0xff]
        %v1849 = vld [vmem:[%s1750 + $0x3d0] sm:$0xff]
        %v1850 = vld [vmem:[%s1750 + $0x3d8] sm:$0xff]
        %v1851 = vld [vmem:[%s1750 + $0x3e8] sm:$0xff]
        %v1852 = vld [vmem:[%s1750 + $0x3f0] sm:$0xff]
        %v1853 = vld [vmem:[%s1750 + $0x3f8] sm:$0xff]
        %v1854 = vld [vmem:[%s1750 + $0x400] sm:$0xff]
        %v1855 = vld [vmem:[%s1750 + $0x410] sm:$0xff]
        %v1856 = vld [vmem:[%s1750 + $0x418] sm:$0xff]
        %v1857 = vld [vmem:[%s1750 + $0x420] sm:$0xff]
        %v1858 = vld [vmem:[%s1750 + $0x428] sm:$0xff]
        %v1859 = vld [vmem:[%s1750 + $0x438] sm:$0xff]
        %v1860 = vld [vmem:[%s1750 + $0x440] sm:$0xff]
        %v1861 = vld [vmem:[%s1750 + $0x448] sm:$0xff]
        %v1862 = vld [vmem:[%s1750 + $0x450] sm:$0xff]
        %v1863 = vld [vmem:[%s1750 + $0x460] sm:$0xff]
        %v1864 = vld [vmem:[%s1750 + $0x468] sm:$0xff]
        %v1865 = vld [vmem:[%s1750 + $0x470] sm:$0xff]
        %v1866 = vld [vmem:[%s1750 + $0x478] sm:$0xff]
        %v1867 = vld [vmem:[%s1750 + $0x488] sm:$0xff]
        %v1868 = vld [vmem:[%s1750 + $0x490] sm:$0xff]
        %v1869 = vld [vmem:[%s1750 + $0x498] sm:$0xff]
        %v1870 = vld [vmem:[%s1750 + $0x4a0] sm:$0xff]
        %v1871 = vld [vmem:[%s1750 + $0x4b0] sm:$0xff]
        %v1872 = vld [vmem:[%s1750 + $0x4b8] sm:$0xff]
        %v1873 = vld [vmem:[%s1750 + $0x4c0] sm:$0xff]
        %v1874 = vld [vmem:[%s1750 + $0x4c8] sm:$0xff]
        %v1875 = vld [vmem:[%s1750 + $0x4d8] sm:$0xff]
        %v1876 = vld [vmem:[%s1750 + $0x4e0] sm:$0xff]
        %v1877 = vld [vmem:[%s1750 + $0x4e8] sm:$0xff]
        %v1878 = vld [vmem:[%s1750 + $0x4f0] sm:$0xff]
        %v1879 = vld [vmem:[%s1750 + $0x1] sm:$0xff]
        %v1880 = vld [vmem:[%s1750 + $0x9] sm:$0xff]
        %v1881 = vld [vmem:[%s1750 + $0x11] sm:$0xff]
        %v1882 = vld [vmem:[%s1750 + $0x19] sm:$0xff]
        %v1883 = vld [vmem:[%s1750 + $0x29] sm:$0xff]
        %v1884 = vld [vmem:[%s1750 + $0x31] sm:$0xff]
        %v1885 = vld [vmem:[%s1750 + $0x39] sm:$0xff]
        %v1886 = vld [vmem:[%s1750 + $0x41] sm:$0xff]
        %v1887 = vld [vmem:[%s1750 + $0x51] sm:$0xff]
        %v1888 = vld [vmem:[%s1750 + $0x59] sm:$0xff]
        %v1889 = vld [vmem:[%s1750 + $0x61] sm:$0xff]
        %v1890 = vld [vmem:[%s1750 + $0x69] sm:$0xff]
        %v1891 = vld [vmem:[%s1750 + $0x79] sm:$0xff]
        %v1892 = vld [vmem:[%s1750 + $0x81] sm:$0xff]
        %v1893 = vld [vmem:[%s1750 + $0x89] sm:$0xff]
        %v1894 = vld [vmem:[%s1750 + $0x91] sm:$0xff]
        %v1895 = vld [vmem:[%s1750 + $0xa1] sm:$0xff]
        %v1896 = vld [vmem:[%s1750 + $0xa9] sm:$0xff]
        %v1897 = vld [vmem:[%s1750 + $0xb1] sm:$0xff]
        %v1898 = vld [vmem:[%s1750 + $0xb9] sm:$0xff]
        %v1899 = vld [vmem:[%s1750 + $0xc9] sm:$0xff]
        %v1900 = vld [vmem:[%s1750 + $0xd1] sm:$0xff]
        %v1901 = vld [vmem:[%s1750 + $0xd9] sm:$0xff]
        %v1902 = vld [vmem:[%s1750 + $0xe1] sm:$0xff]
        %v1903 = vld [vmem:[%s1750 + $0xf1] sm:$0xff]
        %v1904 = vld [vmem:[%s1750 + $0xf9] sm:$0xff]
        %v1905 = vld [vmem:[%s1750 + $0x101] sm:$0xff]
        %v1906 = vld [vmem:[%s1750 + $0x109] sm:$0xff]
        %v1907 = vld [vmem:[%s1750 + $0x119] sm:$0xff]
        %v1908 = vld [vmem:[%s1750 + $0x121] sm:$0xff]
        %v1909 = vld [vmem:[%s1750 + $0x129] sm:$0xff]
        %v1910 = vld [vmem:[%s1750 + $0x131] sm:$0xff]
        %v1911 = vld [vmem:[%s1750 + $0x141] sm:$0xff]
        %v1912 = vld [vmem:[%s1750 + $0x149] sm:$0xff]
        %v1913 = vld [vmem:[%s1750 + $0x151] sm:$0xff]
        %v1914 = vld [vmem:[%s1750 + $0x159] sm:$0xff]
        %v1915 = vld [vmem:[%s1750 + $0x169] sm:$0xff]
        %v1916 = vld [vmem:[%s1750 + $0x171] sm:$0xff]
        %v1917 = vld [vmem:[%s1750 + $0x179] sm:$0xff]
        %v1918 = vld [vmem:[%s1750 + $0x181] sm:$0xff]
        %v1919 = vld [vmem:[%s1750 + $0x191] sm:$0xff]
        %v1920 = vld [vmem:[%s1750 + $0x199] sm:$0xff]
        %v1921 = vld [vmem:[%s1750 + $0x1a1] sm:$0xff]
        %v1922 = vld [vmem:[%s1750 + $0x1a9] sm:$0xff]
        %v1923 = vld [vmem:[%s1750 + $0x1b9] sm:$0xff]
        %v1924 = vld [vmem:[%s1750 + $0x1c1] sm:$0xff]
        %v1925 = vld [vmem:[%s1750 + $0x1c9] sm:$0xff]
        %v1926 = vld [vmem:[%s1750 + $0x1d1] sm:$0xff]
        %v1927 = vld [vmem:[%s1750 + $0x1e1] sm:$0xff]
        %v1928 = vld [vmem:[%s1750 + $0x1e9] sm:$0xff]
        %v1929 = vld [vmem:[%s1750 + $0x1f1] sm:$0xff]
        %v1930 = vld [vmem:[%s1750 + $0x1f9] sm:$0xff]
        %v1931 = vld [vmem:[%s1750 + $0x209] sm:$0xff]
        %v1932 = vld [vmem:[%s1750 + $0x211] sm:$0xff]
        %v1933 = vld [vmem:[%s1750 + $0x219] sm:$0xff]
        %v1934 = vld [vmem:[%s1750 + $0x221] sm:$0xff]
        %v1935 = vld [vmem:[%s1750 + $0x231] sm:$0xff]
        %v1936 = vld [vmem:[%s1750 + $0x239] sm:$0xff]
        %v1937 = vld [vmem:[%s1750 + $0x241] sm:$0xff]
        %v1938 = vld [vmem:[%s1750 + $0x249] sm:$0xff]
        %v1939 = vld [vmem:[%s1750 + $0x259] sm:$0xff]
        %v1940 = vld [vmem:[%s1750 + $0x261] sm:$0xff]
        %v1941 = vld [vmem:[%s1750 + $0x269] sm:$0xff]
        %v1942 = vld [vmem:[%s1750 + $0x271] sm:$0xff]
        %v1943 = vld [vmem:[%s1750 + $0x281] sm:$0xff]
        %v1944 = vld [vmem:[%s1750 + $0x289] sm:$0xff]
        %v1945 = vld [vmem:[%s1750 + $0x291] sm:$0xff]
        %v1946 = vld [vmem:[%s1750 + $0x299] sm:$0xff]
        %v1947 = vld [vmem:[%s1750 + $0x2a9] sm:$0xff]
        %v1948 = vld [vmem:[%s1750 + $0x2b1] sm:$0xff]
        %v1949 = vld [vmem:[%s1750 + $0x2b9] sm:$0xff]
        %v1950 = vld [vmem:[%s1750 + $0x2c1] sm:$0xff]
        %v1951 = vld [vmem:[%s1750 + $0x2d1] sm:$0xff]
        %v1952 = vld [vmem:[%s1750 + $0x2d9] sm:$0xff]
        %v1953 = vld [vmem:[%s1750 + $0x2e1] sm:$0xff]
        %v1954 = vld [vmem:[%s1750 + $0x2e9] sm:$0xff]
        %v1955 = vld [vmem:[%s1750 + $0x2f9] sm:$0xff]
        %v1956 = vld [vmem:[%s1750 + $0x301] sm:$0xff]
        %v1957 = vld [vmem:[%s1750 + $0x309] sm:$0xff]
        %v1958 = vld [vmem:[%s1750 + $0x311] sm:$0xff]
        %v1959 = vld [vmem:[%s1750 + $0x321] sm:$0xff]
        %v1960 = vld [vmem:[%s1750 + $0x329] sm:$0xff]
        %v1961 = vld [vmem:[%s1750 + $0x331] sm:$0xff]
        %v1962 = vld [vmem:[%s1750 + $0x339] sm:$0xff]
        %v1963 = vld [vmem:[%s1750 + $0x349] sm:$0xff]
        %v1964 = vld [vmem:[%s1750 + $0x351] sm:$0xff]
        %v1965 = vld [vmem:[%s1750 + $0x359] sm:$0xff]
        %v1966 = vld [vmem:[%s1750 + $0x361] sm:$0xff]
        %v1967 = vld [vmem:[%s1750 + $0x371] sm:$0xff]
        %v1968 = vld [vmem:[%s1750 + $0x379] sm:$0xff]
        %v1969 = vld [vmem:[%s1750 + $0x381] sm:$0xff]
        %v1970 = vld [vmem:[%s1750 + $0x389] sm:$0xff]
        %v1971 = vld [vmem:[%s1750 + $0x399] sm:$0xff]
        %v1972 = vld [vmem:[%s1750 + $0x3a1] sm:$0xff]
        %v1973 = vld [vmem:[%s1750 + $0x3a9] sm:$0xff]
        %v1974 = vld [vmem:[%s1750 + $0x3b1] sm:$0xff]
        %v1975 = vld [vmem:[%s1750 + $0x3c1] sm:$0xff]
        %v1976 = vld [vmem:[%s1750 + $0x3c9] sm:$0xff]
        %v1977 = vld [vmem:[%s1750 + $0x3d1] sm:$0xff]
        %v1978 = vld [vmem:[%s1750 + $0x3d9] sm:$0xff]
        %v1979 = vld [vmem:[%s1750 + $0x3e9] sm:$0xff]
        %v1980 = vld [vmem:[%s1750 + $0x3f1] sm:$0xff]
        %v1981 = vld [vmem:[%s1750 + $0x3f9] sm:$0xff]
        %v1982 = vld [vmem:[%s1750 + $0x401] sm:$0xff]
        %v1983 = vld [vmem:[%s1750 + $0x411] sm:$0xff]
        %v1984 = vld [vmem:[%s1750 + $0x419] sm:$0xff]
        %v1985 = vld [vmem:[%s1750 + $0x421] sm:$0xff]
        %v1986 = vld [vmem:[%s1750 + $0x429] sm:$0xff]
        %v1987 = vld [vmem:[%s1750 + $0x439] sm:$0xff]
        %v1988 = vld [vmem:[%s1750 + $0x441] sm:$0xff]
        %v1989 = vld [vmem:[%s1750 + $0x449] sm:$0xff]
        %v1990 = vld [vmem:[%s1750 + $0x451] sm:$0xff]
        %v1991 = vld [vmem:[%s1750 + $0x461] sm:$0xff]
        %v1992 = vld [vmem:[%s1750 + $0x469] sm:$0xff]
        %v1993 = vld [vmem:[%s1750 + $0x471] sm:$0xff]
        %v1994 = vld [vmem:[%s1750 + $0x479] sm:$0xff]
        %v1995 = vld [vmem:[%s1750 + $0x489] sm:$0xff]
        %v1996 = vld [vmem:[%s1750 + $0x491] sm:$0xff]
        %v1997 = vld [vmem:[%s1750 + $0x499] sm:$0xff]
        %v1998 = vld [vmem:[%s1750 + $0x4a1] sm:$0xff]
        %v1999 = vld [vmem:[%s1750 + $0x4b1] sm:$0xff]
        %v2000 = vld [vmem:[%s1750 + $0x4b9] sm:$0xff]
        %v2001 = vld [vmem:[%s1750 + $0x4c1] sm:$0xff]
        %v2002 = vld [vmem:[%s1750 + $0x4c9] sm:$0xff]
        %v2003 = vld [vmem:[%s1750 + $0x4d9] sm:$0xff]
        %v2004 = vld [vmem:[%s1750 + $0x4e1] sm:$0xff]
        %v2005 = vld [vmem:[%s1750 + $0x4e9] sm:$0xff]
        %v2006 = vld [vmem:[%s1750 + $0x4f1] sm:$0xff]
        %v2007 = vld [vmem:[%s1750 + $0x2] sm:$0xff]
        %v2008 = vld [vmem:[%s1750 + $0xa] sm:$0xff]
        %v2009 = vld [vmem:[%s1750 + $0x12] sm:$0xff]
        %v2010 = vld [vmem:[%s1750 + $0x1a] sm:$0xff]
        %v2011 = vld [vmem:[%s1750 + $0x2a] sm:$0xff]
        %v2012 = vld [vmem:[%s1750 + $0x32] sm:$0xff]
        %v2013 = vld [vmem:[%s1750 + $0x3a] sm:$0xff]
        %v2014 = vld [vmem:[%s1750 + $0x42] sm:$0xff]
        %v2015 = vld [vmem:[%s1750 + $0x52] sm:$0xff]
        %v2016 = vld [vmem:[%s1750 + $0x5a] sm:$0xff]
        %v2017 = vld [vmem:[%s1750 + $0x62] sm:$0xff]
        %v2018 = vld [vmem:[%s1750 + $0x6a] sm:$0xff]
        %v2019 = vld [vmem:[%s1750 + $0x7a] sm:$0xff]
        %v2020 = vld [vmem:[%s1750 + $0x82] sm:$0xff]
        %v2021 = vld [vmem:[%s1750 + $0x8a] sm:$0xff]
        %v2022 = vld [vmem:[%s1750 + $0x92] sm:$0xff]
        %v2023 = vld [vmem:[%s1750 + $0xa2] sm:$0xff]
        %v2024 = vld [vmem:[%s1750 + $0xaa] sm:$0xff]
        %v2025 = vld [vmem:[%s1750 + $0xb2] sm:$0xff]
        %v2026 = vld [vmem:[%s1750 + $0xba] sm:$0xff]
        %v2027 = vld [vmem:[%s1750 + $0xca] sm:$0xff]
        %v2028 = vld [vmem:[%s1750 + $0xd2] sm:$0xff]
        %v2029 = vld [vmem:[%s1750 + $0xda] sm:$0xff]
        %v2030 = vld [vmem:[%s1750 + $0xe2] sm:$0xff]
        %v2031 = vld [vmem:[%s1750 + $0xf2] sm:$0xff]
        %v2032 = vld [vmem:[%s1750 + $0xfa] sm:$0xff]
        %v2033 = vld [vmem:[%s1750 + $0x102] sm:$0xff]
        %v2034 = vld [vmem:[%s1750 + $0x10a] sm:$0xff]
        %v2035 = vld [vmem:[%s1750 + $0x11a] sm:$0xff]
        %v2036 = vld [vmem:[%s1750 + $0x122] sm:$0xff]
        %v2037 = vld [vmem:[%s1750 + $0x12a] sm:$0xff]
        %v2038 = vld [vmem:[%s1750 + $0x132] sm:$0xff]
        %v2039 = vld [vmem:[%s1750 + $0x142] sm:$0xff]
        %v2040 = vld [vmem:[%s1750 + $0x14a] sm:$0xff]
        %v2041 = vld [vmem:[%s1750 + $0x152] sm:$0xff]
        %v2042 = vld [vmem:[%s1750 + $0x15a] sm:$0xff]
        %v2043 = vld [vmem:[%s1750 + $0x16a] sm:$0xff]
        %v2044 = vld [vmem:[%s1750 + $0x172] sm:$0xff]
        %v2045 = vld [vmem:[%s1750 + $0x17a] sm:$0xff]
        %v2046 = vld [vmem:[%s1750 + $0x182] sm:$0xff]
        %v2047 = vld [vmem:[%s1750 + $0x192] sm:$0xff]
        %v2048 = vld [vmem:[%s1750 + $0x19a] sm:$0xff]
        %v2049 = vld [vmem:[%s1750 + $0x1a2] sm:$0xff]
        %v2050 = vld [vmem:[%s1750 + $0x1aa] sm:$0xff]
        %v2051 = vld [vmem:[%s1750 + $0x1ba] sm:$0xff]
        %v2052 = vld [vmem:[%s1750 + $0x1c2] sm:$0xff]
        %v2053 = vld [vmem:[%s1750 + $0x1ca] sm:$0xff]
        %v2054 = vld [vmem:[%s1750 + $0x1d2] sm:$0xff]
        %v2055 = vld [vmem:[%s1750 + $0x1e2] sm:$0xff]
        %v2056 = vld [vmem:[%s1750 + $0x1ea] sm:$0xff]
        %v2057 = vld [vmem:[%s1750 + $0x1f2] sm:$0xff]
        %v2058 = vld [vmem:[%s1750 + $0x1fa] sm:$0xff]
        %v2059 = vld [vmem:[%s1750 + $0x20a] sm:$0xff]
        %v2060 = vld [vmem:[%s1750 + $0x212] sm:$0xff]
        %v2061 = vld [vmem:[%s1750 + $0x21a] sm:$0xff]
        %v2062 = vld [vmem:[%s1750 + $0x222] sm:$0xff]
        %v2063 = vld [vmem:[%s1750 + $0x232] sm:$0xff]
        %v2064 = vld [vmem:[%s1750 + $0x23a] sm:$0xff]
        %v2065 = vld [vmem:[%s1750 + $0x242] sm:$0xff]
        %v2066 = vld [vmem:[%s1750 + $0x24a] sm:$0xff]
        %v2067 = vld [vmem:[%s1750 + $0x25a] sm:$0xff]
        %v2068 = vld [vmem:[%s1750 + $0x262] sm:$0xff]
        %v2069 = vld [vmem:[%s1750 + $0x26a] sm:$0xff]
        %v2070 = vld [vmem:[%s1750 + $0x272] sm:$0xff]
        %v2071 = vld [vmem:[%s1750 + $0x282] sm:$0xff]
        %v2072 = vld [vmem:[%s1750 + $0x28a] sm:$0xff]
        %v2073 = vld [vmem:[%s1750 + $0x292] sm:$0xff]
        %v2074 = vld [vmem:[%s1750 + $0x29a] sm:$0xff]
        %v2075 = vld [vmem:[%s1750 + $0x2aa] sm:$0xff]
        %v2076 = vld [vmem:[%s1750 + $0x2b2] sm:$0xff]
        %v2077 = vld [vmem:[%s1750 + $0x2ba] sm:$0xff]
        %v2078 = vld [vmem:[%s1750 + $0x2c2] sm:$0xff]
        %v2079 = vld [vmem:[%s1750 + $0x2d2] sm:$0xff]
        %v2080 = vld [vmem:[%s1750 + $0x2da] sm:$0xff]
        %v2081 = vld [vmem:[%s1750 + $0x2e2] sm:$0xff]
        %v2082 = vld [vmem:[%s1750 + $0x2ea] sm:$0xff]
        %v2083 = vld [vmem:[%s1750 + $0x2fa] sm:$0xff]
        %v2084 = vld [vmem:[%s1750 + $0x302] sm:$0xff]
        %v2085 = vld [vmem:[%s1750 + $0x30a] sm:$0xff]
        %v2086 = vld [vmem:[%s1750 + $0x312] sm:$0xff]
        %v2087 = vld [vmem:[%s1750 + $0x322] sm:$0xff]
        %v2088 = vld [vmem:[%s1750 + $0x32a] sm:$0xff]
        %v2089 = vld [vmem:[%s1750 + $0x332] sm:$0xff]
        %v2090 = vld [vmem:[%s1750 + $0x33a] sm:$0xff]
        %v2091 = vld [vmem:[%s1750 + $0x34a] sm:$0xff]
        %v2092 = vld [vmem:[%s1750 + $0x352] sm:$0xff]
        %v2093 = vld [vmem:[%s1750 + $0x35a] sm:$0xff]
        %v2094 = vld [vmem:[%s1750 + $0x362] sm:$0xff]
        %v2095 = vld [vmem:[%s1750 + $0x372] sm:$0xff]
        %v2096 = vld [vmem:[%s1750 + $0x37a] sm:$0xff]
        %v2097 = vld [vmem:[%s1750 + $0x382] sm:$0xff]
        %v2098 = vld [vmem:[%s1750 + $0x38a] sm:$0xff]
        %v2099 = vld [vmem:[%s1750 + $0x39a] sm:$0xff]
        %v2100 = vld [vmem:[%s1750 + $0x3a2] sm:$0xff]
        %v2101 = vld [vmem:[%s1750 + $0x3aa] sm:$0xff]
        %v2102 = vld [vmem:[%s1750 + $0x3b2] sm:$0xff]
        %v2103 = vld [vmem:[%s1750 + $0x3c2] sm:$0xff]
        %v2104 = vld [vmem:[%s1750 + $0x3ca] sm:$0xff]
        %v2105 = vld [vmem:[%s1750 + $0x3d2] sm:$0xff]
        %v2106 = vld [vmem:[%s1750 + $0x3da] sm:$0xff]
        %v2107 = vld [vmem:[%s1750 + $0x3ea] sm:$0xff]
        %v2108 = vld [vmem:[%s1750 + $0x3f2] sm:$0xff]
        %v2109 = vld [vmem:[%s1750 + $0x3fa] sm:$0xff]
        %v2110 = vld [vmem:[%s1750 + $0x402] sm:$0xff]
        %v2111 = vld [vmem:[%s1750 + $0x412] sm:$0xff]
        %v2112 = vld [vmem:[%s1750 + $0x41a] sm:$0xff]
        %v2113 = vld [vmem:[%s1750 + $0x422] sm:$0xff]
        %v2114 = vld [vmem:[%s1750 + $0x42a] sm:$0xff]
        %v2115 = vld [vmem:[%s1750 + $0x43a] sm:$0xff]
        %v2116 = vld [vmem:[%s1750 + $0x442] sm:$0xff]
        %v2117 = vld [vmem:[%s1750 + $0x44a] sm:$0xff]
        %v2118 = vld [vmem:[%s1750 + $0x452] sm:$0xff]
        %v2119 = vld [vmem:[%s1750 + $0x462] sm:$0xff]
        %v2120 = vld [vmem:[%s1750 + $0x46a] sm:$0xff]
        %v2121 = vld [vmem:[%s1750 + $0x472] sm:$0xff]
        %v2122 = vld [vmem:[%s1750 + $0x47a] sm:$0xff]
        %v2123 = vld [vmem:[%s1750 + $0x48a] sm:$0xff]
        %v2124 = vld [vmem:[%s1750 + $0x492] sm:$0xff]
        %v2125 = vld [vmem:[%s1750 + $0x49a] sm:$0xff]
        %v2126 = vld [vmem:[%s1750 + $0x4a2] sm:$0xff]
        %v2127 = vld [vmem:[%s1750 + $0x4b2] sm:$0xff]
        %v2128 = vld [vmem:[%s1750 + $0x4ba] sm:$0xff]
        %v2129 = vld [vmem:[%s1750 + $0x4c2] sm:$0xff]
        %v2130 = vld [vmem:[%s1750 + $0x4ca] sm:$0xff]
        %v2131 = vld [vmem:[%s1750 + $0x4da] sm:$0xff]
        %v2132 = vld [vmem:[%s1750 + $0x4e2] sm:$0xff]
        %v2133 = vld [vmem:[%s1750 + $0x4ea] sm:$0xff]
        %v2134 = vld [vmem:[%s1750 + $0x4f2] sm:$0xff]
        %v2135 = vld [vmem:[%s1750 + $0x3] sm:$0xff]
        %v2136 = vld [vmem:[%s1750 + $0xb] sm:$0xff]
        %v2137 = vld [vmem:[%s1750 + $0x13] sm:$0xff]
        %v2138 = vld [vmem:[%s1750 + $0x1b] sm:$0xff]
        %v2139 = vld [vmem:[%s1750 + $0x2b] sm:$0xff]
        %v2140 = vld [vmem:[%s1750 + $0x33] sm:$0xff]
        %v2141 = vld [vmem:[%s1750 + $0x3b] sm:$0xff]
        %v2142 = vld [vmem:[%s1750 + $0x43] sm:$0xff]
        %v2143 = vld [vmem:[%s1750 + $0x53] sm:$0xff]
        %v2144 = vld [vmem:[%s1750 + $0x5b] sm:$0xff]
        %v2145 = vld [vmem:[%s1750 + $0x63] sm:$0xff]
        %v2146 = vld [vmem:[%s1750 + $0x6b] sm:$0xff]
        %v2147 = vld [vmem:[%s1750 + $0x7b] sm:$0xff]
        %v2148 = vld [vmem:[%s1750 + $0x83] sm:$0xff]
        %v2149 = vld [vmem:[%s1750 + $0x8b] sm:$0xff]
        %v2150 = vld [vmem:[%s1750 + $0x93] sm:$0xff]
        %v2151 = vld [vmem:[%s1750 + $0xa3] sm:$0xff]
        %v2152 = vld [vmem:[%s1750 + $0xab] sm:$0xff]
        %v2153 = vld [vmem:[%s1750 + $0xb3] sm:$0xff]
        %v2154 = vld [vmem:[%s1750 + $0xbb] sm:$0xff]
        %v2155 = vld [vmem:[%s1750 + $0xcb] sm:$0xff]
        %v2156 = vld [vmem:[%s1750 + $0xd3] sm:$0xff]
        %v2157 = vld [vmem:[%s1750 + $0xdb] sm:$0xff]
        %v2158 = vld [vmem:[%s1750 + $0xe3] sm:$0xff]
        %v2159 = vld [vmem:[%s1750 + $0xf3] sm:$0xff]
        %v2160 = vld [vmem:[%s1750 + $0xfb] sm:$0xff]
        %v2161 = vld [vmem:[%s1750 + $0x103] sm:$0xff]
        %v2162 = vld [vmem:[%s1750 + $0x10b] sm:$0xff]
        %v2163 = vld [vmem:[%s1750 + $0x11b] sm:$0xff]
        %v2164 = vld [vmem:[%s1750 + $0x123] sm:$0xff]
        %v2165 = vld [vmem:[%s1750 + $0x12b] sm:$0xff]
        %v2166 = vld [vmem:[%s1750 + $0x133] sm:$0xff]
        %v2167 = vld [vmem:[%s1750 + $0x143] sm:$0xff]
        %v2168 = vld [vmem:[%s1750 + $0x14b] sm:$0xff]
        %v2169 = vld [vmem:[%s1750 + $0x153] sm:$0xff]
        %v2170 = vld [vmem:[%s1750 + $0x15b] sm:$0xff]
        %v2171 = vld [vmem:[%s1750 + $0x16b] sm:$0xff]
        %v2172 = vld [vmem:[%s1750 + $0x173] sm:$0xff]
        %v2173 = vld [vmem:[%s1750 + $0x17b] sm:$0xff]
        %v2174 = vld [vmem:[%s1750 + $0x183] sm:$0xff]
        %v2175 = vld [vmem:[%s1750 + $0x193] sm:$0xff]
        %v2176 = vld [vmem:[%s1750 + $0x19b] sm:$0xff]
        %v2177 = vld [vmem:[%s1750 + $0x1a3] sm:$0xff]
        %v2178 = vld [vmem:[%s1750 + $0x1ab] sm:$0xff]
        %v2179 = vld [vmem:[%s1750 + $0x1bb] sm:$0xff]
        %v2180 = vld [vmem:[%s1750 + $0x1c3] sm:$0xff]
        %v2181 = vld [vmem:[%s1750 + $0x1cb] sm:$0xff]
        %v2182 = vld [vmem:[%s1750 + $0x1d3] sm:$0xff]
        %v2183 = vld [vmem:[%s1750 + $0x1e3] sm:$0xff]
        %v2184 = vld [vmem:[%s1750 + $0x1eb] sm:$0xff]
        %v2185 = vld [vmem:[%s1750 + $0x1f3] sm:$0xff]
        %v2186 = vld [vmem:[%s1750 + $0x1fb] sm:$0xff]
        %v2187 = vld [vmem:[%s1750 + $0x20b] sm:$0xff]
        %v2188 = vld [vmem:[%s1750 + $0x213] sm:$0xff]
        %v2189 = vld [vmem:[%s1750 + $0x21b] sm:$0xff]
        %v2190 = vld [vmem:[%s1750 + $0x223] sm:$0xff]
        %v2191 = vld [vmem:[%s1750 + $0x233] sm:$0xff]
        %v2192 = vld [vmem:[%s1750 + $0x23b] sm:$0xff]
        %v2193 = vld [vmem:[%s1750 + $0x243] sm:$0xff]
        %v2194 = vld [vmem:[%s1750 + $0x24b] sm:$0xff]
        %v2195 = vld [vmem:[%s1750 + $0x25b] sm:$0xff]
        %v2196 = vld [vmem:[%s1750 + $0x263] sm:$0xff]
        %v2197 = vld [vmem:[%s1750 + $0x26b] sm:$0xff]
        %v2198 = vld [vmem:[%s1750 + $0x273] sm:$0xff]
        %v2199 = vld [vmem:[%s1750 + $0x283] sm:$0xff]
        %v2200 = vld [vmem:[%s1750 + $0x28b] sm:$0xff]
        %v2201 = vld [vmem:[%s1750 + $0x293] sm:$0xff]
        %v2202 = vld [vmem:[%s1750 + $0x29b] sm:$0xff]
        %v2203 = vld [vmem:[%s1750 + $0x2ab] sm:$0xff]
        %v2204 = vld [vmem:[%s1750 + $0x2b3] sm:$0xff]
        %v2205 = vld [vmem:[%s1750 + $0x2bb] sm:$0xff]
        %v2206 = vld [vmem:[%s1750 + $0x2c3] sm:$0xff]
        %v2207 = vld [vmem:[%s1750 + $0x2d3] sm:$0xff]
        %v2208 = vld [vmem:[%s1750 + $0x2db] sm:$0xff]
        %v2209 = vld [vmem:[%s1750 + $0x2e3] sm:$0xff]
        %v2210 = vld [vmem:[%s1750 + $0x2eb] sm:$0xff]
        %v2211 = vld [vmem:[%s1750 + $0x2fb] sm:$0xff]
        %v2212 = vld [vmem:[%s1750 + $0x303] sm:$0xff]
        %v2213 = vld [vmem:[%s1750 + $0x30b] sm:$0xff]
        %v2214 = vld [vmem:[%s1750 + $0x313] sm:$0xff]
        %v2215 = vld [vmem:[%s1750 + $0x323] sm:$0xff]
        %v2216 = vld [vmem:[%s1750 + $0x32b] sm:$0xff]
        %v2217 = vld [vmem:[%s1750 + $0x333] sm:$0xff]
        %v2218 = vld [vmem:[%s1750 + $0x33b] sm:$0xff]
        %v2219 = vld [vmem:[%s1750 + $0x34b] sm:$0xff]
        %v2220 = vld [vmem:[%s1750 + $0x353] sm:$0xff]
        %v2221 = vld [vmem:[%s1750 + $0x35b] sm:$0xff]
        %v2222 = vld [vmem:[%s1750 + $0x363] sm:$0xff]
        %v2223 = vld [vmem:[%s1750 + $0x373] sm:$0xff]
        %v2224 = vld [vmem:[%s1750 + $0x37b] sm:$0xff]
        %v2225 = vld [vmem:[%s1750 + $0x383] sm:$0xff]
        %v2226 = vld [vmem:[%s1750 + $0x38b] sm:$0xff]
        %v2227 = vld [vmem:[%s1750 + $0x39b] sm:$0xff]
        %v2228 = vld [vmem:[%s1750 + $0x3a3] sm:$0xff]
        %v2229 = vld [vmem:[%s1750 + $0x3ab] sm:$0xff]
        %v2230 = vld [vmem:[%s1750 + $0x3b3] sm:$0xff]
        %v2231 = vld [vmem:[%s1750 + $0x3c3] sm:$0xff]
        %v2232 = vld [vmem:[%s1750 + $0x3cb] sm:$0xff]
        %v2233 = vld [vmem:[%s1750 + $0x3d3] sm:$0xff]
        %v2234 = vld [vmem:[%s1750 + $0x3db] sm:$0xff]
        %v2235 = vld [vmem:[%s1750 + $0x3eb] sm:$0xff]
        %v2236 = vld [vmem:[%s1750 + $0x3f3] sm:$0xff]
        %v2237 = vld [vmem:[%s1750 + $0x3fb] sm:$0xff]
        %v2238 = vld [vmem:[%s1750 + $0x403] sm:$0xff]
        %v2239 = vld [vmem:[%s1750 + $0x413] sm:$0xff]
        %v2240 = vld [vmem:[%s1750 + $0x41b] sm:$0xff]
        %v2241 = vld [vmem:[%s1750 + $0x423] sm:$0xff]
        %v2242 = vld [vmem:[%s1750 + $0x42b] sm:$0xff]
        %v2243 = vld [vmem:[%s1750 + $0x43b] sm:$0xff]
        %v2244 = vld [vmem:[%s1750 + $0x443] sm:$0xff]
        %v2245 = vld [vmem:[%s1750 + $0x44b] sm:$0xff]
        %v2246 = vld [vmem:[%s1750 + $0x453] sm:$0xff]
        %v2247 = vld [vmem:[%s1750 + $0x463] sm:$0xff]
        %v2248 = vld [vmem:[%s1750 + $0x46b] sm:$0xff]
        %v2249 = vld [vmem:[%s1750 + $0x473] sm:$0xff]
        %v2250 = vld [vmem:[%s1750 + $0x47b] sm:$0xff]
        %v2251 = vld [vmem:[%s1750 + $0x48b] sm:$0xff]
        %v2252 = vld [vmem:[%s1750 + $0x493] sm:$0xff]
        %v2253 = vld [vmem:[%s1750 + $0x49b] sm:$0xff]
        %v2254 = vld [vmem:[%s1750 + $0x4a3] sm:$0xff]
        %v2255 = vld [vmem:[%s1750 + $0x4b3] sm:$0xff]
        %v2256 = vld [vmem:[%s1750 + $0x4bb] sm:$0xff]
        %v2257 = vld [vmem:[%s1750 + $0x4c3] sm:$0xff]
        %v2258 = vld [vmem:[%s1750 + $0x4cb] sm:$0xff]
        %v2259 = vld [vmem:[%s1750 + $0x4db] sm:$0xff]
        %v2260 = vld [vmem:[%s1750 + $0x4e3] sm:$0xff]
        %v2261 = vld [vmem:[%s1750 + $0x4eb] sm:$0xff]
        %v2262 = vld [vmem:[%s1750 + $0x4f3] sm:$0xff]
        %2391 = vrot.lane.b32.xlu0 %v340, 4
        %v2392 = vpop.permute.xlu0 %2391
        %2393 = vrot.lane.b32.xlu0 %v341, 4
        %v2394 = vpop.permute.xlu0 %2393
        %2395 = vrot.lane.b32.xlu0 %v342, 4
        %v2396 = vpop.permute.xlu0 %2395
        %2397 = vrot.lane.b32.xlu0 %v343, 4
        %v2398 = vpop.permute.xlu0 %2397
        %2399 = vrot.lane.b32.xlu0 %v344, 4
        %v2400 = vpop.permute.xlu0 %2399
        %2401 = vrot.lane.b32.xlu0 %v345, 4
        %v2402 = vpop.permute.xlu0 %2401
        %2403 = vrot.lane.b32.xlu0 %v346, 4
        %v2404 = vpop.permute.xlu0 %2403
        %2405 = vrot.lane.b32.xlu0 %v347, 4
        %v2406 = vpop.permute.xlu0 %2405
        %2407 = vrot.lane.b32.xlu0 %v348, 4
        %v2408 = vpop.permute.xlu0 %2407
        %2409 = vrot.lane.b32.xlu0 %v349, 4
        %v2410 = vpop.permute.xlu0 %2409
        %2411 = vrot.lane.b32.xlu0 %v350, 4
        %v2412 = vpop.permute.xlu0 %2411
        %2413 = vrot.lane.b32.xlu0 %v351, 4
        %v2414 = vpop.permute.xlu0 %2413
        %2415 = vrot.lane.b32.xlu0 %v352, 4
        %v2416 = vpop.permute.xlu0 %2415
        %2417 = vrot.lane.b32.xlu0 %v353, 4
        %v2418 = vpop.permute.xlu0 %2417
        %2419 = vrot.lane.b32.xlu0 %v354, 4
        %v2420 = vpop.permute.xlu0 %2419
        %2421 = vrot.lane.b32.xlu0 %v355, 4
        %v2422 = vpop.permute.xlu0 %2421
        %2423 = vrot.lane.b32.xlu0 %v356, 4
        %v2424 = vpop.permute.xlu0 %2423
        %2425 = vrot.lane.b32.xlu0 %v357, 4
        %v2426 = vpop.permute.xlu0 %2425
        %2427 = vrot.lane.b32.xlu0 %v358, 4
        %v2428 = vpop.permute.xlu0 %2427
        %2429 = vrot.lane.b32.xlu0 %v359, 4
        %v2430 = vpop.permute.xlu0 %2429
        %2431 = vrot.lane.b32.xlu0 %v360, 4
        %v2432 = vpop.permute.xlu0 %2431
        %2433 = vrot.lane.b32.xlu0 %v361, 4
        %v2434 = vpop.permute.xlu0 %2433
        %2435 = vrot.lane.b32.xlu0 %v362, 4
        %v2436 = vpop.permute.xlu0 %2435
        %2437 = vrot.lane.b32.xlu0 %v363, 4
        %v2438 = vpop.permute.xlu0 %2437
        %2439 = vrot.lane.b32.xlu0 %v364, 4
        %v2440 = vpop.permute.xlu0 %2439
        %2441 = vrot.lane.b32.xlu0 %v365, 4
        %v2442 = vpop.permute.xlu0 %2441
        %2443 = vrot.lane.b32.xlu0 %v366, 4
        %v2444 = vpop.permute.xlu0 %2443
        %2445 = vrot.lane.b32.xlu0 %v367, 4
        %v2446 = vpop.permute.xlu0 %2445
        %2447 = vrot.lane.b32.xlu0 %v368, 4
        %v2448 = vpop.permute.xlu0 %2447
        %2449 = vrot.lane.b32.xlu0 %v369, 4
        %v2450 = vpop.permute.xlu0 %2449
        %2451 = vrot.lane.b32.xlu0 %v370, 4
        %v2452 = vpop.permute.xlu0 %2451
        %2453 = vrot.lane.b32.xlu0 %v371, 4
        %v2454 = vpop.permute.xlu0 %2453
        %2455 = vrot.lane.b32.xlu0 %v372, 4
        %v2456 = vpop.permute.xlu0 %2455
        %2457 = vrot.lane.b32.xlu0 %v373, 4
        %v2458 = vpop.permute.xlu0 %2457
        %2459 = vrot.lane.b32.xlu0 %v374, 4
        %v2460 = vpop.permute.xlu0 %2459
        %2461 = vrot.lane.b32.xlu0 %v375, 4
        %v2462 = vpop.permute.xlu0 %2461
        %2463 = vrot.lane.b32.xlu0 %v376, 4
        %v2464 = vpop.permute.xlu0 %2463
        %2465 = vrot.lane.b32.xlu0 %v377, 4
        %v2466 = vpop.permute.xlu0 %2465
        %2467 = vrot.lane.b32.xlu0 %v378, 4
        %v2468 = vpop.permute.xlu0 %2467
        %2469 = vrot.lane.b32.xlu0 %v379, 4
        %v2470 = vpop.permute.xlu0 %2469
        %2471 = vrot.lane.b32.xlu0 %v380, 4
        %v2472 = vpop.permute.xlu0 %2471
        %2473 = vrot.lane.b32.xlu0 %v381, 4
        %v2474 = vpop.permute.xlu0 %2473
        %2475 = vrot.lane.b32.xlu0 %v382, 4
        %v2476 = vpop.permute.xlu0 %2475
        %2477 = vrot.lane.b32.xlu0 %v383, 4
        %v2478 = vpop.permute.xlu0 %2477
        %2479 = vrot.lane.b32.xlu0 %v384, 4
        %v2480 = vpop.permute.xlu0 %2479
        %2481 = vrot.lane.b32.xlu0 %v385, 4
        %v2482 = vpop.permute.xlu0 %2481
        %2483 = vrot.lane.b32.xlu0 %v386, 4
        %v2484 = vpop.permute.xlu0 %2483
        %2485 = vrot.lane.b32.xlu0 %v387, 4
        %v2486 = vpop.permute.xlu0 %2485
        %2487 = vrot.lane.b32.xlu0 %v388, 4
        %v2488 = vpop.permute.xlu0 %2487
        %2489 = vrot.lane.b32.xlu0 %v389, 4
        %v2490 = vpop.permute.xlu0 %2489
        %2491 = vrot.lane.b32.xlu0 %v390, 4
        %v2492 = vpop.permute.xlu0 %2491
        %2493 = vrot.lane.b32.xlu0 %v391, 4
        %v2494 = vpop.permute.xlu0 %2493
        %2495 = vrot.lane.b32.xlu0 %v392, 4
        %v2496 = vpop.permute.xlu0 %2495
        %2497 = vrot.lane.b32.xlu0 %v393, 4
        %v2498 = vpop.permute.xlu0 %2497
        %2499 = vrot.lane.b32.xlu0 %v394, 4
        %v2500 = vpop.permute.xlu0 %2499
        %2501 = vrot.lane.b32.xlu0 %v395, 4
        %v2502 = vpop.permute.xlu0 %2501
        %2503 = vrot.lane.b32.xlu0 %v396, 4
        %v2504 = vpop.permute.xlu0 %2503
        %2505 = vrot.lane.b32.xlu0 %v397, 4
        %v2506 = vpop.permute.xlu0 %2505
        %2507 = vrot.lane.b32.xlu0 %v398, 4
        %v2508 = vpop.permute.xlu0 %2507
        %2509 = vrot.lane.b32.xlu0 %v399, 4
        %v2510 = vpop.permute.xlu0 %2509
        %2511 = vrot.lane.b32.xlu0 %v400, 4
        %v2512 = vpop.permute.xlu0 %2511
        %2513 = vrot.lane.b32.xlu0 %v401, 4
        %v2514 = vpop.permute.xlu0 %2513
        %2515 = vrot.lane.b32.xlu0 %v402, 4
        %v2516 = vpop.permute.xlu0 %2515
        %2517 = vrot.lane.b32.xlu0 %v403, 4
        %v2518 = vpop.permute.xlu0 %2517
        %2519 = vrot.lane.b32.xlu0 %v404, 4
        %v2520 = vpop.permute.xlu0 %2519
        %2521 = vrot.lane.b32.xlu0 %v405, 4
        %v2522 = vpop.permute.xlu0 %2521
        %2523 = vrot.lane.b32.xlu0 %v406, 4
        %v2524 = vpop.permute.xlu0 %2523
        %2525 = vrot.lane.b32.xlu0 %v407, 4
        %v2526 = vpop.permute.xlu0 %2525
        %2527 = vrot.lane.b32.xlu0 %v408, 4
        %v2528 = vpop.permute.xlu0 %2527
        %2529 = vrot.lane.b32.xlu0 %v409, 4
        %v2530 = vpop.permute.xlu0 %2529
        %2531 = vrot.lane.b32.xlu0 %v410, 4
        %v2532 = vpop.permute.xlu0 %2531
        %2533 = vrot.lane.b32.xlu0 %v411, 4
        %v2534 = vpop.permute.xlu0 %2533
        %2535 = vrot.lane.b32.xlu0 %v412, 4
        %v2536 = vpop.permute.xlu0 %2535
        %2537 = vrot.lane.b32.xlu0 %v413, 4
        %v2538 = vpop.permute.xlu0 %2537
        %2539 = vrot.lane.b32.xlu0 %v414, 4
        %v2540 = vpop.permute.xlu0 %2539
        %2541 = vrot.lane.b32.xlu0 %v415, 4
        %v2542 = vpop.permute.xlu0 %2541
        %2543 = vrot.lane.b32.xlu0 %v416, 4
        %v2544 = vpop.permute.xlu0 %2543
        %2545 = vrot.lane.b32.xlu0 %v417, 4
        %v2546 = vpop.permute.xlu0 %2545
        %2547 = vrot.lane.b32.xlu0 %v418, 4
        %v2548 = vpop.permute.xlu0 %2547
        %2549 = vrot.lane.b32.xlu0 %v419, 4
        %v2550 = vpop.permute.xlu0 %2549
        %2551 = vrot.lane.b32.xlu0 %v420, 4
        %v2552 = vpop.permute.xlu0 %2551
        %2553 = vrot.lane.b32.xlu0 %v421, 4
        %v2554 = vpop.permute.xlu0 %2553
        %2555 = vrot.lane.b32.xlu0 %v422, 4
        %v2556 = vpop.permute.xlu0 %2555
        %2557 = vrot.lane.b32.xlu0 %v423, 4
        %v2558 = vpop.permute.xlu0 %2557
        %2559 = vrot.lane.b32.xlu0 %v424, 4
        %v2560 = vpop.permute.xlu0 %2559
        %2561 = vrot.lane.b32.xlu0 %v425, 4
        %v2562 = vpop.permute.xlu0 %2561
        %2563 = vrot.lane.b32.xlu0 %v426, 4
        %v2564 = vpop.permute.xlu0 %2563
        %2565 = vrot.lane.b32.xlu0 %v427, 4
        %v2566 = vpop.permute.xlu0 %2565
        %2567 = vrot.lane.b32.xlu0 %v428, 4
        %v2568 = vpop.permute.xlu0 %2567
        %2569 = vrot.lane.b32.xlu0 %v429, 4
        %v2570 = vpop.permute.xlu0 %2569
        %2571 = vrot.lane.b32.xlu0 %v430, 4
        %v2572 = vpop.permute.xlu0 %2571
        %2573 = vrot.lane.b32.xlu0 %v431, 4
        %v2574 = vpop.permute.xlu0 %2573
        %2575 = vrot.lane.b32.xlu0 %v432, 4
        %v2576 = vpop.permute.xlu0 %2575
        %2577 = vrot.lane.b32.xlu0 %v433, 4
        %v2578 = vpop.permute.xlu0 %2577
        %2579 = vrot.lane.b32.xlu0 %v434, 4
        %v2580 = vpop.permute.xlu0 %2579
        %2581 = vrot.lane.b32.xlu0 %v435, 4
        %v2582 = vpop.permute.xlu0 %2581
        %2583 = vrot.lane.b32.xlu0 %v436, 4
        %v2584 = vpop.permute.xlu0 %2583
        %2585 = vrot.lane.b32.xlu0 %v437, 4
        %v2586 = vpop.permute.xlu0 %2585
        %2587 = vrot.lane.b32.xlu0 %v438, 4
        %v2588 = vpop.permute.xlu0 %2587
        %2589 = vrot.lane.b32.xlu0 %v439, 4
        %v2590 = vpop.permute.xlu0 %2589
        %2591 = vrot.lane.b32.xlu0 %v440, 4
        %v2592 = vpop.permute.xlu0 %2591
        %2593 = vrot.lane.b32.xlu0 %v441, 4
        %v2594 = vpop.permute.xlu0 %2593
        %2595 = vrot.lane.b32.xlu0 %v442, 4
        %v2596 = vpop.permute.xlu0 %2595
        %2597 = vrot.lane.b32.xlu0 %v443, 4
        %v2598 = vpop.permute.xlu0 %2597
        %2599 = vrot.lane.b32.xlu0 %v444, 4
        %v2600 = vpop.permute.xlu0 %2599
        %2601 = vrot.lane.b32.xlu0 %v445, 4
        %v2602 = vpop.permute.xlu0 %2601
        %2603 = vrot.lane.b32.xlu0 %v446, 4
        %v2604 = vpop.permute.xlu0 %2603
        %2605 = vrot.lane.b32.xlu0 %v447, 4
        %v2606 = vpop.permute.xlu0 %2605
        %2607 = vrot.lane.b32.xlu0 %v448, 4
        %v2608 = vpop.permute.xlu0 %2607
        %2609 = vrot.lane.b32.xlu0 %v449, 4
        %v2610 = vpop.permute.xlu0 %2609
        %2611 = vrot.lane.b32.xlu0 %v450, 4
        %v2612 = vpop.permute.xlu0 %2611
        %2613 = vrot.lane.b32.xlu0 %v451, 4
        %v2614 = vpop.permute.xlu0 %2613
        %2615 = vrot.lane.b32.xlu0 %v452, 4
        %v2616 = vpop.permute.xlu0 %2615
        %2617 = vrot.lane.b32.xlu0 %v453, 4
        %v2618 = vpop.permute.xlu0 %2617
        %2619 = vrot.lane.b32.xlu0 %v454, 4
        %v2620 = vpop.permute.xlu0 %2619
        %2621 = vrot.lane.b32.xlu0 %v455, 4
        %v2622 = vpop.permute.xlu0 %2621
        %2623 = vrot.lane.b32.xlu0 %v456, 4
        %v2624 = vpop.permute.xlu0 %2623
        %2625 = vrot.lane.b32.xlu0 %v457, 4
        %v2626 = vpop.permute.xlu0 %2625
        %2627 = vrot.lane.b32.xlu0 %v458, 4
        %v2628 = vpop.permute.xlu0 %2627
        %2629 = vrot.lane.b32.xlu0 %v459, 4
        %v2630 = vpop.permute.xlu0 %2629
        %2631 = vrot.lane.b32.xlu0 %v460, 4
        %v2632 = vpop.permute.xlu0 %2631
        %2633 = vrot.lane.b32.xlu0 %v461, 4
        %v2634 = vpop.permute.xlu0 %2633
        %2635 = vrot.lane.b32.xlu0 %v462, 4
        %v2636 = vpop.permute.xlu0 %2635
        %2637 = vrot.lane.b32.xlu0 %v463, 4
        %v2638 = vpop.permute.xlu0 %2637
        %2639 = vrot.lane.b32.xlu0 %v464, 4
        %v2640 = vpop.permute.xlu0 %2639
        %2641 = vrot.lane.b32.xlu0 %v465, 4
        %v2642 = vpop.permute.xlu0 %2641
        %2643 = vrot.lane.b32.xlu0 %v466, 4
        %v2644 = vpop.permute.xlu0 %2643
        %2645 = vrot.lane.b32.xlu0 %v467, 4
        %v2646 = vpop.permute.xlu0 %2645
        %2903 = vrot.lane.b32.xlu0 %v468, 8
        %v2904 = vpop.permute.xlu0 %2903
        %2905 = vrot.lane.b32.xlu0 %v469, 8
        %v2906 = vpop.permute.xlu0 %2905
        %2907 = vrot.lane.b32.xlu0 %v470, 8
        %v2908 = vpop.permute.xlu0 %2907
        %2909 = vrot.lane.b32.xlu0 %v471, 8
        %v2910 = vpop.permute.xlu0 %2909
        %2911 = vrot.lane.b32.xlu0 %v472, 8
        %v2912 = vpop.permute.xlu0 %2911
        %2913 = vrot.lane.b32.xlu0 %v473, 8
        %v2914 = vpop.permute.xlu0 %2913
        %2915 = vrot.lane.b32.xlu0 %v474, 8
        %v2916 = vpop.permute.xlu0 %2915
        %2917 = vrot.lane.b32.xlu0 %v475, 8
        %v2918 = vpop.permute.xlu0 %2917
        %2919 = vrot.lane.b32.xlu0 %v476, 8
        %v2920 = vpop.permute.xlu0 %2919
        %2921 = vrot.lane.b32.xlu0 %v477, 8
        %v2922 = vpop.permute.xlu0 %2921
        %2923 = vrot.lane.b32.xlu0 %v478, 8
        %v2924 = vpop.permute.xlu0 %2923
        %2925 = vrot.lane.b32.xlu0 %v479, 8
        %v2926 = vpop.permute.xlu0 %2925
        %2927 = vrot.lane.b32.xlu0 %v480, 8
        %v2928 = vpop.permute.xlu0 %2927
        %2929 = vrot.lane.b32.xlu0 %v481, 8
        %v2930 = vpop.permute.xlu0 %2929
        %2931 = vrot.lane.b32.xlu0 %v482, 8
        %v2932 = vpop.permute.xlu0 %2931
        %2933 = vrot.lane.b32.xlu0 %v483, 8
        %v2934 = vpop.permute.xlu0 %2933
        %2935 = vrot.lane.b32.xlu0 %v484, 8
        %v2936 = vpop.permute.xlu0 %2935
        %2937 = vrot.lane.b32.xlu0 %v485, 8
        %v2938 = vpop.permute.xlu0 %2937
        %2939 = vrot.lane.b32.xlu0 %v486, 8
        %v2940 = vpop.permute.xlu0 %2939
        %2941 = vrot.lane.b32.xlu0 %v487, 8
        %v2942 = vpop.permute.xlu0 %2941
        %2943 = vrot.lane.b32.xlu0 %v488, 8
        %v2944 = vpop.permute.xlu0 %2943
        %2945 = vrot.lane.b32.xlu0 %v489, 8
        %v2946 = vpop.permute.xlu0 %2945
        %2947 = vrot.lane.b32.xlu0 %v490, 8
        %v2948 = vpop.permute.xlu0 %2947
        %2949 = vrot.lane.b32.xlu0 %v491, 8
        %v2950 = vpop.permute.xlu0 %2949
        %2951 = vrot.lane.b32.xlu0 %v492, 8
        %v2952 = vpop.permute.xlu0 %2951
        %2953 = vrot.lane.b32.xlu0 %v493, 8
        %v2954 = vpop.permute.xlu0 %2953
        %2955 = vrot.lane.b32.xlu0 %v494, 8
        %v2956 = vpop.permute.xlu0 %2955
        %2957 = vrot.lane.b32.xlu0 %v495, 8
        %v2958 = vpop.permute.xlu0 %2957
        %2959 = vrot.lane.b32.xlu0 %v496, 8
        %v2960 = vpop.permute.xlu0 %2959
        %2961 = vrot.lane.b32.xlu0 %v497, 8
        %v2962 = vpop.permute.xlu0 %2961
        %2963 = vrot.lane.b32.xlu0 %v498, 8
        %v2964 = vpop.permute.xlu0 %2963
        %2965 = vrot.lane.b32.xlu0 %v499, 8
        %v2966 = vpop.permute.xlu0 %2965
        %2967 = vrot.lane.b32.xlu0 %v500, 8
        %v2968 = vpop.permute.xlu0 %2967
        %2969 = vrot.lane.b32.xlu0 %v501, 8
        %v2970 = vpop.permute.xlu0 %2969
        %2971 = vrot.lane.b32.xlu0 %v502, 8
        %v2972 = vpop.permute.xlu0 %2971
        %2973 = vrot.lane.b32.xlu0 %v503, 8
        %v2974 = vpop.permute.xlu0 %2973
        %2975 = vrot.lane.b32.xlu0 %v504, 8
        %v2976 = vpop.permute.xlu0 %2975
        %2977 = vrot.lane.b32.xlu0 %v505, 8
        %v2978 = vpop.permute.xlu0 %2977
        %2979 = vrot.lane.b32.xlu0 %v506, 8
        %v2980 = vpop.permute.xlu0 %2979
        %2981 = vrot.lane.b32.xlu0 %v507, 8
        %v2982 = vpop.permute.xlu0 %2981
        %2983 = vrot.lane.b32.xlu0 %v508, 8
        %v2984 = vpop.permute.xlu0 %2983
        %2985 = vrot.lane.b32.xlu0 %v509, 8
        %v2986 = vpop.permute.xlu0 %2985
        %2987 = vrot.lane.b32.xlu0 %v510, 8
        %v2988 = vpop.permute.xlu0 %2987
        %2989 = vrot.lane.b32.xlu0 %v511, 8
        %v2990 = vpop.permute.xlu0 %2989
        %2991 = vrot.lane.b32.xlu0 %v512, 8
        %v2992 = vpop.permute.xlu0 %2991
        %2993 = vrot.lane.b32.xlu0 %v513, 8
        %v2994 = vpop.permute.xlu0 %2993
        %2995 = vrot.lane.b32.xlu0 %v514, 8
        %v2996 = vpop.permute.xlu0 %2995
        %2997 = vrot.lane.b32.xlu0 %v515, 8
        %v2998 = vpop.permute.xlu0 %2997
        %2999 = vrot.lane.b32.xlu0 %v516, 8
        %v3000 = vpop.permute.xlu0 %2999
        %3001 = vrot.lane.b32.xlu0 %v517, 8
        %v3002 = vpop.permute.xlu0 %3001
        %3003 = vrot.lane.b32.xlu0 %v518, 8
        %v3004 = vpop.permute.xlu0 %3003
        %3005 = vrot.lane.b32.xlu0 %v519, 8
        %v3006 = vpop.permute.xlu0 %3005
        %3007 = vrot.lane.b32.xlu0 %v520, 8
        %v3008 = vpop.permute.xlu0 %3007
        %3009 = vrot.lane.b32.xlu0 %v521, 8
        %v3010 = vpop.permute.xlu0 %3009
        %3011 = vrot.lane.b32.xlu0 %v522, 8
        %v3012 = vpop.permute.xlu0 %3011
        %3013 = vrot.lane.b32.xlu0 %v523, 8
        %v3014 = vpop.permute.xlu0 %3013
        %3015 = vrot.lane.b32.xlu0 %v524, 8
        %v3016 = vpop.permute.xlu0 %3015
        %3017 = vrot.lane.b32.xlu0 %v525, 8
        %v3018 = vpop.permute.xlu0 %3017
        %3019 = vrot.lane.b32.xlu0 %v526, 8
        %v3020 = vpop.permute.xlu0 %3019
        %3021 = vrot.lane.b32.xlu0 %v527, 8
        %v3022 = vpop.permute.xlu0 %3021
        %3023 = vrot.lane.b32.xlu0 %v528, 8
        %v3024 = vpop.permute.xlu0 %3023
        %3025 = vrot.lane.b32.xlu0 %v529, 8
        %v3026 = vpop.permute.xlu0 %3025
        %3027 = vrot.lane.b32.xlu0 %v530, 8
        %v3028 = vpop.permute.xlu0 %3027
        %3029 = vrot.lane.b32.xlu0 %v531, 8
        %v3030 = vpop.permute.xlu0 %3029
        %3031 = vrot.lane.b32.xlu0 %v532, 8
        %v3032 = vpop.permute.xlu0 %3031
        %3033 = vrot.lane.b32.xlu0 %v533, 8
        %v3034 = vpop.permute.xlu0 %3033
        %3035 = vrot.lane.b32.xlu0 %v534, 8
        %v3036 = vpop.permute.xlu0 %3035
        %3037 = vrot.lane.b32.xlu0 %v535, 8
        %v3038 = vpop.permute.xlu0 %3037
        %3039 = vrot.lane.b32.xlu0 %v536, 8
        %v3040 = vpop.permute.xlu0 %3039
        %3041 = vrot.lane.b32.xlu0 %v537, 8
        %v3042 = vpop.permute.xlu0 %3041
        %3043 = vrot.lane.b32.xlu0 %v538, 8
        %v3044 = vpop.permute.xlu0 %3043
        %3045 = vrot.lane.b32.xlu0 %v539, 8
        %v3046 = vpop.permute.xlu0 %3045
        %3047 = vrot.lane.b32.xlu0 %v540, 8
        %v3048 = vpop.permute.xlu0 %3047
        %3049 = vrot.lane.b32.xlu0 %v541, 8
        %v3050 = vpop.permute.xlu0 %3049
        %3051 = vrot.lane.b32.xlu0 %v542, 8
        %v3052 = vpop.permute.xlu0 %3051
        %3053 = vrot.lane.b32.xlu0 %v543, 8
        %v3054 = vpop.permute.xlu0 %3053
        %3055 = vrot.lane.b32.xlu0 %v544, 8
        %v3056 = vpop.permute.xlu0 %3055
        %3057 = vrot.lane.b32.xlu0 %v545, 8
        %v3058 = vpop.permute.xlu0 %3057
        %3059 = vrot.lane.b32.xlu0 %v546, 8
        %v3060 = vpop.permute.xlu0 %3059
        %3061 = vrot.lane.b32.xlu0 %v547, 8
        %v3062 = vpop.permute.xlu0 %3061
        %3063 = vrot.lane.b32.xlu0 %v548, 8
        %v3064 = vpop.permute.xlu0 %3063
        %3065 = vrot.lane.b32.xlu0 %v549, 8
        %v3066 = vpop.permute.xlu0 %3065
        %3067 = vrot.lane.b32.xlu0 %v550, 8
        %v3068 = vpop.permute.xlu0 %3067
        %3069 = vrot.lane.b32.xlu0 %v551, 8
        %v3070 = vpop.permute.xlu0 %3069
        %3071 = vrot.lane.b32.xlu0 %v552, 8
        %v3072 = vpop.permute.xlu0 %3071
        %3073 = vrot.lane.b32.xlu0 %v553, 8
        %v3074 = vpop.permute.xlu0 %3073
        %3075 = vrot.lane.b32.xlu0 %v554, 8
        %v3076 = vpop.permute.xlu0 %3075
        %3077 = vrot.lane.b32.xlu0 %v555, 8
        %v3078 = vpop.permute.xlu0 %3077
        %3079 = vrot.lane.b32.xlu0 %v556, 8
        %v3080 = vpop.permute.xlu0 %3079
        %3081 = vrot.lane.b32.xlu0 %v557, 8
        %v3082 = vpop.permute.xlu0 %3081
        %3083 = vrot.lane.b32.xlu0 %v558, 8
        %v3084 = vpop.permute.xlu0 %3083
        %3085 = vrot.lane.b32.xlu0 %v559, 8
        %v3086 = vpop.permute.xlu0 %3085
        %3087 = vrot.lane.b32.xlu0 %v560, 8
        %v3088 = vpop.permute.xlu0 %3087
        %3089 = vrot.lane.b32.xlu0 %v561, 8
        %v3090 = vpop.permute.xlu0 %3089
        %3091 = vrot.lane.b32.xlu0 %v562, 8
        %v3092 = vpop.permute.xlu0 %3091
        %3093 = vrot.lane.b32.xlu0 %v563, 8
        %v3094 = vpop.permute.xlu0 %3093
        %3095 = vrot.lane.b32.xlu0 %v564, 8
        %v3096 = vpop.permute.xlu0 %3095
        %3097 = vrot.lane.b32.xlu0 %v565, 8
        %v3098 = vpop.permute.xlu0 %3097
        %3099 = vrot.lane.b32.xlu0 %v566, 8
        %v3100 = vpop.permute.xlu0 %3099
        %3101 = vrot.lane.b32.xlu0 %v567, 8
        %v3102 = vpop.permute.xlu0 %3101
        %3103 = vrot.lane.b32.xlu0 %v568, 8
        %v3104 = vpop.permute.xlu0 %3103
        %3105 = vrot.lane.b32.xlu0 %v569, 8
        %v3106 = vpop.permute.xlu0 %3105
        %3107 = vrot.lane.b32.xlu0 %v570, 8
        %v3108 = vpop.permute.xlu0 %3107
        %3109 = vrot.lane.b32.xlu0 %v571, 8
        %v3110 = vpop.permute.xlu0 %3109
        %3111 = vrot.lane.b32.xlu0 %v572, 8
        %v3112 = vpop.permute.xlu0 %3111
        %3113 = vrot.lane.b32.xlu0 %v573, 8
        %v3114 = vpop.permute.xlu0 %3113
        %3115 = vrot.lane.b32.xlu0 %v574, 8
        %v3116 = vpop.permute.xlu0 %3115
        %3117 = vrot.lane.b32.xlu0 %v575, 8
        %v3118 = vpop.permute.xlu0 %3117
        %3119 = vrot.lane.b32.xlu0 %v576, 8
        %v3120 = vpop.permute.xlu0 %3119
        %3121 = vrot.lane.b32.xlu0 %v577, 8
        %v3122 = vpop.permute.xlu0 %3121
        %3123 = vrot.lane.b32.xlu0 %v578, 8
        %v3124 = vpop.permute.xlu0 %3123
        %3125 = vrot.lane.b32.xlu0 %v579, 8
        %v3126 = vpop.permute.xlu0 %3125
        %3127 = vrot.lane.b32.xlu0 %v580, 8
        %v3128 = vpop.permute.xlu0 %3127
        %3129 = vrot.lane.b32.xlu0 %v581, 8
        %v3130 = vpop.permute.xlu0 %3129
        %3131 = vrot.lane.b32.xlu0 %v582, 8
        %v3132 = vpop.permute.xlu0 %3131
        %3133 = vrot.lane.b32.xlu0 %v583, 8
        %v3134 = vpop.permute.xlu0 %3133
        %3135 = vrot.lane.b32.xlu0 %v584, 8
        %v3136 = vpop.permute.xlu0 %3135
        %3137 = vrot.lane.b32.xlu0 %v585, 8
        %v3138 = vpop.permute.xlu0 %3137
        %3139 = vrot.lane.b32.xlu0 %v586, 8
        %v3140 = vpop.permute.xlu0 %3139
        %3141 = vrot.lane.b32.xlu0 %v587, 8
        %v3142 = vpop.permute.xlu0 %3141
        %3143 = vrot.lane.b32.xlu0 %v588, 8
        %v3144 = vpop.permute.xlu0 %3143
        %3145 = vrot.lane.b32.xlu0 %v589, 8
        %v3146 = vpop.permute.xlu0 %3145
        %3147 = vrot.lane.b32.xlu0 %v590, 8
        %v3148 = vpop.permute.xlu0 %3147
        %3149 = vrot.lane.b32.xlu0 %v591, 8
        %v3150 = vpop.permute.xlu0 %3149
        %3151 = vrot.lane.b32.xlu0 %v592, 8
        %v3152 = vpop.permute.xlu0 %3151
        %3153 = vrot.lane.b32.xlu0 %v593, 8
        %v3154 = vpop.permute.xlu0 %3153
        %3155 = vrot.lane.b32.xlu0 %v594, 8
        %v3156 = vpop.permute.xlu0 %3155
        %3157 = vrot.lane.b32.xlu0 %v595, 8
        %v3158 = vpop.permute.xlu0 %3157
        %3415 = vrot.lane.b32.xlu0 %v596, 12
        %v3416 = vpop.permute.xlu0 %3415
        %3417 = vrot.lane.b32.xlu0 %v597, 12
        %v3418 = vpop.permute.xlu0 %3417
        %3419 = vrot.lane.b32.xlu0 %v598, 12
        %v3420 = vpop.permute.xlu0 %3419
        %3421 = vrot.lane.b32.xlu0 %v599, 12
        %v3422 = vpop.permute.xlu0 %3421
        %3423 = vrot.lane.b32.xlu0 %v600, 12
        %v3424 = vpop.permute.xlu0 %3423
        %3425 = vrot.lane.b32.xlu0 %v601, 12
        %v3426 = vpop.permute.xlu0 %3425
        %3427 = vrot.lane.b32.xlu0 %v602, 12
        %v3428 = vpop.permute.xlu0 %3427
        %3429 = vrot.lane.b32.xlu0 %v603, 12
        %v3430 = vpop.permute.xlu0 %3429
        %3431 = vrot.lane.b32.xlu0 %v604, 12
        %v3432 = vpop.permute.xlu0 %3431
        %3433 = vrot.lane.b32.xlu0 %v605, 12
        %v3434 = vpop.permute.xlu0 %3433
        %3435 = vrot.lane.b32.xlu0 %v606, 12
        %v3436 = vpop.permute.xlu0 %3435
        %3437 = vrot.lane.b32.xlu0 %v607, 12
        %v3438 = vpop.permute.xlu0 %3437
        %3439 = vrot.lane.b32.xlu0 %v608, 12
        %v3440 = vpop.permute.xlu0 %3439
        %3441 = vrot.lane.b32.xlu0 %v609, 12
        %v3442 = vpop.permute.xlu0 %3441
        %3443 = vrot.lane.b32.xlu0 %v610, 12
        %v3444 = vpop.permute.xlu0 %3443
        %3445 = vrot.lane.b32.xlu0 %v611, 12
        %v3446 = vpop.permute.xlu0 %3445
        %3447 = vrot.lane.b32.xlu0 %v612, 12
        %v3448 = vpop.permute.xlu0 %3447
        %3449 = vrot.lane.b32.xlu0 %v613, 12
        %v3450 = vpop.permute.xlu0 %3449
        %3451 = vrot.lane.b32.xlu0 %v614, 12
        %v3452 = vpop.permute.xlu0 %3451
        %3453 = vrot.lane.b32.xlu0 %v615, 12
        %v3454 = vpop.permute.xlu0 %3453
        %3455 = vrot.lane.b32.xlu0 %v616, 12
        %v3456 = vpop.permute.xlu0 %3455
        %3457 = vrot.lane.b32.xlu0 %v617, 12
        %v3458 = vpop.permute.xlu0 %3457
        %3459 = vrot.lane.b32.xlu0 %v618, 12
        %v3460 = vpop.permute.xlu0 %3459
        %3461 = vrot.lane.b32.xlu0 %v619, 12
        %v3462 = vpop.permute.xlu0 %3461
        %3463 = vrot.lane.b32.xlu0 %v620, 12
        %v3464 = vpop.permute.xlu0 %3463
        %3465 = vrot.lane.b32.xlu0 %v621, 12
        %v3466 = vpop.permute.xlu0 %3465
        %3467 = vrot.lane.b32.xlu0 %v622, 12
        %v3468 = vpop.permute.xlu0 %3467
        %3469 = vrot.lane.b32.xlu0 %v623, 12
        %v3470 = vpop.permute.xlu0 %3469
        %3471 = vrot.lane.b32.xlu0 %v624, 12
        %v3472 = vpop.permute.xlu0 %3471
        %3473 = vrot.lane.b32.xlu0 %v625, 12
        %v3474 = vpop.permute.xlu0 %3473
        %3475 = vrot.lane.b32.xlu0 %v626, 12
        %v3476 = vpop.permute.xlu0 %3475
        %3477 = vrot.lane.b32.xlu0 %v627, 12
        %v3478 = vpop.permute.xlu0 %3477
        %3479 = vrot.lane.b32.xlu0 %v628, 12
        %v3480 = vpop.permute.xlu0 %3479
        %3481 = vrot.lane.b32.xlu0 %v629, 12
        %v3482 = vpop.permute.xlu0 %3481
        %3483 = vrot.lane.b32.xlu0 %v630, 12
        %v3484 = vpop.permute.xlu0 %3483
        %3485 = vrot.lane.b32.xlu0 %v631, 12
        %v3486 = vpop.permute.xlu0 %3485
        %3487 = vrot.lane.b32.xlu0 %v632, 12
        %v3488 = vpop.permute.xlu0 %3487
        %3489 = vrot.lane.b32.xlu0 %v633, 12
        %v3490 = vpop.permute.xlu0 %3489
        %3491 = vrot.lane.b32.xlu0 %v634, 12
        %v3492 = vpop.permute.xlu0 %3491
        %3493 = vrot.lane.b32.xlu0 %v635, 12
        %v3494 = vpop.permute.xlu0 %3493
        %3495 = vrot.lane.b32.xlu0 %v636, 12
        %v3496 = vpop.permute.xlu0 %3495
        %3497 = vrot.lane.b32.xlu0 %v637, 12
        %v3498 = vpop.permute.xlu0 %3497
        %3499 = vrot.lane.b32.xlu0 %v638, 12
        %v3500 = vpop.permute.xlu0 %3499
        %3501 = vrot.lane.b32.xlu0 %v639, 12
        %v3502 = vpop.permute.xlu0 %3501
        %3503 = vrot.lane.b32.xlu0 %v640, 12
        %v3504 = vpop.permute.xlu0 %3503
        %3505 = vrot.lane.b32.xlu0 %v641, 12
        %v3506 = vpop.permute.xlu0 %3505
        %3507 = vrot.lane.b32.xlu0 %v642, 12
        %v3508 = vpop.permute.xlu0 %3507
        %3509 = vrot.lane.b32.xlu0 %v643, 12
        %v3510 = vpop.permute.xlu0 %3509
        %3511 = vrot.lane.b32.xlu0 %v644, 12
        %v3512 = vpop.permute.xlu0 %3511
        %3513 = vrot.lane.b32.xlu0 %v645, 12
        %v3514 = vpop.permute.xlu0 %3513
        %3515 = vrot.lane.b32.xlu0 %v646, 12
        %v3516 = vpop.permute.xlu0 %3515
        %3517 = vrot.lane.b32.xlu0 %v647, 12
        %v3518 = vpop.permute.xlu0 %3517
        %3519 = vrot.lane.b32.xlu0 %v648, 12
        %v3520 = vpop.permute.xlu0 %3519
        %3521 = vrot.lane.b32.xlu0 %v649, 12
        %v3522 = vpop.permute.xlu0 %3521
        %3523 = vrot.lane.b32.xlu0 %v650, 12
        %v3524 = vpop.permute.xlu0 %3523
        %3525 = vrot.lane.b32.xlu0 %v651, 12
        %v3526 = vpop.permute.xlu0 %3525
        %3527 = vrot.lane.b32.xlu0 %v652, 12
        %v3528 = vpop.permute.xlu0 %3527
        %3529 = vrot.lane.b32.xlu0 %v653, 12
        %v3530 = vpop.permute.xlu0 %3529
        %3531 = vrot.lane.b32.xlu0 %v654, 12
        %v3532 = vpop.permute.xlu0 %3531
        %3533 = vrot.lane.b32.xlu0 %v655, 12
        %v3534 = vpop.permute.xlu0 %3533
        %3535 = vrot.lane.b32.xlu0 %v656, 12
        %v3536 = vpop.permute.xlu0 %3535
        %3537 = vrot.lane.b32.xlu0 %v657, 12
        %v3538 = vpop.permute.xlu0 %3537
        %3539 = vrot.lane.b32.xlu0 %v658, 12
        %v3540 = vpop.permute.xlu0 %3539
        %3541 = vrot.lane.b32.xlu0 %v659, 12
        %v3542 = vpop.permute.xlu0 %3541
        %3543 = vrot.lane.b32.xlu0 %v660, 12
        %v3544 = vpop.permute.xlu0 %3543
        %3545 = vrot.lane.b32.xlu0 %v661, 12
        %v3546 = vpop.permute.xlu0 %3545
        %3547 = vrot.lane.b32.xlu0 %v662, 12
        %v3548 = vpop.permute.xlu0 %3547
        %3549 = vrot.lane.b32.xlu0 %v663, 12
        %v3550 = vpop.permute.xlu0 %3549
        %3551 = vrot.lane.b32.xlu0 %v664, 12
        %v3552 = vpop.permute.xlu0 %3551
        %3553 = vrot.lane.b32.xlu0 %v665, 12
        %v3554 = vpop.permute.xlu0 %3553
        %3555 = vrot.lane.b32.xlu0 %v666, 12
        %v3556 = vpop.permute.xlu0 %3555
        %3557 = vrot.lane.b32.xlu0 %v667, 12
        %v3558 = vpop.permute.xlu0 %3557
        %3559 = vrot.lane.b32.xlu0 %v668, 12
        %v3560 = vpop.permute.xlu0 %3559
        %3561 = vrot.lane.b32.xlu0 %v669, 12
        %v3562 = vpop.permute.xlu0 %3561
        %3563 = vrot.lane.b32.xlu0 %v670, 12
        %v3564 = vpop.permute.xlu0 %3563
        %3565 = vrot.lane.b32.xlu0 %v671, 12
        %v3566 = vpop.permute.xlu0 %3565
        %3567 = vrot.lane.b32.xlu0 %v672, 12
        %v3568 = vpop.permute.xlu0 %3567
        %3569 = vrot.lane.b32.xlu0 %v673, 12
        %v3570 = vpop.permute.xlu0 %3569
        %3571 = vrot.lane.b32.xlu0 %v674, 12
        %v3572 = vpop.permute.xlu0 %3571
        %3573 = vrot.lane.b32.xlu0 %v675, 12
        %v3574 = vpop.permute.xlu0 %3573
        %3575 = vrot.lane.b32.xlu0 %v676, 12
        %v3576 = vpop.permute.xlu0 %3575
        %3577 = vrot.lane.b32.xlu0 %v677, 12
        %v3578 = vpop.permute.xlu0 %3577
        %3579 = vrot.lane.b32.xlu0 %v678, 12
        %v3580 = vpop.permute.xlu0 %3579
        %3581 = vrot.lane.b32.xlu0 %v679, 12
        %v3582 = vpop.permute.xlu0 %3581
        %3583 = vrot.lane.b32.xlu0 %v680, 12
        %v3584 = vpop.permute.xlu0 %3583
        %3585 = vrot.lane.b32.xlu0 %v681, 12
        %v3586 = vpop.permute.xlu0 %3585
        %3587 = vrot.lane.b32.xlu0 %v682, 12
        %v3588 = vpop.permute.xlu0 %3587
        %3589 = vrot.lane.b32.xlu0 %v683, 12
        %v3590 = vpop.permute.xlu0 %3589
        %3591 = vrot.lane.b32.xlu0 %v684, 12
        %v3592 = vpop.permute.xlu0 %3591
        %3593 = vrot.lane.b32.xlu0 %v685, 12
        %v3594 = vpop.permute.xlu0 %3593
        %3595 = vrot.lane.b32.xlu0 %v686, 12
        %v3596 = vpop.permute.xlu0 %3595
        %3597 = vrot.lane.b32.xlu0 %v687, 12
        %v3598 = vpop.permute.xlu0 %3597
        %3599 = vrot.lane.b32.xlu0 %v688, 12
        %v3600 = vpop.permute.xlu0 %3599
        %3601 = vrot.lane.b32.xlu0 %v689, 12
        %v3602 = vpop.permute.xlu0 %3601
        %3603 = vrot.lane.b32.xlu0 %v690, 12
        %v3604 = vpop.permute.xlu0 %3603
        %3605 = vrot.lane.b32.xlu0 %v691, 12
        %v3606 = vpop.permute.xlu0 %3605
        %3607 = vrot.lane.b32.xlu0 %v692, 12
        %v3608 = vpop.permute.xlu0 %3607
        %3609 = vrot.lane.b32.xlu0 %v693, 12
        %v3610 = vpop.permute.xlu0 %3609
        %3611 = vrot.lane.b32.xlu0 %v694, 12
        %v3612 = vpop.permute.xlu0 %3611
        %3613 = vrot.lane.b32.xlu0 %v695, 12
        %v3614 = vpop.permute.xlu0 %3613
        %3615 = vrot.lane.b32.xlu0 %v696, 12
        %v3616 = vpop.permute.xlu0 %3615
        %3617 = vrot.lane.b32.xlu0 %v697, 12
        %v3618 = vpop.permute.xlu0 %3617
        %3619 = vrot.lane.b32.xlu0 %v698, 12
        %v3620 = vpop.permute.xlu0 %3619
        %3621 = vrot.lane.b32.xlu0 %v699, 12
        %v3622 = vpop.permute.xlu0 %3621
        %3623 = vrot.lane.b32.xlu0 %v700, 12
        %v3624 = vpop.permute.xlu0 %3623
        %3625 = vrot.lane.b32.xlu0 %v701, 12
        %v3626 = vpop.permute.xlu0 %3625
        %3627 = vrot.lane.b32.xlu0 %v702, 12
        %v3628 = vpop.permute.xlu0 %3627
        %3629 = vrot.lane.b32.xlu0 %v703, 12
        %v3630 = vpop.permute.xlu0 %3629
        %3631 = vrot.lane.b32.xlu0 %v704, 12
        %v3632 = vpop.permute.xlu0 %3631
        %3633 = vrot.lane.b32.xlu0 %v705, 12
        %v3634 = vpop.permute.xlu0 %3633
        %3635 = vrot.lane.b32.xlu0 %v706, 12
        %v3636 = vpop.permute.xlu0 %3635
        %3637 = vrot.lane.b32.xlu0 %v707, 12
        %v3638 = vpop.permute.xlu0 %3637
        %3639 = vrot.lane.b32.xlu0 %v708, 12
        %v3640 = vpop.permute.xlu0 %3639
        %3641 = vrot.lane.b32.xlu0 %v709, 12
        %v3642 = vpop.permute.xlu0 %3641
        %3643 = vrot.lane.b32.xlu0 %v710, 12
        %v3644 = vpop.permute.xlu0 %3643
        %3645 = vrot.lane.b32.xlu0 %v711, 12
        %v3646 = vpop.permute.xlu0 %3645
        %3647 = vrot.lane.b32.xlu0 %v712, 12
        %v3648 = vpop.permute.xlu0 %3647
        %3649 = vrot.lane.b32.xlu0 %v713, 12
        %v3650 = vpop.permute.xlu0 %3649
        %3651 = vrot.lane.b32.xlu0 %v714, 12
        %v3652 = vpop.permute.xlu0 %3651
        %3653 = vrot.lane.b32.xlu0 %v715, 12
        %v3654 = vpop.permute.xlu0 %3653
        %3655 = vrot.lane.b32.xlu0 %v716, 12
        %v3656 = vpop.permute.xlu0 %3655
        %3657 = vrot.lane.b32.xlu0 %v717, 12
        %v3658 = vpop.permute.xlu0 %3657
        %3659 = vrot.lane.b32.xlu0 %v718, 12
        %v3660 = vpop.permute.xlu0 %3659
        %3661 = vrot.lane.b32.xlu0 %v719, 12
        %v3662 = vpop.permute.xlu0 %3661
        %3663 = vrot.lane.b32.xlu0 %v720, 12
        %v3664 = vpop.permute.xlu0 %3663
        %3665 = vrot.lane.b32.xlu0 %v721, 12
        %v3666 = vpop.permute.xlu0 %3665
        %3667 = vrot.lane.b32.xlu0 %v722, 12
        %v3668 = vpop.permute.xlu0 %3667
        %3669 = vrot.lane.b32.xlu0 %v723, 12
        %v3670 = vpop.permute.xlu0 %3669
        %3927 = vrot.lane.b32.xlu0 %v725, 16
        %v3928 = vpop.permute.xlu0 %3927
        %3929 = vrot.lane.b32.xlu0 %v726, 16
        %v3930 = vpop.permute.xlu0 %3929
        %3931 = vrot.lane.b32.xlu0 %v727, 16
        %v3932 = vpop.permute.xlu0 %3931
        %3933 = vrot.lane.b32.xlu0 %v728, 16
        %v3934 = vpop.permute.xlu0 %3933
        %3935 = vrot.lane.b32.xlu0 %v729, 16
        %v3936 = vpop.permute.xlu0 %3935
        %3937 = vrot.lane.b32.xlu0 %v730, 16
        %v3938 = vpop.permute.xlu0 %3937
        %3939 = vrot.lane.b32.xlu0 %v731, 16
        %v3940 = vpop.permute.xlu0 %3939
        %3941 = vrot.lane.b32.xlu0 %v732, 16
        %v3942 = vpop.permute.xlu0 %3941
        %3943 = vrot.lane.b32.xlu0 %v733, 16
        %v3944 = vpop.permute.xlu0 %3943
        %3945 = vrot.lane.b32.xlu0 %v734, 16
        %v3946 = vpop.permute.xlu0 %3945
        %3947 = vrot.lane.b32.xlu0 %v735, 16
        %v3948 = vpop.permute.xlu0 %3947
        %3949 = vrot.lane.b32.xlu0 %v736, 16
        %v3950 = vpop.permute.xlu0 %3949
        %3951 = vrot.lane.b32.xlu0 %v737, 16
        %v3952 = vpop.permute.xlu0 %3951
        %3953 = vrot.lane.b32.xlu0 %v738, 16
        %v3954 = vpop.permute.xlu0 %3953
        %3955 = vrot.lane.b32.xlu0 %v739, 16
        %v3956 = vpop.permute.xlu0 %3955
        %3957 = vrot.lane.b32.xlu0 %v740, 16
        %v3958 = vpop.permute.xlu0 %3957
        %3959 = vrot.lane.b32.xlu0 %v741, 16
        %v3960 = vpop.permute.xlu0 %3959
        %3961 = vrot.lane.b32.xlu0 %v742, 16
        %v3962 = vpop.permute.xlu0 %3961
        %3963 = vrot.lane.b32.xlu0 %v743, 16
        %v3964 = vpop.permute.xlu0 %3963
        %3965 = vrot.lane.b32.xlu0 %v744, 16
        %v3966 = vpop.permute.xlu0 %3965
        %3967 = vrot.lane.b32.xlu0 %v745, 16
        %v3968 = vpop.permute.xlu0 %3967
        %3969 = vrot.lane.b32.xlu0 %v746, 16
        %v3970 = vpop.permute.xlu0 %3969
        %3971 = vrot.lane.b32.xlu0 %v747, 16
        %v3972 = vpop.permute.xlu0 %3971
        %3973 = vrot.lane.b32.xlu0 %v748, 16
        %v3974 = vpop.permute.xlu0 %3973
        %3975 = vrot.lane.b32.xlu0 %v749, 16
        %v3976 = vpop.permute.xlu0 %3975
        %3977 = vrot.lane.b32.xlu0 %v750, 16
        %v3978 = vpop.permute.xlu0 %3977
        %3979 = vrot.lane.b32.xlu0 %v751, 16
        %v3980 = vpop.permute.xlu0 %3979
        %3981 = vrot.lane.b32.xlu0 %v752, 16
        %v3982 = vpop.permute.xlu0 %3981
        %3983 = vrot.lane.b32.xlu0 %v753, 16
        %v3984 = vpop.permute.xlu0 %3983
        %3985 = vrot.lane.b32.xlu0 %v754, 16
        %v3986 = vpop.permute.xlu0 %3985
        %3987 = vrot.lane.b32.xlu0 %v755, 16
        %v3988 = vpop.permute.xlu0 %3987
        %3989 = vrot.lane.b32.xlu0 %v756, 16
        %v3990 = vpop.permute.xlu0 %3989
        %3991 = vrot.lane.b32.xlu0 %v757, 16
        %v3992 = vpop.permute.xlu0 %3991
        %3993 = vrot.lane.b32.xlu0 %v758, 16
        %v3994 = vpop.permute.xlu0 %3993
        %3995 = vrot.lane.b32.xlu0 %v759, 16
        %v3996 = vpop.permute.xlu0 %3995
        %3997 = vrot.lane.b32.xlu0 %v760, 16
        %v3998 = vpop.permute.xlu0 %3997
        %3999 = vrot.lane.b32.xlu0 %v761, 16
        %v4000 = vpop.permute.xlu0 %3999
        %4001 = vrot.lane.b32.xlu0 %v762, 16
        %v4002 = vpop.permute.xlu0 %4001
        %4003 = vrot.lane.b32.xlu0 %v763, 16
        %v4004 = vpop.permute.xlu0 %4003
        %4005 = vrot.lane.b32.xlu0 %v764, 16
        %v4006 = vpop.permute.xlu0 %4005
        %4007 = vrot.lane.b32.xlu0 %v765, 16
        %v4008 = vpop.permute.xlu0 %4007
        %4009 = vrot.lane.b32.xlu0 %v766, 16
        %v4010 = vpop.permute.xlu0 %4009
        %4011 = vrot.lane.b32.xlu0 %v767, 16
        %v4012 = vpop.permute.xlu0 %4011
        %4013 = vrot.lane.b32.xlu0 %v768, 16
        %v4014 = vpop.permute.xlu0 %4013
        %4015 = vrot.lane.b32.xlu0 %v769, 16
        %v4016 = vpop.permute.xlu0 %4015
        %4017 = vrot.lane.b32.xlu0 %v770, 16
        %v4018 = vpop.permute.xlu0 %4017
        %4019 = vrot.lane.b32.xlu0 %v771, 16
        %v4020 = vpop.permute.xlu0 %4019
        %4021 = vrot.lane.b32.xlu0 %v772, 16
        %v4022 = vpop.permute.xlu0 %4021
        %4023 = vrot.lane.b32.xlu0 %v773, 16
        %v4024 = vpop.permute.xlu0 %4023
        %4025 = vrot.lane.b32.xlu0 %v774, 16
        %v4026 = vpop.permute.xlu0 %4025
        %4027 = vrot.lane.b32.xlu0 %v775, 16
        %v4028 = vpop.permute.xlu0 %4027
        %4029 = vrot.lane.b32.xlu0 %v776, 16
        %v4030 = vpop.permute.xlu0 %4029
        %4031 = vrot.lane.b32.xlu0 %v777, 16
        %v4032 = vpop.permute.xlu0 %4031
        %4033 = vrot.lane.b32.xlu0 %v778, 16
        %v4034 = vpop.permute.xlu0 %4033
        %4035 = vrot.lane.b32.xlu0 %v779, 16
        %v4036 = vpop.permute.xlu0 %4035
        %4037 = vrot.lane.b32.xlu0 %v780, 16
        %v4038 = vpop.permute.xlu0 %4037
        %4039 = vrot.lane.b32.xlu0 %v781, 16
        %v4040 = vpop.permute.xlu0 %4039
        %4041 = vrot.lane.b32.xlu0 %v782, 16
        %v4042 = vpop.permute.xlu0 %4041
        %4043 = vrot.lane.b32.xlu0 %v783, 16
        %v4044 = vpop.permute.xlu0 %4043
        %4045 = vrot.lane.b32.xlu0 %v784, 16
        %v4046 = vpop.permute.xlu0 %4045
        %4047 = vrot.lane.b32.xlu0 %v785, 16
        %v4048 = vpop.permute.xlu0 %4047
        %4049 = vrot.lane.b32.xlu0 %v786, 16
        %v4050 = vpop.permute.xlu0 %4049
        %4051 = vrot.lane.b32.xlu0 %v787, 16
        %v4052 = vpop.permute.xlu0 %4051
        %4053 = vrot.lane.b32.xlu0 %v788, 16
        %v4054 = vpop.permute.xlu0 %4053
        %4055 = vrot.lane.b32.xlu0 %v789, 16
        %v4056 = vpop.permute.xlu0 %4055
        %4057 = vrot.lane.b32.xlu0 %v790, 16
        %v4058 = vpop.permute.xlu0 %4057
        %4059 = vrot.lane.b32.xlu0 %v791, 16
        %v4060 = vpop.permute.xlu0 %4059
        %4061 = vrot.lane.b32.xlu0 %v792, 16
        %v4062 = vpop.permute.xlu0 %4061
        %4063 = vrot.lane.b32.xlu0 %v793, 16
        %v4064 = vpop.permute.xlu0 %4063
        %4065 = vrot.lane.b32.xlu0 %v794, 16
        %v4066 = vpop.permute.xlu0 %4065
        %4067 = vrot.lane.b32.xlu0 %v795, 16
        %v4068 = vpop.permute.xlu0 %4067
        %4069 = vrot.lane.b32.xlu0 %v796, 16
        %v4070 = vpop.permute.xlu0 %4069
        %4071 = vrot.lane.b32.xlu0 %v797, 16
        %v4072 = vpop.permute.xlu0 %4071
        %4073 = vrot.lane.b32.xlu0 %v798, 16
        %v4074 = vpop.permute.xlu0 %4073
        %4075 = vrot.lane.b32.xlu0 %v799, 16
        %v4076 = vpop.permute.xlu0 %4075
        %4077 = vrot.lane.b32.xlu0 %v800, 16
        %v4078 = vpop.permute.xlu0 %4077
        %4079 = vrot.lane.b32.xlu0 %v801, 16
        %v4080 = vpop.permute.xlu0 %4079
        %4081 = vrot.lane.b32.xlu0 %v802, 16
        %v4082 = vpop.permute.xlu0 %4081
        %4083 = vrot.lane.b32.xlu0 %v803, 16
        %v4084 = vpop.permute.xlu0 %4083
        %4085 = vrot.lane.b32.xlu0 %v804, 16
        %v4086 = vpop.permute.xlu0 %4085
        %4087 = vrot.lane.b32.xlu0 %v805, 16
        %v4088 = vpop.permute.xlu0 %4087
        %4089 = vrot.lane.b32.xlu0 %v806, 16
        %v4090 = vpop.permute.xlu0 %4089
        %4091 = vrot.lane.b32.xlu0 %v807, 16
        %v4092 = vpop.permute.xlu0 %4091
        %4093 = vrot.lane.b32.xlu0 %v808, 16
        %v4094 = vpop.permute.xlu0 %4093
        %4095 = vrot.lane.b32.xlu0 %v809, 16
        %v4096 = vpop.permute.xlu0 %4095
        %4097 = vrot.lane.b32.xlu0 %v810, 16
        %v4098 = vpop.permute.xlu0 %4097
        %4099 = vrot.lane.b32.xlu0 %v811, 16
        %v4100 = vpop.permute.xlu0 %4099
        %4101 = vrot.lane.b32.xlu0 %v812, 16
        %v4102 = vpop.permute.xlu0 %4101
        %4103 = vrot.lane.b32.xlu0 %v813, 16
        %v4104 = vpop.permute.xlu0 %4103
        %4105 = vrot.lane.b32.xlu0 %v814, 16
        %v4106 = vpop.permute.xlu0 %4105
        %4107 = vrot.lane.b32.xlu0 %v815, 16
        %v4108 = vpop.permute.xlu0 %4107
        %4109 = vrot.lane.b32.xlu0 %v816, 16
        %v4110 = vpop.permute.xlu0 %4109
        %4111 = vrot.lane.b32.xlu0 %v817, 16
        %v4112 = vpop.permute.xlu0 %4111
        %4113 = vrot.lane.b32.xlu0 %v818, 16
        %v4114 = vpop.permute.xlu0 %4113
        %4115 = vrot.lane.b32.xlu0 %v819, 16
        %v4116 = vpop.permute.xlu0 %4115
        %4117 = vrot.lane.b32.xlu0 %v820, 16
        %v4118 = vpop.permute.xlu0 %4117
        %4119 = vrot.lane.b32.xlu0 %v821, 16
        %v4120 = vpop.permute.xlu0 %4119
        %4121 = vrot.lane.b32.xlu0 %v822, 16
        %v4122 = vpop.permute.xlu0 %4121
        %4123 = vrot.lane.b32.xlu0 %v823, 16
        %v4124 = vpop.permute.xlu0 %4123
        %4125 = vrot.lane.b32.xlu0 %v824, 16
        %v4126 = vpop.permute.xlu0 %4125
        %4127 = vrot.lane.b32.xlu0 %v825, 16
        %v4128 = vpop.permute.xlu0 %4127
        %4129 = vrot.lane.b32.xlu0 %v826, 16
        %v4130 = vpop.permute.xlu0 %4129
        %4131 = vrot.lane.b32.xlu0 %v827, 16
        %v4132 = vpop.permute.xlu0 %4131
        %4133 = vrot.lane.b32.xlu0 %v828, 16
        %v4134 = vpop.permute.xlu0 %4133
        %4135 = vrot.lane.b32.xlu0 %v829, 16
        %v4136 = vpop.permute.xlu0 %4135
        %4137 = vrot.lane.b32.xlu0 %v830, 16
        %v4138 = vpop.permute.xlu0 %4137
        %4139 = vrot.lane.b32.xlu0 %v831, 16
        %v4140 = vpop.permute.xlu0 %4139
        %4141 = vrot.lane.b32.xlu0 %v832, 16
        %v4142 = vpop.permute.xlu0 %4141
        %4143 = vrot.lane.b32.xlu0 %v833, 16
        %v4144 = vpop.permute.xlu0 %4143
        %4145 = vrot.lane.b32.xlu0 %v834, 16
        %v4146 = vpop.permute.xlu0 %4145
        %4147 = vrot.lane.b32.xlu0 %v835, 16
        %v4148 = vpop.permute.xlu0 %4147
        %4149 = vrot.lane.b32.xlu0 %v836, 16
        %v4150 = vpop.permute.xlu0 %4149
        %4151 = vrot.lane.b32.xlu0 %v837, 16
        %v4152 = vpop.permute.xlu0 %4151
        %4153 = vrot.lane.b32.xlu0 %v838, 16
        %v4154 = vpop.permute.xlu0 %4153
        %4155 = vrot.lane.b32.xlu0 %v839, 16
        %v4156 = vpop.permute.xlu0 %4155
        %4157 = vrot.lane.b32.xlu0 %v840, 16
        %v4158 = vpop.permute.xlu0 %4157
        %4159 = vrot.lane.b32.xlu0 %v841, 16
        %v4160 = vpop.permute.xlu0 %4159
        %4161 = vrot.lane.b32.xlu0 %v842, 16
        %v4162 = vpop.permute.xlu0 %4161
        %4163 = vrot.lane.b32.xlu0 %v843, 16
        %v4164 = vpop.permute.xlu0 %4163
        %4165 = vrot.lane.b32.xlu0 %v844, 16
        %v4166 = vpop.permute.xlu0 %4165
        %4167 = vrot.lane.b32.xlu0 %v845, 16
        %v4168 = vpop.permute.xlu0 %4167
        %4169 = vrot.lane.b32.xlu0 %v846, 16
        %v4170 = vpop.permute.xlu0 %4169
        %4171 = vrot.lane.b32.xlu0 %v847, 16
        %v4172 = vpop.permute.xlu0 %4171
        %4173 = vrot.lane.b32.xlu0 %v848, 16
        %v4174 = vpop.permute.xlu0 %4173
        %4175 = vrot.lane.b32.xlu0 %v849, 16
        %v4176 = vpop.permute.xlu0 %4175
        %4177 = vrot.lane.b32.xlu0 %v850, 16
        %v4178 = vpop.permute.xlu0 %4177
        %4179 = vrot.lane.b32.xlu0 %v851, 16
        %v4180 = vpop.permute.xlu0 %4179
        %4181 = vrot.lane.b32.xlu0 %v852, 16
        %v4182 = vpop.permute.xlu0 %4181
        %4439 = vrot.lane.b32.xlu0 %v853, 20
        %v4440 = vpop.permute.xlu0 %4439
        %4441 = vrot.lane.b32.xlu0 %v854, 20
        %v4442 = vpop.permute.xlu0 %4441
        %4443 = vrot.lane.b32.xlu0 %v855, 20
        %v4444 = vpop.permute.xlu0 %4443
        %4445 = vrot.lane.b32.xlu0 %v856, 20
        %v4446 = vpop.permute.xlu0 %4445
        %4447 = vrot.lane.b32.xlu0 %v857, 20
        %v4448 = vpop.permute.xlu0 %4447
        %4449 = vrot.lane.b32.xlu0 %v858, 20
        %v4450 = vpop.permute.xlu0 %4449
        %4451 = vrot.lane.b32.xlu0 %v859, 20
        %v4452 = vpop.permute.xlu0 %4451
        %4453 = vrot.lane.b32.xlu0 %v860, 20
        %v4454 = vpop.permute.xlu0 %4453
        %4455 = vrot.lane.b32.xlu0 %v861, 20
        %v4456 = vpop.permute.xlu0 %4455
        %4457 = vrot.lane.b32.xlu0 %v862, 20
        %v4458 = vpop.permute.xlu0 %4457
        %4459 = vrot.lane.b32.xlu0 %v863, 20
        %v4460 = vpop.permute.xlu0 %4459
        %4461 = vrot.lane.b32.xlu0 %v864, 20
        %v4462 = vpop.permute.xlu0 %4461
        %4463 = vrot.lane.b32.xlu0 %v865, 20
        %v4464 = vpop.permute.xlu0 %4463
        %4465 = vrot.lane.b32.xlu0 %v866, 20
        %v4466 = vpop.permute.xlu0 %4465
        %4467 = vrot.lane.b32.xlu0 %v867, 20
        %v4468 = vpop.permute.xlu0 %4467
        %4469 = vrot.lane.b32.xlu0 %v868, 20
        %v4470 = vpop.permute.xlu0 %4469
        %4471 = vrot.lane.b32.xlu0 %v869, 20
        %v4472 = vpop.permute.xlu0 %4471
        %4473 = vrot.lane.b32.xlu0 %v870, 20
        %v4474 = vpop.permute.xlu0 %4473
        %4475 = vrot.lane.b32.xlu0 %v871, 20
        %v4476 = vpop.permute.xlu0 %4475
        %4477 = vrot.lane.b32.xlu0 %v872, 20
        %v4478 = vpop.permute.xlu0 %4477
        %4479 = vrot.lane.b32.xlu0 %v873, 20
        %v4480 = vpop.permute.xlu0 %4479
        %4481 = vrot.lane.b32.xlu0 %v874, 20
        %v4482 = vpop.permute.xlu0 %4481
        %4483 = vrot.lane.b32.xlu0 %v875, 20
        %v4484 = vpop.permute.xlu0 %4483
        %4485 = vrot.lane.b32.xlu0 %v876, 20
        %v4486 = vpop.permute.xlu0 %4485
        %4487 = vrot.lane.b32.xlu0 %v877, 20
        %v4488 = vpop.permute.xlu0 %4487
        %4489 = vrot.lane.b32.xlu0 %v878, 20
        %v4490 = vpop.permute.xlu0 %4489
        %4491 = vrot.lane.b32.xlu0 %v879, 20
        %v4492 = vpop.permute.xlu0 %4491
        %4493 = vrot.lane.b32.xlu0 %v880, 20
        %v4494 = vpop.permute.xlu0 %4493
        %4495 = vrot.lane.b32.xlu0 %v881, 20
        %v4496 = vpop.permute.xlu0 %4495
        %4497 = vrot.lane.b32.xlu0 %v882, 20
        %v4498 = vpop.permute.xlu0 %4497
        %4499 = vrot.lane.b32.xlu0 %v883, 20
        %v4500 = vpop.permute.xlu0 %4499
        %4501 = vrot.lane.b32.xlu0 %v884, 20
        %v4502 = vpop.permute.xlu0 %4501
        %4503 = vrot.lane.b32.xlu0 %v885, 20
        %v4504 = vpop.permute.xlu0 %4503
        %4505 = vrot.lane.b32.xlu0 %v886, 20
        %v4506 = vpop.permute.xlu0 %4505
        %4507 = vrot.lane.b32.xlu0 %v887, 20
        %v4508 = vpop.permute.xlu0 %4507
        %4509 = vrot.lane.b32.xlu0 %v888, 20
        %v4510 = vpop.permute.xlu0 %4509
        %4511 = vrot.lane.b32.xlu0 %v889, 20
        %v4512 = vpop.permute.xlu0 %4511
        %4513 = vrot.lane.b32.xlu0 %v890, 20
        %v4514 = vpop.permute.xlu0 %4513
        %4515 = vrot.lane.b32.xlu0 %v891, 20
        %v4516 = vpop.permute.xlu0 %4515
        %4517 = vrot.lane.b32.xlu0 %v892, 20
        %v4518 = vpop.permute.xlu0 %4517
        %4519 = vrot.lane.b32.xlu0 %v893, 20
        %v4520 = vpop.permute.xlu0 %4519
        %4521 = vrot.lane.b32.xlu0 %v894, 20
        %v4522 = vpop.permute.xlu0 %4521
        %4523 = vrot.lane.b32.xlu0 %v895, 20
        %v4524 = vpop.permute.xlu0 %4523
        %4525 = vrot.lane.b32.xlu0 %v896, 20
        %v4526 = vpop.permute.xlu0 %4525
        %4527 = vrot.lane.b32.xlu0 %v897, 20
        %v4528 = vpop.permute.xlu0 %4527
        %4529 = vrot.lane.b32.xlu0 %v898, 20
        %v4530 = vpop.permute.xlu0 %4529
        %4531 = vrot.lane.b32.xlu0 %v899, 20
        %v4532 = vpop.permute.xlu0 %4531
        %4533 = vrot.lane.b32.xlu0 %v900, 20
        %v4534 = vpop.permute.xlu0 %4533
        %4535 = vrot.lane.b32.xlu0 %v901, 20
        %v4536 = vpop.permute.xlu0 %4535
        %4537 = vrot.lane.b32.xlu0 %v902, 20
        %v4538 = vpop.permute.xlu0 %4537
        %4539 = vrot.lane.b32.xlu0 %v903, 20
        %v4540 = vpop.permute.xlu0 %4539
        %4541 = vrot.lane.b32.xlu0 %v904, 20
        %v4542 = vpop.permute.xlu0 %4541
        %4543 = vrot.lane.b32.xlu0 %v905, 20
        %v4544 = vpop.permute.xlu0 %4543
        %4545 = vrot.lane.b32.xlu0 %v906, 20
        %v4546 = vpop.permute.xlu0 %4545
        %4547 = vrot.lane.b32.xlu0 %v907, 20
        %v4548 = vpop.permute.xlu0 %4547
        %4549 = vrot.lane.b32.xlu0 %v908, 20
        %v4550 = vpop.permute.xlu0 %4549
        %4551 = vrot.lane.b32.xlu0 %v909, 20
        %v4552 = vpop.permute.xlu0 %4551
        %4553 = vrot.lane.b32.xlu0 %v910, 20
        %v4554 = vpop.permute.xlu0 %4553
        %4555 = vrot.lane.b32.xlu0 %v911, 20
        %v4556 = vpop.permute.xlu0 %4555
        %4557 = vrot.lane.b32.xlu0 %v912, 20
        %v4558 = vpop.permute.xlu0 %4557
        %4559 = vrot.lane.b32.xlu0 %v913, 20
        %v4560 = vpop.permute.xlu0 %4559
        %4561 = vrot.lane.b32.xlu0 %v914, 20
        %v4562 = vpop.permute.xlu0 %4561
        %4563 = vrot.lane.b32.xlu0 %v915, 20
        %v4564 = vpop.permute.xlu0 %4563
        %4565 = vrot.lane.b32.xlu0 %v916, 20
        %v4566 = vpop.permute.xlu0 %4565
        %4567 = vrot.lane.b32.xlu0 %v917, 20
        %v4568 = vpop.permute.xlu0 %4567
        %4569 = vrot.lane.b32.xlu0 %v918, 20
        %v4570 = vpop.permute.xlu0 %4569
        %4571 = vrot.lane.b32.xlu0 %v919, 20
        %v4572 = vpop.permute.xlu0 %4571
        %4573 = vrot.lane.b32.xlu0 %v920, 20
        %v4574 = vpop.permute.xlu0 %4573
        %4575 = vrot.lane.b32.xlu0 %v921, 20
        %v4576 = vpop.permute.xlu0 %4575
        %4577 = vrot.lane.b32.xlu0 %v922, 20
        %v4578 = vpop.permute.xlu0 %4577
        %4579 = vrot.lane.b32.xlu0 %v923, 20
        %v4580 = vpop.permute.xlu0 %4579
        %4581 = vrot.lane.b32.xlu0 %v924, 20
        %v4582 = vpop.permute.xlu0 %4581
        %4583 = vrot.lane.b32.xlu0 %v925, 20
        %v4584 = vpop.permute.xlu0 %4583
        %4585 = vrot.lane.b32.xlu0 %v926, 20
        %v4586 = vpop.permute.xlu0 %4585
        %4587 = vrot.lane.b32.xlu0 %v927, 20
        %v4588 = vpop.permute.xlu0 %4587
        %4589 = vrot.lane.b32.xlu0 %v928, 20
        %v4590 = vpop.permute.xlu0 %4589
        %4591 = vrot.lane.b32.xlu0 %v929, 20
        %v4592 = vpop.permute.xlu0 %4591
        %4593 = vrot.lane.b32.xlu0 %v930, 20
        %v4594 = vpop.permute.xlu0 %4593
        %4595 = vrot.lane.b32.xlu0 %v931, 20
        %v4596 = vpop.permute.xlu0 %4595
        %4597 = vrot.lane.b32.xlu0 %v932, 20
        %v4598 = vpop.permute.xlu0 %4597
        %4599 = vrot.lane.b32.xlu0 %v933, 20
        %v4600 = vpop.permute.xlu0 %4599
        %4601 = vrot.lane.b32.xlu0 %v934, 20
        %v4602 = vpop.permute.xlu0 %4601
        %4603 = vrot.lane.b32.xlu0 %v935, 20
        %v4604 = vpop.permute.xlu0 %4603
        %4605 = vrot.lane.b32.xlu0 %v936, 20
        %v4606 = vpop.permute.xlu0 %4605
        %4607 = vrot.lane.b32.xlu0 %v937, 20
        %v4608 = vpop.permute.xlu0 %4607
        %4609 = vrot.lane.b32.xlu0 %v938, 20
        %v4610 = vpop.permute.xlu0 %4609
        %4611 = vrot.lane.b32.xlu0 %v939, 20
        %v4612 = vpop.permute.xlu0 %4611
        %4613 = vrot.lane.b32.xlu0 %v940, 20
        %v4614 = vpop.permute.xlu0 %4613
        %4615 = vrot.lane.b32.xlu0 %v941, 20
        %v4616 = vpop.permute.xlu0 %4615
        %4617 = vrot.lane.b32.xlu0 %v942, 20
        %v4618 = vpop.permute.xlu0 %4617
        %4619 = vrot.lane.b32.xlu0 %v943, 20
        %v4620 = vpop.permute.xlu0 %4619
        %4621 = vrot.lane.b32.xlu0 %v944, 20
        %v4622 = vpop.permute.xlu0 %4621
        %4623 = vrot.lane.b32.xlu0 %v945, 20
        %v4624 = vpop.permute.xlu0 %4623
        %4625 = vrot.lane.b32.xlu0 %v946, 20
        %v4626 = vpop.permute.xlu0 %4625
        %4627 = vrot.lane.b32.xlu0 %v947, 20
        %v4628 = vpop.permute.xlu0 %4627
        %4629 = vrot.lane.b32.xlu0 %v948, 20
        %v4630 = vpop.permute.xlu0 %4629
        %4631 = vrot.lane.b32.xlu0 %v949, 20
        %v4632 = vpop.permute.xlu0 %4631
        %4633 = vrot.lane.b32.xlu0 %v950, 20
        %v4634 = vpop.permute.xlu0 %4633
        %4635 = vrot.lane.b32.xlu0 %v951, 20
        %v4636 = vpop.permute.xlu0 %4635
        %4637 = vrot.lane.b32.xlu0 %v952, 20
        %v4638 = vpop.permute.xlu0 %4637
        %4639 = vrot.lane.b32.xlu0 %v953, 20
        %v4640 = vpop.permute.xlu0 %4639
        %4641 = vrot.lane.b32.xlu0 %v954, 20
        %v4642 = vpop.permute.xlu0 %4641
        %4643 = vrot.lane.b32.xlu0 %v955, 20
        %v4644 = vpop.permute.xlu0 %4643
        %4645 = vrot.lane.b32.xlu0 %v956, 20
        %v4646 = vpop.permute.xlu0 %4645
        %4647 = vrot.lane.b32.xlu0 %v957, 20
        %v4648 = vpop.permute.xlu0 %4647
        %4649 = vrot.lane.b32.xlu0 %v958, 20
        %v4650 = vpop.permute.xlu0 %4649
        %4651 = vrot.lane.b32.xlu0 %v959, 20
        %v4652 = vpop.permute.xlu0 %4651
        %4653 = vrot.lane.b32.xlu0 %v960, 20
        %v4654 = vpop.permute.xlu0 %4653
        %4655 = vrot.lane.b32.xlu0 %v961, 20
        %v4656 = vpop.permute.xlu0 %4655
        %4657 = vrot.lane.b32.xlu0 %v962, 20
        %v4658 = vpop.permute.xlu0 %4657
        %4659 = vrot.lane.b32.xlu0 %v963, 20
        %v4660 = vpop.permute.xlu0 %4659
        %4661 = vrot.lane.b32.xlu0 %v964, 20
        %v4662 = vpop.permute.xlu0 %4661
        %4663 = vrot.lane.b32.xlu0 %v965, 20
        %v4664 = vpop.permute.xlu0 %4663
        %4665 = vrot.lane.b32.xlu0 %v966, 20
        %v4666 = vpop.permute.xlu0 %4665
        %4667 = vrot.lane.b32.xlu0 %v967, 20
        %v4668 = vpop.permute.xlu0 %4667
        %4669 = vrot.lane.b32.xlu0 %v968, 20
        %v4670 = vpop.permute.xlu0 %4669
        %4671 = vrot.lane.b32.xlu0 %v969, 20
        %v4672 = vpop.permute.xlu0 %4671
        %4673 = vrot.lane.b32.xlu0 %v970, 20
        %v4674 = vpop.permute.xlu0 %4673
        %4675 = vrot.lane.b32.xlu0 %v971, 20
        %v4676 = vpop.permute.xlu0 %4675
        %4677 = vrot.lane.b32.xlu0 %v972, 20
        %v4678 = vpop.permute.xlu0 %4677
        %4679 = vrot.lane.b32.xlu0 %v973, 20
        %v4680 = vpop.permute.xlu0 %4679
        %4681 = vrot.lane.b32.xlu0 %v974, 20
        %v4682 = vpop.permute.xlu0 %4681
        %4683 = vrot.lane.b32.xlu0 %v975, 20
        %v4684 = vpop.permute.xlu0 %4683
        %4685 = vrot.lane.b32.xlu0 %v976, 20
        %v4686 = vpop.permute.xlu0 %4685
        %4687 = vrot.lane.b32.xlu0 %v977, 20
        %v4688 = vpop.permute.xlu0 %4687
        %4689 = vrot.lane.b32.xlu0 %v978, 20
        %v4690 = vpop.permute.xlu0 %4689
        %4691 = vrot.lane.b32.xlu0 %v979, 20
        %v4692 = vpop.permute.xlu0 %4691
        %4693 = vrot.lane.b32.xlu0 %v980, 20
        %v4694 = vpop.permute.xlu0 %4693
        %4951 = vrot.lane.b32.xlu0 %v981, 24
        %v4952 = vpop.permute.xlu0 %4951
        %4953 = vrot.lane.b32.xlu0 %v982, 24
        %v4954 = vpop.permute.xlu0 %4953
        %4955 = vrot.lane.b32.xlu0 %v983, 24
        %v4956 = vpop.permute.xlu0 %4955
        %4957 = vrot.lane.b32.xlu0 %v984, 24
        %v4958 = vpop.permute.xlu0 %4957
        %4959 = vrot.lane.b32.xlu0 %v985, 24
        %v4960 = vpop.permute.xlu0 %4959
        %4961 = vrot.lane.b32.xlu0 %v986, 24
        %v4962 = vpop.permute.xlu0 %4961
        %4963 = vrot.lane.b32.xlu0 %v987, 24
        %v4964 = vpop.permute.xlu0 %4963
        %4965 = vrot.lane.b32.xlu0 %v988, 24
        %v4966 = vpop.permute.xlu0 %4965
        %4967 = vrot.lane.b32.xlu0 %v989, 24
        %v4968 = vpop.permute.xlu0 %4967
        %4969 = vrot.lane.b32.xlu0 %v990, 24
        %v4970 = vpop.permute.xlu0 %4969
        %4971 = vrot.lane.b32.xlu0 %v991, 24
        %v4972 = vpop.permute.xlu0 %4971
        %4973 = vrot.lane.b32.xlu0 %v992, 24
        %v4974 = vpop.permute.xlu0 %4973
        %4975 = vrot.lane.b32.xlu0 %v993, 24
        %v4976 = vpop.permute.xlu0 %4975
        %4977 = vrot.lane.b32.xlu0 %v994, 24
        %v4978 = vpop.permute.xlu0 %4977
        %4979 = vrot.lane.b32.xlu0 %v995, 24
        %v4980 = vpop.permute.xlu0 %4979
        %4981 = vrot.lane.b32.xlu0 %v996, 24
        %v4982 = vpop.permute.xlu0 %4981
        %4983 = vrot.lane.b32.xlu0 %v997, 24
        %v4984 = vpop.permute.xlu0 %4983
        %4985 = vrot.lane.b32.xlu0 %v998, 24
        %v4986 = vpop.permute.xlu0 %4985
        %4987 = vrot.lane.b32.xlu0 %v999, 24
        %v4988 = vpop.permute.xlu0 %4987
        %4989 = vrot.lane.b32.xlu0 %v1000, 24
        %v4990 = vpop.permute.xlu0 %4989
        %4991 = vrot.lane.b32.xlu0 %v1001, 24
        %v4992 = vpop.permute.xlu0 %4991
        %4993 = vrot.lane.b32.xlu0 %v1002, 24
        %v4994 = vpop.permute.xlu0 %4993
        %4995 = vrot.lane.b32.xlu0 %v1003, 24
        %v4996 = vpop.permute.xlu0 %4995
        %4997 = vrot.lane.b32.xlu0 %v1004, 24
        %v4998 = vpop.permute.xlu0 %4997
        %4999 = vrot.lane.b32.xlu0 %v1005, 24
        %v5000 = vpop.permute.xlu0 %4999
        %5001 = vrot.lane.b32.xlu0 %v1006, 24
        %v5002 = vpop.permute.xlu0 %5001
        %5003 = vrot.lane.b32.xlu0 %v1007, 24
        %v5004 = vpop.permute.xlu0 %5003
        %5005 = vrot.lane.b32.xlu0 %v1008, 24
        %v5006 = vpop.permute.xlu0 %5005
        %5007 = vrot.lane.b32.xlu0 %v1009, 24
        %v5008 = vpop.permute.xlu0 %5007
        %5009 = vrot.lane.b32.xlu0 %v1010, 24
        %v5010 = vpop.permute.xlu0 %5009
        %5011 = vrot.lane.b32.xlu0 %v1011, 24
        %v5012 = vpop.permute.xlu0 %5011
        %5013 = vrot.lane.b32.xlu0 %v1012, 24
        %v5014 = vpop.permute.xlu0 %5013
        %5015 = vrot.lane.b32.xlu0 %v1013, 24
        %v5016 = vpop.permute.xlu0 %5015
        %5017 = vrot.lane.b32.xlu0 %v1014, 24
        %v5018 = vpop.permute.xlu0 %5017
        %5019 = vrot.lane.b32.xlu0 %v1015, 24
        %v5020 = vpop.permute.xlu0 %5019
        %5021 = vrot.lane.b32.xlu0 %v1016, 24
        %v5022 = vpop.permute.xlu0 %5021
        %5023 = vrot.lane.b32.xlu0 %v1017, 24
        %v5024 = vpop.permute.xlu0 %5023
        %5025 = vrot.lane.b32.xlu0 %v1018, 24
        %v5026 = vpop.permute.xlu0 %5025
        %5027 = vrot.lane.b32.xlu0 %v1019, 24
        %v5028 = vpop.permute.xlu0 %5027
        %5029 = vrot.lane.b32.xlu0 %v1020, 24
        %v5030 = vpop.permute.xlu0 %5029
        %5031 = vrot.lane.b32.xlu0 %v1021, 24
        %v5032 = vpop.permute.xlu0 %5031
        %5033 = vrot.lane.b32.xlu0 %v1022, 24
        %v5034 = vpop.permute.xlu0 %5033
        %5035 = vrot.lane.b32.xlu0 %v1023, 24
        %v5036 = vpop.permute.xlu0 %5035
        %5037 = vrot.lane.b32.xlu0 %v1024, 24
        %v5038 = vpop.permute.xlu0 %5037
        %5039 = vrot.lane.b32.xlu0 %v1025, 24
        %v5040 = vpop.permute.xlu0 %5039
        %5041 = vrot.lane.b32.xlu0 %v1026, 24
        %v5042 = vpop.permute.xlu0 %5041
        %5043 = vrot.lane.b32.xlu0 %v1027, 24
        %v5044 = vpop.permute.xlu0 %5043
        %5045 = vrot.lane.b32.xlu0 %v1028, 24
        %v5046 = vpop.permute.xlu0 %5045
        %5047 = vrot.lane.b32.xlu0 %v1029, 24
        %v5048 = vpop.permute.xlu0 %5047
        %5049 = vrot.lane.b32.xlu0 %v1030, 24
        %v5050 = vpop.permute.xlu0 %5049
        %5051 = vrot.lane.b32.xlu0 %v1031, 24
        %v5052 = vpop.permute.xlu0 %5051
        %5053 = vrot.lane.b32.xlu0 %v1032, 24
        %v5054 = vpop.permute.xlu0 %5053
        %5055 = vrot.lane.b32.xlu0 %v1033, 24
        %v5056 = vpop.permute.xlu0 %5055
        %5057 = vrot.lane.b32.xlu0 %v1034, 24
        %v5058 = vpop.permute.xlu0 %5057
        %5059 = vrot.lane.b32.xlu0 %v1035, 24
        %v5060 = vpop.permute.xlu0 %5059
        %5061 = vrot.lane.b32.xlu0 %v1036, 24
        %v5062 = vpop.permute.xlu0 %5061
        %5063 = vrot.lane.b32.xlu0 %v1037, 24
        %v5064 = vpop.permute.xlu0 %5063
        %5065 = vrot.lane.b32.xlu0 %v1038, 24
        %v5066 = vpop.permute.xlu0 %5065
        %5067 = vrot.lane.b32.xlu0 %v1039, 24
        %v5068 = vpop.permute.xlu0 %5067
        %5069 = vrot.lane.b32.xlu0 %v1040, 24
        %v5070 = vpop.permute.xlu0 %5069
        %5071 = vrot.lane.b32.xlu0 %v1041, 24
        %v5072 = vpop.permute.xlu0 %5071
        %5073 = vrot.lane.b32.xlu0 %v1042, 24
        %v5074 = vpop.permute.xlu0 %5073
        %5075 = vrot.lane.b32.xlu0 %v1043, 24
        %v5076 = vpop.permute.xlu0 %5075
        %5077 = vrot.lane.b32.xlu0 %v1044, 24
        %v5078 = vpop.permute.xlu0 %5077
        %5079 = vrot.lane.b32.xlu0 %v1045, 24
        %v5080 = vpop.permute.xlu0 %5079
        %5081 = vrot.lane.b32.xlu0 %v1046, 24
        %v5082 = vpop.permute.xlu0 %5081
        %5083 = vrot.lane.b32.xlu0 %v1047, 24
        %v5084 = vpop.permute.xlu0 %5083
        %5085 = vrot.lane.b32.xlu0 %v1048, 24
        %v5086 = vpop.permute.xlu0 %5085
        %5087 = vrot.lane.b32.xlu0 %v1049, 24
        %v5088 = vpop.permute.xlu0 %5087
        %5089 = vrot.lane.b32.xlu0 %v1050, 24
        %v5090 = vpop.permute.xlu0 %5089
        %5091 = vrot.lane.b32.xlu0 %v1051, 24
        %v5092 = vpop.permute.xlu0 %5091
        %5093 = vrot.lane.b32.xlu0 %v1052, 24
        %v5094 = vpop.permute.xlu0 %5093
        %5095 = vrot.lane.b32.xlu0 %v1053, 24
        %v5096 = vpop.permute.xlu0 %5095
        %5097 = vrot.lane.b32.xlu0 %v1054, 24
        %v5098 = vpop.permute.xlu0 %5097
        %5099 = vrot.lane.b32.xlu0 %v1055, 24
        %v5100 = vpop.permute.xlu0 %5099
        %5101 = vrot.lane.b32.xlu0 %v1056, 24
        %v5102 = vpop.permute.xlu0 %5101
        %5103 = vrot.lane.b32.xlu0 %v1057, 24
        %v5104 = vpop.permute.xlu0 %5103
        %5105 = vrot.lane.b32.xlu0 %v1058, 24
        %v5106 = vpop.permute.xlu0 %5105
        %5107 = vrot.lane.b32.xlu0 %v1059, 24
        %v5108 = vpop.permute.xlu0 %5107
        %5109 = vrot.lane.b32.xlu0 %v1060, 24
        %v5110 = vpop.permute.xlu0 %5109
        %5111 = vrot.lane.b32.xlu0 %v1061, 24
        %v5112 = vpop.permute.xlu0 %5111
        %5113 = vrot.lane.b32.xlu0 %v1062, 24
        %v5114 = vpop.permute.xlu0 %5113
        %5115 = vrot.lane.b32.xlu0 %v1063, 24
        %v5116 = vpop.permute.xlu0 %5115
        %5117 = vrot.lane.b32.xlu0 %v1064, 24
        %v5118 = vpop.permute.xlu0 %5117
        %5119 = vrot.lane.b32.xlu0 %v1065, 24
        %v5120 = vpop.permute.xlu0 %5119
        %5121 = vrot.lane.b32.xlu0 %v1066, 24
        %v5122 = vpop.permute.xlu0 %5121
        %5123 = vrot.lane.b32.xlu0 %v1067, 24
        %v5124 = vpop.permute.xlu0 %5123
        %5125 = vrot.lane.b32.xlu0 %v1068, 24
        %v5126 = vpop.permute.xlu0 %5125
        %5127 = vrot.lane.b32.xlu0 %v1069, 24
        %v5128 = vpop.permute.xlu0 %5127
        %5129 = vrot.lane.b32.xlu0 %v1070, 24
        %v5130 = vpop.permute.xlu0 %5129
        %5131 = vrot.lane.b32.xlu0 %v1071, 24
        %v5132 = vpop.permute.xlu0 %5131
        %5133 = vrot.lane.b32.xlu0 %v1072, 24
        %v5134 = vpop.permute.xlu0 %5133
        %5135 = vrot.lane.b32.xlu0 %v1073, 24
        %v5136 = vpop.permute.xlu0 %5135
        %5137 = vrot.lane.b32.xlu0 %v1074, 24
        %v5138 = vpop.permute.xlu0 %5137
        %5139 = vrot.lane.b32.xlu0 %v1075, 24
        %v5140 = vpop.permute.xlu0 %5139
        %5141 = vrot.lane.b32.xlu0 %v1076, 24
        %v5142 = vpop.permute.xlu0 %5141
        %5143 = vrot.lane.b32.xlu0 %v1077, 24
        %v5144 = vpop.permute.xlu0 %5143
        %5145 = vrot.lane.b32.xlu0 %v1078, 24
        %v5146 = vpop.permute.xlu0 %5145
        %5147 = vrot.lane.b32.xlu0 %v1079, 24
        %v5148 = vpop.permute.xlu0 %5147
        %5149 = vrot.lane.b32.xlu0 %v1080, 24
        %v5150 = vpop.permute.xlu0 %5149
        %5151 = vrot.lane.b32.xlu0 %v1081, 24
        %v5152 = vpop.permute.xlu0 %5151
        %5153 = vrot.lane.b32.xlu0 %v1082, 24
        %v5154 = vpop.permute.xlu0 %5153
        %5155 = vrot.lane.b32.xlu0 %v1083, 24
        %v5156 = vpop.permute.xlu0 %5155
        %5157 = vrot.lane.b32.xlu0 %v1084, 24
        %v5158 = vpop.permute.xlu0 %5157
        %5159 = vrot.lane.b32.xlu0 %v1085, 24
        %v5160 = vpop.permute.xlu0 %5159
        %5161 = vrot.lane.b32.xlu0 %v1086, 24
        %v5162 = vpop.permute.xlu0 %5161
        %5163 = vrot.lane.b32.xlu0 %v1087, 24
        %v5164 = vpop.permute.xlu0 %5163
        %5165 = vrot.lane.b32.xlu0 %v1088, 24
        %v5166 = vpop.permute.xlu0 %5165
        %5167 = vrot.lane.b32.xlu0 %v1089, 24
        %v5168 = vpop.permute.xlu0 %5167
        %5169 = vrot.lane.b32.xlu0 %v1090, 24
        %v5170 = vpop.permute.xlu0 %5169
        %5171 = vrot.lane.b32.xlu0 %v1091, 24
        %v5172 = vpop.permute.xlu0 %5171
        %5173 = vrot.lane.b32.xlu0 %v1092, 24
        %v5174 = vpop.permute.xlu0 %5173
        %5175 = vrot.lane.b32.xlu0 %v1093, 24
        %v5176 = vpop.permute.xlu0 %5175
        %5177 = vrot.lane.b32.xlu0 %v1094, 24
        %v5178 = vpop.permute.xlu0 %5177
        %5179 = vrot.lane.b32.xlu0 %v1095, 24
        %v5180 = vpop.permute.xlu0 %5179
        %5181 = vrot.lane.b32.xlu0 %v1096, 24
        %v5182 = vpop.permute.xlu0 %5181
        %5183 = vrot.lane.b32.xlu0 %v1097, 24
        %v5184 = vpop.permute.xlu0 %5183
        %5185 = vrot.lane.b32.xlu0 %v1098, 24
        %v5186 = vpop.permute.xlu0 %5185
        %5187 = vrot.lane.b32.xlu0 %v1099, 24
        %v5188 = vpop.permute.xlu0 %5187
        %5189 = vrot.lane.b32.xlu0 %v1100, 24
        %v5190 = vpop.permute.xlu0 %5189
        %5191 = vrot.lane.b32.xlu0 %v1101, 24
        %v5192 = vpop.permute.xlu0 %5191
        %5193 = vrot.lane.b32.xlu0 %v1102, 24
        %v5194 = vpop.permute.xlu0 %5193
        %5195 = vrot.lane.b32.xlu0 %v1103, 24
        %v5196 = vpop.permute.xlu0 %5195
        %5197 = vrot.lane.b32.xlu0 %v1104, 24
        %v5198 = vpop.permute.xlu0 %5197
        %5199 = vrot.lane.b32.xlu0 %v1105, 24
        %v5200 = vpop.permute.xlu0 %5199
        %5201 = vrot.lane.b32.xlu0 %v1106, 24
        %v5202 = vpop.permute.xlu0 %5201
        %5203 = vrot.lane.b32.xlu0 %v1107, 24
        %v5204 = vpop.permute.xlu0 %5203
        %5205 = vrot.lane.b32.xlu0 %v1108, 24
        %v5206 = vpop.permute.xlu0 %5205
        %5463 = vrot.lane.b32.xlu0 %v1109, 28
        %v5464 = vpop.permute.xlu0 %5463
        %5465 = vrot.lane.b32.xlu0 %v1110, 28
        %v5466 = vpop.permute.xlu0 %5465
        %5467 = vrot.lane.b32.xlu0 %v1111, 28
        %v5468 = vpop.permute.xlu0 %5467
        %5469 = vrot.lane.b32.xlu0 %v1112, 28
        %v5470 = vpop.permute.xlu0 %5469
        %5471 = vrot.lane.b32.xlu0 %v1113, 28
        %v5472 = vpop.permute.xlu0 %5471
        %5473 = vrot.lane.b32.xlu0 %v1114, 28
        %v5474 = vpop.permute.xlu0 %5473
        %5475 = vrot.lane.b32.xlu0 %v1115, 28
        %v5476 = vpop.permute.xlu0 %5475
        %5477 = vrot.lane.b32.xlu0 %v1116, 28
        %v5478 = vpop.permute.xlu0 %5477
        %5479 = vrot.lane.b32.xlu0 %v1117, 28
        %v5480 = vpop.permute.xlu0 %5479
        %5481 = vrot.lane.b32.xlu0 %v1118, 28
        %v5482 = vpop.permute.xlu0 %5481
        %5483 = vrot.lane.b32.xlu0 %v1119, 28
        %v5484 = vpop.permute.xlu0 %5483
        %5485 = vrot.lane.b32.xlu0 %v1120, 28
        %v5486 = vpop.permute.xlu0 %5485
        %5487 = vrot.lane.b32.xlu0 %v1121, 28
        %v5488 = vpop.permute.xlu0 %5487
        %5489 = vrot.lane.b32.xlu0 %v1122, 28
        %v5490 = vpop.permute.xlu0 %5489
        %5491 = vrot.lane.b32.xlu0 %v1123, 28
        %v5492 = vpop.permute.xlu0 %5491
        %5493 = vrot.lane.b32.xlu0 %v1124, 28
        %v5494 = vpop.permute.xlu0 %5493
        %5495 = vrot.lane.b32.xlu0 %v1125, 28
        %v5496 = vpop.permute.xlu0 %5495
        %5497 = vrot.lane.b32.xlu0 %v1126, 28
        %v5498 = vpop.permute.xlu0 %5497
        %5499 = vrot.lane.b32.xlu0 %v1127, 28
        %v5500 = vpop.permute.xlu0 %5499
        %5501 = vrot.lane.b32.xlu0 %v1128, 28
        %v5502 = vpop.permute.xlu0 %5501
        %5503 = vrot.lane.b32.xlu0 %v1129, 28
        %v5504 = vpop.permute.xlu0 %5503
        %5505 = vrot.lane.b32.xlu0 %v1130, 28
        %v5506 = vpop.permute.xlu0 %5505
        %5507 = vrot.lane.b32.xlu0 %v1131, 28
        %v5508 = vpop.permute.xlu0 %5507
        %5509 = vrot.lane.b32.xlu0 %v1132, 28
        %v5510 = vpop.permute.xlu0 %5509
        %5511 = vrot.lane.b32.xlu0 %v1133, 28
        %v5512 = vpop.permute.xlu0 %5511
        %5513 = vrot.lane.b32.xlu0 %v1134, 28
        %v5514 = vpop.permute.xlu0 %5513
        %5515 = vrot.lane.b32.xlu0 %v1135, 28
        %v5516 = vpop.permute.xlu0 %5515
        %5517 = vrot.lane.b32.xlu0 %v1136, 28
        %v5518 = vpop.permute.xlu0 %5517
        %5519 = vrot.lane.b32.xlu0 %v1137, 28
        %v5520 = vpop.permute.xlu0 %5519
        %5521 = vrot.lane.b32.xlu0 %v1138, 28
        %v5522 = vpop.permute.xlu0 %5521
        %5523 = vrot.lane.b32.xlu0 %v1139, 28
        %v5524 = vpop.permute.xlu0 %5523
        %5525 = vrot.lane.b32.xlu0 %v1140, 28
        %v5526 = vpop.permute.xlu0 %5525
        %5527 = vrot.lane.b32.xlu0 %v1141, 28
        %v5528 = vpop.permute.xlu0 %5527
        %5529 = vrot.lane.b32.xlu0 %v1142, 28
        %v5530 = vpop.permute.xlu0 %5529
        %5531 = vrot.lane.b32.xlu0 %v1143, 28
        %v5532 = vpop.permute.xlu0 %5531
        %5533 = vrot.lane.b32.xlu0 %v1144, 28
        %v5534 = vpop.permute.xlu0 %5533
        %5535 = vrot.lane.b32.xlu0 %v1145, 28
        %v5536 = vpop.permute.xlu0 %5535
        %5537 = vrot.lane.b32.xlu0 %v1146, 28
        %v5538 = vpop.permute.xlu0 %5537
        %5539 = vrot.lane.b32.xlu0 %v1147, 28
        %v5540 = vpop.permute.xlu0 %5539
        %5541 = vrot.lane.b32.xlu0 %v1148, 28
        %v5542 = vpop.permute.xlu0 %5541
        %5543 = vrot.lane.b32.xlu0 %v1149, 28
        %v5544 = vpop.permute.xlu0 %5543
        %5545 = vrot.lane.b32.xlu0 %v1150, 28
        %v5546 = vpop.permute.xlu0 %5545
        %5547 = vrot.lane.b32.xlu0 %v1151, 28
        %v5548 = vpop.permute.xlu0 %5547
        %5549 = vrot.lane.b32.xlu0 %v1152, 28
        %v5550 = vpop.permute.xlu0 %5549
        %5551 = vrot.lane.b32.xlu0 %v1153, 28
        %v5552 = vpop.permute.xlu0 %5551
        %5553 = vrot.lane.b32.xlu0 %v1154, 28
        %v5554 = vpop.permute.xlu0 %5553
        %5555 = vrot.lane.b32.xlu0 %v1155, 28
        %v5556 = vpop.permute.xlu0 %5555
        %5557 = vrot.lane.b32.xlu0 %v1156, 28
        %v5558 = vpop.permute.xlu0 %5557
        %5559 = vrot.lane.b32.xlu0 %v1157, 28
        %v5560 = vpop.permute.xlu0 %5559
        %5561 = vrot.lane.b32.xlu0 %v1158, 28
        %v5562 = vpop.permute.xlu0 %5561
        %5563 = vrot.lane.b32.xlu0 %v1159, 28
        %v5564 = vpop.permute.xlu0 %5563
        %5565 = vrot.lane.b32.xlu0 %v1160, 28
        %v5566 = vpop.permute.xlu0 %5565
        %5567 = vrot.lane.b32.xlu0 %v1161, 28
        %v5568 = vpop.permute.xlu0 %5567
        %5569 = vrot.lane.b32.xlu0 %v1162, 28
        %v5570 = vpop.permute.xlu0 %5569
        %5571 = vrot.lane.b32.xlu0 %v1163, 28
        %v5572 = vpop.permute.xlu0 %5571
        %5573 = vrot.lane.b32.xlu0 %v1164, 28
        %v5574 = vpop.permute.xlu0 %5573
        %5575 = vrot.lane.b32.xlu0 %v1165, 28
        %v5576 = vpop.permute.xlu0 %5575
        %5577 = vrot.lane.b32.xlu0 %v1166, 28
        %v5578 = vpop.permute.xlu0 %5577
        %5579 = vrot.lane.b32.xlu0 %v1167, 28
        %v5580 = vpop.permute.xlu0 %5579
        %5581 = vrot.lane.b32.xlu0 %v1168, 28
        %v5582 = vpop.permute.xlu0 %5581
        %5583 = vrot.lane.b32.xlu0 %v1169, 28
        %v5584 = vpop.permute.xlu0 %5583
        %5585 = vrot.lane.b32.xlu0 %v1170, 28
        %v5586 = vpop.permute.xlu0 %5585
        %5587 = vrot.lane.b32.xlu0 %v1171, 28
        %v5588 = vpop.permute.xlu0 %5587
        %5589 = vrot.lane.b32.xlu0 %v1172, 28
        %v5590 = vpop.permute.xlu0 %5589
        %5591 = vrot.lane.b32.xlu0 %v1173, 28
        %v5592 = vpop.permute.xlu0 %5591
        %5593 = vrot.lane.b32.xlu0 %v1174, 28
        %v5594 = vpop.permute.xlu0 %5593
        %5595 = vrot.lane.b32.xlu0 %v1175, 28
        %v5596 = vpop.permute.xlu0 %5595
        %5597 = vrot.lane.b32.xlu0 %v1176, 28
        %v5598 = vpop.permute.xlu0 %5597
        %5599 = vrot.lane.b32.xlu0 %v1177, 28
        %v5600 = vpop.permute.xlu0 %5599
        %5601 = vrot.lane.b32.xlu0 %v1178, 28
        %v5602 = vpop.permute.xlu0 %5601
        %5603 = vrot.lane.b32.xlu0 %v1179, 28
        %v5604 = vpop.permute.xlu0 %5603
        %5605 = vrot.lane.b32.xlu0 %v1180, 28
        %v5606 = vpop.permute.xlu0 %5605
        %5607 = vrot.lane.b32.xlu0 %v1181, 28
        %v5608 = vpop.permute.xlu0 %5607
        %5609 = vrot.lane.b32.xlu0 %v1182, 28
        %v5610 = vpop.permute.xlu0 %5609
        %5611 = vrot.lane.b32.xlu0 %v1183, 28
        %v5612 = vpop.permute.xlu0 %5611
        %5613 = vrot.lane.b32.xlu0 %v1184, 28
        %v5614 = vpop.permute.xlu0 %5613
        %5615 = vrot.lane.b32.xlu0 %v1185, 28
        %v5616 = vpop.permute.xlu0 %5615
        %5617 = vrot.lane.b32.xlu0 %v1186, 28
        %v5618 = vpop.permute.xlu0 %5617
        %5619 = vrot.lane.b32.xlu0 %v1187, 28
        %v5620 = vpop.permute.xlu0 %5619
        %5621 = vrot.lane.b32.xlu0 %v1188, 28
        %v5622 = vpop.permute.xlu0 %5621
        %5623 = vrot.lane.b32.xlu0 %v1189, 28
        %v5624 = vpop.permute.xlu0 %5623
        %5625 = vrot.lane.b32.xlu0 %v1190, 28
        %v5626 = vpop.permute.xlu0 %5625
        %5627 = vrot.lane.b32.xlu0 %v1191, 28
        %v5628 = vpop.permute.xlu0 %5627
        %5629 = vrot.lane.b32.xlu0 %v1192, 28
        %v5630 = vpop.permute.xlu0 %5629
        %5631 = vrot.lane.b32.xlu0 %v1193, 28
        %v5632 = vpop.permute.xlu0 %5631
        %5633 = vrot.lane.b32.xlu0 %v1194, 28
        %v5634 = vpop.permute.xlu0 %5633
        %5635 = vrot.lane.b32.xlu0 %v1195, 28
        %v5636 = vpop.permute.xlu0 %5635
        %5637 = vrot.lane.b32.xlu0 %v1196, 28
        %v5638 = vpop.permute.xlu0 %5637
        %5639 = vrot.lane.b32.xlu0 %v1197, 28
        %v5640 = vpop.permute.xlu0 %5639
        %5641 = vrot.lane.b32.xlu0 %v1198, 28
        %v5642 = vpop.permute.xlu0 %5641
        %5643 = vrot.lane.b32.xlu0 %v1199, 28
        %v5644 = vpop.permute.xlu0 %5643
        %5645 = vrot.lane.b32.xlu0 %v1200, 28
        %v5646 = vpop.permute.xlu0 %5645
        %5647 = vrot.lane.b32.xlu0 %v1201, 28
        %v5648 = vpop.permute.xlu0 %5647
        %5649 = vrot.lane.b32.xlu0 %v1202, 28
        %v5650 = vpop.permute.xlu0 %5649
        %5651 = vrot.lane.b32.xlu0 %v1203, 28
        %v5652 = vpop.permute.xlu0 %5651
        %5653 = vrot.lane.b32.xlu0 %v1204, 28
        %v5654 = vpop.permute.xlu0 %5653
        %5655 = vrot.lane.b32.xlu0 %v1205, 28
        %v5656 = vpop.permute.xlu0 %5655
        %5657 = vrot.lane.b32.xlu0 %v1206, 28
        %v5658 = vpop.permute.xlu0 %5657
        %5659 = vrot.lane.b32.xlu0 %v1207, 28
        %v5660 = vpop.permute.xlu0 %5659
        %5661 = vrot.lane.b32.xlu0 %v1208, 28
        %v5662 = vpop.permute.xlu0 %5661
        %5663 = vrot.lane.b32.xlu0 %v1209, 28
        %v5664 = vpop.permute.xlu0 %5663
        %5665 = vrot.lane.b32.xlu0 %v1210, 28
        %v5666 = vpop.permute.xlu0 %5665
        %5667 = vrot.lane.b32.xlu0 %v1211, 28
        %v5668 = vpop.permute.xlu0 %5667
        %5669 = vrot.lane.b32.xlu0 %v1212, 28
        %v5670 = vpop.permute.xlu0 %5669
        %5671 = vrot.lane.b32.xlu0 %v1213, 28
        %v5672 = vpop.permute.xlu0 %5671
        %5673 = vrot.lane.b32.xlu0 %v1214, 28
        %v5674 = vpop.permute.xlu0 %5673
        %5675 = vrot.lane.b32.xlu0 %v1215, 28
        %v5676 = vpop.permute.xlu0 %5675
        %5677 = vrot.lane.b32.xlu0 %v1216, 28
        %v5678 = vpop.permute.xlu0 %5677
        %5679 = vrot.lane.b32.xlu0 %v1217, 28
        %v5680 = vpop.permute.xlu0 %5679
        %5681 = vrot.lane.b32.xlu0 %v1218, 28
        %v5682 = vpop.permute.xlu0 %5681
        %5683 = vrot.lane.b32.xlu0 %v1219, 28
        %v5684 = vpop.permute.xlu0 %5683
        %5685 = vrot.lane.b32.xlu0 %v1220, 28
        %v5686 = vpop.permute.xlu0 %5685
        %5687 = vrot.lane.b32.xlu0 %v1221, 28
        %v5688 = vpop.permute.xlu0 %5687
        %5689 = vrot.lane.b32.xlu0 %v1222, 28
        %v5690 = vpop.permute.xlu0 %5689
        %5691 = vrot.lane.b32.xlu0 %v1223, 28
        %v5692 = vpop.permute.xlu0 %5691
        %5693 = vrot.lane.b32.xlu0 %v1224, 28
        %v5694 = vpop.permute.xlu0 %5693
        %5695 = vrot.lane.b32.xlu0 %v1225, 28
        %v5696 = vpop.permute.xlu0 %5695
        %5697 = vrot.lane.b32.xlu0 %v1226, 28
        %v5698 = vpop.permute.xlu0 %5697
        %5699 = vrot.lane.b32.xlu0 %v1227, 28
        %v5700 = vpop.permute.xlu0 %5699
        %5701 = vrot.lane.b32.xlu0 %v1228, 28
        %v5702 = vpop.permute.xlu0 %5701
        %5703 = vrot.lane.b32.xlu0 %v1229, 28
        %v5704 = vpop.permute.xlu0 %5703
        %5705 = vrot.lane.b32.xlu0 %v1230, 28
        %v5706 = vpop.permute.xlu0 %5705
        %5707 = vrot.lane.b32.xlu0 %v1231, 28
        %v5708 = vpop.permute.xlu0 %5707
        %5709 = vrot.lane.b32.xlu0 %v1232, 28
        %v5710 = vpop.permute.xlu0 %5709
        %5711 = vrot.lane.b32.xlu0 %v1233, 28
        %v5712 = vpop.permute.xlu0 %5711
        %5713 = vrot.lane.b32.xlu0 %v1234, 28
        %v5714 = vpop.permute.xlu0 %5713
        %5715 = vrot.lane.b32.xlu0 %v1235, 28
        %v5716 = vpop.permute.xlu0 %5715
        %5717 = vrot.lane.b32.xlu0 %v1236, 28
        %v5718 = vpop.permute.xlu0 %5717
        %5975 = vrot.lane.b32.xlu0 %v1238, 32
        %v5976 = vpop.permute.xlu0 %5975
        %5977 = vrot.lane.b32.xlu0 %v1239, 32
        %v5978 = vpop.permute.xlu0 %5977
        %5979 = vrot.lane.b32.xlu0 %v1240, 32
        %v5980 = vpop.permute.xlu0 %5979
        %5981 = vrot.lane.b32.xlu0 %v1241, 32
        %v5982 = vpop.permute.xlu0 %5981
        %5983 = vrot.lane.b32.xlu0 %v1242, 32
        %v5984 = vpop.permute.xlu0 %5983
        %5985 = vrot.lane.b32.xlu0 %v1243, 32
        %v5986 = vpop.permute.xlu0 %5985
        %5987 = vrot.lane.b32.xlu0 %v1244, 32
        %v5988 = vpop.permute.xlu0 %5987
        %5989 = vrot.lane.b32.xlu0 %v1245, 32
        %v5990 = vpop.permute.xlu0 %5989
        %5991 = vrot.lane.b32.xlu0 %v1246, 32
        %v5992 = vpop.permute.xlu0 %5991
        %5993 = vrot.lane.b32.xlu0 %v1247, 32
        %v5994 = vpop.permute.xlu0 %5993
        %5995 = vrot.lane.b32.xlu0 %v1248, 32
        %v5996 = vpop.permute.xlu0 %5995
        %5997 = vrot.lane.b32.xlu0 %v1249, 32
        %v5998 = vpop.permute.xlu0 %5997
        %5999 = vrot.lane.b32.xlu0 %v1250, 32
        %v6000 = vpop.permute.xlu0 %5999
        %6001 = vrot.lane.b32.xlu0 %v1251, 32
        %v6002 = vpop.permute.xlu0 %6001
        %6003 = vrot.lane.b32.xlu0 %v1252, 32
        %v6004 = vpop.permute.xlu0 %6003
        %6005 = vrot.lane.b32.xlu0 %v1253, 32
        %v6006 = vpop.permute.xlu0 %6005
        %6007 = vrot.lane.b32.xlu0 %v1254, 32
        %v6008 = vpop.permute.xlu0 %6007
        %6009 = vrot.lane.b32.xlu0 %v1255, 32
        %v6010 = vpop.permute.xlu0 %6009
        %6011 = vrot.lane.b32.xlu0 %v1256, 32
        %v6012 = vpop.permute.xlu0 %6011
        %6013 = vrot.lane.b32.xlu0 %v1257, 32
        %v6014 = vpop.permute.xlu0 %6013
        %6015 = vrot.lane.b32.xlu0 %v1258, 32
        %v6016 = vpop.permute.xlu0 %6015
        %6017 = vrot.lane.b32.xlu0 %v1259, 32
        %v6018 = vpop.permute.xlu0 %6017
        %6019 = vrot.lane.b32.xlu0 %v1260, 32
        %v6020 = vpop.permute.xlu0 %6019
        %6021 = vrot.lane.b32.xlu0 %v1261, 32
        %v6022 = vpop.permute.xlu0 %6021
        %6023 = vrot.lane.b32.xlu0 %v1262, 32
        %v6024 = vpop.permute.xlu0 %6023
        %6025 = vrot.lane.b32.xlu0 %v1263, 32
        %v6026 = vpop.permute.xlu0 %6025
        %6027 = vrot.lane.b32.xlu0 %v1264, 32
        %v6028 = vpop.permute.xlu0 %6027
        %6029 = vrot.lane.b32.xlu0 %v1265, 32
        %v6030 = vpop.permute.xlu0 %6029
        %6031 = vrot.lane.b32.xlu0 %v1266, 32
        %v6032 = vpop.permute.xlu0 %6031
        %6033 = vrot.lane.b32.xlu0 %v1267, 32
        %v6034 = vpop.permute.xlu0 %6033
        %6035 = vrot.lane.b32.xlu0 %v1268, 32
        %v6036 = vpop.permute.xlu0 %6035
        %6037 = vrot.lane.b32.xlu0 %v1269, 32
        %v6038 = vpop.permute.xlu0 %6037
        %6039 = vrot.lane.b32.xlu0 %v1270, 32
        %v6040 = vpop.permute.xlu0 %6039
        %6041 = vrot.lane.b32.xlu0 %v1271, 32
        %v6042 = vpop.permute.xlu0 %6041
        %6043 = vrot.lane.b32.xlu0 %v1272, 32
        %v6044 = vpop.permute.xlu0 %6043
        %6045 = vrot.lane.b32.xlu0 %v1273, 32
        %v6046 = vpop.permute.xlu0 %6045
        %6047 = vrot.lane.b32.xlu0 %v1274, 32
        %v6048 = vpop.permute.xlu0 %6047
        %6049 = vrot.lane.b32.xlu0 %v1275, 32
        %v6050 = vpop.permute.xlu0 %6049
        %6051 = vrot.lane.b32.xlu0 %v1276, 32
        %v6052 = vpop.permute.xlu0 %6051
        %6053 = vrot.lane.b32.xlu0 %v1277, 32
        %v6054 = vpop.permute.xlu0 %6053
        %6055 = vrot.lane.b32.xlu0 %v1278, 32
        %v6056 = vpop.permute.xlu0 %6055
        %6057 = vrot.lane.b32.xlu0 %v1279, 32
        %v6058 = vpop.permute.xlu0 %6057
        %6059 = vrot.lane.b32.xlu0 %v1280, 32
        %v6060 = vpop.permute.xlu0 %6059
        %6061 = vrot.lane.b32.xlu0 %v1281, 32
        %v6062 = vpop.permute.xlu0 %6061
        %6063 = vrot.lane.b32.xlu0 %v1282, 32
        %v6064 = vpop.permute.xlu0 %6063
        %6065 = vrot.lane.b32.xlu0 %v1283, 32
        %v6066 = vpop.permute.xlu0 %6065
        %6067 = vrot.lane.b32.xlu0 %v1284, 32
        %v6068 = vpop.permute.xlu0 %6067
        %6069 = vrot.lane.b32.xlu0 %v1285, 32
        %v6070 = vpop.permute.xlu0 %6069
        %6071 = vrot.lane.b32.xlu0 %v1286, 32
        %v6072 = vpop.permute.xlu0 %6071
        %6073 = vrot.lane.b32.xlu0 %v1287, 32
        %v6074 = vpop.permute.xlu0 %6073
        %6075 = vrot.lane.b32.xlu0 %v1288, 32
        %v6076 = vpop.permute.xlu0 %6075
        %6077 = vrot.lane.b32.xlu0 %v1289, 32
        %v6078 = vpop.permute.xlu0 %6077
        %6079 = vrot.lane.b32.xlu0 %v1290, 32
        %v6080 = vpop.permute.xlu0 %6079
        %6081 = vrot.lane.b32.xlu0 %v1291, 32
        %v6082 = vpop.permute.xlu0 %6081
        %6083 = vrot.lane.b32.xlu0 %v1292, 32
        %v6084 = vpop.permute.xlu0 %6083
        %6085 = vrot.lane.b32.xlu0 %v1293, 32
        %v6086 = vpop.permute.xlu0 %6085
        %6087 = vrot.lane.b32.xlu0 %v1294, 32
        %v6088 = vpop.permute.xlu0 %6087
        %6089 = vrot.lane.b32.xlu0 %v1295, 32
        %v6090 = vpop.permute.xlu0 %6089
        %6091 = vrot.lane.b32.xlu0 %v1296, 32
        %v6092 = vpop.permute.xlu0 %6091
        %6093 = vrot.lane.b32.xlu0 %v1297, 32
        %v6094 = vpop.permute.xlu0 %6093
        %6095 = vrot.lane.b32.xlu0 %v1298, 32
        %v6096 = vpop.permute.xlu0 %6095
        %6097 = vrot.lane.b32.xlu0 %v1299, 32
        %v6098 = vpop.permute.xlu0 %6097
        %6099 = vrot.lane.b32.xlu0 %v1300, 32
        %v6100 = vpop.permute.xlu0 %6099
        %6101 = vrot.lane.b32.xlu0 %v1301, 32
        %v6102 = vpop.permute.xlu0 %6101
        %6103 = vrot.lane.b32.xlu0 %v1302, 32
        %v6104 = vpop.permute.xlu0 %6103
        %6105 = vrot.lane.b32.xlu0 %v1303, 32
        %v6106 = vpop.permute.xlu0 %6105
        %6107 = vrot.lane.b32.xlu0 %v1304, 32
        %v6108 = vpop.permute.xlu0 %6107
        %6109 = vrot.lane.b32.xlu0 %v1305, 32
        %v6110 = vpop.permute.xlu0 %6109
        %6111 = vrot.lane.b32.xlu0 %v1306, 32
        %v6112 = vpop.permute.xlu0 %6111
        %6113 = vrot.lane.b32.xlu0 %v1307, 32
        %v6114 = vpop.permute.xlu0 %6113
        %6115 = vrot.lane.b32.xlu0 %v1308, 32
        %v6116 = vpop.permute.xlu0 %6115
        %6117 = vrot.lane.b32.xlu0 %v1309, 32
        %v6118 = vpop.permute.xlu0 %6117
        %6119 = vrot.lane.b32.xlu0 %v1310, 32
        %v6120 = vpop.permute.xlu0 %6119
        %6121 = vrot.lane.b32.xlu0 %v1311, 32
        %v6122 = vpop.permute.xlu0 %6121
        %6123 = vrot.lane.b32.xlu0 %v1312, 32
        %v6124 = vpop.permute.xlu0 %6123
        %6125 = vrot.lane.b32.xlu0 %v1313, 32
        %v6126 = vpop.permute.xlu0 %6125
        %6127 = vrot.lane.b32.xlu0 %v1314, 32
        %v6128 = vpop.permute.xlu0 %6127
        %6129 = vrot.lane.b32.xlu0 %v1315, 32
        %v6130 = vpop.permute.xlu0 %6129
        %6131 = vrot.lane.b32.xlu0 %v1316, 32
        %v6132 = vpop.permute.xlu0 %6131
        %6133 = vrot.lane.b32.xlu0 %v1317, 32
        %v6134 = vpop.permute.xlu0 %6133
        %6135 = vrot.lane.b32.xlu0 %v1318, 32
        %v6136 = vpop.permute.xlu0 %6135
        %6137 = vrot.lane.b32.xlu0 %v1319, 32
        %v6138 = vpop.permute.xlu0 %6137
        %6139 = vrot.lane.b32.xlu0 %v1320, 32
        %v6140 = vpop.permute.xlu0 %6139
        %6141 = vrot.lane.b32.xlu0 %v1321, 32
        %v6142 = vpop.permute.xlu0 %6141
        %6143 = vrot.lane.b32.xlu0 %v1322, 32
        %v6144 = vpop.permute.xlu0 %6143
        %6145 = vrot.lane.b32.xlu0 %v1323, 32
        %v6146 = vpop.permute.xlu0 %6145
        %6147 = vrot.lane.b32.xlu0 %v1324, 32
        %v6148 = vpop.permute.xlu0 %6147
        %6149 = vrot.lane.b32.xlu0 %v1325, 32
        %v6150 = vpop.permute.xlu0 %6149
        %6151 = vrot.lane.b32.xlu0 %v1326, 32
        %v6152 = vpop.permute.xlu0 %6151
        %6153 = vrot.lane.b32.xlu0 %v1327, 32
        %v6154 = vpop.permute.xlu0 %6153
        %6155 = vrot.lane.b32.xlu0 %v1328, 32
        %v6156 = vpop.permute.xlu0 %6155
        %6157 = vrot.lane.b32.xlu0 %v1329, 32
        %v6158 = vpop.permute.xlu0 %6157
        %6159 = vrot.lane.b32.xlu0 %v1330, 32
        %v6160 = vpop.permute.xlu0 %6159
        %6161 = vrot.lane.b32.xlu0 %v1331, 32
        %v6162 = vpop.permute.xlu0 %6161
        %6163 = vrot.lane.b32.xlu0 %v1332, 32
        %v6164 = vpop.permute.xlu0 %6163
        %6165 = vrot.lane.b32.xlu0 %v1333, 32
        %v6166 = vpop.permute.xlu0 %6165
        %6167 = vrot.lane.b32.xlu0 %v1334, 32
        %v6168 = vpop.permute.xlu0 %6167
        %6169 = vrot.lane.b32.xlu0 %v1335, 32
        %v6170 = vpop.permute.xlu0 %6169
        %6171 = vrot.lane.b32.xlu0 %v1336, 32
        %v6172 = vpop.permute.xlu0 %6171
        %6173 = vrot.lane.b32.xlu0 %v1337, 32
        %v6174 = vpop.permute.xlu0 %6173
        %6175 = vrot.lane.b32.xlu0 %v1338, 32
        %v6176 = vpop.permute.xlu0 %6175
        %6177 = vrot.lane.b32.xlu0 %v1339, 32
        %v6178 = vpop.permute.xlu0 %6177
        %6179 = vrot.lane.b32.xlu0 %v1340, 32
        %v6180 = vpop.permute.xlu0 %6179
        %6181 = vrot.lane.b32.xlu0 %v1341, 32
        %v6182 = vpop.permute.xlu0 %6181
        %6183 = vrot.lane.b32.xlu0 %v1342, 32
        %v6184 = vpop.permute.xlu0 %6183
        %6185 = vrot.lane.b32.xlu0 %v1343, 32
        %v6186 = vpop.permute.xlu0 %6185
        %6187 = vrot.lane.b32.xlu0 %v1344, 32
        %v6188 = vpop.permute.xlu0 %6187
        %6189 = vrot.lane.b32.xlu0 %v1345, 32
        %v6190 = vpop.permute.xlu0 %6189
        %6191 = vrot.lane.b32.xlu0 %v1346, 32
        %v6192 = vpop.permute.xlu0 %6191
        %6193 = vrot.lane.b32.xlu0 %v1347, 32
        %v6194 = vpop.permute.xlu0 %6193
        %6195 = vrot.lane.b32.xlu0 %v1348, 32
        %v6196 = vpop.permute.xlu0 %6195
        %6197 = vrot.lane.b32.xlu0 %v1349, 32
        %v6198 = vpop.permute.xlu0 %6197
        %6199 = vrot.lane.b32.xlu0 %v1350, 32
        %v6200 = vpop.permute.xlu0 %6199
        %6201 = vrot.lane.b32.xlu0 %v1351, 32
        %v6202 = vpop.permute.xlu0 %6201
        %6203 = vrot.lane.b32.xlu0 %v1352, 32
        %v6204 = vpop.permute.xlu0 %6203
        %6205 = vrot.lane.b32.xlu0 %v1353, 32
        %v6206 = vpop.permute.xlu0 %6205
        %6207 = vrot.lane.b32.xlu0 %v1354, 32
        %v6208 = vpop.permute.xlu0 %6207
        %6209 = vrot.lane.b32.xlu0 %v1355, 32
        %v6210 = vpop.permute.xlu0 %6209
        %6211 = vrot.lane.b32.xlu0 %v1356, 32
        %v6212 = vpop.permute.xlu0 %6211
        %6213 = vrot.lane.b32.xlu0 %v1357, 32
        %v6214 = vpop.permute.xlu0 %6213
        %6215 = vrot.lane.b32.xlu0 %v1358, 32
        %v6216 = vpop.permute.xlu0 %6215
        %6217 = vrot.lane.b32.xlu0 %v1359, 32
        %v6218 = vpop.permute.xlu0 %6217
        %6219 = vrot.lane.b32.xlu0 %v1360, 32
        %v6220 = vpop.permute.xlu0 %6219
        %6221 = vrot.lane.b32.xlu0 %v1361, 32
        %v6222 = vpop.permute.xlu0 %6221
        %6223 = vrot.lane.b32.xlu0 %v1362, 32
        %v6224 = vpop.permute.xlu0 %6223
        %6225 = vrot.lane.b32.xlu0 %v1363, 32
        %v6226 = vpop.permute.xlu0 %6225
        %6227 = vrot.lane.b32.xlu0 %v1364, 32
        %v6228 = vpop.permute.xlu0 %6227
        %6229 = vrot.lane.b32.xlu0 %v1365, 32
        %v6230 = vpop.permute.xlu0 %6229
        %6487 = vrot.lane.b32.xlu0 %v1366, 36
        %v6488 = vpop.permute.xlu0 %6487
        %6489 = vrot.lane.b32.xlu0 %v1367, 36
        %v6490 = vpop.permute.xlu0 %6489
        %6491 = vrot.lane.b32.xlu0 %v1368, 36
        %v6492 = vpop.permute.xlu0 %6491
        %6493 = vrot.lane.b32.xlu0 %v1369, 36
        %v6494 = vpop.permute.xlu0 %6493
        %6495 = vrot.lane.b32.xlu0 %v1370, 36
        %v6496 = vpop.permute.xlu0 %6495
        %6497 = vrot.lane.b32.xlu0 %v1371, 36
        %v6498 = vpop.permute.xlu0 %6497
        %6499 = vrot.lane.b32.xlu0 %v1372, 36
        %v6500 = vpop.permute.xlu0 %6499
        %6501 = vrot.lane.b32.xlu0 %v1373, 36
        %v6502 = vpop.permute.xlu0 %6501
        %6503 = vrot.lane.b32.xlu0 %v1374, 36
        %v6504 = vpop.permute.xlu0 %6503
        %6505 = vrot.lane.b32.xlu0 %v1375, 36
        %v6506 = vpop.permute.xlu0 %6505
        %6507 = vrot.lane.b32.xlu0 %v1376, 36
        %v6508 = vpop.permute.xlu0 %6507
        %6509 = vrot.lane.b32.xlu0 %v1377, 36
        %v6510 = vpop.permute.xlu0 %6509
        %6511 = vrot.lane.b32.xlu0 %v1378, 36
        %v6512 = vpop.permute.xlu0 %6511
        %6513 = vrot.lane.b32.xlu0 %v1379, 36
        %v6514 = vpop.permute.xlu0 %6513
        %6515 = vrot.lane.b32.xlu0 %v1380, 36
        %v6516 = vpop.permute.xlu0 %6515
        %6517 = vrot.lane.b32.xlu0 %v1381, 36
        %v6518 = vpop.permute.xlu0 %6517
        %6519 = vrot.lane.b32.xlu0 %v1382, 36
        %v6520 = vpop.permute.xlu0 %6519
        %6521 = vrot.lane.b32.xlu0 %v1383, 36
        %v6522 = vpop.permute.xlu0 %6521
        %6523 = vrot.lane.b32.xlu0 %v1384, 36
        %v6524 = vpop.permute.xlu0 %6523
        %6525 = vrot.lane.b32.xlu0 %v1385, 36
        %v6526 = vpop.permute.xlu0 %6525
        %6527 = vrot.lane.b32.xlu0 %v1386, 36
        %v6528 = vpop.permute.xlu0 %6527
        %6529 = vrot.lane.b32.xlu0 %v1387, 36
        %v6530 = vpop.permute.xlu0 %6529
        %6531 = vrot.lane.b32.xlu0 %v1388, 36
        %v6532 = vpop.permute.xlu0 %6531
        %6533 = vrot.lane.b32.xlu0 %v1389, 36
        %v6534 = vpop.permute.xlu0 %6533
        %6535 = vrot.lane.b32.xlu0 %v1390, 36
        %v6536 = vpop.permute.xlu0 %6535
        %6537 = vrot.lane.b32.xlu0 %v1391, 36
        %v6538 = vpop.permute.xlu0 %6537
        %6539 = vrot.lane.b32.xlu0 %v1392, 36
        %v6540 = vpop.permute.xlu0 %6539
        %6541 = vrot.lane.b32.xlu0 %v1393, 36
        %v6542 = vpop.permute.xlu0 %6541
        %6543 = vrot.lane.b32.xlu0 %v1394, 36
        %v6544 = vpop.permute.xlu0 %6543
        %6545 = vrot.lane.b32.xlu0 %v1395, 36
        %v6546 = vpop.permute.xlu0 %6545
        %6547 = vrot.lane.b32.xlu0 %v1396, 36
        %v6548 = vpop.permute.xlu0 %6547
        %6549 = vrot.lane.b32.xlu0 %v1397, 36
        %v6550 = vpop.permute.xlu0 %6549
        %6551 = vrot.lane.b32.xlu0 %v1398, 36
        %v6552 = vpop.permute.xlu0 %6551
        %6553 = vrot.lane.b32.xlu0 %v1399, 36
        %v6554 = vpop.permute.xlu0 %6553
        %6555 = vrot.lane.b32.xlu0 %v1400, 36
        %v6556 = vpop.permute.xlu0 %6555
        %6557 = vrot.lane.b32.xlu0 %v1401, 36
        %v6558 = vpop.permute.xlu0 %6557
        %6559 = vrot.lane.b32.xlu0 %v1402, 36
        %v6560 = vpop.permute.xlu0 %6559
        %6561 = vrot.lane.b32.xlu0 %v1403, 36
        %v6562 = vpop.permute.xlu0 %6561
        %6563 = vrot.lane.b32.xlu0 %v1404, 36
        %v6564 = vpop.permute.xlu0 %6563
        %6565 = vrot.lane.b32.xlu0 %v1405, 36
        %v6566 = vpop.permute.xlu0 %6565
        %6567 = vrot.lane.b32.xlu0 %v1406, 36
        %v6568 = vpop.permute.xlu0 %6567
        %6569 = vrot.lane.b32.xlu0 %v1407, 36
        %v6570 = vpop.permute.xlu0 %6569
        %6571 = vrot.lane.b32.xlu0 %v1408, 36
        %v6572 = vpop.permute.xlu0 %6571
        %6573 = vrot.lane.b32.xlu0 %v1409, 36
        %v6574 = vpop.permute.xlu0 %6573
        %6575 = vrot.lane.b32.xlu0 %v1410, 36
        %v6576 = vpop.permute.xlu0 %6575
        %6577 = vrot.lane.b32.xlu0 %v1411, 36
        %v6578 = vpop.permute.xlu0 %6577
        %6579 = vrot.lane.b32.xlu0 %v1412, 36
        %v6580 = vpop.permute.xlu0 %6579
        %6581 = vrot.lane.b32.xlu0 %v1413, 36
        %v6582 = vpop.permute.xlu0 %6581
        %6583 = vrot.lane.b32.xlu0 %v1414, 36
        %v6584 = vpop.permute.xlu0 %6583
        %6585 = vrot.lane.b32.xlu0 %v1415, 36
        %v6586 = vpop.permute.xlu0 %6585
        %6587 = vrot.lane.b32.xlu0 %v1416, 36
        %v6588 = vpop.permute.xlu0 %6587
        %6589 = vrot.lane.b32.xlu0 %v1417, 36
        %v6590 = vpop.permute.xlu0 %6589
        %6591 = vrot.lane.b32.xlu0 %v1418, 36
        %v6592 = vpop.permute.xlu0 %6591
        %6593 = vrot.lane.b32.xlu0 %v1419, 36
        %v6594 = vpop.permute.xlu0 %6593
        %6595 = vrot.lane.b32.xlu0 %v1420, 36
        %v6596 = vpop.permute.xlu0 %6595
        %6597 = vrot.lane.b32.xlu0 %v1421, 36
        %v6598 = vpop.permute.xlu0 %6597
        %6599 = vrot.lane.b32.xlu0 %v1422, 36
        %v6600 = vpop.permute.xlu0 %6599
        %6601 = vrot.lane.b32.xlu0 %v1423, 36
        %v6602 = vpop.permute.xlu0 %6601
        %6603 = vrot.lane.b32.xlu0 %v1424, 36
        %v6604 = vpop.permute.xlu0 %6603
        %6605 = vrot.lane.b32.xlu0 %v1425, 36
        %v6606 = vpop.permute.xlu0 %6605
        %6607 = vrot.lane.b32.xlu0 %v1426, 36
        %v6608 = vpop.permute.xlu0 %6607
        %6609 = vrot.lane.b32.xlu0 %v1427, 36
        %v6610 = vpop.permute.xlu0 %6609
        %6611 = vrot.lane.b32.xlu0 %v1428, 36
        %v6612 = vpop.permute.xlu0 %6611
        %6613 = vrot.lane.b32.xlu0 %v1429, 36
        %v6614 = vpop.permute.xlu0 %6613
        %6615 = vrot.lane.b32.xlu0 %v1430, 36
        %v6616 = vpop.permute.xlu0 %6615
        %6617 = vrot.lane.b32.xlu0 %v1431, 36
        %v6618 = vpop.permute.xlu0 %6617
        %6619 = vrot.lane.b32.xlu0 %v1432, 36
        %v6620 = vpop.permute.xlu0 %6619
        %6621 = vrot.lane.b32.xlu0 %v1433, 36
        %v6622 = vpop.permute.xlu0 %6621
        %6623 = vrot.lane.b32.xlu0 %v1434, 36
        %v6624 = vpop.permute.xlu0 %6623
        %6625 = vrot.lane.b32.xlu0 %v1435, 36
        %v6626 = vpop.permute.xlu0 %6625
        %6627 = vrot.lane.b32.xlu0 %v1436, 36
        %v6628 = vpop.permute.xlu0 %6627
        %6629 = vrot.lane.b32.xlu0 %v1437, 36
        %v6630 = vpop.permute.xlu0 %6629
        %6631 = vrot.lane.b32.xlu0 %v1438, 36
        %v6632 = vpop.permute.xlu0 %6631
        %6633 = vrot.lane.b32.xlu0 %v1439, 36
        %v6634 = vpop.permute.xlu0 %6633
        %6635 = vrot.lane.b32.xlu0 %v1440, 36
        %v6636 = vpop.permute.xlu0 %6635
        %6637 = vrot.lane.b32.xlu0 %v1441, 36
        %v6638 = vpop.permute.xlu0 %6637
        %6639 = vrot.lane.b32.xlu0 %v1442, 36
        %v6640 = vpop.permute.xlu0 %6639
        %6641 = vrot.lane.b32.xlu0 %v1443, 36
        %v6642 = vpop.permute.xlu0 %6641
        %6643 = vrot.lane.b32.xlu0 %v1444, 36
        %v6644 = vpop.permute.xlu0 %6643
        %6645 = vrot.lane.b32.xlu0 %v1445, 36
        %v6646 = vpop.permute.xlu0 %6645
        %6647 = vrot.lane.b32.xlu0 %v1446, 36
        %v6648 = vpop.permute.xlu0 %6647
        %6649 = vrot.lane.b32.xlu0 %v1447, 36
        %v6650 = vpop.permute.xlu0 %6649
        %6651 = vrot.lane.b32.xlu0 %v1448, 36
        %v6652 = vpop.permute.xlu0 %6651
        %6653 = vrot.lane.b32.xlu0 %v1449, 36
        %v6654 = vpop.permute.xlu0 %6653
        %6655 = vrot.lane.b32.xlu0 %v1450, 36
        %v6656 = vpop.permute.xlu0 %6655
        %6657 = vrot.lane.b32.xlu0 %v1451, 36
        %v6658 = vpop.permute.xlu0 %6657
        %6659 = vrot.lane.b32.xlu0 %v1452, 36
        %v6660 = vpop.permute.xlu0 %6659
        %6661 = vrot.lane.b32.xlu0 %v1453, 36
        %v6662 = vpop.permute.xlu0 %6661
        %6663 = vrot.lane.b32.xlu0 %v1454, 36
        %v6664 = vpop.permute.xlu0 %6663
        %6665 = vrot.lane.b32.xlu0 %v1455, 36
        %v6666 = vpop.permute.xlu0 %6665
        %6667 = vrot.lane.b32.xlu0 %v1456, 36
        %v6668 = vpop.permute.xlu0 %6667
        %6669 = vrot.lane.b32.xlu0 %v1457, 36
        %v6670 = vpop.permute.xlu0 %6669
        %6671 = vrot.lane.b32.xlu0 %v1458, 36
        %v6672 = vpop.permute.xlu0 %6671
        %6673 = vrot.lane.b32.xlu0 %v1459, 36
        %v6674 = vpop.permute.xlu0 %6673
        %6675 = vrot.lane.b32.xlu0 %v1460, 36
        %v6676 = vpop.permute.xlu0 %6675
        %6677 = vrot.lane.b32.xlu0 %v1461, 36
        %v6678 = vpop.permute.xlu0 %6677
        %6679 = vrot.lane.b32.xlu0 %v1462, 36
        %v6680 = vpop.permute.xlu0 %6679
        %6681 = vrot.lane.b32.xlu0 %v1463, 36
        %v6682 = vpop.permute.xlu0 %6681
        %6683 = vrot.lane.b32.xlu0 %v1464, 36
        %v6684 = vpop.permute.xlu0 %6683
        %6685 = vrot.lane.b32.xlu0 %v1465, 36
        %v6686 = vpop.permute.xlu0 %6685
        %6687 = vrot.lane.b32.xlu0 %v1466, 36
        %v6688 = vpop.permute.xlu0 %6687
        %6689 = vrot.lane.b32.xlu0 %v1467, 36
        %v6690 = vpop.permute.xlu0 %6689
        %6691 = vrot.lane.b32.xlu0 %v1468, 36
        %v6692 = vpop.permute.xlu0 %6691
        %6693 = vrot.lane.b32.xlu0 %v1469, 36
        %v6694 = vpop.permute.xlu0 %6693
        %6695 = vrot.lane.b32.xlu0 %v1470, 36
        %v6696 = vpop.permute.xlu0 %6695
        %6697 = vrot.lane.b32.xlu0 %v1471, 36
        %v6698 = vpop.permute.xlu0 %6697
        %6699 = vrot.lane.b32.xlu0 %v1472, 36
        %v6700 = vpop.permute.xlu0 %6699
        %6701 = vrot.lane.b32.xlu0 %v1473, 36
        %v6702 = vpop.permute.xlu0 %6701
        %6703 = vrot.lane.b32.xlu0 %v1474, 36
        %v6704 = vpop.permute.xlu0 %6703
        %6705 = vrot.lane.b32.xlu0 %v1475, 36
        %v6706 = vpop.permute.xlu0 %6705
        %6707 = vrot.lane.b32.xlu0 %v1476, 36
        %v6708 = vpop.permute.xlu0 %6707
        %6709 = vrot.lane.b32.xlu0 %v1477, 36
        %v6710 = vpop.permute.xlu0 %6709
        %6711 = vrot.lane.b32.xlu0 %v1478, 36
        %v6712 = vpop.permute.xlu0 %6711
        %6713 = vrot.lane.b32.xlu0 %v1479, 36
        %v6714 = vpop.permute.xlu0 %6713
        %6715 = vrot.lane.b32.xlu0 %v1480, 36
        %v6716 = vpop.permute.xlu0 %6715
        %6717 = vrot.lane.b32.xlu0 %v1481, 36
        %v6718 = vpop.permute.xlu0 %6717
        %6719 = vrot.lane.b32.xlu0 %v1482, 36
        %v6720 = vpop.permute.xlu0 %6719
        %6721 = vrot.lane.b32.xlu0 %v1483, 36
        %v6722 = vpop.permute.xlu0 %6721
        %6723 = vrot.lane.b32.xlu0 %v1484, 36
        %v6724 = vpop.permute.xlu0 %6723
        %6725 = vrot.lane.b32.xlu0 %v1485, 36
        %v6726 = vpop.permute.xlu0 %6725
        %6727 = vrot.lane.b32.xlu0 %v1486, 36
        %v6728 = vpop.permute.xlu0 %6727
        %6729 = vrot.lane.b32.xlu0 %v1487, 36
        %v6730 = vpop.permute.xlu0 %6729
        %6731 = vrot.lane.b32.xlu0 %v1488, 36
        %v6732 = vpop.permute.xlu0 %6731
        %6733 = vrot.lane.b32.xlu0 %v1489, 36
        %v6734 = vpop.permute.xlu0 %6733
        %6735 = vrot.lane.b32.xlu0 %v1490, 36
        %v6736 = vpop.permute.xlu0 %6735
        %6737 = vrot.lane.b32.xlu0 %v1491, 36
        %v6738 = vpop.permute.xlu0 %6737
        %6739 = vrot.lane.b32.xlu0 %v1492, 36
        %v6740 = vpop.permute.xlu0 %6739
        %6741 = vrot.lane.b32.xlu0 %v1493, 36
        %v6742 = vpop.permute.xlu0 %6741
        %6999 = vrot.lane.b32.xlu0 %v1494, 40
        %v7000 = vpop.permute.xlu0 %6999
        %7001 = vrot.lane.b32.xlu0 %v1495, 40
        %v7002 = vpop.permute.xlu0 %7001
        %7003 = vrot.lane.b32.xlu0 %v1496, 40
        %v7004 = vpop.permute.xlu0 %7003
        %7005 = vrot.lane.b32.xlu0 %v1497, 40
        %v7006 = vpop.permute.xlu0 %7005
        %7007 = vrot.lane.b32.xlu0 %v1498, 40
        %v7008 = vpop.permute.xlu0 %7007
        %7009 = vrot.lane.b32.xlu0 %v1499, 40
        %v7010 = vpop.permute.xlu0 %7009
        %7011 = vrot.lane.b32.xlu0 %v1500, 40
        %v7012 = vpop.permute.xlu0 %7011
        %7013 = vrot.lane.b32.xlu0 %v1501, 40
        %v7014 = vpop.permute.xlu0 %7013
        %7015 = vrot.lane.b32.xlu0 %v1502, 40
        %v7016 = vpop.permute.xlu0 %7015
        %7017 = vrot.lane.b32.xlu0 %v1503, 40
        %v7018 = vpop.permute.xlu0 %7017
        %7019 = vrot.lane.b32.xlu0 %v1504, 40
        %v7020 = vpop.permute.xlu0 %7019
        %7021 = vrot.lane.b32.xlu0 %v1505, 40
        %v7022 = vpop.permute.xlu0 %7021
        %7023 = vrot.lane.b32.xlu0 %v1506, 40
        %v7024 = vpop.permute.xlu0 %7023
        %7025 = vrot.lane.b32.xlu0 %v1507, 40
        %v7026 = vpop.permute.xlu0 %7025
        %7027 = vrot.lane.b32.xlu0 %v1508, 40
        %v7028 = vpop.permute.xlu0 %7027
        %7029 = vrot.lane.b32.xlu0 %v1509, 40
        %v7030 = vpop.permute.xlu0 %7029
        %7031 = vrot.lane.b32.xlu0 %v1510, 40
        %v7032 = vpop.permute.xlu0 %7031
        %7033 = vrot.lane.b32.xlu0 %v1511, 40
        %v7034 = vpop.permute.xlu0 %7033
        %7035 = vrot.lane.b32.xlu0 %v1512, 40
        %v7036 = vpop.permute.xlu0 %7035
        %7037 = vrot.lane.b32.xlu0 %v1513, 40
        %v7038 = vpop.permute.xlu0 %7037
        %7039 = vrot.lane.b32.xlu0 %v1514, 40
        %v7040 = vpop.permute.xlu0 %7039
        %7041 = vrot.lane.b32.xlu0 %v1515, 40
        %v7042 = vpop.permute.xlu0 %7041
        %7043 = vrot.lane.b32.xlu0 %v1516, 40
        %v7044 = vpop.permute.xlu0 %7043
        %7045 = vrot.lane.b32.xlu0 %v1517, 40
        %v7046 = vpop.permute.xlu0 %7045
        %7047 = vrot.lane.b32.xlu0 %v1518, 40
        %v7048 = vpop.permute.xlu0 %7047
        %7049 = vrot.lane.b32.xlu0 %v1519, 40
        %v7050 = vpop.permute.xlu0 %7049
        %7051 = vrot.lane.b32.xlu0 %v1520, 40
        %v7052 = vpop.permute.xlu0 %7051
        %7053 = vrot.lane.b32.xlu0 %v1521, 40
        %v7054 = vpop.permute.xlu0 %7053
        %7055 = vrot.lane.b32.xlu0 %v1522, 40
        %v7056 = vpop.permute.xlu0 %7055
        %7057 = vrot.lane.b32.xlu0 %v1523, 40
        %v7058 = vpop.permute.xlu0 %7057
        %7059 = vrot.lane.b32.xlu0 %v1524, 40
        %v7060 = vpop.permute.xlu0 %7059
        %7061 = vrot.lane.b32.xlu0 %v1525, 40
        %v7062 = vpop.permute.xlu0 %7061
        %7063 = vrot.lane.b32.xlu0 %v1526, 40
        %v7064 = vpop.permute.xlu0 %7063
        %7065 = vrot.lane.b32.xlu0 %v1527, 40
        %v7066 = vpop.permute.xlu0 %7065
        %7067 = vrot.lane.b32.xlu0 %v1528, 40
        %v7068 = vpop.permute.xlu0 %7067
        %7069 = vrot.lane.b32.xlu0 %v1529, 40
        %v7070 = vpop.permute.xlu0 %7069
        %7071 = vrot.lane.b32.xlu0 %v1530, 40
        %v7072 = vpop.permute.xlu0 %7071
        %7073 = vrot.lane.b32.xlu0 %v1531, 40
        %v7074 = vpop.permute.xlu0 %7073
        %7075 = vrot.lane.b32.xlu0 %v1532, 40
        %v7076 = vpop.permute.xlu0 %7075
        %7077 = vrot.lane.b32.xlu0 %v1533, 40
        %v7078 = vpop.permute.xlu0 %7077
        %7079 = vrot.lane.b32.xlu0 %v1534, 40
        %v7080 = vpop.permute.xlu0 %7079
        %7081 = vrot.lane.b32.xlu0 %v1535, 40
        %v7082 = vpop.permute.xlu0 %7081
        %7083 = vrot.lane.b32.xlu0 %v1536, 40
        %v7084 = vpop.permute.xlu0 %7083
        %7085 = vrot.lane.b32.xlu0 %v1537, 40
        %v7086 = vpop.permute.xlu0 %7085
        %7087 = vrot.lane.b32.xlu0 %v1538, 40
        %v7088 = vpop.permute.xlu0 %7087
        %7089 = vrot.lane.b32.xlu0 %v1539, 40
        %v7090 = vpop.permute.xlu0 %7089
        %7091 = vrot.lane.b32.xlu0 %v1540, 40
        %v7092 = vpop.permute.xlu0 %7091
        %7093 = vrot.lane.b32.xlu0 %v1541, 40
        %v7094 = vpop.permute.xlu0 %7093
        %7095 = vrot.lane.b32.xlu0 %v1542, 40
        %v7096 = vpop.permute.xlu0 %7095
        %7097 = vrot.lane.b32.xlu0 %v1543, 40
        %v7098 = vpop.permute.xlu0 %7097
        %7099 = vrot.lane.b32.xlu0 %v1544, 40
        %v7100 = vpop.permute.xlu0 %7099
        %7101 = vrot.lane.b32.xlu0 %v1545, 40
        %v7102 = vpop.permute.xlu0 %7101
        %7103 = vrot.lane.b32.xlu0 %v1546, 40
        %v7104 = vpop.permute.xlu0 %7103
        %7105 = vrot.lane.b32.xlu0 %v1547, 40
        %v7106 = vpop.permute.xlu0 %7105
        %7107 = vrot.lane.b32.xlu0 %v1548, 40
        %v7108 = vpop.permute.xlu0 %7107
        %7109 = vrot.lane.b32.xlu0 %v1549, 40
        %v7110 = vpop.permute.xlu0 %7109
        %7111 = vrot.lane.b32.xlu0 %v1550, 40
        %v7112 = vpop.permute.xlu0 %7111
        %7113 = vrot.lane.b32.xlu0 %v1551, 40
        %v7114 = vpop.permute.xlu0 %7113
        %7115 = vrot.lane.b32.xlu0 %v1552, 40
        %v7116 = vpop.permute.xlu0 %7115
        %7117 = vrot.lane.b32.xlu0 %v1553, 40
        %v7118 = vpop.permute.xlu0 %7117
        %7119 = vrot.lane.b32.xlu0 %v1554, 40
        %v7120 = vpop.permute.xlu0 %7119
        %7121 = vrot.lane.b32.xlu0 %v1555, 40
        %v7122 = vpop.permute.xlu0 %7121
        %7123 = vrot.lane.b32.xlu0 %v1556, 40
        %v7124 = vpop.permute.xlu0 %7123
        %7125 = vrot.lane.b32.xlu0 %v1557, 40
        %v7126 = vpop.permute.xlu0 %7125
        %7127 = vrot.lane.b32.xlu0 %v1558, 40
        %v7128 = vpop.permute.xlu0 %7127
        %7129 = vrot.lane.b32.xlu0 %v1559, 40
        %v7130 = vpop.permute.xlu0 %7129
        %7131 = vrot.lane.b32.xlu0 %v1560, 40
        %v7132 = vpop.permute.xlu0 %7131
        %7133 = vrot.lane.b32.xlu0 %v1561, 40
        %v7134 = vpop.permute.xlu0 %7133
        %7135 = vrot.lane.b32.xlu0 %v1562, 40
        %v7136 = vpop.permute.xlu0 %7135
        %7137 = vrot.lane.b32.xlu0 %v1563, 40
        %v7138 = vpop.permute.xlu0 %7137
        %7139 = vrot.lane.b32.xlu0 %v1564, 40
        %v7140 = vpop.permute.xlu0 %7139
        %7141 = vrot.lane.b32.xlu0 %v1565, 40
        %v7142 = vpop.permute.xlu0 %7141
        %7143 = vrot.lane.b32.xlu0 %v1566, 40
        %v7144 = vpop.permute.xlu0 %7143
        %7145 = vrot.lane.b32.xlu0 %v1567, 40
        %v7146 = vpop.permute.xlu0 %7145
        %7147 = vrot.lane.b32.xlu0 %v1568, 40
        %v7148 = vpop.permute.xlu0 %7147
        %7149 = vrot.lane.b32.xlu0 %v1569, 40
        %v7150 = vpop.permute.xlu0 %7149
        %7151 = vrot.lane.b32.xlu0 %v1570, 40
        %v7152 = vpop.permute.xlu0 %7151
        %7153 = vrot.lane.b32.xlu0 %v1571, 40
        %v7154 = vpop.permute.xlu0 %7153
        %7155 = vrot.lane.b32.xlu0 %v1572, 40
        %v7156 = vpop.permute.xlu0 %7155
        %7157 = vrot.lane.b32.xlu0 %v1573, 40
        %v7158 = vpop.permute.xlu0 %7157
        %7159 = vrot.lane.b32.xlu0 %v1574, 40
        %v7160 = vpop.permute.xlu0 %7159
        %7161 = vrot.lane.b32.xlu0 %v1575, 40
        %v7162 = vpop.permute.xlu0 %7161
        %7163 = vrot.lane.b32.xlu0 %v1576, 40
        %v7164 = vpop.permute.xlu0 %7163
        %7165 = vrot.lane.b32.xlu0 %v1577, 40
        %v7166 = vpop.permute.xlu0 %7165
        %7167 = vrot.lane.b32.xlu0 %v1578, 40
        %v7168 = vpop.permute.xlu0 %7167
        %7169 = vrot.lane.b32.xlu0 %v1579, 40
        %v7170 = vpop.permute.xlu0 %7169
        %7171 = vrot.lane.b32.xlu0 %v1580, 40
        %v7172 = vpop.permute.xlu0 %7171
        %7173 = vrot.lane.b32.xlu0 %v1581, 40
        %v7174 = vpop.permute.xlu0 %7173
        %7175 = vrot.lane.b32.xlu0 %v1582, 40
        %v7176 = vpop.permute.xlu0 %7175
        %7177 = vrot.lane.b32.xlu0 %v1583, 40
        %v7178 = vpop.permute.xlu0 %7177
        %7179 = vrot.lane.b32.xlu0 %v1584, 40
        %v7180 = vpop.permute.xlu0 %7179
        %7181 = vrot.lane.b32.xlu0 %v1585, 40
        %v7182 = vpop.permute.xlu0 %7181
        %7183 = vrot.lane.b32.xlu0 %v1586, 40
        %v7184 = vpop.permute.xlu0 %7183
        %7185 = vrot.lane.b32.xlu0 %v1587, 40
        %v7186 = vpop.permute.xlu0 %7185
        %7187 = vrot.lane.b32.xlu0 %v1588, 40
        %v7188 = vpop.permute.xlu0 %7187
        %7189 = vrot.lane.b32.xlu0 %v1589, 40
        %v7190 = vpop.permute.xlu0 %7189
        %7191 = vrot.lane.b32.xlu0 %v1590, 40
        %v7192 = vpop.permute.xlu0 %7191
        %7193 = vrot.lane.b32.xlu0 %v1591, 40
        %v7194 = vpop.permute.xlu0 %7193
        %7195 = vrot.lane.b32.xlu0 %v1592, 40
        %v7196 = vpop.permute.xlu0 %7195
        %7197 = vrot.lane.b32.xlu0 %v1593, 40
        %v7198 = vpop.permute.xlu0 %7197
        %7199 = vrot.lane.b32.xlu0 %v1594, 40
        %v7200 = vpop.permute.xlu0 %7199
        %7201 = vrot.lane.b32.xlu0 %v1595, 40
        %v7202 = vpop.permute.xlu0 %7201
        %7203 = vrot.lane.b32.xlu0 %v1596, 40
        %v7204 = vpop.permute.xlu0 %7203
        %7205 = vrot.lane.b32.xlu0 %v1597, 40
        %v7206 = vpop.permute.xlu0 %7205
        %7207 = vrot.lane.b32.xlu0 %v1598, 40
        %v7208 = vpop.permute.xlu0 %7207
        %7209 = vrot.lane.b32.xlu0 %v1599, 40
        %v7210 = vpop.permute.xlu0 %7209
        %7211 = vrot.lane.b32.xlu0 %v1600, 40
        %v7212 = vpop.permute.xlu0 %7211
        %7213 = vrot.lane.b32.xlu0 %v1601, 40
        %v7214 = vpop.permute.xlu0 %7213
        %7215 = vrot.lane.b32.xlu0 %v1602, 40
        %v7216 = vpop.permute.xlu0 %7215
        %7217 = vrot.lane.b32.xlu0 %v1603, 40
        %v7218 = vpop.permute.xlu0 %7217
        %7219 = vrot.lane.b32.xlu0 %v1604, 40
        %v7220 = vpop.permute.xlu0 %7219
        %7221 = vrot.lane.b32.xlu0 %v1605, 40
        %v7222 = vpop.permute.xlu0 %7221
        %7223 = vrot.lane.b32.xlu0 %v1606, 40
        %v7224 = vpop.permute.xlu0 %7223
        %7225 = vrot.lane.b32.xlu0 %v1607, 40
        %v7226 = vpop.permute.xlu0 %7225
        %7227 = vrot.lane.b32.xlu0 %v1608, 40
        %v7228 = vpop.permute.xlu0 %7227
        %7229 = vrot.lane.b32.xlu0 %v1609, 40
        %v7230 = vpop.permute.xlu0 %7229
        %7231 = vrot.lane.b32.xlu0 %v1610, 40
        %v7232 = vpop.permute.xlu0 %7231
        %7233 = vrot.lane.b32.xlu0 %v1611, 40
        %v7234 = vpop.permute.xlu0 %7233
        %7235 = vrot.lane.b32.xlu0 %v1612, 40
        %v7236 = vpop.permute.xlu0 %7235
        %7237 = vrot.lane.b32.xlu0 %v1613, 40
        %v7238 = vpop.permute.xlu0 %7237
        %7239 = vrot.lane.b32.xlu0 %v1614, 40
        %v7240 = vpop.permute.xlu0 %7239
        %7241 = vrot.lane.b32.xlu0 %v1615, 40
        %v7242 = vpop.permute.xlu0 %7241
        %7243 = vrot.lane.b32.xlu0 %v1616, 40
        %v7244 = vpop.permute.xlu0 %7243
        %7245 = vrot.lane.b32.xlu0 %v1617, 40
        %v7246 = vpop.permute.xlu0 %7245
        %7247 = vrot.lane.b32.xlu0 %v1618, 40
        %v7248 = vpop.permute.xlu0 %7247
        %7249 = vrot.lane.b32.xlu0 %v1619, 40
        %v7250 = vpop.permute.xlu0 %7249
        %7251 = vrot.lane.b32.xlu0 %v1620, 40
        %v7252 = vpop.permute.xlu0 %7251
        %7253 = vrot.lane.b32.xlu0 %v1621, 40
        %v7254 = vpop.permute.xlu0 %7253
        %7511 = vrot.lane.b32.xlu0 %v1622, 44
        %v7512 = vpop.permute.xlu0 %7511
        %7513 = vrot.lane.b32.xlu0 %v1623, 44
        %v7514 = vpop.permute.xlu0 %7513
        %7515 = vrot.lane.b32.xlu0 %v1624, 44
        %v7516 = vpop.permute.xlu0 %7515
        %7517 = vrot.lane.b32.xlu0 %v1625, 44
        %v7518 = vpop.permute.xlu0 %7517
        %7519 = vrot.lane.b32.xlu0 %v1626, 44
        %v7520 = vpop.permute.xlu0 %7519
        %7521 = vrot.lane.b32.xlu0 %v1627, 44
        %v7522 = vpop.permute.xlu0 %7521
        %7523 = vrot.lane.b32.xlu0 %v1628, 44
        %v7524 = vpop.permute.xlu0 %7523
        %7525 = vrot.lane.b32.xlu0 %v1629, 44
        %v7526 = vpop.permute.xlu0 %7525
        %7527 = vrot.lane.b32.xlu0 %v1630, 44
        %v7528 = vpop.permute.xlu0 %7527
        %7529 = vrot.lane.b32.xlu0 %v1631, 44
        %v7530 = vpop.permute.xlu0 %7529
        %7531 = vrot.lane.b32.xlu0 %v1632, 44
        %v7532 = vpop.permute.xlu0 %7531
        %7533 = vrot.lane.b32.xlu0 %v1633, 44
        %v7534 = vpop.permute.xlu0 %7533
        %7535 = vrot.lane.b32.xlu0 %v1634, 44
        %v7536 = vpop.permute.xlu0 %7535
        %7537 = vrot.lane.b32.xlu0 %v1635, 44
        %v7538 = vpop.permute.xlu0 %7537
        %7539 = vrot.lane.b32.xlu0 %v1636, 44
        %v7540 = vpop.permute.xlu0 %7539
        %7541 = vrot.lane.b32.xlu0 %v1637, 44
        %v7542 = vpop.permute.xlu0 %7541
        %7543 = vrot.lane.b32.xlu0 %v1638, 44
        %v7544 = vpop.permute.xlu0 %7543
        %7545 = vrot.lane.b32.xlu0 %v1639, 44
        %v7546 = vpop.permute.xlu0 %7545
        %7547 = vrot.lane.b32.xlu0 %v1640, 44
        %v7548 = vpop.permute.xlu0 %7547
        %7549 = vrot.lane.b32.xlu0 %v1641, 44
        %v7550 = vpop.permute.xlu0 %7549
        %7551 = vrot.lane.b32.xlu0 %v1642, 44
        %v7552 = vpop.permute.xlu0 %7551
        %7553 = vrot.lane.b32.xlu0 %v1643, 44
        %v7554 = vpop.permute.xlu0 %7553
        %7555 = vrot.lane.b32.xlu0 %v1644, 44
        %v7556 = vpop.permute.xlu0 %7555
        %7557 = vrot.lane.b32.xlu0 %v1645, 44
        %v7558 = vpop.permute.xlu0 %7557
        %7559 = vrot.lane.b32.xlu0 %v1646, 44
        %v7560 = vpop.permute.xlu0 %7559
        %7561 = vrot.lane.b32.xlu0 %v1647, 44
        %v7562 = vpop.permute.xlu0 %7561
        %7563 = vrot.lane.b32.xlu0 %v1648, 44
        %v7564 = vpop.permute.xlu0 %7563
        %7565 = vrot.lane.b32.xlu0 %v1649, 44
        %v7566 = vpop.permute.xlu0 %7565
        %7567 = vrot.lane.b32.xlu0 %v1650, 44
        %v7568 = vpop.permute.xlu0 %7567
        %7569 = vrot.lane.b32.xlu0 %v1651, 44
        %v7570 = vpop.permute.xlu0 %7569
        %7571 = vrot.lane.b32.xlu0 %v1652, 44
        %v7572 = vpop.permute.xlu0 %7571
        %7573 = vrot.lane.b32.xlu0 %v1653, 44
        %v7574 = vpop.permute.xlu0 %7573
        %7575 = vrot.lane.b32.xlu0 %v1654, 44
        %v7576 = vpop.permute.xlu0 %7575
        %7577 = vrot.lane.b32.xlu0 %v1655, 44
        %v7578 = vpop.permute.xlu0 %7577
        %7579 = vrot.lane.b32.xlu0 %v1656, 44
        %v7580 = vpop.permute.xlu0 %7579
        %7581 = vrot.lane.b32.xlu0 %v1657, 44
        %v7582 = vpop.permute.xlu0 %7581
        %7583 = vrot.lane.b32.xlu0 %v1658, 44
        %v7584 = vpop.permute.xlu0 %7583
        %7585 = vrot.lane.b32.xlu0 %v1659, 44
        %v7586 = vpop.permute.xlu0 %7585
        %7587 = vrot.lane.b32.xlu0 %v1660, 44
        %v7588 = vpop.permute.xlu0 %7587
        %7589 = vrot.lane.b32.xlu0 %v1661, 44
        %v7590 = vpop.permute.xlu0 %7589
        %7591 = vrot.lane.b32.xlu0 %v1662, 44
        %v7592 = vpop.permute.xlu0 %7591
        %7593 = vrot.lane.b32.xlu0 %v1663, 44
        %v7594 = vpop.permute.xlu0 %7593
        %7595 = vrot.lane.b32.xlu0 %v1664, 44
        %v7596 = vpop.permute.xlu0 %7595
        %7597 = vrot.lane.b32.xlu0 %v1665, 44
        %v7598 = vpop.permute.xlu0 %7597
        %7599 = vrot.lane.b32.xlu0 %v1666, 44
        %v7600 = vpop.permute.xlu0 %7599
        %7601 = vrot.lane.b32.xlu0 %v1667, 44
        %v7602 = vpop.permute.xlu0 %7601
        %7603 = vrot.lane.b32.xlu0 %v1668, 44
        %v7604 = vpop.permute.xlu0 %7603
        %7605 = vrot.lane.b32.xlu0 %v1669, 44
        %v7606 = vpop.permute.xlu0 %7605
        %7607 = vrot.lane.b32.xlu0 %v1670, 44
        %v7608 = vpop.permute.xlu0 %7607
        %7609 = vrot.lane.b32.xlu0 %v1671, 44
        %v7610 = vpop.permute.xlu0 %7609
        %7611 = vrot.lane.b32.xlu0 %v1672, 44
        %v7612 = vpop.permute.xlu0 %7611
        %7613 = vrot.lane.b32.xlu0 %v1673, 44
        %v7614 = vpop.permute.xlu0 %7613
        %7615 = vrot.lane.b32.xlu0 %v1674, 44
        %v7616 = vpop.permute.xlu0 %7615
        %7617 = vrot.lane.b32.xlu0 %v1675, 44
        %v7618 = vpop.permute.xlu0 %7617
        %7619 = vrot.lane.b32.xlu0 %v1676, 44
        %v7620 = vpop.permute.xlu0 %7619
        %7621 = vrot.lane.b32.xlu0 %v1677, 44
        %v7622 = vpop.permute.xlu0 %7621
        %7623 = vrot.lane.b32.xlu0 %v1678, 44
        %v7624 = vpop.permute.xlu0 %7623
        %7625 = vrot.lane.b32.xlu0 %v1679, 44
        %v7626 = vpop.permute.xlu0 %7625
        %7627 = vrot.lane.b32.xlu0 %v1680, 44
        %v7628 = vpop.permute.xlu0 %7627
        %7629 = vrot.lane.b32.xlu0 %v1681, 44
        %v7630 = vpop.permute.xlu0 %7629
        %7631 = vrot.lane.b32.xlu0 %v1682, 44
        %v7632 = vpop.permute.xlu0 %7631
        %7633 = vrot.lane.b32.xlu0 %v1683, 44
        %v7634 = vpop.permute.xlu0 %7633
        %7635 = vrot.lane.b32.xlu0 %v1684, 44
        %v7636 = vpop.permute.xlu0 %7635
        %7637 = vrot.lane.b32.xlu0 %v1685, 44
        %v7638 = vpop.permute.xlu0 %7637
        %7639 = vrot.lane.b32.xlu0 %v1686, 44
        %v7640 = vpop.permute.xlu0 %7639
        %7641 = vrot.lane.b32.xlu0 %v1687, 44
        %v7642 = vpop.permute.xlu0 %7641
        %7643 = vrot.lane.b32.xlu0 %v1688, 44
        %v7644 = vpop.permute.xlu0 %7643
        %7645 = vrot.lane.b32.xlu0 %v1689, 44
        %v7646 = vpop.permute.xlu0 %7645
        %7647 = vrot.lane.b32.xlu0 %v1690, 44
        %v7648 = vpop.permute.xlu0 %7647
        %7649 = vrot.lane.b32.xlu0 %v1691, 44
        %v7650 = vpop.permute.xlu0 %7649
        %7651 = vrot.lane.b32.xlu0 %v1692, 44
        %v7652 = vpop.permute.xlu0 %7651
        %7653 = vrot.lane.b32.xlu0 %v1693, 44
        %v7654 = vpop.permute.xlu0 %7653
        %7655 = vrot.lane.b32.xlu0 %v1694, 44
        %v7656 = vpop.permute.xlu0 %7655
        %7657 = vrot.lane.b32.xlu0 %v1695, 44
        %v7658 = vpop.permute.xlu0 %7657
        %7659 = vrot.lane.b32.xlu0 %v1696, 44
        %v7660 = vpop.permute.xlu0 %7659
        %7661 = vrot.lane.b32.xlu0 %v1697, 44
        %v7662 = vpop.permute.xlu0 %7661
        %7663 = vrot.lane.b32.xlu0 %v1698, 44
        %v7664 = vpop.permute.xlu0 %7663
        %7665 = vrot.lane.b32.xlu0 %v1699, 44
        %v7666 = vpop.permute.xlu0 %7665
        %7667 = vrot.lane.b32.xlu0 %v1700, 44
        %v7668 = vpop.permute.xlu0 %7667
        %7669 = vrot.lane.b32.xlu0 %v1701, 44
        %v7670 = vpop.permute.xlu0 %7669
        %7671 = vrot.lane.b32.xlu0 %v1702, 44
        %v7672 = vpop.permute.xlu0 %7671
        %7673 = vrot.lane.b32.xlu0 %v1703, 44
        %v7674 = vpop.permute.xlu0 %7673
        %7675 = vrot.lane.b32.xlu0 %v1704, 44
        %v7676 = vpop.permute.xlu0 %7675
        %7677 = vrot.lane.b32.xlu0 %v1705, 44
        %v7678 = vpop.permute.xlu0 %7677
        %7679 = vrot.lane.b32.xlu0 %v1706, 44
        %v7680 = vpop.permute.xlu0 %7679
        %7681 = vrot.lane.b32.xlu0 %v1707, 44
        %v7682 = vpop.permute.xlu0 %7681
        %7683 = vrot.lane.b32.xlu0 %v1708, 44
        %v7684 = vpop.permute.xlu0 %7683
        %7685 = vrot.lane.b32.xlu0 %v1709, 44
        %v7686 = vpop.permute.xlu0 %7685
        %7687 = vrot.lane.b32.xlu0 %v1710, 44
        %v7688 = vpop.permute.xlu0 %7687
        %7689 = vrot.lane.b32.xlu0 %v1711, 44
        %v7690 = vpop.permute.xlu0 %7689
        %7691 = vrot.lane.b32.xlu0 %v1712, 44
        %v7692 = vpop.permute.xlu0 %7691
        %7693 = vrot.lane.b32.xlu0 %v1713, 44
        %v7694 = vpop.permute.xlu0 %7693
        %7695 = vrot.lane.b32.xlu0 %v1714, 44
        %v7696 = vpop.permute.xlu0 %7695
        %7697 = vrot.lane.b32.xlu0 %v1715, 44
        %v7698 = vpop.permute.xlu0 %7697
        %7699 = vrot.lane.b32.xlu0 %v1716, 44
        %v7700 = vpop.permute.xlu0 %7699
        %7701 = vrot.lane.b32.xlu0 %v1717, 44
        %v7702 = vpop.permute.xlu0 %7701
        %7703 = vrot.lane.b32.xlu0 %v1718, 44
        %v7704 = vpop.permute.xlu0 %7703
        %7705 = vrot.lane.b32.xlu0 %v1719, 44
        %v7706 = vpop.permute.xlu0 %7705
        %7707 = vrot.lane.b32.xlu0 %v1720, 44
        %v7708 = vpop.permute.xlu0 %7707
        %7709 = vrot.lane.b32.xlu0 %v1721, 44
        %v7710 = vpop.permute.xlu0 %7709
        %7711 = vrot.lane.b32.xlu0 %v1722, 44
        %v7712 = vpop.permute.xlu0 %7711
        %7713 = vrot.lane.b32.xlu0 %v1723, 44
        %v7714 = vpop.permute.xlu0 %7713
        %7715 = vrot.lane.b32.xlu0 %v1724, 44
        %v7716 = vpop.permute.xlu0 %7715
        %7717 = vrot.lane.b32.xlu0 %v1725, 44
        %v7718 = vpop.permute.xlu0 %7717
        %7719 = vrot.lane.b32.xlu0 %v1726, 44
        %v7720 = vpop.permute.xlu0 %7719
        %7721 = vrot.lane.b32.xlu0 %v1727, 44
        %v7722 = vpop.permute.xlu0 %7721
        %7723 = vrot.lane.b32.xlu0 %v1728, 44
        %v7724 = vpop.permute.xlu0 %7723
        %7725 = vrot.lane.b32.xlu0 %v1729, 44
        %v7726 = vpop.permute.xlu0 %7725
        %7727 = vrot.lane.b32.xlu0 %v1730, 44
        %v7728 = vpop.permute.xlu0 %7727
        %7729 = vrot.lane.b32.xlu0 %v1731, 44
        %v7730 = vpop.permute.xlu0 %7729
        %7731 = vrot.lane.b32.xlu0 %v1732, 44
        %v7732 = vpop.permute.xlu0 %7731
        %7733 = vrot.lane.b32.xlu0 %v1733, 44
        %v7734 = vpop.permute.xlu0 %7733
        %7735 = vrot.lane.b32.xlu0 %v1734, 44
        %v7736 = vpop.permute.xlu0 %7735
        %7737 = vrot.lane.b32.xlu0 %v1735, 44
        %v7738 = vpop.permute.xlu0 %7737
        %7739 = vrot.lane.b32.xlu0 %v1736, 44
        %v7740 = vpop.permute.xlu0 %7739
        %7741 = vrot.lane.b32.xlu0 %v1737, 44
        %v7742 = vpop.permute.xlu0 %7741
        %7743 = vrot.lane.b32.xlu0 %v1738, 44
        %v7744 = vpop.permute.xlu0 %7743
        %7745 = vrot.lane.b32.xlu0 %v1739, 44
        %v7746 = vpop.permute.xlu0 %7745
        %7747 = vrot.lane.b32.xlu0 %v1740, 44
        %v7748 = vpop.permute.xlu0 %7747
        %7749 = vrot.lane.b32.xlu0 %v1741, 44
        %v7750 = vpop.permute.xlu0 %7749
        %7751 = vrot.lane.b32.xlu0 %v1742, 44
        %v7752 = vpop.permute.xlu0 %7751
        %7753 = vrot.lane.b32.xlu0 %v1743, 44
        %v7754 = vpop.permute.xlu0 %7753
        %7755 = vrot.lane.b32.xlu0 %v1744, 44
        %v7756 = vpop.permute.xlu0 %7755
        %7757 = vrot.lane.b32.xlu0 %v1745, 44
        %v7758 = vpop.permute.xlu0 %7757
        %7759 = vrot.lane.b32.xlu0 %v1746, 44
        %v7760 = vpop.permute.xlu0 %7759
        %7761 = vrot.lane.b32.xlu0 %v1747, 44
        %v7762 = vpop.permute.xlu0 %7761
        %7763 = vrot.lane.b32.xlu0 %v1748, 44
        %v7764 = vpop.permute.xlu0 %7763
        %7765 = vrot.lane.b32.xlu0 %v1749, 44
        %v7766 = vpop.permute.xlu0 %7765
        %8023 = vrot.lane.b32.xlu0 %v1751, 48
        %v8024 = vpop.permute.xlu0 %8023
        %8025 = vrot.lane.b32.xlu0 %v1752, 48
        %v8026 = vpop.permute.xlu0 %8025
        %8027 = vrot.lane.b32.xlu0 %v1753, 48
        %v8028 = vpop.permute.xlu0 %8027
        %8029 = vrot.lane.b32.xlu0 %v1754, 48
        %v8030 = vpop.permute.xlu0 %8029
        %8031 = vrot.lane.b32.xlu0 %v1755, 48
        %v8032 = vpop.permute.xlu0 %8031
        %8033 = vrot.lane.b32.xlu0 %v1756, 48
        %v8034 = vpop.permute.xlu0 %8033
        %8035 = vrot.lane.b32.xlu0 %v1757, 48
        %v8036 = vpop.permute.xlu0 %8035
        %8037 = vrot.lane.b32.xlu0 %v1758, 48
        %v8038 = vpop.permute.xlu0 %8037
        %8039 = vrot.lane.b32.xlu0 %v1759, 48
        %v8040 = vpop.permute.xlu0 %8039
        %8041 = vrot.lane.b32.xlu0 %v1760, 48
        %v8042 = vpop.permute.xlu0 %8041
        %8043 = vrot.lane.b32.xlu0 %v1761, 48
        %v8044 = vpop.permute.xlu0 %8043
        %8045 = vrot.lane.b32.xlu0 %v1762, 48
        %v8046 = vpop.permute.xlu0 %8045
        %8047 = vrot.lane.b32.xlu0 %v1763, 48
        %v8048 = vpop.permute.xlu0 %8047
        %8049 = vrot.lane.b32.xlu0 %v1764, 48
        %v8050 = vpop.permute.xlu0 %8049
        %8051 = vrot.lane.b32.xlu0 %v1765, 48
        %v8052 = vpop.permute.xlu0 %8051
        %8053 = vrot.lane.b32.xlu0 %v1766, 48
        %v8054 = vpop.permute.xlu0 %8053
        %8055 = vrot.lane.b32.xlu0 %v1767, 48
        %v8056 = vpop.permute.xlu0 %8055
        %8057 = vrot.lane.b32.xlu0 %v1768, 48
        %v8058 = vpop.permute.xlu0 %8057
        %8059 = vrot.lane.b32.xlu0 %v1769, 48
        %v8060 = vpop.permute.xlu0 %8059
        %8061 = vrot.lane.b32.xlu0 %v1770, 48
        %v8062 = vpop.permute.xlu0 %8061
        %8063 = vrot.lane.b32.xlu0 %v1771, 48
        %v8064 = vpop.permute.xlu0 %8063
        %8065 = vrot.lane.b32.xlu0 %v1772, 48
        %v8066 = vpop.permute.xlu0 %8065
        %8067 = vrot.lane.b32.xlu0 %v1773, 48
        %v8068 = vpop.permute.xlu0 %8067
        %8069 = vrot.lane.b32.xlu0 %v1774, 48
        %v8070 = vpop.permute.xlu0 %8069
        %8071 = vrot.lane.b32.xlu0 %v1775, 48
        %v8072 = vpop.permute.xlu0 %8071
        %8073 = vrot.lane.b32.xlu0 %v1776, 48
        %v8074 = vpop.permute.xlu0 %8073
        %8075 = vrot.lane.b32.xlu0 %v1777, 48
        %v8076 = vpop.permute.xlu0 %8075
        %8077 = vrot.lane.b32.xlu0 %v1778, 48
        %v8078 = vpop.permute.xlu0 %8077
        %8079 = vrot.lane.b32.xlu0 %v1779, 48
        %v8080 = vpop.permute.xlu0 %8079
        %8081 = vrot.lane.b32.xlu0 %v1780, 48
        %v8082 = vpop.permute.xlu0 %8081
        %8083 = vrot.lane.b32.xlu0 %v1781, 48
        %v8084 = vpop.permute.xlu0 %8083
        %8085 = vrot.lane.b32.xlu0 %v1782, 48
        %v8086 = vpop.permute.xlu0 %8085
        %8087 = vrot.lane.b32.xlu0 %v1783, 48
        %v8088 = vpop.permute.xlu0 %8087
        %8089 = vrot.lane.b32.xlu0 %v1784, 48
        %v8090 = vpop.permute.xlu0 %8089
        %8091 = vrot.lane.b32.xlu0 %v1785, 48
        %v8092 = vpop.permute.xlu0 %8091
        %8093 = vrot.lane.b32.xlu0 %v1786, 48
        %v8094 = vpop.permute.xlu0 %8093
        %8095 = vrot.lane.b32.xlu0 %v1787, 48
        %v8096 = vpop.permute.xlu0 %8095
        %8097 = vrot.lane.b32.xlu0 %v1788, 48
        %v8098 = vpop.permute.xlu0 %8097
        %8099 = vrot.lane.b32.xlu0 %v1789, 48
        %v8100 = vpop.permute.xlu0 %8099
        %8101 = vrot.lane.b32.xlu0 %v1790, 48
        %v8102 = vpop.permute.xlu0 %8101
        %8103 = vrot.lane.b32.xlu0 %v1791, 48
        %v8104 = vpop.permute.xlu0 %8103
        %8105 = vrot.lane.b32.xlu0 %v1792, 48
        %v8106 = vpop.permute.xlu0 %8105
        %8107 = vrot.lane.b32.xlu0 %v1793, 48
        %v8108 = vpop.permute.xlu0 %8107
        %8109 = vrot.lane.b32.xlu0 %v1794, 48
        %v8110 = vpop.permute.xlu0 %8109
        %8111 = vrot.lane.b32.xlu0 %v1795, 48
        %v8112 = vpop.permute.xlu0 %8111
        %8113 = vrot.lane.b32.xlu0 %v1796, 48
        %v8114 = vpop.permute.xlu0 %8113
        %8115 = vrot.lane.b32.xlu0 %v1797, 48
        %v8116 = vpop.permute.xlu0 %8115
        %8117 = vrot.lane.b32.xlu0 %v1798, 48
        %v8118 = vpop.permute.xlu0 %8117
        %8119 = vrot.lane.b32.xlu0 %v1799, 48
        %v8120 = vpop.permute.xlu0 %8119
        %8121 = vrot.lane.b32.xlu0 %v1800, 48
        %v8122 = vpop.permute.xlu0 %8121
        %8123 = vrot.lane.b32.xlu0 %v1801, 48
        %v8124 = vpop.permute.xlu0 %8123
        %8125 = vrot.lane.b32.xlu0 %v1802, 48
        %v8126 = vpop.permute.xlu0 %8125
        %8127 = vrot.lane.b32.xlu0 %v1803, 48
        %v8128 = vpop.permute.xlu0 %8127
        %8129 = vrot.lane.b32.xlu0 %v1804, 48
        %v8130 = vpop.permute.xlu0 %8129
        %8131 = vrot.lane.b32.xlu0 %v1805, 48
        %v8132 = vpop.permute.xlu0 %8131
        %8133 = vrot.lane.b32.xlu0 %v1806, 48
        %v8134 = vpop.permute.xlu0 %8133
        %8135 = vrot.lane.b32.xlu0 %v1807, 48
        %v8136 = vpop.permute.xlu0 %8135
        %8137 = vrot.lane.b32.xlu0 %v1808, 48
        %v8138 = vpop.permute.xlu0 %8137
        %8139 = vrot.lane.b32.xlu0 %v1809, 48
        %v8140 = vpop.permute.xlu0 %8139
        %8141 = vrot.lane.b32.xlu0 %v1810, 48
        %v8142 = vpop.permute.xlu0 %8141
        %8143 = vrot.lane.b32.xlu0 %v1811, 48
        %v8144 = vpop.permute.xlu0 %8143
        %8145 = vrot.lane.b32.xlu0 %v1812, 48
        %v8146 = vpop.permute.xlu0 %8145
        %8147 = vrot.lane.b32.xlu0 %v1813, 48
        %v8148 = vpop.permute.xlu0 %8147
        %8149 = vrot.lane.b32.xlu0 %v1814, 48
        %v8150 = vpop.permute.xlu0 %8149
        %8151 = vrot.lane.b32.xlu0 %v1815, 48
        %v8152 = vpop.permute.xlu0 %8151
        %8153 = vrot.lane.b32.xlu0 %v1816, 48
        %v8154 = vpop.permute.xlu0 %8153
        %8155 = vrot.lane.b32.xlu0 %v1817, 48
        %v8156 = vpop.permute.xlu0 %8155
        %8157 = vrot.lane.b32.xlu0 %v1818, 48
        %v8158 = vpop.permute.xlu0 %8157
        %8159 = vrot.lane.b32.xlu0 %v1819, 48
        %v8160 = vpop.permute.xlu0 %8159
        %8161 = vrot.lane.b32.xlu0 %v1820, 48
        %v8162 = vpop.permute.xlu0 %8161
        %8163 = vrot.lane.b32.xlu0 %v1821, 48
        %v8164 = vpop.permute.xlu0 %8163
        %8165 = vrot.lane.b32.xlu0 %v1822, 48
        %v8166 = vpop.permute.xlu0 %8165
        %8167 = vrot.lane.b32.xlu0 %v1823, 48
        %v8168 = vpop.permute.xlu0 %8167
        %8169 = vrot.lane.b32.xlu0 %v1824, 48
        %v8170 = vpop.permute.xlu0 %8169
        %8171 = vrot.lane.b32.xlu0 %v1825, 48
        %v8172 = vpop.permute.xlu0 %8171
        %8173 = vrot.lane.b32.xlu0 %v1826, 48
        %v8174 = vpop.permute.xlu0 %8173
        %8175 = vrot.lane.b32.xlu0 %v1827, 48
        %v8176 = vpop.permute.xlu0 %8175
        %8177 = vrot.lane.b32.xlu0 %v1828, 48
        %v8178 = vpop.permute.xlu0 %8177
        %8179 = vrot.lane.b32.xlu0 %v1829, 48
        %v8180 = vpop.permute.xlu0 %8179
        %8181 = vrot.lane.b32.xlu0 %v1830, 48
        %v8182 = vpop.permute.xlu0 %8181
        %8183 = vrot.lane.b32.xlu0 %v1831, 48
        %v8184 = vpop.permute.xlu0 %8183
        %8185 = vrot.lane.b32.xlu0 %v1832, 48
        %v8186 = vpop.permute.xlu0 %8185
        %8187 = vrot.lane.b32.xlu0 %v1833, 48
        %v8188 = vpop.permute.xlu0 %8187
        %8189 = vrot.lane.b32.xlu0 %v1834, 48
        %v8190 = vpop.permute.xlu0 %8189
        %8191 = vrot.lane.b32.xlu0 %v1835, 48
        %v8192 = vpop.permute.xlu0 %8191
        %8193 = vrot.lane.b32.xlu0 %v1836, 48
        %v8194 = vpop.permute.xlu0 %8193
        %8195 = vrot.lane.b32.xlu0 %v1837, 48
        %v8196 = vpop.permute.xlu0 %8195
        %8197 = vrot.lane.b32.xlu0 %v1838, 48
        %v8198 = vpop.permute.xlu0 %8197
        %8199 = vrot.lane.b32.xlu0 %v1839, 48
        %v8200 = vpop.permute.xlu0 %8199
        %8201 = vrot.lane.b32.xlu0 %v1840, 48
        %v8202 = vpop.permute.xlu0 %8201
        %8203 = vrot.lane.b32.xlu0 %v1841, 48
        %v8204 = vpop.permute.xlu0 %8203
        %8205 = vrot.lane.b32.xlu0 %v1842, 48
        %v8206 = vpop.permute.xlu0 %8205
        %8207 = vrot.lane.b32.xlu0 %v1843, 48
        %v8208 = vpop.permute.xlu0 %8207
        %8209 = vrot.lane.b32.xlu0 %v1844, 48
        %v8210 = vpop.permute.xlu0 %8209
        %8211 = vrot.lane.b32.xlu0 %v1845, 48
        %v8212 = vpop.permute.xlu0 %8211
        %8213 = vrot.lane.b32.xlu0 %v1846, 48
        %v8214 = vpop.permute.xlu0 %8213
        %8215 = vrot.lane.b32.xlu0 %v1847, 48
        %v8216 = vpop.permute.xlu0 %8215
        %8217 = vrot.lane.b32.xlu0 %v1848, 48
        %v8218 = vpop.permute.xlu0 %8217
        %8219 = vrot.lane.b32.xlu0 %v1849, 48
        %v8220 = vpop.permute.xlu0 %8219
        %8221 = vrot.lane.b32.xlu0 %v1850, 48
        %v8222 = vpop.permute.xlu0 %8221
        %8223 = vrot.lane.b32.xlu0 %v1851, 48
        %v8224 = vpop.permute.xlu0 %8223
        %8225 = vrot.lane.b32.xlu0 %v1852, 48
        %v8226 = vpop.permute.xlu0 %8225
        %8227 = vrot.lane.b32.xlu0 %v1853, 48
        %v8228 = vpop.permute.xlu0 %8227
        %8229 = vrot.lane.b32.xlu0 %v1854, 48
        %v8230 = vpop.permute.xlu0 %8229
        %8231 = vrot.lane.b32.xlu0 %v1855, 48
        %v8232 = vpop.permute.xlu0 %8231
        %8233 = vrot.lane.b32.xlu0 %v1856, 48
        %v8234 = vpop.permute.xlu0 %8233
        %8235 = vrot.lane.b32.xlu0 %v1857, 48
        %v8236 = vpop.permute.xlu0 %8235
        %8237 = vrot.lane.b32.xlu0 %v1858, 48
        %v8238 = vpop.permute.xlu0 %8237
        %8239 = vrot.lane.b32.xlu0 %v1859, 48
        %v8240 = vpop.permute.xlu0 %8239
        %8241 = vrot.lane.b32.xlu0 %v1860, 48
        %v8242 = vpop.permute.xlu0 %8241
        %8243 = vrot.lane.b32.xlu0 %v1861, 48
        %v8244 = vpop.permute.xlu0 %8243
        %8245 = vrot.lane.b32.xlu0 %v1862, 48
        %v8246 = vpop.permute.xlu0 %8245
        %8247 = vrot.lane.b32.xlu0 %v1863, 48
        %v8248 = vpop.permute.xlu0 %8247
        %8249 = vrot.lane.b32.xlu0 %v1864, 48
        %v8250 = vpop.permute.xlu0 %8249
        %8251 = vrot.lane.b32.xlu0 %v1865, 48
        %v8252 = vpop.permute.xlu0 %8251
        %8253 = vrot.lane.b32.xlu0 %v1866, 48
        %v8254 = vpop.permute.xlu0 %8253
        %8255 = vrot.lane.b32.xlu0 %v1867, 48
        %v8256 = vpop.permute.xlu0 %8255
        %8257 = vrot.lane.b32.xlu0 %v1868, 48
        %v8258 = vpop.permute.xlu0 %8257
        %8259 = vrot.lane.b32.xlu0 %v1869, 48
        %v8260 = vpop.permute.xlu0 %8259
        %8261 = vrot.lane.b32.xlu0 %v1870, 48
        %v8262 = vpop.permute.xlu0 %8261
        %8263 = vrot.lane.b32.xlu0 %v1871, 48
        %v8264 = vpop.permute.xlu0 %8263
        %8265 = vrot.lane.b32.xlu0 %v1872, 48
        %v8266 = vpop.permute.xlu0 %8265
        %8267 = vrot.lane.b32.xlu0 %v1873, 48
        %v8268 = vpop.permute.xlu0 %8267
        %8269 = vrot.lane.b32.xlu0 %v1874, 48
        %v8270 = vpop.permute.xlu0 %8269
        %8271 = vrot.lane.b32.xlu0 %v1875, 48
        %v8272 = vpop.permute.xlu0 %8271
        %8273 = vrot.lane.b32.xlu0 %v1876, 48
        %v8274 = vpop.permute.xlu0 %8273
        %8275 = vrot.lane.b32.xlu0 %v1877, 48
        %v8276 = vpop.permute.xlu0 %8275
        %8277 = vrot.lane.b32.xlu0 %v1878, 48
        %v8278 = vpop.permute.xlu0 %8277
        %8535 = vrot.lane.b32.xlu0 %v1879, 52
        %v8536 = vpop.permute.xlu0 %8535
        %8537 = vrot.lane.b32.xlu0 %v1880, 52
        %v8538 = vpop.permute.xlu0 %8537
        %8539 = vrot.lane.b32.xlu0 %v1881, 52
        %v8540 = vpop.permute.xlu0 %8539
        %8541 = vrot.lane.b32.xlu0 %v1882, 52
        %v8542 = vpop.permute.xlu0 %8541
        %8543 = vrot.lane.b32.xlu0 %v1883, 52
        %v8544 = vpop.permute.xlu0 %8543
        %8545 = vrot.lane.b32.xlu0 %v1884, 52
        %v8546 = vpop.permute.xlu0 %8545
        %8547 = vrot.lane.b32.xlu0 %v1885, 52
        %v8548 = vpop.permute.xlu0 %8547
        %8549 = vrot.lane.b32.xlu0 %v1886, 52
        %v8550 = vpop.permute.xlu0 %8549
        %8551 = vrot.lane.b32.xlu0 %v1887, 52
        %v8552 = vpop.permute.xlu0 %8551
        %8553 = vrot.lane.b32.xlu0 %v1888, 52
        %v8554 = vpop.permute.xlu0 %8553
        %8555 = vrot.lane.b32.xlu0 %v1889, 52
        %v8556 = vpop.permute.xlu0 %8555
        %8557 = vrot.lane.b32.xlu0 %v1890, 52
        %v8558 = vpop.permute.xlu0 %8557
        %8559 = vrot.lane.b32.xlu0 %v1891, 52
        %v8560 = vpop.permute.xlu0 %8559
        %8561 = vrot.lane.b32.xlu0 %v1892, 52
        %v8562 = vpop.permute.xlu0 %8561
        %8563 = vrot.lane.b32.xlu0 %v1893, 52
        %v8564 = vpop.permute.xlu0 %8563
        %8565 = vrot.lane.b32.xlu0 %v1894, 52
        %v8566 = vpop.permute.xlu0 %8565
        %8567 = vrot.lane.b32.xlu0 %v1895, 52
        %v8568 = vpop.permute.xlu0 %8567
        %8569 = vrot.lane.b32.xlu0 %v1896, 52
        %v8570 = vpop.permute.xlu0 %8569
        %8571 = vrot.lane.b32.xlu0 %v1897, 52
        %v8572 = vpop.permute.xlu0 %8571
        %8573 = vrot.lane.b32.xlu0 %v1898, 52
        %v8574 = vpop.permute.xlu0 %8573
        %8575 = vrot.lane.b32.xlu0 %v1899, 52
        %v8576 = vpop.permute.xlu0 %8575
        %8577 = vrot.lane.b32.xlu0 %v1900, 52
        %v8578 = vpop.permute.xlu0 %8577
        %8579 = vrot.lane.b32.xlu0 %v1901, 52
        %v8580 = vpop.permute.xlu0 %8579
        %8581 = vrot.lane.b32.xlu0 %v1902, 52
        %v8582 = vpop.permute.xlu0 %8581
        %8583 = vrot.lane.b32.xlu0 %v1903, 52
        %v8584 = vpop.permute.xlu0 %8583
        %8585 = vrot.lane.b32.xlu0 %v1904, 52
        %v8586 = vpop.permute.xlu0 %8585
        %8587 = vrot.lane.b32.xlu0 %v1905, 52
        %v8588 = vpop.permute.xlu0 %8587
        %8589 = vrot.lane.b32.xlu0 %v1906, 52
        %v8590 = vpop.permute.xlu0 %8589
        %8591 = vrot.lane.b32.xlu0 %v1907, 52
        %v8592 = vpop.permute.xlu0 %8591
        %8593 = vrot.lane.b32.xlu0 %v1908, 52
        %v8594 = vpop.permute.xlu0 %8593
        %8595 = vrot.lane.b32.xlu0 %v1909, 52
        %v8596 = vpop.permute.xlu0 %8595
        %8597 = vrot.lane.b32.xlu0 %v1910, 52
        %v8598 = vpop.permute.xlu0 %8597
        %8599 = vrot.lane.b32.xlu0 %v1911, 52
        %v8600 = vpop.permute.xlu0 %8599
        %8601 = vrot.lane.b32.xlu0 %v1912, 52
        %v8602 = vpop.permute.xlu0 %8601
        %8603 = vrot.lane.b32.xlu0 %v1913, 52
        %v8604 = vpop.permute.xlu0 %8603
        %8605 = vrot.lane.b32.xlu0 %v1914, 52
        %v8606 = vpop.permute.xlu0 %8605
        %8607 = vrot.lane.b32.xlu0 %v1915, 52
        %v8608 = vpop.permute.xlu0 %8607
        %8609 = vrot.lane.b32.xlu0 %v1916, 52
        %v8610 = vpop.permute.xlu0 %8609
        %8611 = vrot.lane.b32.xlu0 %v1917, 52
        %v8612 = vpop.permute.xlu0 %8611
        %8613 = vrot.lane.b32.xlu0 %v1918, 52
        %v8614 = vpop.permute.xlu0 %8613
        %8615 = vrot.lane.b32.xlu0 %v1919, 52
        %v8616 = vpop.permute.xlu0 %8615
        %8617 = vrot.lane.b32.xlu0 %v1920, 52
        %v8618 = vpop.permute.xlu0 %8617
        %8619 = vrot.lane.b32.xlu0 %v1921, 52
        %v8620 = vpop.permute.xlu0 %8619
        %8621 = vrot.lane.b32.xlu0 %v1922, 52
        %v8622 = vpop.permute.xlu0 %8621
        %8623 = vrot.lane.b32.xlu0 %v1923, 52
        %v8624 = vpop.permute.xlu0 %8623
        %8625 = vrot.lane.b32.xlu0 %v1924, 52
        %v8626 = vpop.permute.xlu0 %8625
        %8627 = vrot.lane.b32.xlu0 %v1925, 52
        %v8628 = vpop.permute.xlu0 %8627
        %8629 = vrot.lane.b32.xlu0 %v1926, 52
        %v8630 = vpop.permute.xlu0 %8629
        %8631 = vrot.lane.b32.xlu0 %v1927, 52
        %v8632 = vpop.permute.xlu0 %8631
        %8633 = vrot.lane.b32.xlu0 %v1928, 52
        %v8634 = vpop.permute.xlu0 %8633
        %8635 = vrot.lane.b32.xlu0 %v1929, 52
        %v8636 = vpop.permute.xlu0 %8635
        %8637 = vrot.lane.b32.xlu0 %v1930, 52
        %v8638 = vpop.permute.xlu0 %8637
        %8639 = vrot.lane.b32.xlu0 %v1931, 52
        %v8640 = vpop.permute.xlu0 %8639
        %8641 = vrot.lane.b32.xlu0 %v1932, 52
        %v8642 = vpop.permute.xlu0 %8641
        %8643 = vrot.lane.b32.xlu0 %v1933, 52
        %v8644 = vpop.permute.xlu0 %8643
        %8645 = vrot.lane.b32.xlu0 %v1934, 52
        %v8646 = vpop.permute.xlu0 %8645
        %8647 = vrot.lane.b32.xlu0 %v1935, 52
        %v8648 = vpop.permute.xlu0 %8647
        %8649 = vrot.lane.b32.xlu0 %v1936, 52
        %v8650 = vpop.permute.xlu0 %8649
        %8651 = vrot.lane.b32.xlu0 %v1937, 52
        %v8652 = vpop.permute.xlu0 %8651
        %8653 = vrot.lane.b32.xlu0 %v1938, 52
        %v8654 = vpop.permute.xlu0 %8653
        %8655 = vrot.lane.b32.xlu0 %v1939, 52
        %v8656 = vpop.permute.xlu0 %8655
        %8657 = vrot.lane.b32.xlu0 %v1940, 52
        %v8658 = vpop.permute.xlu0 %8657
        %8659 = vrot.lane.b32.xlu0 %v1941, 52
        %v8660 = vpop.permute.xlu0 %8659
        %8661 = vrot.lane.b32.xlu0 %v1942, 52
        %v8662 = vpop.permute.xlu0 %8661
        %8663 = vrot.lane.b32.xlu0 %v1943, 52
        %v8664 = vpop.permute.xlu0 %8663
        %8665 = vrot.lane.b32.xlu0 %v1944, 52
        %v8666 = vpop.permute.xlu0 %8665
        %8667 = vrot.lane.b32.xlu0 %v1945, 52
        %v8668 = vpop.permute.xlu0 %8667
        %8669 = vrot.lane.b32.xlu0 %v1946, 52
        %v8670 = vpop.permute.xlu0 %8669
        %8671 = vrot.lane.b32.xlu0 %v1947, 52
        %v8672 = vpop.permute.xlu0 %8671
        %8673 = vrot.lane.b32.xlu0 %v1948, 52
        %v8674 = vpop.permute.xlu0 %8673
        %8675 = vrot.lane.b32.xlu0 %v1949, 52
        %v8676 = vpop.permute.xlu0 %8675
        %8677 = vrot.lane.b32.xlu0 %v1950, 52
        %v8678 = vpop.permute.xlu0 %8677
        %8679 = vrot.lane.b32.xlu0 %v1951, 52
        %v8680 = vpop.permute.xlu0 %8679
        %8681 = vrot.lane.b32.xlu0 %v1952, 52
        %v8682 = vpop.permute.xlu0 %8681
        %8683 = vrot.lane.b32.xlu0 %v1953, 52
        %v8684 = vpop.permute.xlu0 %8683
        %8685 = vrot.lane.b32.xlu0 %v1954, 52
        %v8686 = vpop.permute.xlu0 %8685
        %8687 = vrot.lane.b32.xlu0 %v1955, 52
        %v8688 = vpop.permute.xlu0 %8687
        %8689 = vrot.lane.b32.xlu0 %v1956, 52
        %v8690 = vpop.permute.xlu0 %8689
        %8691 = vrot.lane.b32.xlu0 %v1957, 52
        %v8692 = vpop.permute.xlu0 %8691
        %8693 = vrot.lane.b32.xlu0 %v1958, 52
        %v8694 = vpop.permute.xlu0 %8693
        %8695 = vrot.lane.b32.xlu0 %v1959, 52
        %v8696 = vpop.permute.xlu0 %8695
        %8697 = vrot.lane.b32.xlu0 %v1960, 52
        %v8698 = vpop.permute.xlu0 %8697
        %8699 = vrot.lane.b32.xlu0 %v1961, 52
        %v8700 = vpop.permute.xlu0 %8699
        %8701 = vrot.lane.b32.xlu0 %v1962, 52
        %v8702 = vpop.permute.xlu0 %8701
        %8703 = vrot.lane.b32.xlu0 %v1963, 52
        %v8704 = vpop.permute.xlu0 %8703
        %8705 = vrot.lane.b32.xlu0 %v1964, 52
        %v8706 = vpop.permute.xlu0 %8705
        %8707 = vrot.lane.b32.xlu0 %v1965, 52
        %v8708 = vpop.permute.xlu0 %8707
        %8709 = vrot.lane.b32.xlu0 %v1966, 52
        %v8710 = vpop.permute.xlu0 %8709
        %8711 = vrot.lane.b32.xlu0 %v1967, 52
        %v8712 = vpop.permute.xlu0 %8711
        %8713 = vrot.lane.b32.xlu0 %v1968, 52
        %v8714 = vpop.permute.xlu0 %8713
        %8715 = vrot.lane.b32.xlu0 %v1969, 52
        %v8716 = vpop.permute.xlu0 %8715
        %8717 = vrot.lane.b32.xlu0 %v1970, 52
        %v8718 = vpop.permute.xlu0 %8717
        %8719 = vrot.lane.b32.xlu0 %v1971, 52
        %v8720 = vpop.permute.xlu0 %8719
        %8721 = vrot.lane.b32.xlu0 %v1972, 52
        %v8722 = vpop.permute.xlu0 %8721
        %8723 = vrot.lane.b32.xlu0 %v1973, 52
        %v8724 = vpop.permute.xlu0 %8723
        %8725 = vrot.lane.b32.xlu0 %v1974, 52
        %v8726 = vpop.permute.xlu0 %8725
        %8727 = vrot.lane.b32.xlu0 %v1975, 52
        %v8728 = vpop.permute.xlu0 %8727
        %8729 = vrot.lane.b32.xlu0 %v1976, 52
        %v8730 = vpop.permute.xlu0 %8729
        %8731 = vrot.lane.b32.xlu0 %v1977, 52
        %v8732 = vpop.permute.xlu0 %8731
        %8733 = vrot.lane.b32.xlu0 %v1978, 52
        %v8734 = vpop.permute.xlu0 %8733
        %8735 = vrot.lane.b32.xlu0 %v1979, 52
        %v8736 = vpop.permute.xlu0 %8735
        %8737 = vrot.lane.b32.xlu0 %v1980, 52
        %v8738 = vpop.permute.xlu0 %8737
        %8739 = vrot.lane.b32.xlu0 %v1981, 52
        %v8740 = vpop.permute.xlu0 %8739
        %8741 = vrot.lane.b32.xlu0 %v1982, 52
        %v8742 = vpop.permute.xlu0 %8741
        %8743 = vrot.lane.b32.xlu0 %v1983, 52
        %v8744 = vpop.permute.xlu0 %8743
        %8745 = vrot.lane.b32.xlu0 %v1984, 52
        %v8746 = vpop.permute.xlu0 %8745
        %8747 = vrot.lane.b32.xlu0 %v1985, 52
        %v8748 = vpop.permute.xlu0 %8747
        %8749 = vrot.lane.b32.xlu0 %v1986, 52
        %v8750 = vpop.permute.xlu0 %8749
        %8751 = vrot.lane.b32.xlu0 %v1987, 52
        %v8752 = vpop.permute.xlu0 %8751
        %8753 = vrot.lane.b32.xlu0 %v1988, 52
        %v8754 = vpop.permute.xlu0 %8753
        %8755 = vrot.lane.b32.xlu0 %v1989, 52
        %v8756 = vpop.permute.xlu0 %8755
        %8757 = vrot.lane.b32.xlu0 %v1990, 52
        %v8758 = vpop.permute.xlu0 %8757
        %8759 = vrot.lane.b32.xlu0 %v1991, 52
        %v8760 = vpop.permute.xlu0 %8759
        %8761 = vrot.lane.b32.xlu0 %v1992, 52
        %v8762 = vpop.permute.xlu0 %8761
        %8763 = vrot.lane.b32.xlu0 %v1993, 52
        %v8764 = vpop.permute.xlu0 %8763
        %8765 = vrot.lane.b32.xlu0 %v1994, 52
        %v8766 = vpop.permute.xlu0 %8765
        %8767 = vrot.lane.b32.xlu0 %v1995, 52
        %v8768 = vpop.permute.xlu0 %8767
        %8769 = vrot.lane.b32.xlu0 %v1996, 52
        %v8770 = vpop.permute.xlu0 %8769
        %8771 = vrot.lane.b32.xlu0 %v1997, 52
        %v8772 = vpop.permute.xlu0 %8771
        %8773 = vrot.lane.b32.xlu0 %v1998, 52
        %v8774 = vpop.permute.xlu0 %8773
        %8775 = vrot.lane.b32.xlu0 %v1999, 52
        %v8776 = vpop.permute.xlu0 %8775
        %8777 = vrot.lane.b32.xlu0 %v2000, 52
        %v8778 = vpop.permute.xlu0 %8777
        %8779 = vrot.lane.b32.xlu0 %v2001, 52
        %v8780 = vpop.permute.xlu0 %8779
        %8781 = vrot.lane.b32.xlu0 %v2002, 52
        %v8782 = vpop.permute.xlu0 %8781
        %8783 = vrot.lane.b32.xlu0 %v2003, 52
        %v8784 = vpop.permute.xlu0 %8783
        %8785 = vrot.lane.b32.xlu0 %v2004, 52
        %v8786 = vpop.permute.xlu0 %8785
        %8787 = vrot.lane.b32.xlu0 %v2005, 52
        %v8788 = vpop.permute.xlu0 %8787
        %8789 = vrot.lane.b32.xlu0 %v2006, 52
        %v8790 = vpop.permute.xlu0 %8789
        %9047 = vrot.lane.b32.xlu0 %v2007, 56
        %v9048 = vpop.permute.xlu0 %9047
        %9049 = vrot.lane.b32.xlu0 %v2008, 56
        %v9050 = vpop.permute.xlu0 %9049
        %9051 = vrot.lane.b32.xlu0 %v2009, 56
        %v9052 = vpop.permute.xlu0 %9051
        %9053 = vrot.lane.b32.xlu0 %v2010, 56
        %v9054 = vpop.permute.xlu0 %9053
        %9055 = vrot.lane.b32.xlu0 %v2011, 56
        %v9056 = vpop.permute.xlu0 %9055
        %9057 = vrot.lane.b32.xlu0 %v2012, 56
        %v9058 = vpop.permute.xlu0 %9057
        %9059 = vrot.lane.b32.xlu0 %v2013, 56
        %v9060 = vpop.permute.xlu0 %9059
        %9061 = vrot.lane.b32.xlu0 %v2014, 56
        %v9062 = vpop.permute.xlu0 %9061
        %9063 = vrot.lane.b32.xlu0 %v2015, 56
        %v9064 = vpop.permute.xlu0 %9063
        %9065 = vrot.lane.b32.xlu0 %v2016, 56
        %v9066 = vpop.permute.xlu0 %9065
        %9067 = vrot.lane.b32.xlu0 %v2017, 56
        %v9068 = vpop.permute.xlu0 %9067
        %9069 = vrot.lane.b32.xlu0 %v2018, 56
        %v9070 = vpop.permute.xlu0 %9069
        %9071 = vrot.lane.b32.xlu0 %v2019, 56
        %v9072 = vpop.permute.xlu0 %9071
        %9073 = vrot.lane.b32.xlu0 %v2020, 56
        %v9074 = vpop.permute.xlu0 %9073
        %9075 = vrot.lane.b32.xlu0 %v2021, 56
        %v9076 = vpop.permute.xlu0 %9075
        %9077 = vrot.lane.b32.xlu0 %v2022, 56
        %v9078 = vpop.permute.xlu0 %9077
        %9079 = vrot.lane.b32.xlu0 %v2023, 56
        %v9080 = vpop.permute.xlu0 %9079
        %9081 = vrot.lane.b32.xlu0 %v2024, 56
        %v9082 = vpop.permute.xlu0 %9081
        %9083 = vrot.lane.b32.xlu0 %v2025, 56
        %v9084 = vpop.permute.xlu0 %9083
        %9085 = vrot.lane.b32.xlu0 %v2026, 56
        %v9086 = vpop.permute.xlu0 %9085
        %9087 = vrot.lane.b32.xlu0 %v2027, 56
        %v9088 = vpop.permute.xlu0 %9087
        %9089 = vrot.lane.b32.xlu0 %v2028, 56
        %v9090 = vpop.permute.xlu0 %9089
        %9091 = vrot.lane.b32.xlu0 %v2029, 56
        %v9092 = vpop.permute.xlu0 %9091
        %9093 = vrot.lane.b32.xlu0 %v2030, 56
        %v9094 = vpop.permute.xlu0 %9093
        %9095 = vrot.lane.b32.xlu0 %v2031, 56
        %v9096 = vpop.permute.xlu0 %9095
        %9097 = vrot.lane.b32.xlu0 %v2032, 56
        %v9098 = vpop.permute.xlu0 %9097
        %9099 = vrot.lane.b32.xlu0 %v2033, 56
        %v9100 = vpop.permute.xlu0 %9099
        %9101 = vrot.lane.b32.xlu0 %v2034, 56
        %v9102 = vpop.permute.xlu0 %9101
        %9103 = vrot.lane.b32.xlu0 %v2035, 56
        %v9104 = vpop.permute.xlu0 %9103
        %9105 = vrot.lane.b32.xlu0 %v2036, 56
        %v9106 = vpop.permute.xlu0 %9105
        %9107 = vrot.lane.b32.xlu0 %v2037, 56
        %v9108 = vpop.permute.xlu0 %9107
        %9109 = vrot.lane.b32.xlu0 %v2038, 56
        %v9110 = vpop.permute.xlu0 %9109
        %9111 = vrot.lane.b32.xlu0 %v2039, 56
        %v9112 = vpop.permute.xlu0 %9111
        %9113 = vrot.lane.b32.xlu0 %v2040, 56
        %v9114 = vpop.permute.xlu0 %9113
        %9115 = vrot.lane.b32.xlu0 %v2041, 56
        %v9116 = vpop.permute.xlu0 %9115
        %9117 = vrot.lane.b32.xlu0 %v2042, 56
        %v9118 = vpop.permute.xlu0 %9117
        %9119 = vrot.lane.b32.xlu0 %v2043, 56
        %v9120 = vpop.permute.xlu0 %9119
        %9121 = vrot.lane.b32.xlu0 %v2044, 56
        %v9122 = vpop.permute.xlu0 %9121
        %9123 = vrot.lane.b32.xlu0 %v2045, 56
        %v9124 = vpop.permute.xlu0 %9123
        %9125 = vrot.lane.b32.xlu0 %v2046, 56
        %v9126 = vpop.permute.xlu0 %9125
        %9127 = vrot.lane.b32.xlu0 %v2047, 56
        %v9128 = vpop.permute.xlu0 %9127
        %9129 = vrot.lane.b32.xlu0 %v2048, 56
        %v9130 = vpop.permute.xlu0 %9129
        %9131 = vrot.lane.b32.xlu0 %v2049, 56
        %v9132 = vpop.permute.xlu0 %9131
        %9133 = vrot.lane.b32.xlu0 %v2050, 56
        %v9134 = vpop.permute.xlu0 %9133
        %9135 = vrot.lane.b32.xlu0 %v2051, 56
        %v9136 = vpop.permute.xlu0 %9135
        %9137 = vrot.lane.b32.xlu0 %v2052, 56
        %v9138 = vpop.permute.xlu0 %9137
        %9139 = vrot.lane.b32.xlu0 %v2053, 56
        %v9140 = vpop.permute.xlu0 %9139
        %9141 = vrot.lane.b32.xlu0 %v2054, 56
        %v9142 = vpop.permute.xlu0 %9141
        %9143 = vrot.lane.b32.xlu0 %v2055, 56
        %v9144 = vpop.permute.xlu0 %9143
        %9145 = vrot.lane.b32.xlu0 %v2056, 56
        %v9146 = vpop.permute.xlu0 %9145
        %9147 = vrot.lane.b32.xlu0 %v2057, 56
        %v9148 = vpop.permute.xlu0 %9147
        %9149 = vrot.lane.b32.xlu0 %v2058, 56
        %v9150 = vpop.permute.xlu0 %9149
        %9151 = vrot.lane.b32.xlu0 %v2059, 56
        %v9152 = vpop.permute.xlu0 %9151
        %9153 = vrot.lane.b32.xlu0 %v2060, 56
        %v9154 = vpop.permute.xlu0 %9153
        %9155 = vrot.lane.b32.xlu0 %v2061, 56
        %v9156 = vpop.permute.xlu0 %9155
        %9157 = vrot.lane.b32.xlu0 %v2062, 56
        %v9158 = vpop.permute.xlu0 %9157
        %9159 = vrot.lane.b32.xlu0 %v2063, 56
        %v9160 = vpop.permute.xlu0 %9159
        %9161 = vrot.lane.b32.xlu0 %v2064, 56
        %v9162 = vpop.permute.xlu0 %9161
        %9163 = vrot.lane.b32.xlu0 %v2065, 56
        %v9164 = vpop.permute.xlu0 %9163
        %9165 = vrot.lane.b32.xlu0 %v2066, 56
        %v9166 = vpop.permute.xlu0 %9165
        %9167 = vrot.lane.b32.xlu0 %v2067, 56
        %v9168 = vpop.permute.xlu0 %9167
        %9169 = vrot.lane.b32.xlu0 %v2068, 56
        %v9170 = vpop.permute.xlu0 %9169
        %9171 = vrot.lane.b32.xlu0 %v2069, 56
        %v9172 = vpop.permute.xlu0 %9171
        %9173 = vrot.lane.b32.xlu0 %v2070, 56
        %v9174 = vpop.permute.xlu0 %9173
        %9175 = vrot.lane.b32.xlu0 %v2071, 56
        %v9176 = vpop.permute.xlu0 %9175
        %9177 = vrot.lane.b32.xlu0 %v2072, 56
        %v9178 = vpop.permute.xlu0 %9177
        %9179 = vrot.lane.b32.xlu0 %v2073, 56
        %v9180 = vpop.permute.xlu0 %9179
        %9181 = vrot.lane.b32.xlu0 %v2074, 56
        %v9182 = vpop.permute.xlu0 %9181
        %9183 = vrot.lane.b32.xlu0 %v2075, 56
        %v9184 = vpop.permute.xlu0 %9183
        %9185 = vrot.lane.b32.xlu0 %v2076, 56
        %v9186 = vpop.permute.xlu0 %9185
        %9187 = vrot.lane.b32.xlu0 %v2077, 56
        %v9188 = vpop.permute.xlu0 %9187
        %9189 = vrot.lane.b32.xlu0 %v2078, 56
        %v9190 = vpop.permute.xlu0 %9189
        %9191 = vrot.lane.b32.xlu0 %v2079, 56
        %v9192 = vpop.permute.xlu0 %9191
        %9193 = vrot.lane.b32.xlu0 %v2080, 56
        %v9194 = vpop.permute.xlu0 %9193
        %9195 = vrot.lane.b32.xlu0 %v2081, 56
        %v9196 = vpop.permute.xlu0 %9195
        %9197 = vrot.lane.b32.xlu0 %v2082, 56
        %v9198 = vpop.permute.xlu0 %9197
        %9199 = vrot.lane.b32.xlu0 %v2083, 56
        %v9200 = vpop.permute.xlu0 %9199
        %9201 = vrot.lane.b32.xlu0 %v2084, 56
        %v9202 = vpop.permute.xlu0 %9201
        %9203 = vrot.lane.b32.xlu0 %v2085, 56
        %v9204 = vpop.permute.xlu0 %9203
        %9205 = vrot.lane.b32.xlu0 %v2086, 56
        %v9206 = vpop.permute.xlu0 %9205
        %9207 = vrot.lane.b32.xlu0 %v2087, 56
        %v9208 = vpop.permute.xlu0 %9207
        %9209 = vrot.lane.b32.xlu0 %v2088, 56
        %v9210 = vpop.permute.xlu0 %9209
        %9211 = vrot.lane.b32.xlu0 %v2089, 56
        %v9212 = vpop.permute.xlu0 %9211
        %9213 = vrot.lane.b32.xlu0 %v2090, 56
        %v9214 = vpop.permute.xlu0 %9213
        %9215 = vrot.lane.b32.xlu0 %v2091, 56
        %v9216 = vpop.permute.xlu0 %9215
        %9217 = vrot.lane.b32.xlu0 %v2092, 56
        %v9218 = vpop.permute.xlu0 %9217
        %9219 = vrot.lane.b32.xlu0 %v2093, 56
        %v9220 = vpop.permute.xlu0 %9219
        %9221 = vrot.lane.b32.xlu0 %v2094, 56
        %v9222 = vpop.permute.xlu0 %9221
        %9223 = vrot.lane.b32.xlu0 %v2095, 56
        %v9224 = vpop.permute.xlu0 %9223
        %9225 = vrot.lane.b32.xlu0 %v2096, 56
        %v9226 = vpop.permute.xlu0 %9225
        %9227 = vrot.lane.b32.xlu0 %v2097, 56
        %v9228 = vpop.permute.xlu0 %9227
        %9229 = vrot.lane.b32.xlu0 %v2098, 56
        %v9230 = vpop.permute.xlu0 %9229
        %9231 = vrot.lane.b32.xlu0 %v2099, 56
        %v9232 = vpop.permute.xlu0 %9231
        %9233 = vrot.lane.b32.xlu0 %v2100, 56
        %v9234 = vpop.permute.xlu0 %9233
        %9235 = vrot.lane.b32.xlu0 %v2101, 56
        %v9236 = vpop.permute.xlu0 %9235
        %9237 = vrot.lane.b32.xlu0 %v2102, 56
        %v9238 = vpop.permute.xlu0 %9237
        %9239 = vrot.lane.b32.xlu0 %v2103, 56
        %v9240 = vpop.permute.xlu0 %9239
        %9241 = vrot.lane.b32.xlu0 %v2104, 56
        %v9242 = vpop.permute.xlu0 %9241
        %9243 = vrot.lane.b32.xlu0 %v2105, 56
        %v9244 = vpop.permute.xlu0 %9243
        %9245 = vrot.lane.b32.xlu0 %v2106, 56
        %v9246 = vpop.permute.xlu0 %9245
        %9247 = vrot.lane.b32.xlu0 %v2107, 56
        %v9248 = vpop.permute.xlu0 %9247
        %9249 = vrot.lane.b32.xlu0 %v2108, 56
        %v9250 = vpop.permute.xlu0 %9249
        %9251 = vrot.lane.b32.xlu0 %v2109, 56
        %v9252 = vpop.permute.xlu0 %9251
        %9253 = vrot.lane.b32.xlu0 %v2110, 56
        %v9254 = vpop.permute.xlu0 %9253
        %9255 = vrot.lane.b32.xlu0 %v2111, 56
        %v9256 = vpop.permute.xlu0 %9255
        %9257 = vrot.lane.b32.xlu0 %v2112, 56
        %v9258 = vpop.permute.xlu0 %9257
        %9259 = vrot.lane.b32.xlu0 %v2113, 56
        %v9260 = vpop.permute.xlu0 %9259
        %9261 = vrot.lane.b32.xlu0 %v2114, 56
        %v9262 = vpop.permute.xlu0 %9261
        %9263 = vrot.lane.b32.xlu0 %v2115, 56
        %v9264 = vpop.permute.xlu0 %9263
        %9265 = vrot.lane.b32.xlu0 %v2116, 56
        %v9266 = vpop.permute.xlu0 %9265
        %9267 = vrot.lane.b32.xlu0 %v2117, 56
        %v9268 = vpop.permute.xlu0 %9267
        %9269 = vrot.lane.b32.xlu0 %v2118, 56
        %v9270 = vpop.permute.xlu0 %9269
        %9271 = vrot.lane.b32.xlu0 %v2119, 56
        %v9272 = vpop.permute.xlu0 %9271
        %9273 = vrot.lane.b32.xlu0 %v2120, 56
        %v9274 = vpop.permute.xlu0 %9273
        %9275 = vrot.lane.b32.xlu0 %v2121, 56
        %v9276 = vpop.permute.xlu0 %9275
        %9277 = vrot.lane.b32.xlu0 %v2122, 56
        %v9278 = vpop.permute.xlu0 %9277
        %9279 = vrot.lane.b32.xlu0 %v2123, 56
        %v9280 = vpop.permute.xlu0 %9279
        %9281 = vrot.lane.b32.xlu0 %v2124, 56
        %v9282 = vpop.permute.xlu0 %9281
        %9283 = vrot.lane.b32.xlu0 %v2125, 56
        %v9284 = vpop.permute.xlu0 %9283
        %9285 = vrot.lane.b32.xlu0 %v2126, 56
        %v9286 = vpop.permute.xlu0 %9285
        %9287 = vrot.lane.b32.xlu0 %v2127, 56
        %v9288 = vpop.permute.xlu0 %9287
        %9289 = vrot.lane.b32.xlu0 %v2128, 56
        %v9290 = vpop.permute.xlu0 %9289
        %9291 = vrot.lane.b32.xlu0 %v2129, 56
        %v9292 = vpop.permute.xlu0 %9291
        %9293 = vrot.lane.b32.xlu0 %v2130, 56
        %v9294 = vpop.permute.xlu0 %9293
        %9295 = vrot.lane.b32.xlu0 %v2131, 56
        %v9296 = vpop.permute.xlu0 %9295
        %9297 = vrot.lane.b32.xlu0 %v2132, 56
        %v9298 = vpop.permute.xlu0 %9297
        %9299 = vrot.lane.b32.xlu0 %v2133, 56
        %v9300 = vpop.permute.xlu0 %9299
        %9301 = vrot.lane.b32.xlu0 %v2134, 56
        %v9302 = vpop.permute.xlu0 %9301
        %9559 = vrot.lane.b32.xlu0 %v2135, 60
        %v9560 = vpop.permute.xlu0 %9559
        %9561 = vrot.lane.b32.xlu0 %v2136, 60
        %v9562 = vpop.permute.xlu0 %9561
        %9563 = vrot.lane.b32.xlu0 %v2137, 60
        %v9564 = vpop.permute.xlu0 %9563
        %9565 = vrot.lane.b32.xlu0 %v2138, 60
        %v9566 = vpop.permute.xlu0 %9565
        %9567 = vrot.lane.b32.xlu0 %v2139, 60
        %v9568 = vpop.permute.xlu0 %9567
        %9569 = vrot.lane.b32.xlu0 %v2140, 60
        %v9570 = vpop.permute.xlu0 %9569
        %9571 = vrot.lane.b32.xlu0 %v2141, 60
        %v9572 = vpop.permute.xlu0 %9571
        %9573 = vrot.lane.b32.xlu0 %v2142, 60
        %v9574 = vpop.permute.xlu0 %9573
        %9575 = vrot.lane.b32.xlu0 %v2143, 60
        %v9576 = vpop.permute.xlu0 %9575
        %9577 = vrot.lane.b32.xlu0 %v2144, 60
        %v9578 = vpop.permute.xlu0 %9577
        %9579 = vrot.lane.b32.xlu0 %v2145, 60
        %v9580 = vpop.permute.xlu0 %9579
        %9581 = vrot.lane.b32.xlu0 %v2146, 60
        %v9582 = vpop.permute.xlu0 %9581
        %9583 = vrot.lane.b32.xlu0 %v2147, 60
        %v9584 = vpop.permute.xlu0 %9583
        %9585 = vrot.lane.b32.xlu0 %v2148, 60
        %v9586 = vpop.permute.xlu0 %9585
        %9587 = vrot.lane.b32.xlu0 %v2149, 60
        %v9588 = vpop.permute.xlu0 %9587
        %9589 = vrot.lane.b32.xlu0 %v2150, 60
        %v9590 = vpop.permute.xlu0 %9589
        %9591 = vrot.lane.b32.xlu0 %v2151, 60
        %v9592 = vpop.permute.xlu0 %9591
        %9593 = vrot.lane.b32.xlu0 %v2152, 60
        %v9594 = vpop.permute.xlu0 %9593
        %9595 = vrot.lane.b32.xlu0 %v2153, 60
        %v9596 = vpop.permute.xlu0 %9595
        %9597 = vrot.lane.b32.xlu0 %v2154, 60
        %v9598 = vpop.permute.xlu0 %9597
        %9599 = vrot.lane.b32.xlu0 %v2155, 60
        %v9600 = vpop.permute.xlu0 %9599
        %9601 = vrot.lane.b32.xlu0 %v2156, 60
        %v9602 = vpop.permute.xlu0 %9601
        %9603 = vrot.lane.b32.xlu0 %v2157, 60
        %v9604 = vpop.permute.xlu0 %9603
        %9605 = vrot.lane.b32.xlu0 %v2158, 60
        %v9606 = vpop.permute.xlu0 %9605
        %9607 = vrot.lane.b32.xlu0 %v2159, 60
        %v9608 = vpop.permute.xlu0 %9607
        %9609 = vrot.lane.b32.xlu0 %v2160, 60
        %v9610 = vpop.permute.xlu0 %9609
        %9611 = vrot.lane.b32.xlu0 %v2161, 60
        %v9612 = vpop.permute.xlu0 %9611
        %9613 = vrot.lane.b32.xlu0 %v2162, 60
        %v9614 = vpop.permute.xlu0 %9613
        %9615 = vrot.lane.b32.xlu0 %v2163, 60
        %v9616 = vpop.permute.xlu0 %9615
        %9617 = vrot.lane.b32.xlu0 %v2164, 60
        %v9618 = vpop.permute.xlu0 %9617
        %9619 = vrot.lane.b32.xlu0 %v2165, 60
        %v9620 = vpop.permute.xlu0 %9619
        %9621 = vrot.lane.b32.xlu0 %v2166, 60
        %v9622 = vpop.permute.xlu0 %9621
        %9623 = vrot.lane.b32.xlu0 %v2167, 60
        %v9624 = vpop.permute.xlu0 %9623
        %9625 = vrot.lane.b32.xlu0 %v2168, 60
        %v9626 = vpop.permute.xlu0 %9625
        %9627 = vrot.lane.b32.xlu0 %v2169, 60
        %v9628 = vpop.permute.xlu0 %9627
        %9629 = vrot.lane.b32.xlu0 %v2170, 60
        %v9630 = vpop.permute.xlu0 %9629
        %9631 = vrot.lane.b32.xlu0 %v2171, 60
        %v9632 = vpop.permute.xlu0 %9631
        %9633 = vrot.lane.b32.xlu0 %v2172, 60
        %v9634 = vpop.permute.xlu0 %9633
        %9635 = vrot.lane.b32.xlu0 %v2173, 60
        %v9636 = vpop.permute.xlu0 %9635
        %9637 = vrot.lane.b32.xlu0 %v2174, 60
        %v9638 = vpop.permute.xlu0 %9637
        %9639 = vrot.lane.b32.xlu0 %v2175, 60
        %v9640 = vpop.permute.xlu0 %9639
        %9641 = vrot.lane.b32.xlu0 %v2176, 60
        %v9642 = vpop.permute.xlu0 %9641
        %9643 = vrot.lane.b32.xlu0 %v2177, 60
        %v9644 = vpop.permute.xlu0 %9643
        %9645 = vrot.lane.b32.xlu0 %v2178, 60
        %v9646 = vpop.permute.xlu0 %9645
        %9647 = vrot.lane.b32.xlu0 %v2179, 60
        %v9648 = vpop.permute.xlu0 %9647
        %9649 = vrot.lane.b32.xlu0 %v2180, 60
        %v9650 = vpop.permute.xlu0 %9649
        %9651 = vrot.lane.b32.xlu0 %v2181, 60
        %v9652 = vpop.permute.xlu0 %9651
        %9653 = vrot.lane.b32.xlu0 %v2182, 60
        %v9654 = vpop.permute.xlu0 %9653
        %9655 = vrot.lane.b32.xlu0 %v2183, 60
        %v9656 = vpop.permute.xlu0 %9655
        %9657 = vrot.lane.b32.xlu0 %v2184, 60
        %v9658 = vpop.permute.xlu0 %9657
        %9659 = vrot.lane.b32.xlu0 %v2185, 60
        %v9660 = vpop.permute.xlu0 %9659
        %9661 = vrot.lane.b32.xlu0 %v2186, 60
        %v9662 = vpop.permute.xlu0 %9661
        %9663 = vrot.lane.b32.xlu0 %v2187, 60
        %v9664 = vpop.permute.xlu0 %9663
        %9665 = vrot.lane.b32.xlu0 %v2188, 60
        %v9666 = vpop.permute.xlu0 %9665
        %9667 = vrot.lane.b32.xlu0 %v2189, 60
        %v9668 = vpop.permute.xlu0 %9667
        %9669 = vrot.lane.b32.xlu0 %v2190, 60
        %v9670 = vpop.permute.xlu0 %9669
        %9671 = vrot.lane.b32.xlu0 %v2191, 60
        %v9672 = vpop.permute.xlu0 %9671
        %9673 = vrot.lane.b32.xlu0 %v2192, 60
        %v9674 = vpop.permute.xlu0 %9673
        %9675 = vrot.lane.b32.xlu0 %v2193, 60
        %v9676 = vpop.permute.xlu0 %9675
        %9677 = vrot.lane.b32.xlu0 %v2194, 60
        %v9678 = vpop.permute.xlu0 %9677
        %9679 = vrot.lane.b32.xlu0 %v2195, 60
        %v9680 = vpop.permute.xlu0 %9679
        %9681 = vrot.lane.b32.xlu0 %v2196, 60
        %v9682 = vpop.permute.xlu0 %9681
        %9683 = vrot.lane.b32.xlu0 %v2197, 60
        %v9684 = vpop.permute.xlu0 %9683
        %9685 = vrot.lane.b32.xlu0 %v2198, 60
        %v9686 = vpop.permute.xlu0 %9685
        %9687 = vrot.lane.b32.xlu0 %v2199, 60
        %v9688 = vpop.permute.xlu0 %9687
        %9689 = vrot.lane.b32.xlu0 %v2200, 60
        %v9690 = vpop.permute.xlu0 %9689
        %9691 = vrot.lane.b32.xlu0 %v2201, 60
        %v9692 = vpop.permute.xlu0 %9691
        %9693 = vrot.lane.b32.xlu0 %v2202, 60
        %v9694 = vpop.permute.xlu0 %9693
        %9695 = vrot.lane.b32.xlu0 %v2203, 60
        %v9696 = vpop.permute.xlu0 %9695
        %9697 = vrot.lane.b32.xlu0 %v2204, 60
        %v9698 = vpop.permute.xlu0 %9697
        %9699 = vrot.lane.b32.xlu0 %v2205, 60
        %v9700 = vpop.permute.xlu0 %9699
        %9701 = vrot.lane.b32.xlu0 %v2206, 60
        %v9702 = vpop.permute.xlu0 %9701
        %9703 = vrot.lane.b32.xlu0 %v2207, 60
        %v9704 = vpop.permute.xlu0 %9703
        %9705 = vrot.lane.b32.xlu0 %v2208, 60
        %v9706 = vpop.permute.xlu0 %9705
        %9707 = vrot.lane.b32.xlu0 %v2209, 60
        %v9708 = vpop.permute.xlu0 %9707
        %9709 = vrot.lane.b32.xlu0 %v2210, 60
        %v9710 = vpop.permute.xlu0 %9709
        %9711 = vrot.lane.b32.xlu0 %v2211, 60
        %v9712 = vpop.permute.xlu0 %9711
        %9713 = vrot.lane.b32.xlu0 %v2212, 60
        %v9714 = vpop.permute.xlu0 %9713
        %9715 = vrot.lane.b32.xlu0 %v2213, 60
        %v9716 = vpop.permute.xlu0 %9715
        %9717 = vrot.lane.b32.xlu0 %v2214, 60
        %v9718 = vpop.permute.xlu0 %9717
        %9719 = vrot.lane.b32.xlu0 %v2215, 60
        %v9720 = vpop.permute.xlu0 %9719
        %9721 = vrot.lane.b32.xlu0 %v2216, 60
        %v9722 = vpop.permute.xlu0 %9721
        %9723 = vrot.lane.b32.xlu0 %v2217, 60
        %v9724 = vpop.permute.xlu0 %9723
        %9725 = vrot.lane.b32.xlu0 %v2218, 60
        %v9726 = vpop.permute.xlu0 %9725
        %9727 = vrot.lane.b32.xlu0 %v2219, 60
        %v9728 = vpop.permute.xlu0 %9727
        %9729 = vrot.lane.b32.xlu0 %v2220, 60
        %v9730 = vpop.permute.xlu0 %9729
        %9731 = vrot.lane.b32.xlu0 %v2221, 60
        %v9732 = vpop.permute.xlu0 %9731
        %9733 = vrot.lane.b32.xlu0 %v2222, 60
        %v9734 = vpop.permute.xlu0 %9733
        %9735 = vrot.lane.b32.xlu0 %v2223, 60
        %v9736 = vpop.permute.xlu0 %9735
        %9737 = vrot.lane.b32.xlu0 %v2224, 60
        %v9738 = vpop.permute.xlu0 %9737
        %9739 = vrot.lane.b32.xlu0 %v2225, 60
        %v9740 = vpop.permute.xlu0 %9739
        %9741 = vrot.lane.b32.xlu0 %v2226, 60
        %v9742 = vpop.permute.xlu0 %9741
        %9743 = vrot.lane.b32.xlu0 %v2227, 60
        %v9744 = vpop.permute.xlu0 %9743
        %9745 = vrot.lane.b32.xlu0 %v2228, 60
        %v9746 = vpop.permute.xlu0 %9745
        %9747 = vrot.lane.b32.xlu0 %v2229, 60
        %v9748 = vpop.permute.xlu0 %9747
        %9749 = vrot.lane.b32.xlu0 %v2230, 60
        %v9750 = vpop.permute.xlu0 %9749
        %9751 = vrot.lane.b32.xlu0 %v2231, 60
        %v9752 = vpop.permute.xlu0 %9751
        %9753 = vrot.lane.b32.xlu0 %v2232, 60
        %v9754 = vpop.permute.xlu0 %9753
        %9755 = vrot.lane.b32.xlu0 %v2233, 60
        %v9756 = vpop.permute.xlu0 %9755
        %9757 = vrot.lane.b32.xlu0 %v2234, 60
        %v9758 = vpop.permute.xlu0 %9757
        %9759 = vrot.lane.b32.xlu0 %v2235, 60
        %v9760 = vpop.permute.xlu0 %9759
        %9761 = vrot.lane.b32.xlu0 %v2236, 60
        %v9762 = vpop.permute.xlu0 %9761
        %9763 = vrot.lane.b32.xlu0 %v2237, 60
        %v9764 = vpop.permute.xlu0 %9763
        %9765 = vrot.lane.b32.xlu0 %v2238, 60
        %v9766 = vpop.permute.xlu0 %9765
        %9767 = vrot.lane.b32.xlu0 %v2239, 60
        %v9768 = vpop.permute.xlu0 %9767
        %9769 = vrot.lane.b32.xlu0 %v2240, 60
        %v9770 = vpop.permute.xlu0 %9769
        %9771 = vrot.lane.b32.xlu0 %v2241, 60
        %v9772 = vpop.permute.xlu0 %9771
        %9773 = vrot.lane.b32.xlu0 %v2242, 60
        %v9774 = vpop.permute.xlu0 %9773
        %9775 = vrot.lane.b32.xlu0 %v2243, 60
        %v9776 = vpop.permute.xlu0 %9775
        %9777 = vrot.lane.b32.xlu0 %v2244, 60
        %v9778 = vpop.permute.xlu0 %9777
        %9779 = vrot.lane.b32.xlu0 %v2245, 60
        %v9780 = vpop.permute.xlu0 %9779
        %9781 = vrot.lane.b32.xlu0 %v2246, 60
        %v9782 = vpop.permute.xlu0 %9781
        %9783 = vrot.lane.b32.xlu0 %v2247, 60
        %v9784 = vpop.permute.xlu0 %9783
        %9785 = vrot.lane.b32.xlu0 %v2248, 60
        %v9786 = vpop.permute.xlu0 %9785
        %9787 = vrot.lane.b32.xlu0 %v2249, 60
        %v9788 = vpop.permute.xlu0 %9787
        %9789 = vrot.lane.b32.xlu0 %v2250, 60
        %v9790 = vpop.permute.xlu0 %9789
        %9791 = vrot.lane.b32.xlu0 %v2251, 60
        %v9792 = vpop.permute.xlu0 %9791
        %9793 = vrot.lane.b32.xlu0 %v2252, 60
        %v9794 = vpop.permute.xlu0 %9793
        %9795 = vrot.lane.b32.xlu0 %v2253, 60
        %v9796 = vpop.permute.xlu0 %9795
        %9797 = vrot.lane.b32.xlu0 %v2254, 60
        %v9798 = vpop.permute.xlu0 %9797
        %9799 = vrot.lane.b32.xlu0 %v2255, 60
        %v9800 = vpop.permute.xlu0 %9799
        %9801 = vrot.lane.b32.xlu0 %v2256, 60
        %v9802 = vpop.permute.xlu0 %9801
        %9803 = vrot.lane.b32.xlu0 %v2257, 60
        %v9804 = vpop.permute.xlu0 %9803
        %9805 = vrot.lane.b32.xlu0 %v2258, 60
        %v9806 = vpop.permute.xlu0 %9805
        %9807 = vrot.lane.b32.xlu0 %v2259, 60
        %v9808 = vpop.permute.xlu0 %9807
        %9809 = vrot.lane.b32.xlu0 %v2260, 60
        %v9810 = vpop.permute.xlu0 %9809
        %9811 = vrot.lane.b32.xlu0 %v2261, 60
        %v9812 = vpop.permute.xlu0 %9811
        %9813 = vrot.lane.b32.xlu0 %v2262, 60
        %v9814 = vpop.permute.xlu0 %9813
        %vm9943 = vcmask 31744
        %v9944 = vsel %vm9943, %v212, %v2392
        %v9945 = vsel %vm9943, %v213, %v2394
        %v9946 = vsel %vm9943, %v214, %v2396
        %v9947 = vsel %vm9943, %v215, %v2398
        %v9948 = vsel %vm9943, %v216, %v2400
        %v9949 = vsel %vm9943, %v217, %v2402
        %v9950 = vsel %vm9943, %v218, %v2404
        %v9951 = vsel %vm9943, %v219, %v2406
        %v9952 = vsel %vm9943, %v220, %v2408
        %v9953 = vsel %vm9943, %v221, %v2410
        %v9954 = vsel %vm9943, %v222, %v2412
        %v9955 = vsel %vm9943, %v223, %v2414
        %v9956 = vsel %vm9943, %v224, %v2416
        %v9957 = vsel %vm9943, %v225, %v2418
        %v9958 = vsel %vm9943, %v226, %v2420
        %v9959 = vsel %vm9943, %v227, %v2422
        %v9960 = vsel %vm9943, %v228, %v2424
        %v9961 = vsel %vm9943, %v229, %v2426
        %v9962 = vsel %vm9943, %v230, %v2428
        %v9963 = vsel %vm9943, %v231, %v2430
        %v9964 = vsel %vm9943, %v232, %v2432
        %v9965 = vsel %vm9943, %v233, %v2434
        %v9966 = vsel %vm9943, %v234, %v2436
        %v9967 = vsel %vm9943, %v235, %v2438
        %v9968 = vsel %vm9943, %v236, %v2440
        %v9969 = vsel %vm9943, %v237, %v2442
        %v9970 = vsel %vm9943, %v238, %v2444
        %v9971 = vsel %vm9943, %v239, %v2446
        %v9972 = vsel %vm9943, %v240, %v2448
        %v9973 = vsel %vm9943, %v241, %v2450
        %v9974 = vsel %vm9943, %v242, %v2452
        %v9975 = vsel %vm9943, %v243, %v2454
        %v9976 = vsel %vm9943, %v244, %v2456
        %v9977 = vsel %vm9943, %v245, %v2458
        %v9978 = vsel %vm9943, %v246, %v2460
        %v9979 = vsel %vm9943, %v247, %v2462
        %v9980 = vsel %vm9943, %v248, %v2464
        %v9981 = vsel %vm9943, %v249, %v2466
        %v9982 = vsel %vm9943, %v250, %v2468
        %v9983 = vsel %vm9943, %v251, %v2470
        %v9984 = vsel %vm9943, %v252, %v2472
        %v9985 = vsel %vm9943, %v253, %v2474
        %v9986 = vsel %vm9943, %v254, %v2476
        %v9987 = vsel %vm9943, %v255, %v2478
        %v9988 = vsel %vm9943, %v256, %v2480
        %v9989 = vsel %vm9943, %v257, %v2482
        %v9990 = vsel %vm9943, %v258, %v2484
        %v9991 = vsel %vm9943, %v259, %v2486
        %v9992 = vsel %vm9943, %v260, %v2488
        %v9993 = vsel %vm9943, %v261, %v2490
        %v9994 = vsel %vm9943, %v262, %v2492
        %v9995 = vsel %vm9943, %v263, %v2494
        %v9996 = vsel %vm9943, %v264, %v2496
        %v9997 = vsel %vm9943, %v265, %v2498
        %v9998 = vsel %vm9943, %v266, %v2500
        %v9999 = vsel %vm9943, %v267, %v2502
        %v10000 = vsel %vm9943, %v268, %v2504
        %v10001 = vsel %vm9943, %v269, %v2506
        %v10002 = vsel %vm9943, %v270, %v2508
        %v10003 = vsel %vm9943, %v271, %v2510
        %v10004 = vsel %vm9943, %v272, %v2512
        %v10005 = vsel %vm9943, %v273, %v2514
        %v10006 = vsel %vm9943, %v274, %v2516
        %v10007 = vsel %vm9943, %v275, %v2518
        %v10008 = vsel %vm9943, %v276, %v2520
        %v10009 = vsel %vm9943, %v277, %v2522
        %v10010 = vsel %vm9943, %v278, %v2524
        %v10011 = vsel %vm9943, %v279, %v2526
        %v10012 = vsel %vm9943, %v280, %v2528
        %v10013 = vsel %vm9943, %v281, %v2530
        %v10014 = vsel %vm9943, %v282, %v2532
        %v10015 = vsel %vm9943, %v283, %v2534
        %v10016 = vsel %vm9943, %v284, %v2536
        %v10017 = vsel %vm9943, %v285, %v2538
        %v10018 = vsel %vm9943, %v286, %v2540
        %v10019 = vsel %vm9943, %v287, %v2542
        %v10020 = vsel %vm9943, %v288, %v2544
        %v10021 = vsel %vm9943, %v289, %v2546
        %v10022 = vsel %vm9943, %v290, %v2548
        %v10023 = vsel %vm9943, %v291, %v2550
        %v10024 = vsel %vm9943, %v292, %v2552
        %v10025 = vsel %vm9943, %v293, %v2554
        %v10026 = vsel %vm9943, %v294, %v2556
        %v10027 = vsel %vm9943, %v295, %v2558
        %v10028 = vsel %vm9943, %v296, %v2560
        %v10029 = vsel %vm9943, %v297, %v2562
        %v10030 = vsel %vm9943, %v298, %v2564
        %v10031 = vsel %vm9943, %v299, %v2566
        %v10032 = vsel %vm9943, %v300, %v2568
        %v10033 = vsel %vm9943, %v301, %v2570
        %v10034 = vsel %vm9943, %v302, %v2572
        %v10035 = vsel %vm9943, %v303, %v2574
        %v10036 = vsel %vm9943, %v304, %v2576
        %v10037 = vsel %vm9943, %v305, %v2578
        %v10038 = vsel %vm9943, %v306, %v2580
        %v10039 = vsel %vm9943, %v307, %v2582
        %v10040 = vsel %vm9943, %v308, %v2584
        %v10041 = vsel %vm9943, %v309, %v2586
        %v10042 = vsel %vm9943, %v310, %v2588
        %v10043 = vsel %vm9943, %v311, %v2590
        %v10044 = vsel %vm9943, %v312, %v2592
        %v10045 = vsel %vm9943, %v313, %v2594
        %v10046 = vsel %vm9943, %v314, %v2596
        %v10047 = vsel %vm9943, %v315, %v2598
        %v10048 = vsel %vm9943, %v316, %v2600
        %v10049 = vsel %vm9943, %v317, %v2602
        %v10050 = vsel %vm9943, %v318, %v2604
        %v10051 = vsel %vm9943, %v319, %v2606
        %v10052 = vsel %vm9943, %v320, %v2608
        %v10053 = vsel %vm9943, %v321, %v2610
        %v10054 = vsel %vm9943, %v322, %v2612
        %v10055 = vsel %vm9943, %v323, %v2614
        %v10056 = vsel %vm9943, %v324, %v2616
        %v10057 = vsel %vm9943, %v325, %v2618
        %v10058 = vsel %vm9943, %v326, %v2620
        %v10059 = vsel %vm9943, %v327, %v2622
        %v10060 = vsel %vm9943, %v328, %v2624
        %v10061 = vsel %vm9943, %v329, %v2626
        %v10062 = vsel %vm9943, %v330, %v2628
        %v10063 = vsel %vm9943, %v331, %v2630
        %v10064 = vsel %vm9943, %v332, %v2632
        %v10065 = vsel %vm9943, %v333, %v2634
        %v10066 = vsel %vm9943, %v334, %v2636
        %v10067 = vsel %vm9943, %v335, %v2638
        %v10068 = vsel %vm9943, %v336, %v2640
        %v10069 = vsel %vm9943, %v337, %v2642
        %v10070 = vsel %vm9943, %v338, %v2644
        %v10071 = vsel %vm9943, %v339, %v2646
        %vm10072 = vcmask 64512
        %v10073 = vsel %vm10072, %v9944, %v2904
        %v10074 = vsel %vm10072, %v9945, %v2906
        %v10075 = vsel %vm10072, %v9946, %v2908
        %v10076 = vsel %vm10072, %v9947, %v2910
        %v10077 = vsel %vm10072, %v9948, %v2912
        %v10078 = vsel %vm10072, %v9949, %v2914
        %v10079 = vsel %vm10072, %v9950, %v2916
        %v10080 = vsel %vm10072, %v9951, %v2918
        %v10081 = vsel %vm10072, %v9952, %v2920
        %v10082 = vsel %vm10072, %v9953, %v2922
        %v10083 = vsel %vm10072, %v9954, %v2924
        %v10084 = vsel %vm10072, %v9955, %v2926
        %v10085 = vsel %vm10072, %v9956, %v2928
        %v10086 = vsel %vm10072, %v9957, %v2930
        %v10087 = vsel %vm10072, %v9958, %v2932
        %v10088 = vsel %vm10072, %v9959, %v2934
        %v10089 = vsel %vm10072, %v9960, %v2936
        %v10090 = vsel %vm10072, %v9961, %v2938
        %v10091 = vsel %vm10072, %v9962, %v2940
        %v10092 = vsel %vm10072, %v9963, %v2942
        %v10093 = vsel %vm10072, %v9964, %v2944
        %v10094 = vsel %vm10072, %v9965, %v2946
        %v10095 = vsel %vm10072, %v9966, %v2948
        %v10096 = vsel %vm10072, %v9967, %v2950
        %v10097 = vsel %vm10072, %v9968, %v2952
        %v10098 = vsel %vm10072, %v9969, %v2954
        %v10099 = vsel %vm10072, %v9970, %v2956
        %v10100 = vsel %vm10072, %v9971, %v2958
        %v10101 = vsel %vm10072, %v9972, %v2960
        %v10102 = vsel %vm10072, %v9973, %v2962
        %v10103 = vsel %vm10072, %v9974, %v2964
        %v10104 = vsel %vm10072, %v9975, %v2966
        %v10105 = vsel %vm10072, %v9976, %v2968
        %v10106 = vsel %vm10072, %v9977, %v2970
        %v10107 = vsel %vm10072, %v9978, %v2972
        %v10108 = vsel %vm10072, %v9979, %v2974
        %v10109 = vsel %vm10072, %v9980, %v2976
        %v10110 = vsel %vm10072, %v9981, %v2978
        %v10111 = vsel %vm10072, %v9982, %v2980
        %v10112 = vsel %vm10072, %v9983, %v2982
        %v10113 = vsel %vm10072, %v9984, %v2984
        %v10114 = vsel %vm10072, %v9985, %v2986
        %v10115 = vsel %vm10072, %v9986, %v2988
        %v10116 = vsel %vm10072, %v9987, %v2990
        %v10117 = vsel %vm10072, %v9988, %v2992
        %v10118 = vsel %vm10072, %v9989, %v2994
        %v10119 = vsel %vm10072, %v9990, %v2996
        %v10120 = vsel %vm10072, %v9991, %v2998
        %v10121 = vsel %vm10072, %v9992, %v3000
        %v10122 = vsel %vm10072, %v9993, %v3002
        %v10123 = vsel %vm10072, %v9994, %v3004
        %v10124 = vsel %vm10072, %v9995, %v3006
        %v10125 = vsel %vm10072, %v9996, %v3008
        %v10126 = vsel %vm10072, %v9997, %v3010
        %v10127 = vsel %vm10072, %v9998, %v3012
        %v10128 = vsel %vm10072, %v9999, %v3014
        %v10129 = vsel %vm10072, %v10000, %v3016
        %v10130 = vsel %vm10072, %v10001, %v3018
        %v10131 = vsel %vm10072, %v10002, %v3020
        %v10132 = vsel %vm10072, %v10003, %v3022
        %v10133 = vsel %vm10072, %v10004, %v3024
        %v10134 = vsel %vm10072, %v10005, %v3026
        %v10135 = vsel %vm10072, %v10006, %v3028
        %v10136 = vsel %vm10072, %v10007, %v3030
        %v10137 = vsel %vm10072, %v10008, %v3032
        %v10138 = vsel %vm10072, %v10009, %v3034
        %v10139 = vsel %vm10072, %v10010, %v3036
        %v10140 = vsel %vm10072, %v10011, %v3038
        %v10141 = vsel %vm10072, %v10012, %v3040
        %v10142 = vsel %vm10072, %v10013, %v3042
        %v10143 = vsel %vm10072, %v10014, %v3044
        %v10144 = vsel %vm10072, %v10015, %v3046
        %v10145 = vsel %vm10072, %v10016, %v3048
        %v10146 = vsel %vm10072, %v10017, %v3050
        %v10147 = vsel %vm10072, %v10018, %v3052
        %v10148 = vsel %vm10072, %v10019, %v3054
        %v10149 = vsel %vm10072, %v10020, %v3056
        %v10150 = vsel %vm10072, %v10021, %v3058
        %v10151 = vsel %vm10072, %v10022, %v3060
        %v10152 = vsel %vm10072, %v10023, %v3062
        %v10153 = vsel %vm10072, %v10024, %v3064
        %v10154 = vsel %vm10072, %v10025, %v3066
        %v10155 = vsel %vm10072, %v10026, %v3068
        %v10156 = vsel %vm10072, %v10027, %v3070
        %v10157 = vsel %vm10072, %v10028, %v3072
        %v10158 = vsel %vm10072, %v10029, %v3074
        %v10159 = vsel %vm10072, %v10030, %v3076
        %v10160 = vsel %vm10072, %v10031, %v3078
        %v10161 = vsel %vm10072, %v10032, %v3080
        %v10162 = vsel %vm10072, %v10033, %v3082
        %v10163 = vsel %vm10072, %v10034, %v3084
        %v10164 = vsel %vm10072, %v10035, %v3086
        %v10165 = vsel %vm10072, %v10036, %v3088
        %v10166 = vsel %vm10072, %v10037, %v3090
        %v10167 = vsel %vm10072, %v10038, %v3092
        %v10168 = vsel %vm10072, %v10039, %v3094
        %v10169 = vsel %vm10072, %v10040, %v3096
        %v10170 = vsel %vm10072, %v10041, %v3098
        %v10171 = vsel %vm10072, %v10042, %v3100
        %v10172 = vsel %vm10072, %v10043, %v3102
        %v10173 = vsel %vm10072, %v10044, %v3104
        %v10174 = vsel %vm10072, %v10045, %v3106
        %v10175 = vsel %vm10072, %v10046, %v3108
        %v10176 = vsel %vm10072, %v10047, %v3110
        %v10177 = vsel %vm10072, %v10048, %v3112
        %v10178 = vsel %vm10072, %v10049, %v3114
        %v10179 = vsel %vm10072, %v10050, %v3116
        %v10180 = vsel %vm10072, %v10051, %v3118
        %v10181 = vsel %vm10072, %v10052, %v3120
        %v10182 = vsel %vm10072, %v10053, %v3122
        %v10183 = vsel %vm10072, %v10054, %v3124
        %v10184 = vsel %vm10072, %v10055, %v3126
        %v10185 = vsel %vm10072, %v10056, %v3128
        %v10186 = vsel %vm10072, %v10057, %v3130
        %v10187 = vsel %vm10072, %v10058, %v3132
        %v10188 = vsel %vm10072, %v10059, %v3134
        %v10189 = vsel %vm10072, %v10060, %v3136
        %v10190 = vsel %vm10072, %v10061, %v3138
        %v10191 = vsel %vm10072, %v10062, %v3140
        %v10192 = vsel %vm10072, %v10063, %v3142
        %v10193 = vsel %vm10072, %v10064, %v3144
        %v10194 = vsel %vm10072, %v10065, %v3146
        %v10195 = vsel %vm10072, %v10066, %v3148
        %v10196 = vsel %vm10072, %v10067, %v3150
        %v10197 = vsel %vm10072, %v10068, %v3152
        %v10198 = vsel %vm10072, %v10069, %v3154
        %v10199 = vsel %vm10072, %v10070, %v3156
        %v10200 = vsel %vm10072, %v10071, %v3158
        %vm10201 = vcmask 97280
        %v10202 = vsel %vm10201, %v10073, %v3416
        %v10203 = vsel %vm10201, %v10074, %v3418
        %v10204 = vsel %vm10201, %v10075, %v3420
        %v10205 = vsel %vm10201, %v10076, %v3422
        %v10206 = vsel %vm10201, %v10077, %v3424
        %v10207 = vsel %vm10201, %v10078, %v3426
        %v10208 = vsel %vm10201, %v10079, %v3428
        %v10209 = vsel %vm10201, %v10080, %v3430
        %v10210 = vsel %vm10201, %v10081, %v3432
        %v10211 = vsel %vm10201, %v10082, %v3434
        %v10212 = vsel %vm10201, %v10083, %v3436
        %v10213 = vsel %vm10201, %v10084, %v3438
        %v10214 = vsel %vm10201, %v10085, %v3440
        %v10215 = vsel %vm10201, %v10086, %v3442
        %v10216 = vsel %vm10201, %v10087, %v3444
        %v10217 = vsel %vm10201, %v10088, %v3446
        %v10218 = vsel %vm10201, %v10089, %v3448
        %v10219 = vsel %vm10201, %v10090, %v3450
        %v10220 = vsel %vm10201, %v10091, %v3452
        %v10221 = vsel %vm10201, %v10092, %v3454
        %v10222 = vsel %vm10201, %v10093, %v3456
        %v10223 = vsel %vm10201, %v10094, %v3458
        %v10224 = vsel %vm10201, %v10095, %v3460
        %v10225 = vsel %vm10201, %v10096, %v3462
        %v10226 = vsel %vm10201, %v10097, %v3464
        %v10227 = vsel %vm10201, %v10098, %v3466
        %v10228 = vsel %vm10201, %v10099, %v3468
        %v10229 = vsel %vm10201, %v10100, %v3470
        %v10230 = vsel %vm10201, %v10101, %v3472
        %v10231 = vsel %vm10201, %v10102, %v3474
        %v10232 = vsel %vm10201, %v10103, %v3476
        %v10233 = vsel %vm10201, %v10104, %v3478
        %v10234 = vsel %vm10201, %v10105, %v3480
        %v10235 = vsel %vm10201, %v10106, %v3482
        %v10236 = vsel %vm10201, %v10107, %v3484
        %v10237 = vsel %vm10201, %v10108, %v3486
        %v10238 = vsel %vm10201, %v10109, %v3488
        %v10239 = vsel %vm10201, %v10110, %v3490
        %v10240 = vsel %vm10201, %v10111, %v3492
        %v10241 = vsel %vm10201, %v10112, %v3494
        %v10242 = vsel %vm10201, %v10113, %v3496
        %v10243 = vsel %vm10201, %v10114, %v3498
        %v10244 = vsel %vm10201, %v10115, %v3500
        %v10245 = vsel %vm10201, %v10116, %v3502
        %v10246 = vsel %vm10201, %v10117, %v3504
        %v10247 = vsel %vm10201, %v10118, %v3506
        %v10248 = vsel %vm10201, %v10119, %v3508
        %v10249 = vsel %vm10201, %v10120, %v3510
        %v10250 = vsel %vm10201, %v10121, %v3512
        %v10251 = vsel %vm10201, %v10122, %v3514
        %v10252 = vsel %vm10201, %v10123, %v3516
        %v10253 = vsel %vm10201, %v10124, %v3518
        %v10254 = vsel %vm10201, %v10125, %v3520
        %v10255 = vsel %vm10201, %v10126, %v3522
        %v10256 = vsel %vm10201, %v10127, %v3524
        %v10257 = vsel %vm10201, %v10128, %v3526
        %v10258 = vsel %vm10201, %v10129, %v3528
        %v10259 = vsel %vm10201, %v10130, %v3530
        %v10260 = vsel %vm10201, %v10131, %v3532
        %v10261 = vsel %vm10201, %v10132, %v3534
        %v10262 = vsel %vm10201, %v10133, %v3536
        %v10263 = vsel %vm10201, %v10134, %v3538
        %v10264 = vsel %vm10201, %v10135, %v3540
        %v10265 = vsel %vm10201, %v10136, %v3542
        %v10266 = vsel %vm10201, %v10137, %v3544
        %v10267 = vsel %vm10201, %v10138, %v3546
        %v10268 = vsel %vm10201, %v10139, %v3548
        %v10269 = vsel %vm10201, %v10140, %v3550
        %v10270 = vsel %vm10201, %v10141, %v3552
        %v10271 = vsel %vm10201, %v10142, %v3554
        %v10272 = vsel %vm10201, %v10143, %v3556
        %v10273 = vsel %vm10201, %v10144, %v3558
        %v10274 = vsel %vm10201, %v10145, %v3560
        %v10275 = vsel %vm10201, %v10146, %v3562
        %v10276 = vsel %vm10201, %v10147, %v3564
        %v10277 = vsel %vm10201, %v10148, %v3566
        %v10278 = vsel %vm10201, %v10149, %v3568
        %v10279 = vsel %vm10201, %v10150, %v3570
        %v10280 = vsel %vm10201, %v10151, %v3572
        %v10281 = vsel %vm10201, %v10152, %v3574
        %v10282 = vsel %vm10201, %v10153, %v3576
        %v10283 = vsel %vm10201, %v10154, %v3578
        %v10284 = vsel %vm10201, %v10155, %v3580
        %v10285 = vsel %vm10201, %v10156, %v3582
        %v10286 = vsel %vm10201, %v10157, %v3584
        %v10287 = vsel %vm10201, %v10158, %v3586
        %v10288 = vsel %vm10201, %v10159, %v3588
        %v10289 = vsel %vm10201, %v10160, %v3590
        %v10290 = vsel %vm10201, %v10161, %v3592
        %v10291 = vsel %vm10201, %v10162, %v3594
        %v10292 = vsel %vm10201, %v10163, %v3596
        %v10293 = vsel %vm10201, %v10164, %v3598
        %v10294 = vsel %vm10201, %v10165, %v3600
        %v10295 = vsel %vm10201, %v10166, %v3602
        %v10296 = vsel %vm10201, %v10167, %v3604
        %v10297 = vsel %vm10201, %v10168, %v3606
        %v10298 = vsel %vm10201, %v10169, %v3608
        %v10299 = vsel %vm10201, %v10170, %v3610
        %v10300 = vsel %vm10201, %v10171, %v3612
        %v10301 = vsel %vm10201, %v10172, %v3614
        %v10302 = vsel %vm10201, %v10173, %v3616
        %v10303 = vsel %vm10201, %v10174, %v3618
        %v10304 = vsel %vm10201, %v10175, %v3620
        %v10305 = vsel %vm10201, %v10176, %v3622
        %v10306 = vsel %vm10201, %v10177, %v3624
        %v10307 = vsel %vm10201, %v10178, %v3626
        %v10308 = vsel %vm10201, %v10179, %v3628
        %v10309 = vsel %vm10201, %v10180, %v3630
        %v10310 = vsel %vm10201, %v10181, %v3632
        %v10311 = vsel %vm10201, %v10182, %v3634
        %v10312 = vsel %vm10201, %v10183, %v3636
        %v10313 = vsel %vm10201, %v10184, %v3638
        %v10314 = vsel %vm10201, %v10185, %v3640
        %v10315 = vsel %vm10201, %v10186, %v3642
        %v10316 = vsel %vm10201, %v10187, %v3644
        %v10317 = vsel %vm10201, %v10188, %v3646
        %v10318 = vsel %vm10201, %v10189, %v3648
        %v10319 = vsel %vm10201, %v10190, %v3650
        %v10320 = vsel %vm10201, %v10191, %v3652
        %v10321 = vsel %vm10201, %v10192, %v3654
        %v10322 = vsel %vm10201, %v10193, %v3656
        %v10323 = vsel %vm10201, %v10194, %v3658
        %v10324 = vsel %vm10201, %v10195, %v3660
        %v10325 = vsel %vm10201, %v10196, %v3662
        %v10326 = vsel %vm10201, %v10197, %v3664
        %v10327 = vsel %vm10201, %v10198, %v3666
        %v10328 = vsel %vm10201, %v10199, %v3668
        %v10329 = vsel %vm10201, %v10200, %v3670
        %vm10330 = vcmask 130048
        %v10331 = vsel %vm10330, %v10202, %v3928
        %v10332 = vsel %vm10330, %v10203, %v3930
        %v10333 = vsel %vm10330, %v10204, %v3932
        %v10334 = vsel %vm10330, %v10205, %v3934
        %v10335 = vsel %vm10330, %v10206, %v3936
        %v10336 = vsel %vm10330, %v10207, %v3938
        %v10337 = vsel %vm10330, %v10208, %v3940
        %v10338 = vsel %vm10330, %v10209, %v3942
        %v10339 = vsel %vm10330, %v10210, %v3944
        %v10340 = vsel %vm10330, %v10211, %v3946
        %v10341 = vsel %vm10330, %v10212, %v3948
        %v10342 = vsel %vm10330, %v10213, %v3950
        %v10343 = vsel %vm10330, %v10214, %v3952
        %v10344 = vsel %vm10330, %v10215, %v3954
        %v10345 = vsel %vm10330, %v10216, %v3956
        %v10346 = vsel %vm10330, %v10217, %v3958
        %v10347 = vsel %vm10330, %v10218, %v3960
        %v10348 = vsel %vm10330, %v10219, %v3962
        %v10349 = vsel %vm10330, %v10220, %v3964
        %v10350 = vsel %vm10330, %v10221, %v3966
        %v10351 = vsel %vm10330, %v10222, %v3968
        %v10352 = vsel %vm10330, %v10223, %v3970
        %v10353 = vsel %vm10330, %v10224, %v3972
        %v10354 = vsel %vm10330, %v10225, %v3974
        %v10355 = vsel %vm10330, %v10226, %v3976
        %v10356 = vsel %vm10330, %v10227, %v3978
        %v10357 = vsel %vm10330, %v10228, %v3980
        %v10358 = vsel %vm10330, %v10229, %v3982
        %v10359 = vsel %vm10330, %v10230, %v3984
        %v10360 = vsel %vm10330, %v10231, %v3986
        %v10361 = vsel %vm10330, %v10232, %v3988
        %v10362 = vsel %vm10330, %v10233, %v3990
        %v10363 = vsel %vm10330, %v10234, %v3992
        %v10364 = vsel %vm10330, %v10235, %v3994
        %v10365 = vsel %vm10330, %v10236, %v3996
        %v10366 = vsel %vm10330, %v10237, %v3998
        %v10367 = vsel %vm10330, %v10238, %v4000
        %v10368 = vsel %vm10330, %v10239, %v4002
        %v10369 = vsel %vm10330, %v10240, %v4004
        %v10370 = vsel %vm10330, %v10241, %v4006
        %v10371 = vsel %vm10330, %v10242, %v4008
        %v10372 = vsel %vm10330, %v10243, %v4010
        %v10373 = vsel %vm10330, %v10244, %v4012
        %v10374 = vsel %vm10330, %v10245, %v4014
        %v10375 = vsel %vm10330, %v10246, %v4016
        %v10376 = vsel %vm10330, %v10247, %v4018
        %v10377 = vsel %vm10330, %v10248, %v4020
        %v10378 = vsel %vm10330, %v10249, %v4022
        %v10379 = vsel %vm10330, %v10250, %v4024
        %v10380 = vsel %vm10330, %v10251, %v4026
        %v10381 = vsel %vm10330, %v10252, %v4028
        %v10382 = vsel %vm10330, %v10253, %v4030
        %v10383 = vsel %vm10330, %v10254, %v4032
        %v10384 = vsel %vm10330, %v10255, %v4034
        %v10385 = vsel %vm10330, %v10256, %v4036
        %v10386 = vsel %vm10330, %v10257, %v4038
        %v10387 = vsel %vm10330, %v10258, %v4040
        %v10388 = vsel %vm10330, %v10259, %v4042
        %v10389 = vsel %vm10330, %v10260, %v4044
        %v10390 = vsel %vm10330, %v10261, %v4046
        %v10391 = vsel %vm10330, %v10262, %v4048
        %v10392 = vsel %vm10330, %v10263, %v4050
        %v10393 = vsel %vm10330, %v10264, %v4052
        %v10394 = vsel %vm10330, %v10265, %v4054
        %v10395 = vsel %vm10330, %v10266, %v4056
        %v10396 = vsel %vm10330, %v10267, %v4058
        %v10397 = vsel %vm10330, %v10268, %v4060
        %v10398 = vsel %vm10330, %v10269, %v4062
        %v10399 = vsel %vm10330, %v10270, %v4064
        %v10400 = vsel %vm10330, %v10271, %v4066
        %v10401 = vsel %vm10330, %v10272, %v4068
        %v10402 = vsel %vm10330, %v10273, %v4070
        %v10403 = vsel %vm10330, %v10274, %v4072
        %v10404 = vsel %vm10330, %v10275, %v4074
        %v10405 = vsel %vm10330, %v10276, %v4076
        %v10406 = vsel %vm10330, %v10277, %v4078
        %v10407 = vsel %vm10330, %v10278, %v4080
        %v10408 = vsel %vm10330, %v10279, %v4082
        %v10409 = vsel %vm10330, %v10280, %v4084
        %v10410 = vsel %vm10330, %v10281, %v4086
        %v10411 = vsel %vm10330, %v10282, %v4088
        %v10412 = vsel %vm10330, %v10283, %v4090
        %v10413 = vsel %vm10330, %v10284, %v4092
        %v10414 = vsel %vm10330, %v10285, %v4094
        %v10415 = vsel %vm10330, %v10286, %v4096
        %v10416 = vsel %vm10330, %v10287, %v4098
        %v10417 = vsel %vm10330, %v10288, %v4100
        %v10418 = vsel %vm10330, %v10289, %v4102
        %v10419 = vsel %vm10330, %v10290, %v4104
        %v10420 = vsel %vm10330, %v10291, %v4106
        %v10421 = vsel %vm10330, %v10292, %v4108
        %v10422 = vsel %vm10330, %v10293, %v4110
        %v10423 = vsel %vm10330, %v10294, %v4112
        %v10424 = vsel %vm10330, %v10295, %v4114
        %v10425 = vsel %vm10330, %v10296, %v4116
        %v10426 = vsel %vm10330, %v10297, %v4118
        %v10427 = vsel %vm10330, %v10298, %v4120
        %v10428 = vsel %vm10330, %v10299, %v4122
        %v10429 = vsel %vm10330, %v10300, %v4124
        %v10430 = vsel %vm10330, %v10301, %v4126
        %v10431 = vsel %vm10330, %v10302, %v4128
        %v10432 = vsel %vm10330, %v10303, %v4130
        %v10433 = vsel %vm10330, %v10304, %v4132
        %v10434 = vsel %vm10330, %v10305, %v4134
        %v10435 = vsel %vm10330, %v10306, %v4136
        %v10436 = vsel %vm10330, %v10307, %v4138
        %v10437 = vsel %vm10330, %v10308, %v4140
        %v10438 = vsel %vm10330, %v10309, %v4142
        %v10439 = vsel %vm10330, %v10310, %v4144
        %v10440 = vsel %vm10330, %v10311, %v4146
        %v10441 = vsel %vm10330, %v10312, %v4148
        %v10442 = vsel %vm10330, %v10313, %v4150
        %v10443 = vsel %vm10330, %v10314, %v4152
        %v10444 = vsel %vm10330, %v10315, %v4154
        %v10445 = vsel %vm10330, %v10316, %v4156
        %v10446 = vsel %vm10330, %v10317, %v4158
        %v10447 = vsel %vm10330, %v10318, %v4160
        %v10448 = vsel %vm10330, %v10319, %v4162
        %v10449 = vsel %vm10330, %v10320, %v4164
        %v10450 = vsel %vm10330, %v10321, %v4166
        %v10451 = vsel %vm10330, %v10322, %v4168
        %v10452 = vsel %vm10330, %v10323, %v4170
        %v10453 = vsel %vm10330, %v10324, %v4172
        %v10454 = vsel %vm10330, %v10325, %v4174
        %v10455 = vsel %vm10330, %v10326, %v4176
        %v10456 = vsel %vm10330, %v10327, %v4178
        %v10457 = vsel %vm10330, %v10328, %v4180
        %v10458 = vsel %vm10330, %v10329, %v4182
        %vm10459 = vcmask 162816
        %v10460 = vsel %vm10459, %v10331, %v4440
        %v10461 = vsel %vm10459, %v10332, %v4442
        %v10462 = vsel %vm10459, %v10333, %v4444
        %v10463 = vsel %vm10459, %v10334, %v4446
        %v10464 = vsel %vm10459, %v10335, %v4448
        %v10465 = vsel %vm10459, %v10336, %v4450
        %v10466 = vsel %vm10459, %v10337, %v4452
        %v10467 = vsel %vm10459, %v10338, %v4454
        %v10468 = vsel %vm10459, %v10339, %v4456
        %v10469 = vsel %vm10459, %v10340, %v4458
        %v10470 = vsel %vm10459, %v10341, %v4460
        %v10471 = vsel %vm10459, %v10342, %v4462
        %v10472 = vsel %vm10459, %v10343, %v4464
        %v10473 = vsel %vm10459, %v10344, %v4466
        %v10474 = vsel %vm10459, %v10345, %v4468
        %v10475 = vsel %vm10459, %v10346, %v4470
        %v10476 = vsel %vm10459, %v10347, %v4472
        %v10477 = vsel %vm10459, %v10348, %v4474
        %v10478 = vsel %vm10459, %v10349, %v4476
        %v10479 = vsel %vm10459, %v10350, %v4478
        %v10480 = vsel %vm10459, %v10351, %v4480
        %v10481 = vsel %vm10459, %v10352, %v4482
        %v10482 = vsel %vm10459, %v10353, %v4484
        %v10483 = vsel %vm10459, %v10354, %v4486
        %v10484 = vsel %vm10459, %v10355, %v4488
        %v10485 = vsel %vm10459, %v10356, %v4490
        %v10486 = vsel %vm10459, %v10357, %v4492
        %v10487 = vsel %vm10459, %v10358, %v4494
        %v10488 = vsel %vm10459, %v10359, %v4496
        %v10489 = vsel %vm10459, %v10360, %v4498
        %v10490 = vsel %vm10459, %v10361, %v4500
        %v10491 = vsel %vm10459, %v10362, %v4502
        %v10492 = vsel %vm10459, %v10363, %v4504
        %v10493 = vsel %vm10459, %v10364, %v4506
        %v10494 = vsel %vm10459, %v10365, %v4508
        %v10495 = vsel %vm10459, %v10366, %v4510
        %v10496 = vsel %vm10459, %v10367, %v4512
        %v10497 = vsel %vm10459, %v10368, %v4514
        %v10498 = vsel %vm10459, %v10369, %v4516
        %v10499 = vsel %vm10459, %v10370, %v4518
        %v10500 = vsel %vm10459, %v10371, %v4520
        %v10501 = vsel %vm10459, %v10372, %v4522
        %v10502 = vsel %vm10459, %v10373, %v4524
        %v10503 = vsel %vm10459, %v10374, %v4526
        %v10504 = vsel %vm10459, %v10375, %v4528
        %v10505 = vsel %vm10459, %v10376, %v4530
        %v10506 = vsel %vm10459, %v10377, %v4532
        %v10507 = vsel %vm10459, %v10378, %v4534
        %v10508 = vsel %vm10459, %v10379, %v4536
        %v10509 = vsel %vm10459, %v10380, %v4538
        %v10510 = vsel %vm10459, %v10381, %v4540
        %v10511 = vsel %vm10459, %v10382, %v4542
        %v10512 = vsel %vm10459, %v10383, %v4544
        %v10513 = vsel %vm10459, %v10384, %v4546
        %v10514 = vsel %vm10459, %v10385, %v4548
        %v10515 = vsel %vm10459, %v10386, %v4550
        %v10516 = vsel %vm10459, %v10387, %v4552
        %v10517 = vsel %vm10459, %v10388, %v4554
        %v10518 = vsel %vm10459, %v10389, %v4556
        %v10519 = vsel %vm10459, %v10390, %v4558
        %v10520 = vsel %vm10459, %v10391, %v4560
        %v10521 = vsel %vm10459, %v10392, %v4562
        %v10522 = vsel %vm10459, %v10393, %v4564
        %v10523 = vsel %vm10459, %v10394, %v4566
        %v10524 = vsel %vm10459, %v10395, %v4568
        %v10525 = vsel %vm10459, %v10396, %v4570
        %v10526 = vsel %vm10459, %v10397, %v4572
        %v10527 = vsel %vm10459, %v10398, %v4574
        %v10528 = vsel %vm10459, %v10399, %v4576
        %v10529 = vsel %vm10459, %v10400, %v4578
        %v10530 = vsel %vm10459, %v10401, %v4580
        %v10531 = vsel %vm10459, %v10402, %v4582
        %v10532 = vsel %vm10459, %v10403, %v4584
        %v10533 = vsel %vm10459, %v10404, %v4586
        %v10534 = vsel %vm10459, %v10405, %v4588
        %v10535 = vsel %vm10459, %v10406, %v4590
        %v10536 = vsel %vm10459, %v10407, %v4592
        %v10537 = vsel %vm10459, %v10408, %v4594
        %v10538 = vsel %vm10459, %v10409, %v4596
        %v10539 = vsel %vm10459, %v10410, %v4598
        %v10540 = vsel %vm10459, %v10411, %v4600
        %v10541 = vsel %vm10459, %v10412, %v4602
        %v10542 = vsel %vm10459, %v10413, %v4604
        %v10543 = vsel %vm10459, %v10414, %v4606
        %v10544 = vsel %vm10459, %v10415, %v4608
        %v10545 = vsel %vm10459, %v10416, %v4610
        %v10546 = vsel %vm10459, %v10417, %v4612
        %v10547 = vsel %vm10459, %v10418, %v4614
        %v10548 = vsel %vm10459, %v10419, %v4616
        %v10549 = vsel %vm10459, %v10420, %v4618
        %v10550 = vsel %vm10459, %v10421, %v4620
        %v10551 = vsel %vm10459, %v10422, %v4622
        %v10552 = vsel %vm10459, %v10423, %v4624
        %v10553 = vsel %vm10459, %v10424, %v4626
        %v10554 = vsel %vm10459, %v10425, %v4628
        %v10555 = vsel %vm10459, %v10426, %v4630
        %v10556 = vsel %vm10459, %v10427, %v4632
        %v10557 = vsel %vm10459, %v10428, %v4634
        %v10558 = vsel %vm10459, %v10429, %v4636
        %v10559 = vsel %vm10459, %v10430, %v4638
        %v10560 = vsel %vm10459, %v10431, %v4640
        %v10561 = vsel %vm10459, %v10432, %v4642
        %v10562 = vsel %vm10459, %v10433, %v4644
        %v10563 = vsel %vm10459, %v10434, %v4646
        %v10564 = vsel %vm10459, %v10435, %v4648
        %v10565 = vsel %vm10459, %v10436, %v4650
        %v10566 = vsel %vm10459, %v10437, %v4652
        %v10567 = vsel %vm10459, %v10438, %v4654
        %v10568 = vsel %vm10459, %v10439, %v4656
        %v10569 = vsel %vm10459, %v10440, %v4658
        %v10570 = vsel %vm10459, %v10441, %v4660
        %v10571 = vsel %vm10459, %v10442, %v4662
        %v10572 = vsel %vm10459, %v10443, %v4664
        %v10573 = vsel %vm10459, %v10444, %v4666
        %v10574 = vsel %vm10459, %v10445, %v4668
        %v10575 = vsel %vm10459, %v10446, %v4670
        %v10576 = vsel %vm10459, %v10447, %v4672
        %v10577 = vsel %vm10459, %v10448, %v4674
        %v10578 = vsel %vm10459, %v10449, %v4676
        %v10579 = vsel %vm10459, %v10450, %v4678
        %v10580 = vsel %vm10459, %v10451, %v4680
        %v10581 = vsel %vm10459, %v10452, %v4682
        %v10582 = vsel %vm10459, %v10453, %v4684
        %v10583 = vsel %vm10459, %v10454, %v4686
        %v10584 = vsel %vm10459, %v10455, %v4688
        %v10585 = vsel %vm10459, %v10456, %v4690
        %v10586 = vsel %vm10459, %v10457, %v4692
        %v10587 = vsel %vm10459, %v10458, %v4694
        %vm10588 = vcmask 195584
        %v10589 = vsel %vm10588, %v10460, %v4952
        %v10590 = vsel %vm10588, %v10461, %v4954
        %v10591 = vsel %vm10588, %v10462, %v4956
        %v10592 = vsel %vm10588, %v10463, %v4958
        %v10593 = vsel %vm10588, %v10464, %v4960
        %v10594 = vsel %vm10588, %v10465, %v4962
        %v10595 = vsel %vm10588, %v10466, %v4964
        %v10596 = vsel %vm10588, %v10467, %v4966
        %v10597 = vsel %vm10588, %v10468, %v4968
        %v10598 = vsel %vm10588, %v10469, %v4970
        %v10599 = vsel %vm10588, %v10470, %v4972
        %v10600 = vsel %vm10588, %v10471, %v4974
        %v10601 = vsel %vm10588, %v10472, %v4976
        %v10602 = vsel %vm10588, %v10473, %v4978
        %v10603 = vsel %vm10588, %v10474, %v4980
        %v10604 = vsel %vm10588, %v10475, %v4982
        %v10605 = vsel %vm10588, %v10476, %v4984
        %v10606 = vsel %vm10588, %v10477, %v4986
        %v10607 = vsel %vm10588, %v10478, %v4988
        %v10608 = vsel %vm10588, %v10479, %v4990
        %v10609 = vsel %vm10588, %v10480, %v4992
        %v10610 = vsel %vm10588, %v10481, %v4994
        %v10611 = vsel %vm10588, %v10482, %v4996
        %v10612 = vsel %vm10588, %v10483, %v4998
        %v10613 = vsel %vm10588, %v10484, %v5000
        %v10614 = vsel %vm10588, %v10485, %v5002
        %v10615 = vsel %vm10588, %v10486, %v5004
        %v10616 = vsel %vm10588, %v10487, %v5006
        %v10617 = vsel %vm10588, %v10488, %v5008
        %v10618 = vsel %vm10588, %v10489, %v5010
        %v10619 = vsel %vm10588, %v10490, %v5012
        %v10620 = vsel %vm10588, %v10491, %v5014
        %v10621 = vsel %vm10588, %v10492, %v5016
        %v10622 = vsel %vm10588, %v10493, %v5018
        %v10623 = vsel %vm10588, %v10494, %v5020
        %v10624 = vsel %vm10588, %v10495, %v5022
        %v10625 = vsel %vm10588, %v10496, %v5024
        %v10626 = vsel %vm10588, %v10497, %v5026
        %v10627 = vsel %vm10588, %v10498, %v5028
        %v10628 = vsel %vm10588, %v10499, %v5030
        %v10629 = vsel %vm10588, %v10500, %v5032
        %v10630 = vsel %vm10588, %v10501, %v5034
        %v10631 = vsel %vm10588, %v10502, %v5036
        %v10632 = vsel %vm10588, %v10503, %v5038
        %v10633 = vsel %vm10588, %v10504, %v5040
        %v10634 = vsel %vm10588, %v10505, %v5042
        %v10635 = vsel %vm10588, %v10506, %v5044
        %v10636 = vsel %vm10588, %v10507, %v5046
        %v10637 = vsel %vm10588, %v10508, %v5048
        %v10638 = vsel %vm10588, %v10509, %v5050
        %v10639 = vsel %vm10588, %v10510, %v5052
        %v10640 = vsel %vm10588, %v10511, %v5054
        %v10641 = vsel %vm10588, %v10512, %v5056
        %v10642 = vsel %vm10588, %v10513, %v5058
        %v10643 = vsel %vm10588, %v10514, %v5060
        %v10644 = vsel %vm10588, %v10515, %v5062
        %v10645 = vsel %vm10588, %v10516, %v5064
        %v10646 = vsel %vm10588, %v10517, %v5066
        %v10647 = vsel %vm10588, %v10518, %v5068
        %v10648 = vsel %vm10588, %v10519, %v5070
        %v10649 = vsel %vm10588, %v10520, %v5072
        %v10650 = vsel %vm10588, %v10521, %v5074
        %v10651 = vsel %vm10588, %v10522, %v5076
        %v10652 = vsel %vm10588, %v10523, %v5078
        %v10653 = vsel %vm10588, %v10524, %v5080
        %v10654 = vsel %vm10588, %v10525, %v5082
        %v10655 = vsel %vm10588, %v10526, %v5084
        %v10656 = vsel %vm10588, %v10527, %v5086
        %v10657 = vsel %vm10588, %v10528, %v5088
        %v10658 = vsel %vm10588, %v10529, %v5090
        %v10659 = vsel %vm10588, %v10530, %v5092
        %v10660 = vsel %vm10588, %v10531, %v5094
        %v10661 = vsel %vm10588, %v10532, %v5096
        %v10662 = vsel %vm10588, %v10533, %v5098
        %v10663 = vsel %vm10588, %v10534, %v5100
        %v10664 = vsel %vm10588, %v10535, %v5102
        %v10665 = vsel %vm10588, %v10536, %v5104
        %v10666 = vsel %vm10588, %v10537, %v5106
        %v10667 = vsel %vm10588, %v10538, %v5108
        %v10668 = vsel %vm10588, %v10539, %v5110
        %v10669 = vsel %vm10588, %v10540, %v5112
        %v10670 = vsel %vm10588, %v10541, %v5114
        %v10671 = vsel %vm10588, %v10542, %v5116
        %v10672 = vsel %vm10588, %v10543, %v5118
        %v10673 = vsel %vm10588, %v10544, %v5120
        %v10674 = vsel %vm10588, %v10545, %v5122
        %v10675 = vsel %vm10588, %v10546, %v5124
        %v10676 = vsel %vm10588, %v10547, %v5126
        %v10677 = vsel %vm10588, %v10548, %v5128
        %v10678 = vsel %vm10588, %v10549, %v5130
        %v10679 = vsel %vm10588, %v10550, %v5132
        %v10680 = vsel %vm10588, %v10551, %v5134
        %v10681 = vsel %vm10588, %v10552, %v5136
        %v10682 = vsel %vm10588, %v10553, %v5138
        %v10683 = vsel %vm10588, %v10554, %v5140
        %v10684 = vsel %vm10588, %v10555, %v5142
        %v10685 = vsel %vm10588, %v10556, %v5144
        %v10686 = vsel %vm10588, %v10557, %v5146
        %v10687 = vsel %vm10588, %v10558, %v5148
        %v10688 = vsel %vm10588, %v10559, %v5150
        %v10689 = vsel %vm10588, %v10560, %v5152
        %v10690 = vsel %vm10588, %v10561, %v5154
        %v10691 = vsel %vm10588, %v10562, %v5156
        %v10692 = vsel %vm10588, %v10563, %v5158
        %v10693 = vsel %vm10588, %v10564, %v5160
        %v10694 = vsel %vm10588, %v10565, %v5162
        %v10695 = vsel %vm10588, %v10566, %v5164
        %v10696 = vsel %vm10588, %v10567, %v5166
        %v10697 = vsel %vm10588, %v10568, %v5168
        %v10698 = vsel %vm10588, %v10569, %v5170
        %v10699 = vsel %vm10588, %v10570, %v5172
        %v10700 = vsel %vm10588, %v10571, %v5174
        %v10701 = vsel %vm10588, %v10572, %v5176
        %v10702 = vsel %vm10588, %v10573, %v5178
        %v10703 = vsel %vm10588, %v10574, %v5180
        %v10704 = vsel %vm10588, %v10575, %v5182
        %v10705 = vsel %vm10588, %v10576, %v5184
        %v10706 = vsel %vm10588, %v10577, %v5186
        %v10707 = vsel %vm10588, %v10578, %v5188
        %v10708 = vsel %vm10588, %v10579, %v5190
        %v10709 = vsel %vm10588, %v10580, %v5192
        %v10710 = vsel %vm10588, %v10581, %v5194
        %v10711 = vsel %vm10588, %v10582, %v5196
        %v10712 = vsel %vm10588, %v10583, %v5198
        %v10713 = vsel %vm10588, %v10584, %v5200
        %v10714 = vsel %vm10588, %v10585, %v5202
        %v10715 = vsel %vm10588, %v10586, %v5204
        %v10716 = vsel %vm10588, %v10587, %v5206
        %vm10717 = vcmask 228352
        %v10718 = vsel %vm10717, %v10589, %v5464
        %v10719 = vsel %vm10717, %v10590, %v5466
        %v10720 = vsel %vm10717, %v10591, %v5468
        %v10721 = vsel %vm10717, %v10592, %v5470
        %v10722 = vsel %vm10717, %v10593, %v5472
        %v10723 = vsel %vm10717, %v10594, %v5474
        %v10724 = vsel %vm10717, %v10595, %v5476
        %v10725 = vsel %vm10717, %v10596, %v5478
        %v10726 = vsel %vm10717, %v10597, %v5480
        %v10727 = vsel %vm10717, %v10598, %v5482
        %v10728 = vsel %vm10717, %v10599, %v5484
        %v10729 = vsel %vm10717, %v10600, %v5486
        %v10730 = vsel %vm10717, %v10601, %v5488
        %v10731 = vsel %vm10717, %v10602, %v5490
        %v10732 = vsel %vm10717, %v10603, %v5492
        %v10733 = vsel %vm10717, %v10604, %v5494
        %v10734 = vsel %vm10717, %v10605, %v5496
        %v10735 = vsel %vm10717, %v10606, %v5498
        %v10736 = vsel %vm10717, %v10607, %v5500
        %v10737 = vsel %vm10717, %v10608, %v5502
        %v10738 = vsel %vm10717, %v10609, %v5504
        %v10739 = vsel %vm10717, %v10610, %v5506
        %v10740 = vsel %vm10717, %v10611, %v5508
        %v10741 = vsel %vm10717, %v10612, %v5510
        %v10742 = vsel %vm10717, %v10613, %v5512
        %v10743 = vsel %vm10717, %v10614, %v5514
        %v10744 = vsel %vm10717, %v10615, %v5516
        %v10745 = vsel %vm10717, %v10616, %v5518
        %v10746 = vsel %vm10717, %v10617, %v5520
        %v10747 = vsel %vm10717, %v10618, %v5522
        %v10748 = vsel %vm10717, %v10619, %v5524
        %v10749 = vsel %vm10717, %v10620, %v5526
        %v10750 = vsel %vm10717, %v10621, %v5528
        %v10751 = vsel %vm10717, %v10622, %v5530
        %v10752 = vsel %vm10717, %v10623, %v5532
        %v10753 = vsel %vm10717, %v10624, %v5534
        %v10754 = vsel %vm10717, %v10625, %v5536
        %v10755 = vsel %vm10717, %v10626, %v5538
        %v10756 = vsel %vm10717, %v10627, %v5540
        %v10757 = vsel %vm10717, %v10628, %v5542
        %v10758 = vsel %vm10717, %v10629, %v5544
        %v10759 = vsel %vm10717, %v10630, %v5546
        %v10760 = vsel %vm10717, %v10631, %v5548
        %v10761 = vsel %vm10717, %v10632, %v5550
        %v10762 = vsel %vm10717, %v10633, %v5552
        %v10763 = vsel %vm10717, %v10634, %v5554
        %v10764 = vsel %vm10717, %v10635, %v5556
        %v10765 = vsel %vm10717, %v10636, %v5558
        %v10766 = vsel %vm10717, %v10637, %v5560
        %v10767 = vsel %vm10717, %v10638, %v5562
        %v10768 = vsel %vm10717, %v10639, %v5564
        %v10769 = vsel %vm10717, %v10640, %v5566
        %v10770 = vsel %vm10717, %v10641, %v5568
        %v10771 = vsel %vm10717, %v10642, %v5570
        %v10772 = vsel %vm10717, %v10643, %v5572
        %v10773 = vsel %vm10717, %v10644, %v5574
        %v10774 = vsel %vm10717, %v10645, %v5576
        %v10775 = vsel %vm10717, %v10646, %v5578
        %v10776 = vsel %vm10717, %v10647, %v5580
        %v10777 = vsel %vm10717, %v10648, %v5582
        %v10778 = vsel %vm10717, %v10649, %v5584
        %v10779 = vsel %vm10717, %v10650, %v5586
        %v10780 = vsel %vm10717, %v10651, %v5588
        %v10781 = vsel %vm10717, %v10652, %v5590
        %v10782 = vsel %vm10717, %v10653, %v5592
        %v10783 = vsel %vm10717, %v10654, %v5594
        %v10784 = vsel %vm10717, %v10655, %v5596
        %v10785 = vsel %vm10717, %v10656, %v5598
        %v10786 = vsel %vm10717, %v10657, %v5600
        %v10787 = vsel %vm10717, %v10658, %v5602
        %v10788 = vsel %vm10717, %v10659, %v5604
        %v10789 = vsel %vm10717, %v10660, %v5606
        %v10790 = vsel %vm10717, %v10661, %v5608
        %v10791 = vsel %vm10717, %v10662, %v5610
        %v10792 = vsel %vm10717, %v10663, %v5612
        %v10793 = vsel %vm10717, %v10664, %v5614
        %v10794 = vsel %vm10717, %v10665, %v5616
        %v10795 = vsel %vm10717, %v10666, %v5618
        %v10796 = vsel %vm10717, %v10667, %v5620
        %v10797 = vsel %vm10717, %v10668, %v5622
        %v10798 = vsel %vm10717, %v10669, %v5624
        %v10799 = vsel %vm10717, %v10670, %v5626
        %v10800 = vsel %vm10717, %v10671, %v5628
        %v10801 = vsel %vm10717, %v10672, %v5630
        %v10802 = vsel %vm10717, %v10673, %v5632
        %v10803 = vsel %vm10717, %v10674, %v5634
        %v10804 = vsel %vm10717, %v10675, %v5636
        %v10805 = vsel %vm10717, %v10676, %v5638
        %v10806 = vsel %vm10717, %v10677, %v5640
        %v10807 = vsel %vm10717, %v10678, %v5642
        %v10808 = vsel %vm10717, %v10679, %v5644
        %v10809 = vsel %vm10717, %v10680, %v5646
        %v10810 = vsel %vm10717, %v10681, %v5648
        %v10811 = vsel %vm10717, %v10682, %v5650
        %v10812 = vsel %vm10717, %v10683, %v5652
        %v10813 = vsel %vm10717, %v10684, %v5654
        %v10814 = vsel %vm10717, %v10685, %v5656
        %v10815 = vsel %vm10717, %v10686, %v5658
        %v10816 = vsel %vm10717, %v10687, %v5660
        %v10817 = vsel %vm10717, %v10688, %v5662
        %v10818 = vsel %vm10717, %v10689, %v5664
        %v10819 = vsel %vm10717, %v10690, %v5666
        %v10820 = vsel %vm10717, %v10691, %v5668
        %v10821 = vsel %vm10717, %v10692, %v5670
        %v10822 = vsel %vm10717, %v10693, %v5672
        %v10823 = vsel %vm10717, %v10694, %v5674
        %v10824 = vsel %vm10717, %v10695, %v5676
        %v10825 = vsel %vm10717, %v10696, %v5678
        %v10826 = vsel %vm10717, %v10697, %v5680
        %v10827 = vsel %vm10717, %v10698, %v5682
        %v10828 = vsel %vm10717, %v10699, %v5684
        %v10829 = vsel %vm10717, %v10700, %v5686
        %v10830 = vsel %vm10717, %v10701, %v5688
        %v10831 = vsel %vm10717, %v10702, %v5690
        %v10832 = vsel %vm10717, %v10703, %v5692
        %v10833 = vsel %vm10717, %v10704, %v5694
        %v10834 = vsel %vm10717, %v10705, %v5696
        %v10835 = vsel %vm10717, %v10706, %v5698
        %v10836 = vsel %vm10717, %v10707, %v5700
        %v10837 = vsel %vm10717, %v10708, %v5702
        %v10838 = vsel %vm10717, %v10709, %v5704
        %v10839 = vsel %vm10717, %v10710, %v5706
        %v10840 = vsel %vm10717, %v10711, %v5708
        %v10841 = vsel %vm10717, %v10712, %v5710
        %v10842 = vsel %vm10717, %v10713, %v5712
        %v10843 = vsel %vm10717, %v10714, %v5714
        %v10844 = vsel %vm10717, %v10715, %v5716
        %v10845 = vsel %vm10717, %v10716, %v5718
        %vm10846 = vcmask 261120
        %v10847 = vsel %vm10846, %v10718, %v5976
        %v10848 = vsel %vm10846, %v10719, %v5978
        %v10849 = vsel %vm10846, %v10720, %v5980
        %v10850 = vsel %vm10846, %v10721, %v5982
        %v10851 = vsel %vm10846, %v10722, %v5984
        %v10852 = vsel %vm10846, %v10723, %v5986
        %v10853 = vsel %vm10846, %v10724, %v5988
        %v10854 = vsel %vm10846, %v10725, %v5990
        %v10855 = vsel %vm10846, %v10726, %v5992
        %v10856 = vsel %vm10846, %v10727, %v5994
        %v10857 = vsel %vm10846, %v10728, %v5996
        %v10858 = vsel %vm10846, %v10729, %v5998
        %v10859 = vsel %vm10846, %v10730, %v6000
        %v10860 = vsel %vm10846, %v10731, %v6002
        %v10861 = vsel %vm10846, %v10732, %v6004
        %v10862 = vsel %vm10846, %v10733, %v6006
        %v10863 = vsel %vm10846, %v10734, %v6008
        %v10864 = vsel %vm10846, %v10735, %v6010
        %v10865 = vsel %vm10846, %v10736, %v6012
        %v10866 = vsel %vm10846, %v10737, %v6014
        %v10867 = vsel %vm10846, %v10738, %v6016
        %v10868 = vsel %vm10846, %v10739, %v6018
        %v10869 = vsel %vm10846, %v10740, %v6020
        %v10870 = vsel %vm10846, %v10741, %v6022
        %v10871 = vsel %vm10846, %v10742, %v6024
        %v10872 = vsel %vm10846, %v10743, %v6026
        %v10873 = vsel %vm10846, %v10744, %v6028
        %v10874 = vsel %vm10846, %v10745, %v6030
        %v10875 = vsel %vm10846, %v10746, %v6032
        %v10876 = vsel %vm10846, %v10747, %v6034
        %v10877 = vsel %vm10846, %v10748, %v6036
        %v10878 = vsel %vm10846, %v10749, %v6038
        %v10879 = vsel %vm10846, %v10750, %v6040
        %v10880 = vsel %vm10846, %v10751, %v6042
        %v10881 = vsel %vm10846, %v10752, %v6044
        %v10882 = vsel %vm10846, %v10753, %v6046
        %v10883 = vsel %vm10846, %v10754, %v6048
        %v10884 = vsel %vm10846, %v10755, %v6050
        %v10885 = vsel %vm10846, %v10756, %v6052
        %v10886 = vsel %vm10846, %v10757, %v6054
        %v10887 = vsel %vm10846, %v10758, %v6056
        %v10888 = vsel %vm10846, %v10759, %v6058
        %v10889 = vsel %vm10846, %v10760, %v6060
        %v10890 = vsel %vm10846, %v10761, %v6062
        %v10891 = vsel %vm10846, %v10762, %v6064
        %v10892 = vsel %vm10846, %v10763, %v6066
        %v10893 = vsel %vm10846, %v10764, %v6068
        %v10894 = vsel %vm10846, %v10765, %v6070
        %v10895 = vsel %vm10846, %v10766, %v6072
        %v10896 = vsel %vm10846, %v10767, %v6074
        %v10897 = vsel %vm10846, %v10768, %v6076
        %v10898 = vsel %vm10846, %v10769, %v6078
        %v10899 = vsel %vm10846, %v10770, %v6080
        %v10900 = vsel %vm10846, %v10771, %v6082
        %v10901 = vsel %vm10846, %v10772, %v6084
        %v10902 = vsel %vm10846, %v10773, %v6086
        %v10903 = vsel %vm10846, %v10774, %v6088
        %v10904 = vsel %vm10846, %v10775, %v6090
        %v10905 = vsel %vm10846, %v10776, %v6092
        %v10906 = vsel %vm10846, %v10777, %v6094
        %v10907 = vsel %vm10846, %v10778, %v6096
        %v10908 = vsel %vm10846, %v10779, %v6098
        %v10909 = vsel %vm10846, %v10780, %v6100
        %v10910 = vsel %vm10846, %v10781, %v6102
        %v10911 = vsel %vm10846, %v10782, %v6104
        %v10912 = vsel %vm10846, %v10783, %v6106
        %v10913 = vsel %vm10846, %v10784, %v6108
        %v10914 = vsel %vm10846, %v10785, %v6110
        %v10915 = vsel %vm10846, %v10786, %v6112
        %v10916 = vsel %vm10846, %v10787, %v6114
        %v10917 = vsel %vm10846, %v10788, %v6116
        %v10918 = vsel %vm10846, %v10789, %v6118
        %v10919 = vsel %vm10846, %v10790, %v6120
        %v10920 = vsel %vm10846, %v10791, %v6122
        %v10921 = vsel %vm10846, %v10792, %v6124
        %v10922 = vsel %vm10846, %v10793, %v6126
        %v10923 = vsel %vm10846, %v10794, %v6128
        %v10924 = vsel %vm10846, %v10795, %v6130
        %v10925 = vsel %vm10846, %v10796, %v6132
        %v10926 = vsel %vm10846, %v10797, %v6134
        %v10927 = vsel %vm10846, %v10798, %v6136
        %v10928 = vsel %vm10846, %v10799, %v6138
        %v10929 = vsel %vm10846, %v10800, %v6140
        %v10930 = vsel %vm10846, %v10801, %v6142
        %v10931 = vsel %vm10846, %v10802, %v6144
        %v10932 = vsel %vm10846, %v10803, %v6146
        %v10933 = vsel %vm10846, %v10804, %v6148
        %v10934 = vsel %vm10846, %v10805, %v6150
        %v10935 = vsel %vm10846, %v10806, %v6152
        %v10936 = vsel %vm10846, %v10807, %v6154
        %v10937 = vsel %vm10846, %v10808, %v6156
        %v10938 = vsel %vm10846, %v10809, %v6158
        %v10939 = vsel %vm10846, %v10810, %v6160
        %v10940 = vsel %vm10846, %v10811, %v6162
        %v10941 = vsel %vm10846, %v10812, %v6164
        %v10942 = vsel %vm10846, %v10813, %v6166
        %v10943 = vsel %vm10846, %v10814, %v6168
        %v10944 = vsel %vm10846, %v10815, %v6170
        %v10945 = vsel %vm10846, %v10816, %v6172
        %v10946 = vsel %vm10846, %v10817, %v6174
        %v10947 = vsel %vm10846, %v10818, %v6176
        %v10948 = vsel %vm10846, %v10819, %v6178
        %v10949 = vsel %vm10846, %v10820, %v6180
        %v10950 = vsel %vm10846, %v10821, %v6182
        %v10951 = vsel %vm10846, %v10822, %v6184
        %v10952 = vsel %vm10846, %v10823, %v6186
        %v10953 = vsel %vm10846, %v10824, %v6188
        %v10954 = vsel %vm10846, %v10825, %v6190
        %v10955 = vsel %vm10846, %v10826, %v6192
        %v10956 = vsel %vm10846, %v10827, %v6194
        %v10957 = vsel %vm10846, %v10828, %v6196
        %v10958 = vsel %vm10846, %v10829, %v6198
        %v10959 = vsel %vm10846, %v10830, %v6200
        %v10960 = vsel %vm10846, %v10831, %v6202
        %v10961 = vsel %vm10846, %v10832, %v6204
        %v10962 = vsel %vm10846, %v10833, %v6206
        %v10963 = vsel %vm10846, %v10834, %v6208
        %v10964 = vsel %vm10846, %v10835, %v6210
        %v10965 = vsel %vm10846, %v10836, %v6212
        %v10966 = vsel %vm10846, %v10837, %v6214
        %v10967 = vsel %vm10846, %v10838, %v6216
        %v10968 = vsel %vm10846, %v10839, %v6218
        %v10969 = vsel %vm10846, %v10840, %v6220
        %v10970 = vsel %vm10846, %v10841, %v6222
        %v10971 = vsel %vm10846, %v10842, %v6224
        %v10972 = vsel %vm10846, %v10843, %v6226
        %v10973 = vsel %vm10846, %v10844, %v6228
        %v10974 = vsel %vm10846, %v10845, %v6230
        %vm10975 = vcmask 293888
        %v10976 = vsel %vm10975, %v10847, %v6488
        %v10977 = vsel %vm10975, %v10848, %v6490
        %v10978 = vsel %vm10975, %v10849, %v6492
        %v10979 = vsel %vm10975, %v10850, %v6494
        %v10980 = vsel %vm10975, %v10851, %v6496
        %v10981 = vsel %vm10975, %v10852, %v6498
        %v10982 = vsel %vm10975, %v10853, %v6500
        %v10983 = vsel %vm10975, %v10854, %v6502
        %v10984 = vsel %vm10975, %v10855, %v6504
        %v10985 = vsel %vm10975, %v10856, %v6506
        %v10986 = vsel %vm10975, %v10857, %v6508
        %v10987 = vsel %vm10975, %v10858, %v6510
        %v10988 = vsel %vm10975, %v10859, %v6512
        %v10989 = vsel %vm10975, %v10860, %v6514
        %v10990 = vsel %vm10975, %v10861, %v6516
        %v10991 = vsel %vm10975, %v10862, %v6518
        %v10992 = vsel %vm10975, %v10863, %v6520
        %v10993 = vsel %vm10975, %v10864, %v6522
        %v10994 = vsel %vm10975, %v10865, %v6524
        %v10995 = vsel %vm10975, %v10866, %v6526
        %v10996 = vsel %vm10975, %v10867, %v6528
        %v10997 = vsel %vm10975, %v10868, %v6530
        %v10998 = vsel %vm10975, %v10869, %v6532
        %v10999 = vsel %vm10975, %v10870, %v6534
        %v11000 = vsel %vm10975, %v10871, %v6536
        %v11001 = vsel %vm10975, %v10872, %v6538
        %v11002 = vsel %vm10975, %v10873, %v6540
        %v11003 = vsel %vm10975, %v10874, %v6542
        %v11004 = vsel %vm10975, %v10875, %v6544
        %v11005 = vsel %vm10975, %v10876, %v6546
        %v11006 = vsel %vm10975, %v10877, %v6548
        %v11007 = vsel %vm10975, %v10878, %v6550
        %v11008 = vsel %vm10975, %v10879, %v6552
        %v11009 = vsel %vm10975, %v10880, %v6554
        %v11010 = vsel %vm10975, %v10881, %v6556
        %v11011 = vsel %vm10975, %v10882, %v6558
        %v11012 = vsel %vm10975, %v10883, %v6560
        %v11013 = vsel %vm10975, %v10884, %v6562
        %v11014 = vsel %vm10975, %v10885, %v6564
        %v11015 = vsel %vm10975, %v10886, %v6566
        %v11016 = vsel %vm10975, %v10887, %v6568
        %v11017 = vsel %vm10975, %v10888, %v6570
        %v11018 = vsel %vm10975, %v10889, %v6572
        %v11019 = vsel %vm10975, %v10890, %v6574
        %v11020 = vsel %vm10975, %v10891, %v6576
        %v11021 = vsel %vm10975, %v10892, %v6578
        %v11022 = vsel %vm10975, %v10893, %v6580
        %v11023 = vsel %vm10975, %v10894, %v6582
        %v11024 = vsel %vm10975, %v10895, %v6584
        %v11025 = vsel %vm10975, %v10896, %v6586
        %v11026 = vsel %vm10975, %v10897, %v6588
        %v11027 = vsel %vm10975, %v10898, %v6590
        %v11028 = vsel %vm10975, %v10899, %v6592
        %v11029 = vsel %vm10975, %v10900, %v6594
        %v11030 = vsel %vm10975, %v10901, %v6596
        %v11031 = vsel %vm10975, %v10902, %v6598
        %v11032 = vsel %vm10975, %v10903, %v6600
        %v11033 = vsel %vm10975, %v10904, %v6602
        %v11034 = vsel %vm10975, %v10905, %v6604
        %v11035 = vsel %vm10975, %v10906, %v6606
        %v11036 = vsel %vm10975, %v10907, %v6608
        %v11037 = vsel %vm10975, %v10908, %v6610
        %v11038 = vsel %vm10975, %v10909, %v6612
        %v11039 = vsel %vm10975, %v10910, %v6614
        %v11040 = vsel %vm10975, %v10911, %v6616
        %v11041 = vsel %vm10975, %v10912, %v6618
        %v11042 = vsel %vm10975, %v10913, %v6620
        %v11043 = vsel %vm10975, %v10914, %v6622
        %v11044 = vsel %vm10975, %v10915, %v6624
        %v11045 = vsel %vm10975, %v10916, %v6626
        %v11046 = vsel %vm10975, %v10917, %v6628
        %v11047 = vsel %vm10975, %v10918, %v6630
        %v11048 = vsel %vm10975, %v10919, %v6632
        %v11049 = vsel %vm10975, %v10920, %v6634
        %v11050 = vsel %vm10975, %v10921, %v6636
        %v11051 = vsel %vm10975, %v10922, %v6638
        %v11052 = vsel %vm10975, %v10923, %v6640
        %v11053 = vsel %vm10975, %v10924, %v6642
        %v11054 = vsel %vm10975, %v10925, %v6644
        %v11055 = vsel %vm10975, %v10926, %v6646
        %v11056 = vsel %vm10975, %v10927, %v6648
        %v11057 = vsel %vm10975, %v10928, %v6650
        %v11058 = vsel %vm10975, %v10929, %v6652
        %v11059 = vsel %vm10975, %v10930, %v6654
        %v11060 = vsel %vm10975, %v10931, %v6656
        %v11061 = vsel %vm10975, %v10932, %v6658
        %v11062 = vsel %vm10975, %v10933, %v6660
        %v11063 = vsel %vm10975, %v10934, %v6662
        %v11064 = vsel %vm10975, %v10935, %v6664
        %v11065 = vsel %vm10975, %v10936, %v6666
        %v11066 = vsel %vm10975, %v10937, %v6668
        %v11067 = vsel %vm10975, %v10938, %v6670
        %v11068 = vsel %vm10975, %v10939, %v6672
        %v11069 = vsel %vm10975, %v10940, %v6674
        %v11070 = vsel %vm10975, %v10941, %v6676
        %v11071 = vsel %vm10975, %v10942, %v6678
        %v11072 = vsel %vm10975, %v10943, %v6680
        %v11073 = vsel %vm10975, %v10944, %v6682
        %v11074 = vsel %vm10975, %v10945, %v6684
        %v11075 = vsel %vm10975, %v10946, %v6686
        %v11076 = vsel %vm10975, %v10947, %v6688
        %v11077 = vsel %vm10975, %v10948, %v6690
        %v11078 = vsel %vm10975, %v10949, %v6692
        %v11079 = vsel %vm10975, %v10950, %v6694
        %v11080 = vsel %vm10975, %v10951, %v6696
        %v11081 = vsel %vm10975, %v10952, %v6698
        %v11082 = vsel %vm10975, %v10953, %v6700
        %v11083 = vsel %vm10975, %v10954, %v6702
        %v11084 = vsel %vm10975, %v10955, %v6704
        %v11085 = vsel %vm10975, %v10956, %v6706
        %v11086 = vsel %vm10975, %v10957, %v6708
        %v11087 = vsel %vm10975, %v10958, %v6710
        %v11088 = vsel %vm10975, %v10959, %v6712
        %v11089 = vsel %vm10975, %v10960, %v6714
        %v11090 = vsel %vm10975, %v10961, %v6716
        %v11091 = vsel %vm10975, %v10962, %v6718
        %v11092 = vsel %vm10975, %v10963, %v6720
        %v11093 = vsel %vm10975, %v10964, %v6722
        %v11094 = vsel %vm10975, %v10965, %v6724
        %v11095 = vsel %vm10975, %v10966, %v6726
        %v11096 = vsel %vm10975, %v10967, %v6728
        %v11097 = vsel %vm10975, %v10968, %v6730
        %v11098 = vsel %vm10975, %v10969, %v6732
        %v11099 = vsel %vm10975, %v10970, %v6734
        %v11100 = vsel %vm10975, %v10971, %v6736
        %v11101 = vsel %vm10975, %v10972, %v6738
        %v11102 = vsel %vm10975, %v10973, %v6740
        %v11103 = vsel %vm10975, %v10974, %v6742
        %vm11104 = vcmask 326656
        %v11105 = vsel %vm11104, %v10976, %v7000
        %v11106 = vsel %vm11104, %v10977, %v7002
        %v11107 = vsel %vm11104, %v10978, %v7004
        %v11108 = vsel %vm11104, %v10979, %v7006
        %v11109 = vsel %vm11104, %v10980, %v7008
        %v11110 = vsel %vm11104, %v10981, %v7010
        %v11111 = vsel %vm11104, %v10982, %v7012
        %v11112 = vsel %vm11104, %v10983, %v7014
        %v11113 = vsel %vm11104, %v10984, %v7016
        %v11114 = vsel %vm11104, %v10985, %v7018
        %v11115 = vsel %vm11104, %v10986, %v7020
        %v11116 = vsel %vm11104, %v10987, %v7022
        %v11117 = vsel %vm11104, %v10988, %v7024
        %v11118 = vsel %vm11104, %v10989, %v7026
        %v11119 = vsel %vm11104, %v10990, %v7028
        %v11120 = vsel %vm11104, %v10991, %v7030
        %v11121 = vsel %vm11104, %v10992, %v7032
        %v11122 = vsel %vm11104, %v10993, %v7034
        %v11123 = vsel %vm11104, %v10994, %v7036
        %v11124 = vsel %vm11104, %v10995, %v7038
        %v11125 = vsel %vm11104, %v10996, %v7040
        %v11126 = vsel %vm11104, %v10997, %v7042
        %v11127 = vsel %vm11104, %v10998, %v7044
        %v11128 = vsel %vm11104, %v10999, %v7046
        %v11129 = vsel %vm11104, %v11000, %v7048
        %v11130 = vsel %vm11104, %v11001, %v7050
        %v11131 = vsel %vm11104, %v11002, %v7052
        %v11132 = vsel %vm11104, %v11003, %v7054
        %v11133 = vsel %vm11104, %v11004, %v7056
        %v11134 = vsel %vm11104, %v11005, %v7058
        %v11135 = vsel %vm11104, %v11006, %v7060
        %v11136 = vsel %vm11104, %v11007, %v7062
        %v11137 = vsel %vm11104, %v11008, %v7064
        %v11138 = vsel %vm11104, %v11009, %v7066
        %v11139 = vsel %vm11104, %v11010, %v7068
        %v11140 = vsel %vm11104, %v11011, %v7070
        %v11141 = vsel %vm11104, %v11012, %v7072
        %v11142 = vsel %vm11104, %v11013, %v7074
        %v11143 = vsel %vm11104, %v11014, %v7076
        %v11144 = vsel %vm11104, %v11015, %v7078
        %v11145 = vsel %vm11104, %v11016, %v7080
        %v11146 = vsel %vm11104, %v11017, %v7082
        %v11147 = vsel %vm11104, %v11018, %v7084
        %v11148 = vsel %vm11104, %v11019, %v7086
        %v11149 = vsel %vm11104, %v11020, %v7088
        %v11150 = vsel %vm11104, %v11021, %v7090
        %v11151 = vsel %vm11104, %v11022, %v7092
        %v11152 = vsel %vm11104, %v11023, %v7094
        %v11153 = vsel %vm11104, %v11024, %v7096
        %v11154 = vsel %vm11104, %v11025, %v7098
        %v11155 = vsel %vm11104, %v11026, %v7100
        %v11156 = vsel %vm11104, %v11027, %v7102
        %v11157 = vsel %vm11104, %v11028, %v7104
        %v11158 = vsel %vm11104, %v11029, %v7106
        %v11159 = vsel %vm11104, %v11030, %v7108
        %v11160 = vsel %vm11104, %v11031, %v7110
        %v11161 = vsel %vm11104, %v11032, %v7112
        %v11162 = vsel %vm11104, %v11033, %v7114
        %v11163 = vsel %vm11104, %v11034, %v7116
        %v11164 = vsel %vm11104, %v11035, %v7118
        %v11165 = vsel %vm11104, %v11036, %v7120
        %v11166 = vsel %vm11104, %v11037, %v7122
        %v11167 = vsel %vm11104, %v11038, %v7124
        %v11168 = vsel %vm11104, %v11039, %v7126
        %v11169 = vsel %vm11104, %v11040, %v7128
        %v11170 = vsel %vm11104, %v11041, %v7130
        %v11171 = vsel %vm11104, %v11042, %v7132
        %v11172 = vsel %vm11104, %v11043, %v7134
        %v11173 = vsel %vm11104, %v11044, %v7136
        %v11174 = vsel %vm11104, %v11045, %v7138
        %v11175 = vsel %vm11104, %v11046, %v7140
        %v11176 = vsel %vm11104, %v11047, %v7142
        %v11177 = vsel %vm11104, %v11048, %v7144
        %v11178 = vsel %vm11104, %v11049, %v7146
        %v11179 = vsel %vm11104, %v11050, %v7148
        %v11180 = vsel %vm11104, %v11051, %v7150
        %v11181 = vsel %vm11104, %v11052, %v7152
        %v11182 = vsel %vm11104, %v11053, %v7154
        %v11183 = vsel %vm11104, %v11054, %v7156
        %v11184 = vsel %vm11104, %v11055, %v7158
        %v11185 = vsel %vm11104, %v11056, %v7160
        %v11186 = vsel %vm11104, %v11057, %v7162
        %v11187 = vsel %vm11104, %v11058, %v7164
        %v11188 = vsel %vm11104, %v11059, %v7166
        %v11189 = vsel %vm11104, %v11060, %v7168
        %v11190 = vsel %vm11104, %v11061, %v7170
        %v11191 = vsel %vm11104, %v11062, %v7172
        %v11192 = vsel %vm11104, %v11063, %v7174
        %v11193 = vsel %vm11104, %v11064, %v7176
        %v11194 = vsel %vm11104, %v11065, %v7178
        %v11195 = vsel %vm11104, %v11066, %v7180
        %v11196 = vsel %vm11104, %v11067, %v7182
        %v11197 = vsel %vm11104, %v11068, %v7184
        %v11198 = vsel %vm11104, %v11069, %v7186
        %v11199 = vsel %vm11104, %v11070, %v7188
        %v11200 = vsel %vm11104, %v11071, %v7190
        %v11201 = vsel %vm11104, %v11072, %v7192
        %v11202 = vsel %vm11104, %v11073, %v7194
        %v11203 = vsel %vm11104, %v11074, %v7196
        %v11204 = vsel %vm11104, %v11075, %v7198
        %v11205 = vsel %vm11104, %v11076, %v7200
        %v11206 = vsel %vm11104, %v11077, %v7202
        %v11207 = vsel %vm11104, %v11078, %v7204
        %v11208 = vsel %vm11104, %v11079, %v7206
        %v11209 = vsel %vm11104, %v11080, %v7208
        %v11210 = vsel %vm11104, %v11081, %v7210
        %v11211 = vsel %vm11104, %v11082, %v7212
        %v11212 = vsel %vm11104, %v11083, %v7214
        %v11213 = vsel %vm11104, %v11084, %v7216
        %v11214 = vsel %vm11104, %v11085, %v7218
        %v11215 = vsel %vm11104, %v11086, %v7220
        %v11216 = vsel %vm11104, %v11087, %v7222
        %v11217 = vsel %vm11104, %v11088, %v7224
        %v11218 = vsel %vm11104, %v11089, %v7226
        %v11219 = vsel %vm11104, %v11090, %v7228
        %v11220 = vsel %vm11104, %v11091, %v7230
        %v11221 = vsel %vm11104, %v11092, %v7232
        %v11222 = vsel %vm11104, %v11093, %v7234
        %v11223 = vsel %vm11104, %v11094, %v7236
        %v11224 = vsel %vm11104, %v11095, %v7238
        %v11225 = vsel %vm11104, %v11096, %v7240
        %v11226 = vsel %vm11104, %v11097, %v7242
        %v11227 = vsel %vm11104, %v11098, %v7244
        %v11228 = vsel %vm11104, %v11099, %v7246
        %v11229 = vsel %vm11104, %v11100, %v7248
        %v11230 = vsel %vm11104, %v11101, %v7250
        %v11231 = vsel %vm11104, %v11102, %v7252
        %v11232 = vsel %vm11104, %v11103, %v7254
        %vm11233 = vcmask 359424
        %v11234 = vsel %vm11233, %v11105, %v7512
        %v11235 = vsel %vm11233, %v11106, %v7514
        %v11236 = vsel %vm11233, %v11107, %v7516
        %v11237 = vsel %vm11233, %v11108, %v7518
        %v11238 = vsel %vm11233, %v11109, %v7520
        %v11239 = vsel %vm11233, %v11110, %v7522
        %v11240 = vsel %vm11233, %v11111, %v7524
        %v11241 = vsel %vm11233, %v11112, %v7526
        %v11242 = vsel %vm11233, %v11113, %v7528
        %v11243 = vsel %vm11233, %v11114, %v7530
        %v11244 = vsel %vm11233, %v11115, %v7532
        %v11245 = vsel %vm11233, %v11116, %v7534
        %v11246 = vsel %vm11233, %v11117, %v7536
        %v11247 = vsel %vm11233, %v11118, %v7538
        %v11248 = vsel %vm11233, %v11119, %v7540
        %v11249 = vsel %vm11233, %v11120, %v7542
        %v11250 = vsel %vm11233, %v11121, %v7544
        %v11251 = vsel %vm11233, %v11122, %v7546
        %v11252 = vsel %vm11233, %v11123, %v7548
        %v11253 = vsel %vm11233, %v11124, %v7550
        %v11254 = vsel %vm11233, %v11125, %v7552
        %v11255 = vsel %vm11233, %v11126, %v7554
        %v11256 = vsel %vm11233, %v11127, %v7556
        %v11257 = vsel %vm11233, %v11128, %v7558
        %v11258 = vsel %vm11233, %v11129, %v7560
        %v11259 = vsel %vm11233, %v11130, %v7562
        %v11260 = vsel %vm11233, %v11131, %v7564
        %v11261 = vsel %vm11233, %v11132, %v7566
        %v11262 = vsel %vm11233, %v11133, %v7568
        %v11263 = vsel %vm11233, %v11134, %v7570
        %v11264 = vsel %vm11233, %v11135, %v7572
        %v11265 = vsel %vm11233, %v11136, %v7574
        %v11266 = vsel %vm11233, %v11137, %v7576
        %v11267 = vsel %vm11233, %v11138, %v7578
        %v11268 = vsel %vm11233, %v11139, %v7580
        %v11269 = vsel %vm11233, %v11140, %v7582
        %v11270 = vsel %vm11233, %v11141, %v7584
        %v11271 = vsel %vm11233, %v11142, %v7586
        %v11272 = vsel %vm11233, %v11143, %v7588
        %v11273 = vsel %vm11233, %v11144, %v7590
        %v11274 = vsel %vm11233, %v11145, %v7592
        %v11275 = vsel %vm11233, %v11146, %v7594
        %v11276 = vsel %vm11233, %v11147, %v7596
        %v11277 = vsel %vm11233, %v11148, %v7598
        %v11278 = vsel %vm11233, %v11149, %v7600
        %v11279 = vsel %vm11233, %v11150, %v7602
        %v11280 = vsel %vm11233, %v11151, %v7604
        %v11281 = vsel %vm11233, %v11152, %v7606
        %v11282 = vsel %vm11233, %v11153, %v7608
        %v11283 = vsel %vm11233, %v11154, %v7610
        %v11284 = vsel %vm11233, %v11155, %v7612
        %v11285 = vsel %vm11233, %v11156, %v7614
        %v11286 = vsel %vm11233, %v11157, %v7616
        %v11287 = vsel %vm11233, %v11158, %v7618
        %v11288 = vsel %vm11233, %v11159, %v7620
        %v11289 = vsel %vm11233, %v11160, %v7622
        %v11290 = vsel %vm11233, %v11161, %v7624
        %v11291 = vsel %vm11233, %v11162, %v7626
        %v11292 = vsel %vm11233, %v11163, %v7628
        %v11293 = vsel %vm11233, %v11164, %v7630
        %v11294 = vsel %vm11233, %v11165, %v7632
        %v11295 = vsel %vm11233, %v11166, %v7634
        %v11296 = vsel %vm11233, %v11167, %v7636
        %v11297 = vsel %vm11233, %v11168, %v7638
        %v11298 = vsel %vm11233, %v11169, %v7640
        %v11299 = vsel %vm11233, %v11170, %v7642
        %v11300 = vsel %vm11233, %v11171, %v7644
        %v11301 = vsel %vm11233, %v11172, %v7646
        %v11302 = vsel %vm11233, %v11173, %v7648
        %v11303 = vsel %vm11233, %v11174, %v7650
        %v11304 = vsel %vm11233, %v11175, %v7652
        %v11305 = vsel %vm11233, %v11176, %v7654
        %v11306 = vsel %vm11233, %v11177, %v7656
        %v11307 = vsel %vm11233, %v11178, %v7658
        %v11308 = vsel %vm11233, %v11179, %v7660
        %v11309 = vsel %vm11233, %v11180, %v7662
        %v11310 = vsel %vm11233, %v11181, %v7664
        %v11311 = vsel %vm11233, %v11182, %v7666
        %v11312 = vsel %vm11233, %v11183, %v7668
        %v11313 = vsel %vm11233, %v11184, %v7670
        %v11314 = vsel %vm11233, %v11185, %v7672
        %v11315 = vsel %vm11233, %v11186, %v7674
        %v11316 = vsel %vm11233, %v11187, %v7676
        %v11317 = vsel %vm11233, %v11188, %v7678
        %v11318 = vsel %vm11233, %v11189, %v7680
        %v11319 = vsel %vm11233, %v11190, %v7682
        %v11320 = vsel %vm11233, %v11191, %v7684
        %v11321 = vsel %vm11233, %v11192, %v7686
        %v11322 = vsel %vm11233, %v11193, %v7688
        %v11323 = vsel %vm11233, %v11194, %v7690
        %v11324 = vsel %vm11233, %v11195, %v7692
        %v11325 = vsel %vm11233, %v11196, %v7694
        %v11326 = vsel %vm11233, %v11197, %v7696
        %v11327 = vsel %vm11233, %v11198, %v7698
        %v11328 = vsel %vm11233, %v11199, %v7700
        %v11329 = vsel %vm11233, %v11200, %v7702
        %v11330 = vsel %vm11233, %v11201, %v7704
        %v11331 = vsel %vm11233, %v11202, %v7706
        %v11332 = vsel %vm11233, %v11203, %v7708
        %v11333 = vsel %vm11233, %v11204, %v7710
        %v11334 = vsel %vm11233, %v11205, %v7712
        %v11335 = vsel %vm11233, %v11206, %v7714
        %v11336 = vsel %vm11233, %v11207, %v7716
        %v11337 = vsel %vm11233, %v11208, %v7718
        %v11338 = vsel %vm11233, %v11209, %v7720
        %v11339 = vsel %vm11233, %v11210, %v7722
        %v11340 = vsel %vm11233, %v11211, %v7724
        %v11341 = vsel %vm11233, %v11212, %v7726
        %v11342 = vsel %vm11233, %v11213, %v7728
        %v11343 = vsel %vm11233, %v11214, %v7730
        %v11344 = vsel %vm11233, %v11215, %v7732
        %v11345 = vsel %vm11233, %v11216, %v7734
        %v11346 = vsel %vm11233, %v11217, %v7736
        %v11347 = vsel %vm11233, %v11218, %v7738
        %v11348 = vsel %vm11233, %v11219, %v7740
        %v11349 = vsel %vm11233, %v11220, %v7742
        %v11350 = vsel %vm11233, %v11221, %v7744
        %v11351 = vsel %vm11233, %v11222, %v7746
        %v11352 = vsel %vm11233, %v11223, %v7748
        %v11353 = vsel %vm11233, %v11224, %v7750
        %v11354 = vsel %vm11233, %v11225, %v7752
        %v11355 = vsel %vm11233, %v11226, %v7754
        %v11356 = vsel %vm11233, %v11227, %v7756
        %v11357 = vsel %vm11233, %v11228, %v7758
        %v11358 = vsel %vm11233, %v11229, %v7760
        %v11359 = vsel %vm11233, %v11230, %v7762
        %v11360 = vsel %vm11233, %v11231, %v7764
        %v11361 = vsel %vm11233, %v11232, %v7766
        %vm11362 = vcmask 392192
        %v11363 = vsel %vm11362, %v11234, %v8024
        %v11364 = vsel %vm11362, %v11235, %v8026
        %v11365 = vsel %vm11362, %v11236, %v8028
        %v11366 = vsel %vm11362, %v11237, %v8030
        %v11367 = vsel %vm11362, %v11238, %v8032
        %v11368 = vsel %vm11362, %v11239, %v8034
        %v11369 = vsel %vm11362, %v11240, %v8036
        %v11370 = vsel %vm11362, %v11241, %v8038
        %v11371 = vsel %vm11362, %v11242, %v8040
        %v11372 = vsel %vm11362, %v11243, %v8042
        %v11373 = vsel %vm11362, %v11244, %v8044
        %v11374 = vsel %vm11362, %v11245, %v8046
        %v11375 = vsel %vm11362, %v11246, %v8048
        %v11376 = vsel %vm11362, %v11247, %v8050
        %v11377 = vsel %vm11362, %v11248, %v8052
        %v11378 = vsel %vm11362, %v11249, %v8054
        %v11379 = vsel %vm11362, %v11250, %v8056
        %v11380 = vsel %vm11362, %v11251, %v8058
        %v11381 = vsel %vm11362, %v11252, %v8060
        %v11382 = vsel %vm11362, %v11253, %v8062
        %v11383 = vsel %vm11362, %v11254, %v8064
        %v11384 = vsel %vm11362, %v11255, %v8066
        %v11385 = vsel %vm11362, %v11256, %v8068
        %v11386 = vsel %vm11362, %v11257, %v8070
        %v11387 = vsel %vm11362, %v11258, %v8072
        %v11388 = vsel %vm11362, %v11259, %v8074
        %v11389 = vsel %vm11362, %v11260, %v8076
        %v11390 = vsel %vm11362, %v11261, %v8078
        %v11391 = vsel %vm11362, %v11262, %v8080
        %v11392 = vsel %vm11362, %v11263, %v8082
        %v11393 = vsel %vm11362, %v11264, %v8084
        %v11394 = vsel %vm11362, %v11265, %v8086
        %v11395 = vsel %vm11362, %v11266, %v8088
        %v11396 = vsel %vm11362, %v11267, %v8090
        %v11397 = vsel %vm11362, %v11268, %v8092
        %v11398 = vsel %vm11362, %v11269, %v8094
        %v11399 = vsel %vm11362, %v11270, %v8096
        %v11400 = vsel %vm11362, %v11271, %v8098
        %v11401 = vsel %vm11362, %v11272, %v8100
        %v11402 = vsel %vm11362, %v11273, %v8102
        %v11403 = vsel %vm11362, %v11274, %v8104
        %v11404 = vsel %vm11362, %v11275, %v8106
        %v11405 = vsel %vm11362, %v11276, %v8108
        %v11406 = vsel %vm11362, %v11277, %v8110
        %v11407 = vsel %vm11362, %v11278, %v8112
        %v11408 = vsel %vm11362, %v11279, %v8114
        %v11409 = vsel %vm11362, %v11280, %v8116
        %v11410 = vsel %vm11362, %v11281, %v8118
        %v11411 = vsel %vm11362, %v11282, %v8120
        %v11412 = vsel %vm11362, %v11283, %v8122
        %v11413 = vsel %vm11362, %v11284, %v8124
        %v11414 = vsel %vm11362, %v11285, %v8126
        %v11415 = vsel %vm11362, %v11286, %v8128
        %v11416 = vsel %vm11362, %v11287, %v8130
        %v11417 = vsel %vm11362, %v11288, %v8132
        %v11418 = vsel %vm11362, %v11289, %v8134
        %v11419 = vsel %vm11362, %v11290, %v8136
        %v11420 = vsel %vm11362, %v11291, %v8138
        %v11421 = vsel %vm11362, %v11292, %v8140
        %v11422 = vsel %vm11362, %v11293, %v8142
        %v11423 = vsel %vm11362, %v11294, %v8144
        %v11424 = vsel %vm11362, %v11295, %v8146
        %v11425 = vsel %vm11362, %v11296, %v8148
        %v11426 = vsel %vm11362, %v11297, %v8150
        %v11427 = vsel %vm11362, %v11298, %v8152
        %v11428 = vsel %vm11362, %v11299, %v8154
        %v11429 = vsel %vm11362, %v11300, %v8156
        %v11430 = vsel %vm11362, %v11301, %v8158
        %v11431 = vsel %vm11362, %v11302, %v8160
        %v11432 = vsel %vm11362, %v11303, %v8162
        %v11433 = vsel %vm11362, %v11304, %v8164
        %v11434 = vsel %vm11362, %v11305, %v8166
        %v11435 = vsel %vm11362, %v11306, %v8168
        %v11436 = vsel %vm11362, %v11307, %v8170
        %v11437 = vsel %vm11362, %v11308, %v8172
        %v11438 = vsel %vm11362, %v11309, %v8174
        %v11439 = vsel %vm11362, %v11310, %v8176
        %v11440 = vsel %vm11362, %v11311, %v8178
        %v11441 = vsel %vm11362, %v11312, %v8180
        %v11442 = vsel %vm11362, %v11313, %v8182
        %v11443 = vsel %vm11362, %v11314, %v8184
        %v11444 = vsel %vm11362, %v11315, %v8186
        %v11445 = vsel %vm11362, %v11316, %v8188
        %v11446 = vsel %vm11362, %v11317, %v8190
        %v11447 = vsel %vm11362, %v11318, %v8192
        %v11448 = vsel %vm11362, %v11319, %v8194
        %v11449 = vsel %vm11362, %v11320, %v8196
        %v11450 = vsel %vm11362, %v11321, %v8198
        %v11451 = vsel %vm11362, %v11322, %v8200
        %v11452 = vsel %vm11362, %v11323, %v8202
        %v11453 = vsel %vm11362, %v11324, %v8204
        %v11454 = vsel %vm11362, %v11325, %v8206
        %v11455 = vsel %vm11362, %v11326, %v8208
        %v11456 = vsel %vm11362, %v11327, %v8210
        %v11457 = vsel %vm11362, %v11328, %v8212
        %v11458 = vsel %vm11362, %v11329, %v8214
        %v11459 = vsel %vm11362, %v11330, %v8216
        %v11460 = vsel %vm11362, %v11331, %v8218
        %v11461 = vsel %vm11362, %v11332, %v8220
        %v11462 = vsel %vm11362, %v11333, %v8222
        %v11463 = vsel %vm11362, %v11334, %v8224
        %v11464 = vsel %vm11362, %v11335, %v8226
        %v11465 = vsel %vm11362, %v11336, %v8228
        %v11466 = vsel %vm11362, %v11337, %v8230
        %v11467 = vsel %vm11362, %v11338, %v8232
        %v11468 = vsel %vm11362, %v11339, %v8234
        %v11469 = vsel %vm11362, %v11340, %v8236
        %v11470 = vsel %vm11362, %v11341, %v8238
        %v11471 = vsel %vm11362, %v11342, %v8240
        %v11472 = vsel %vm11362, %v11343, %v8242
        %v11473 = vsel %vm11362, %v11344, %v8244
        %v11474 = vsel %vm11362, %v11345, %v8246
        %v11475 = vsel %vm11362, %v11346, %v8248
        %v11476 = vsel %vm11362, %v11347, %v8250
        %v11477 = vsel %vm11362, %v11348, %v8252
        %v11478 = vsel %vm11362, %v11349, %v8254
        %v11479 = vsel %vm11362, %v11350, %v8256
        %v11480 = vsel %vm11362, %v11351, %v8258
        %v11481 = vsel %vm11362, %v11352, %v8260
        %v11482 = vsel %vm11362, %v11353, %v8262
        %v11483 = vsel %vm11362, %v11354, %v8264
        %v11484 = vsel %vm11362, %v11355, %v8266
        %v11485 = vsel %vm11362, %v11356, %v8268
        %v11486 = vsel %vm11362, %v11357, %v8270
        %v11487 = vsel %vm11362, %v11358, %v8272
        %v11488 = vsel %vm11362, %v11359, %v8274
        %v11489 = vsel %vm11362, %v11360, %v8276
        %v11490 = vsel %vm11362, %v11361, %v8278
        %vm11491 = vcmask 424960
        %v11492 = vsel %vm11491, %v11363, %v8536
        %v11493 = vsel %vm11491, %v11364, %v8538
        %v11494 = vsel %vm11491, %v11365, %v8540
        %v11495 = vsel %vm11491, %v11366, %v8542
        %v11496 = vsel %vm11491, %v11367, %v8544
        %v11497 = vsel %vm11491, %v11368, %v8546
        %v11498 = vsel %vm11491, %v11369, %v8548
        %v11499 = vsel %vm11491, %v11370, %v8550
        %v11500 = vsel %vm11491, %v11371, %v8552
        %v11501 = vsel %vm11491, %v11372, %v8554
        %v11502 = vsel %vm11491, %v11373, %v8556
        %v11503 = vsel %vm11491, %v11374, %v8558
        %v11504 = vsel %vm11491, %v11375, %v8560
        %v11505 = vsel %vm11491, %v11376, %v8562
        %v11506 = vsel %vm11491, %v11377, %v8564
        %v11507 = vsel %vm11491, %v11378, %v8566
        %v11508 = vsel %vm11491, %v11379, %v8568
        %v11509 = vsel %vm11491, %v11380, %v8570
        %v11510 = vsel %vm11491, %v11381, %v8572
        %v11511 = vsel %vm11491, %v11382, %v8574
        %v11512 = vsel %vm11491, %v11383, %v8576
        %v11513 = vsel %vm11491, %v11384, %v8578
        %v11514 = vsel %vm11491, %v11385, %v8580
        %v11515 = vsel %vm11491, %v11386, %v8582
        %v11516 = vsel %vm11491, %v11387, %v8584
        %v11517 = vsel %vm11491, %v11388, %v8586
        %v11518 = vsel %vm11491, %v11389, %v8588
        %v11519 = vsel %vm11491, %v11390, %v8590
        %v11520 = vsel %vm11491, %v11391, %v8592
        %v11521 = vsel %vm11491, %v11392, %v8594
        %v11522 = vsel %vm11491, %v11393, %v8596
        %v11523 = vsel %vm11491, %v11394, %v8598
        %v11524 = vsel %vm11491, %v11395, %v8600
        %v11525 = vsel %vm11491, %v11396, %v8602
        %v11526 = vsel %vm11491, %v11397, %v8604
        %v11527 = vsel %vm11491, %v11398, %v8606
        %v11528 = vsel %vm11491, %v11399, %v8608
        %v11529 = vsel %vm11491, %v11400, %v8610
        %v11530 = vsel %vm11491, %v11401, %v8612
        %v11531 = vsel %vm11491, %v11402, %v8614
        %v11532 = vsel %vm11491, %v11403, %v8616
        %v11533 = vsel %vm11491, %v11404, %v8618
        %v11534 = vsel %vm11491, %v11405, %v8620
        %v11535 = vsel %vm11491, %v11406, %v8622
        %v11536 = vsel %vm11491, %v11407, %v8624
        %v11537 = vsel %vm11491, %v11408, %v8626
        %v11538 = vsel %vm11491, %v11409, %v8628
        %v11539 = vsel %vm11491, %v11410, %v8630
        %v11540 = vsel %vm11491, %v11411, %v8632
        %v11541 = vsel %vm11491, %v11412, %v8634
        %v11542 = vsel %vm11491, %v11413, %v8636
        %v11543 = vsel %vm11491, %v11414, %v8638
        %v11544 = vsel %vm11491, %v11415, %v8640
        %v11545 = vsel %vm11491, %v11416, %v8642
        %v11546 = vsel %vm11491, %v11417, %v8644
        %v11547 = vsel %vm11491, %v11418, %v8646
        %v11548 = vsel %vm11491, %v11419, %v8648
        %v11549 = vsel %vm11491, %v11420, %v8650
        %v11550 = vsel %vm11491, %v11421, %v8652
        %v11551 = vsel %vm11491, %v11422, %v8654
        %v11552 = vsel %vm11491, %v11423, %v8656
        %v11553 = vsel %vm11491, %v11424, %v8658
        %v11554 = vsel %vm11491, %v11425, %v8660
        %v11555 = vsel %vm11491, %v11426, %v8662
        %v11556 = vsel %vm11491, %v11427, %v8664
        %v11557 = vsel %vm11491, %v11428, %v8666
        %v11558 = vsel %vm11491, %v11429, %v8668
        %v11559 = vsel %vm11491, %v11430, %v8670
        %v11560 = vsel %vm11491, %v11431, %v8672
        %v11561 = vsel %vm11491, %v11432, %v8674
        %v11562 = vsel %vm11491, %v11433, %v8676
        %v11563 = vsel %vm11491, %v11434, %v8678
        %v11564 = vsel %vm11491, %v11435, %v8680
        %v11565 = vsel %vm11491, %v11436, %v8682
        %v11566 = vsel %vm11491, %v11437, %v8684
        %v11567 = vsel %vm11491, %v11438, %v8686
        %v11568 = vsel %vm11491, %v11439, %v8688
        %v11569 = vsel %vm11491, %v11440, %v8690
        %v11570 = vsel %vm11491, %v11441, %v8692
        %v11571 = vsel %vm11491, %v11442, %v8694
        %v11572 = vsel %vm11491, %v11443, %v8696
        %v11573 = vsel %vm11491, %v11444, %v8698
        %v11574 = vsel %vm11491, %v11445, %v8700
        %v11575 = vsel %vm11491, %v11446, %v8702
        %v11576 = vsel %vm11491, %v11447, %v8704
        %v11577 = vsel %vm11491, %v11448, %v8706
        %v11578 = vsel %vm11491, %v11449, %v8708
        %v11579 = vsel %vm11491, %v11450, %v8710
        %v11580 = vsel %vm11491, %v11451, %v8712
        %v11581 = vsel %vm11491, %v11452, %v8714
        %v11582 = vsel %vm11491, %v11453, %v8716
        %v11583 = vsel %vm11491, %v11454, %v8718
        %v11584 = vsel %vm11491, %v11455, %v8720
        %v11585 = vsel %vm11491, %v11456, %v8722
        %v11586 = vsel %vm11491, %v11457, %v8724
        %v11587 = vsel %vm11491, %v11458, %v8726
        %v11588 = vsel %vm11491, %v11459, %v8728
        %v11589 = vsel %vm11491, %v11460, %v8730
        %v11590 = vsel %vm11491, %v11461, %v8732
        %v11591 = vsel %vm11491, %v11462, %v8734
        %v11592 = vsel %vm11491, %v11463, %v8736
        %v11593 = vsel %vm11491, %v11464, %v8738
        %v11594 = vsel %vm11491, %v11465, %v8740
        %v11595 = vsel %vm11491, %v11466, %v8742
        %v11596 = vsel %vm11491, %v11467, %v8744
        %v11597 = vsel %vm11491, %v11468, %v8746
        %v11598 = vsel %vm11491, %v11469, %v8748
        %v11599 = vsel %vm11491, %v11470, %v8750
        %v11600 = vsel %vm11491, %v11471, %v8752
        %v11601 = vsel %vm11491, %v11472, %v8754
        %v11602 = vsel %vm11491, %v11473, %v8756
        %v11603 = vsel %vm11491, %v11474, %v8758
        %v11604 = vsel %vm11491, %v11475, %v8760
        %v11605 = vsel %vm11491, %v11476, %v8762
        %v11606 = vsel %vm11491, %v11477, %v8764
        %v11607 = vsel %vm11491, %v11478, %v8766
        %v11608 = vsel %vm11491, %v11479, %v8768
        %v11609 = vsel %vm11491, %v11480, %v8770
        %v11610 = vsel %vm11491, %v11481, %v8772
        %v11611 = vsel %vm11491, %v11482, %v8774
        %v11612 = vsel %vm11491, %v11483, %v8776
        %v11613 = vsel %vm11491, %v11484, %v8778
        %v11614 = vsel %vm11491, %v11485, %v8780
        %v11615 = vsel %vm11491, %v11486, %v8782
        %v11616 = vsel %vm11491, %v11487, %v8784
        %v11617 = vsel %vm11491, %v11488, %v8786
        %v11618 = vsel %vm11491, %v11489, %v8788
        %v11619 = vsel %vm11491, %v11490, %v8790
        %vm11620 = vcmask 457728
        %v11621 = vsel %vm11620, %v11492, %v9048
        %v11622 = vsel %vm11620, %v11493, %v9050
        %v11623 = vsel %vm11620, %v11494, %v9052
        %v11624 = vsel %vm11620, %v11495, %v9054
        %v11625 = vsel %vm11620, %v11496, %v9056
        %v11626 = vsel %vm11620, %v11497, %v9058
        %v11627 = vsel %vm11620, %v11498, %v9060
        %v11628 = vsel %vm11620, %v11499, %v9062
        %v11629 = vsel %vm11620, %v11500, %v9064
        %v11630 = vsel %vm11620, %v11501, %v9066
        %v11631 = vsel %vm11620, %v11502, %v9068
        %v11632 = vsel %vm11620, %v11503, %v9070
        %v11633 = vsel %vm11620, %v11504, %v9072
        %v11634 = vsel %vm11620, %v11505, %v9074
        %v11635 = vsel %vm11620, %v11506, %v9076
        %v11636 = vsel %vm11620, %v11507, %v9078
        %v11637 = vsel %vm11620, %v11508, %v9080
        %v11638 = vsel %vm11620, %v11509, %v9082
        %v11639 = vsel %vm11620, %v11510, %v9084
        %v11640 = vsel %vm11620, %v11511, %v9086
        %v11641 = vsel %vm11620, %v11512, %v9088
        %v11642 = vsel %vm11620, %v11513, %v9090
        %v11643 = vsel %vm11620, %v11514, %v9092
        %v11644 = vsel %vm11620, %v11515, %v9094
        %v11645 = vsel %vm11620, %v11516, %v9096
        %v11646 = vsel %vm11620, %v11517, %v9098
        %v11647 = vsel %vm11620, %v11518, %v9100
        %v11648 = vsel %vm11620, %v11519, %v9102
        %v11649 = vsel %vm11620, %v11520, %v9104
        %v11650 = vsel %vm11620, %v11521, %v9106
        %v11651 = vsel %vm11620, %v11522, %v9108
        %v11652 = vsel %vm11620, %v11523, %v9110
        %v11653 = vsel %vm11620, %v11524, %v9112
        %v11654 = vsel %vm11620, %v11525, %v9114
        %v11655 = vsel %vm11620, %v11526, %v9116
        %v11656 = vsel %vm11620, %v11527, %v9118
        %v11657 = vsel %vm11620, %v11528, %v9120
        %v11658 = vsel %vm11620, %v11529, %v9122
        %v11659 = vsel %vm11620, %v11530, %v9124
        %v11660 = vsel %vm11620, %v11531, %v9126
        %v11661 = vsel %vm11620, %v11532, %v9128
        %v11662 = vsel %vm11620, %v11533, %v9130
        %v11663 = vsel %vm11620, %v11534, %v9132
        %v11664 = vsel %vm11620, %v11535, %v9134
        %v11665 = vsel %vm11620, %v11536, %v9136
        %v11666 = vsel %vm11620, %v11537, %v9138
        %v11667 = vsel %vm11620, %v11538, %v9140
        %v11668 = vsel %vm11620, %v11539, %v9142
        %v11669 = vsel %vm11620, %v11540, %v9144
        %v11670 = vsel %vm11620, %v11541, %v9146
        %v11671 = vsel %vm11620, %v11542, %v9148
        %v11672 = vsel %vm11620, %v11543, %v9150
        %v11673 = vsel %vm11620, %v11544, %v9152
        %v11674 = vsel %vm11620, %v11545, %v9154
        %v11675 = vsel %vm11620, %v11546, %v9156
        %v11676 = vsel %vm11620, %v11547, %v9158
        %v11677 = vsel %vm11620, %v11548, %v9160
        %v11678 = vsel %vm11620, %v11549, %v9162
        %v11679 = vsel %vm11620, %v11550, %v9164
        %v11680 = vsel %vm11620, %v11551, %v9166
        %v11681 = vsel %vm11620, %v11552, %v9168
        %v11682 = vsel %vm11620, %v11553, %v9170
        %v11683 = vsel %vm11620, %v11554, %v9172
        %v11684 = vsel %vm11620, %v11555, %v9174
        %v11685 = vsel %vm11620, %v11556, %v9176
        %v11686 = vsel %vm11620, %v11557, %v9178
        %v11687 = vsel %vm11620, %v11558, %v9180
        %v11688 = vsel %vm11620, %v11559, %v9182
        %v11689 = vsel %vm11620, %v11560, %v9184
        %v11690 = vsel %vm11620, %v11561, %v9186
        %v11691 = vsel %vm11620, %v11562, %v9188
        %v11692 = vsel %vm11620, %v11563, %v9190
        %v11693 = vsel %vm11620, %v11564, %v9192
        %v11694 = vsel %vm11620, %v11565, %v9194
        %v11695 = vsel %vm11620, %v11566, %v9196
        %v11696 = vsel %vm11620, %v11567, %v9198
        %v11697 = vsel %vm11620, %v11568, %v9200
        %v11698 = vsel %vm11620, %v11569, %v9202
        %v11699 = vsel %vm11620, %v11570, %v9204
        %v11700 = vsel %vm11620, %v11571, %v9206
        %v11701 = vsel %vm11620, %v11572, %v9208
        %v11702 = vsel %vm11620, %v11573, %v9210
        %v11703 = vsel %vm11620, %v11574, %v9212
        %v11704 = vsel %vm11620, %v11575, %v9214
        %v11705 = vsel %vm11620, %v11576, %v9216
        %v11706 = vsel %vm11620, %v11577, %v9218
        %v11707 = vsel %vm11620, %v11578, %v9220
        %v11708 = vsel %vm11620, %v11579, %v9222
        %v11709 = vsel %vm11620, %v11580, %v9224
        %v11710 = vsel %vm11620, %v11581, %v9226
        %v11711 = vsel %vm11620, %v11582, %v9228
        %v11712 = vsel %vm11620, %v11583, %v9230
        %v11713 = vsel %vm11620, %v11584, %v9232
        %v11714 = vsel %vm11620, %v11585, %v9234
        %v11715 = vsel %vm11620, %v11586, %v9236
        %v11716 = vsel %vm11620, %v11587, %v9238
        %v11717 = vsel %vm11620, %v11588, %v9240
        %v11718 = vsel %vm11620, %v11589, %v9242
        %v11719 = vsel %vm11620, %v11590, %v9244
        %v11720 = vsel %vm11620, %v11591, %v9246
        %v11721 = vsel %vm11620, %v11592, %v9248
        %v11722 = vsel %vm11620, %v11593, %v9250
        %v11723 = vsel %vm11620, %v11594, %v9252
        %v11724 = vsel %vm11620, %v11595, %v9254
        %v11725 = vsel %vm11620, %v11596, %v9256
        %v11726 = vsel %vm11620, %v11597, %v9258
        %v11727 = vsel %vm11620, %v11598, %v9260
        %v11728 = vsel %vm11620, %v11599, %v9262
        %v11729 = vsel %vm11620, %v11600, %v9264
        %v11730 = vsel %vm11620, %v11601, %v9266
        %v11731 = vsel %vm11620, %v11602, %v9268
        %v11732 = vsel %vm11620, %v11603, %v9270
        %v11733 = vsel %vm11620, %v11604, %v9272
        %v11734 = vsel %vm11620, %v11605, %v9274
        %v11735 = vsel %vm11620, %v11606, %v9276
        %v11736 = vsel %vm11620, %v11607, %v9278
        %v11737 = vsel %vm11620, %v11608, %v9280
        %v11738 = vsel %vm11620, %v11609, %v9282
        %v11739 = vsel %vm11620, %v11610, %v9284
        %v11740 = vsel %vm11620, %v11611, %v9286
        %v11741 = vsel %vm11620, %v11612, %v9288
        %v11742 = vsel %vm11620, %v11613, %v9290
        %v11743 = vsel %vm11620, %v11614, %v9292
        %v11744 = vsel %vm11620, %v11615, %v9294
        %v11745 = vsel %vm11620, %v11616, %v9296
        %v11746 = vsel %vm11620, %v11617, %v9298
        %v11747 = vsel %vm11620, %v11618, %v9300
        %v11748 = vsel %vm11620, %v11619, %v9302
        %vm11749 = vcmask 490496
        %v11750 = vsel %vm11749, %v11621, %v9560
        %v11751 = vsel %vm11749, %v11622, %v9562
        %v11752 = vsel %vm11749, %v11623, %v9564
        %v11753 = vsel %vm11749, %v11624, %v9566
        %v11754 = vsel %vm11749, %v11625, %v9568
        %v11755 = vsel %vm11749, %v11626, %v9570
        %v11756 = vsel %vm11749, %v11627, %v9572
        %v11757 = vsel %vm11749, %v11628, %v9574
        %v11758 = vsel %vm11749, %v11629, %v9576
        %v11759 = vsel %vm11749, %v11630, %v9578
        %v11760 = vsel %vm11749, %v11631, %v9580
        %v11761 = vsel %vm11749, %v11632, %v9582
        %v11762 = vsel %vm11749, %v11633, %v9584
        %v11763 = vsel %vm11749, %v11634, %v9586
        %v11764 = vsel %vm11749, %v11635, %v9588
        %v11765 = vsel %vm11749, %v11636, %v9590
        %v11766 = vsel %vm11749, %v11637, %v9592
        %v11767 = vsel %vm11749, %v11638, %v9594
        %v11768 = vsel %vm11749, %v11639, %v9596
        %v11769 = vsel %vm11749, %v11640, %v9598
        %v11770 = vsel %vm11749, %v11641, %v9600
        %v11771 = vsel %vm11749, %v11642, %v9602
        %v11772 = vsel %vm11749, %v11643, %v9604
        %v11773 = vsel %vm11749, %v11644, %v9606
        %v11774 = vsel %vm11749, %v11645, %v9608
        %v11775 = vsel %vm11749, %v11646, %v9610
        %v11776 = vsel %vm11749, %v11647, %v9612
        %v11777 = vsel %vm11749, %v11648, %v9614
        %v11778 = vsel %vm11749, %v11649, %v9616
        %v11779 = vsel %vm11749, %v11650, %v9618
        %v11780 = vsel %vm11749, %v11651, %v9620
        %v11781 = vsel %vm11749, %v11652, %v9622
        %v11782 = vsel %vm11749, %v11653, %v9624
        %v11783 = vsel %vm11749, %v11654, %v9626
        %v11784 = vsel %vm11749, %v11655, %v9628
        %v11785 = vsel %vm11749, %v11656, %v9630
        %v11786 = vsel %vm11749, %v11657, %v9632
        %v11787 = vsel %vm11749, %v11658, %v9634
        %v11788 = vsel %vm11749, %v11659, %v9636
        %v11789 = vsel %vm11749, %v11660, %v9638
        %v11790 = vsel %vm11749, %v11661, %v9640
        %v11791 = vsel %vm11749, %v11662, %v9642
        %v11792 = vsel %vm11749, %v11663, %v9644
        %v11793 = vsel %vm11749, %v11664, %v9646
        %v11794 = vsel %vm11749, %v11665, %v9648
        %v11795 = vsel %vm11749, %v11666, %v9650
        %v11796 = vsel %vm11749, %v11667, %v9652
        %v11797 = vsel %vm11749, %v11668, %v9654
        %v11798 = vsel %vm11749, %v11669, %v9656
        %v11799 = vsel %vm11749, %v11670, %v9658
        %v11800 = vsel %vm11749, %v11671, %v9660
        %v11801 = vsel %vm11749, %v11672, %v9662
        %v11802 = vsel %vm11749, %v11673, %v9664
        %v11803 = vsel %vm11749, %v11674, %v9666
        %v11804 = vsel %vm11749, %v11675, %v9668
        %v11805 = vsel %vm11749, %v11676, %v9670
        %v11806 = vsel %vm11749, %v11677, %v9672
        %v11807 = vsel %vm11749, %v11678, %v9674
        %v11808 = vsel %vm11749, %v11679, %v9676
        %v11809 = vsel %vm11749, %v11680, %v9678
        %v11810 = vsel %vm11749, %v11681, %v9680
        %v11811 = vsel %vm11749, %v11682, %v9682
        %v11812 = vsel %vm11749, %v11683, %v9684
        %v11813 = vsel %vm11749, %v11684, %v9686
        %v11814 = vsel %vm11749, %v11685, %v9688
        %v11815 = vsel %vm11749, %v11686, %v9690
        %v11816 = vsel %vm11749, %v11687, %v9692
        %v11817 = vsel %vm11749, %v11688, %v9694
        %v11818 = vsel %vm11749, %v11689, %v9696
        %v11819 = vsel %vm11749, %v11690, %v9698
        %v11820 = vsel %vm11749, %v11691, %v9700
        %v11821 = vsel %vm11749, %v11692, %v9702
        %v11822 = vsel %vm11749, %v11693, %v9704
        %v11823 = vsel %vm11749, %v11694, %v9706
        %v11824 = vsel %vm11749, %v11695, %v9708
        %v11825 = vsel %vm11749, %v11696, %v9710
        %v11826 = vsel %vm11749, %v11697, %v9712
        %v11827 = vsel %vm11749, %v11698, %v9714
        %v11828 = vsel %vm11749, %v11699, %v9716
        %v11829 = vsel %vm11749, %v11700, %v9718
        %v11830 = vsel %vm11749, %v11701, %v9720
        %v11831 = vsel %vm11749, %v11702, %v9722
        %v11832 = vsel %vm11749, %v11703, %v9724
        %v11833 = vsel %vm11749, %v11704, %v9726
        %v11834 = vsel %vm11749, %v11705, %v9728
        %v11835 = vsel %vm11749, %v11706, %v9730
        %v11836 = vsel %vm11749, %v11707, %v9732
        %v11837 = vsel %vm11749, %v11708, %v9734
        %v11838 = vsel %vm11749, %v11709, %v9736
        %v11839 = vsel %vm11749, %v11710, %v9738
        %v11840 = vsel %vm11749, %v11711, %v9740
        %v11841 = vsel %vm11749, %v11712, %v9742
        %v11842 = vsel %vm11749, %v11713, %v9744
        %v11843 = vsel %vm11749, %v11714, %v9746
        %v11844 = vsel %vm11749, %v11715, %v9748
        %v11845 = vsel %vm11749, %v11716, %v9750
        %v11846 = vsel %vm11749, %v11717, %v9752
        %v11847 = vsel %vm11749, %v11718, %v9754
        %v11848 = vsel %vm11749, %v11719, %v9756
        %v11849 = vsel %vm11749, %v11720, %v9758
        %v11850 = vsel %vm11749, %v11721, %v9760
        %v11851 = vsel %vm11749, %v11722, %v9762
        %v11852 = vsel %vm11749, %v11723, %v9764
        %v11853 = vsel %vm11749, %v11724, %v9766
        %v11854 = vsel %vm11749, %v11725, %v9768
        %v11855 = vsel %vm11749, %v11726, %v9770
        %v11856 = vsel %vm11749, %v11727, %v9772
        %v11857 = vsel %vm11749, %v11728, %v9774
        %v11858 = vsel %vm11749, %v11729, %v9776
        %v11859 = vsel %vm11749, %v11730, %v9778
        %v11860 = vsel %vm11749, %v11731, %v9780
        %v11861 = vsel %vm11749, %v11732, %v9782
        %v11862 = vsel %vm11749, %v11733, %v9784
        %v11863 = vsel %vm11749, %v11734, %v9786
        %v11864 = vsel %vm11749, %v11735, %v9788
        %v11865 = vsel %vm11749, %v11736, %v9790
        %v11866 = vsel %vm11749, %v11737, %v9792
        %v11867 = vsel %vm11749, %v11738, %v9794
        %v11868 = vsel %vm11749, %v11739, %v9796
        %v11869 = vsel %vm11749, %v11740, %v9798
        %v11870 = vsel %vm11749, %v11741, %v9800
        %v11871 = vsel %vm11749, %v11742, %v9802
        %v11872 = vsel %vm11749, %v11743, %v9804
        %v11873 = vsel %vm11749, %v11744, %v9806
        %v11874 = vsel %vm11749, %v11745, %v9808
        %v11875 = vsel %vm11749, %v11746, %v9810
        %v11876 = vsel %vm11749, %v11747, %v9812
        %v11877 = vsel %vm11749, %v11748, %v9814
        %v11878 = vld [vmem:[%s1] sm:$0xff]
        %v11879 = vld [vmem:[%s1 + $0x8] sm:$0xff]
        %v11880 = vld [vmem:[%s1 + $0x10] sm:$0xff]
        %v11881 = vld [vmem:[%s1 + $0x18] sm:$0xff]
        %v11882 = vld [vmem:[%s1 + $0x20] sm:$0xff]
        %v11883 = vld [vmem:[%s1 + $0x28] sm:$0xff]
        %v11884 = vld [vmem:[%s1 + $0x30] sm:$0xff]
        %v11885 = vld [vmem:[%s1 + $0x38] sm:$0xff]
        %vm11886 = vcmask 523264
        %v11888 = vsel %vm11886, %v11750, 0
        %v11891 = vsel %vm11886, %v11751, 0
        %v11894 = vsel %vm11886, %v11752, 0
        %v11897 = vsel %vm11886, %v11753, 0
        %v11900 = vsel %vm11886, %v11754, 0
        %v11903 = vsel %vm11886, %v11755, 0
        %v11906 = vsel %vm11886, %v11756, 0
        %v11909 = vsel %vm11886, %v11757, 0
        %v11912 = vsel %vm11886, %v11758, 0
        %v11915 = vsel %vm11886, %v11759, 0
        %v11918 = vsel %vm11886, %v11760, 0
        %v11921 = vsel %vm11886, %v11761, 0
        %v11924 = vsel %vm11886, %v11762, 0
        %v11927 = vsel %vm11886, %v11763, 0
        %v11930 = vsel %vm11886, %v11764, 0
        %v11933 = vsel %vm11886, %v11765, 0
        %v11936 = vsel %vm11886, %v11766, 0
        %v11939 = vsel %vm11886, %v11767, 0
        %v11942 = vsel %vm11886, %v11768, 0
        %v11945 = vsel %vm11886, %v11769, 0
        %v11948 = vsel %vm11886, %v11770, 0
        %v11951 = vsel %vm11886, %v11771, 0
        %v11954 = vsel %vm11886, %v11772, 0
        %v11957 = vsel %vm11886, %v11773, 0
        %v11960 = vsel %vm11886, %v11774, 0
        %v11963 = vsel %vm11886, %v11775, 0
        %v11966 = vsel %vm11886, %v11776, 0
        %v11969 = vsel %vm11886, %v11777, 0
        %v11972 = vsel %vm11886, %v11778, 0
        %v11975 = vsel %vm11886, %v11779, 0
        %v11978 = vsel %vm11886, %v11780, 0
        %v11981 = vsel %vm11886, %v11781, 0
        %v11984 = vsel %vm11886, %v11782, 0
        %v11987 = vsel %vm11886, %v11783, 0
        %v11990 = vsel %vm11886, %v11784, 0
        %v11993 = vsel %vm11886, %v11785, 0
        %v11996 = vsel %vm11886, %v11786, 0
        %v11999 = vsel %vm11886, %v11787, 0
        %v12002 = vsel %vm11886, %v11788, 0
        %v12005 = vsel %vm11886, %v11789, 0
        %v12008 = vsel %vm11886, %v11790, 0
        %v12011 = vsel %vm11886, %v11791, 0
        %v12014 = vsel %vm11886, %v11792, 0
        %v12017 = vsel %vm11886, %v11793, 0
        %v12020 = vsel %vm11886, %v11794, 0
        %v12023 = vsel %vm11886, %v11795, 0
        %v12026 = vsel %vm11886, %v11796, 0
        %v12029 = vsel %vm11886, %v11797, 0
        %v12032 = vsel %vm11886, %v11798, 0
        %v12035 = vsel %vm11886, %v11799, 0
        %v12038 = vsel %vm11886, %v11800, 0
        %v12041 = vsel %vm11886, %v11801, 0
        %v12044 = vsel %vm11886, %v11802, 0
        %v12047 = vsel %vm11886, %v11803, 0
        %v12050 = vsel %vm11886, %v11804, 0
        %v12053 = vsel %vm11886, %v11805, 0
        %v12056 = vsel %vm11886, %v11806, 0
        %v12059 = vsel %vm11886, %v11807, 0
        %v12062 = vsel %vm11886, %v11808, 0
        %v12065 = vsel %vm11886, %v11809, 0
        %v12068 = vsel %vm11886, %v11810, 0
        %v12071 = vsel %vm11886, %v11811, 0
        %v12074 = vsel %vm11886, %v11812, 0
        %v12077 = vsel %vm11886, %v11813, 0
        %v12080 = vsel %vm11886, %v11814, 0
        %v12083 = vsel %vm11886, %v11815, 0
        %v12086 = vsel %vm11886, %v11816, 0
        %v12089 = vsel %vm11886, %v11817, 0
        %v12092 = vsel %vm11886, %v11818, 0
        %v12095 = vsel %vm11886, %v11819, 0
        %v12098 = vsel %vm11886, %v11820, 0
        %v12101 = vsel %vm11886, %v11821, 0
        %v12104 = vsel %vm11886, %v11822, 0
        %v12107 = vsel %vm11886, %v11823, 0
        %v12110 = vsel %vm11886, %v11824, 0
        %v12113 = vsel %vm11886, %v11825, 0
        %v12116 = vsel %vm11886, %v11826, 0
        %v12119 = vsel %vm11886, %v11827, 0
        %v12122 = vsel %vm11886, %v11828, 0
        %v12125 = vsel %vm11886, %v11829, 0
        %v12128 = vsel %vm11886, %v11830, 0
        %v12131 = vsel %vm11886, %v11831, 0
        %v12134 = vsel %vm11886, %v11832, 0
        %v12137 = vsel %vm11886, %v11833, 0
        %v12140 = vsel %vm11886, %v11834, 0
        %v12143 = vsel %vm11886, %v11835, 0
        %v12146 = vsel %vm11886, %v11836, 0
        %v12149 = vsel %vm11886, %v11837, 0
        %v12152 = vsel %vm11886, %v11838, 0
        %v12155 = vsel %vm11886, %v11839, 0
        %v12158 = vsel %vm11886, %v11840, 0
        %v12161 = vsel %vm11886, %v11841, 0
        %v12164 = vsel %vm11886, %v11842, 0
        %v12167 = vsel %vm11886, %v11843, 0
        %v12170 = vsel %vm11886, %v11844, 0
        %v12173 = vsel %vm11886, %v11845, 0
        %v12176 = vsel %vm11886, %v11846, 0
        %v12179 = vsel %vm11886, %v11847, 0
        %v12182 = vsel %vm11886, %v11848, 0
        %v12185 = vsel %vm11886, %v11849, 0
        %v12188 = vsel %vm11886, %v11850, 0
        %v12191 = vsel %vm11886, %v11851, 0
        %v12194 = vsel %vm11886, %v11852, 0
        %v12197 = vsel %vm11886, %v11853, 0
        %v12200 = vsel %vm11886, %v11854, 0
        %v12203 = vsel %vm11886, %v11855, 0
        %v12206 = vsel %vm11886, %v11856, 0
        %v12209 = vsel %vm11886, %v11857, 0
        %v12212 = vsel %vm11886, %v11858, 0
        %v12215 = vsel %vm11886, %v11859, 0
        %v12218 = vsel %vm11886, %v11860, 0
        %v12221 = vsel %vm11886, %v11861, 0
        %v12224 = vsel %vm11886, %v11862, 0
        %v12227 = vsel %vm11886, %v11863, 0
        %v12230 = vsel %vm11886, %v11864, 0
        %v12233 = vsel %vm11886, %v11865, 0
        %v12236 = vsel %vm11886, %v11866, 0
        %v12239 = vsel %vm11886, %v11867, 0
        %v12242 = vsel %vm11886, %v11868, 0
        %v12245 = vsel %vm11886, %v11869, 0
        %v12248 = vsel %vm11886, %v11870, 0
        %v12251 = vsel %vm11886, %v11871, 0
        %v12254 = vsel %vm11886, %v11872, 0
        %v12257 = vsel %vm11886, %v11873, 0
        %v12260 = vsel %vm11886, %v11874, 0
        %v12263 = vsel %vm11886, %v11875, 0
        %v12266 = vsel %vm11886, %v11876, 0
        %v12269 = vsel %vm11886, %v11877, 0
        %12271 = vmatprep.subr.mxu0 0.0
        %12272 = vmatpush1.msra.mxu0 %v11878
        %12273 = vmatprep.subr.mxu0 0.0
        %12274 = vmatpush1.msra.mxu0 %v11879
        %12275 = vmatprep.subr.mxu0 0.0
        %12276 = vmatpush1.msra.mxu0 %v11880
        %12277 = vmatprep.subr.mxu0 0.0
        %12278 = vmatpush1.msra.mxu0 %v11881
        %12279 = vmatprep.subr.mxu0 0.0
        %12280 = vmatpush1.msra.mxu0 %v11882
        %12281 = vmatprep.subr.mxu0 0.0
        %12282 = vmatpush1.msra.mxu0 %v11883
        %12283 = vmatprep.subr.mxu0 0.0
        %12284 = vmatpush1.msra.mxu0 %v11884
        %12285 = vmatprep.subr.mxu0 0.0
        %12286 = vmatpush1.msra.mxu0 %v11885
        %12287 = vmatprep.subr.mxu0 0.0
        %12288 = vmatpush1.msra.mxu0 0.0
        %12289 = vmatprep.subr.mxu0 0.0
        %12290 = vmatpush1.msra.mxu0 0.0
        %12291 = vmatprep.subr.mxu0 0.0
        %12292 = vmatpush1.msra.mxu0 0.0
        %12293 = vmatprep.subr.mxu0 0.0
        %12294 = vmatpush1.msra.mxu0 0.0
        %12295 = vmatprep.subr.mxu0 0.0
        %12296 = vmatpush1.msra.mxu0 0.0
        %12297 = vmatprep.subr.mxu0 0.0
        %12298 = vmatpush1.msra.mxu0 0.0
        %12299 = vmatprep.subr.mxu0 0.0
        %12300 = vmatpush1.msra.mxu0 0.0
        %12301 = vmatprep.subr.mxu0 0.0
        %12302 = vmatpush1.msra.mxu0 0.0
        %12303 = vmatprep.subr.mxu0 0.0
        %12304 = vmatpush1.msra.mxu0 0.0
        %12305 = vmatprep.subr.mxu0 0.0
        %12306 = vmatpush1.msra.mxu0 0.0
        %12307 = vmatprep.subr.mxu0 0.0
        %12308 = vmatpush1.msra.mxu0 0.0
        %12309 = vmatprep.subr.mxu0 0.0
        %12310 = vmatpush1.msra.mxu0 0.0
        %12311 = vmatprep.subr.mxu0 0.0
        %12312 = vmatpush1.msra.mxu0 0.0
        %12313 = vmatprep.subr.mxu0 0.0
        %12314 = vmatpush1.msra.mxu0 0.0
        %12315 = vmatprep.subr.mxu0 0.0
        %12316 = vmatpush1.msra.mxu0 0.0
        %12317 = vmatprep.subr.mxu0 0.0
        %12318 = vmatpush1.msra.mxu0 0.0
        %12319 = vmatprep.subr.mxu0 0.0
        %12320 = vmatpush1.msra.mxu0 0.0
        %12321 = vmatprep.subr.mxu0 0.0
        %12322 = vmatpush1.msra.mxu0 0.0
        %12323 = vmatprep.subr.mxu0 0.0
        %12324 = vmatpush1.msra.mxu0 0.0
        %12325 = vmatprep.subr.mxu0 0.0
        %12326 = vmatpush1.msra.mxu0 0.0
        %12327 = vmatprep.subr.mxu0 0.0
        %12328 = vmatpush1.msra.mxu0 0.0
        %12329 = vmatprep.subr.mxu0 0.0
        %12330 = vmatpush1.msra.mxu0 0.0
        %12331 = vmatprep.subr.mxu0 0.0
        %12332 = vmatpush1.msra.mxu0 0.0
        %12333 = vmatprep.subr.mxu0 0.0
        %12334 = vmatpush1.msra.mxu0 0.0
        %12335 = vmatprep.mubr.f32.mxu0 0.0
        %12336 = vmatmul.mubr.f32.gmra.mrb[0].mxu0 %v11888
        %v12337 = vpop.f32.mrb[0].mxu0
        %v12338 = vadd.f32 0.0, %v12337
        %v12339 = vpop.f32.mrb[0].mxu0
        %12340 = vmatprep.mubr.f32.mxu0 0.0
        %12341 = vmatmul.mubr.f32.gmra.mrb[0].mxu0 %v11891
        %v12342 = vpop.f32.mrb[0].mxu0
        %v12343 = vadd.f32 0.0, %v12342
        %v12344 = vpop.f32.mrb[0].mxu0
        %12345 = vmatprep.mubr.f32.mxu0 0.0
        %12346 = vmatmul.mubr.f32.gmra.mrb[0].mxu0 %v11894
        %v12347 = vpop.f32.mrb[0].mxu0
        %v12348 = vadd.f32 0.0, %v12347
        %v12349 = vpop.f32.mrb[0].mxu0
        %12350 = vmatprep.mubr.f32.mxu0 0.0
        %12351 = vmatmul.mubr.f32.gmra.mrb[0].mxu0 %v11897
        %v12352 = vpop.f32.mrb[0].mxu0
        %v12353 = vadd.f32 0.0, %v12352
        %v12354 = vpop.f32.mrb[0].mxu0
        %12355 = vmatprep.mubr.f32.mxu0 0.0
        %12356 = vmatmul.mubr.f32.gmra.mrb[0].mxu0 %v11900
        %v12357 = vpop.f32.mrb[0].mxu0
        %v12358 = vadd.f32 0.0, %v12357
        %v12359 = vpop.f32.mrb[0].mxu0
        %12360 = vmatprep.mubr.f32.mxu0 0.0
        %12361 = vmatmul.mubr.f32.gmra.mrb[0].mxu0 %v11903
        %v12362 = vpop.f32.mrb[0].mxu0
        %v12363 = vadd.f32 0.0, %v12362
        %v12364 = vpop.f32.mrb[0].mxu0
        %12365 = vmatprep.mubr.f32.mxu0 0.0
        %12366 = vmatmul.mubr.f32.gmra.mrb[0].mxu0 %v11906
        %v12367 = vpop.f32.mrb[0].mxu0
        %v12368 = vadd.f32 0.0, %v12367
        %v12369 = vpop.f32.mrb[0].mxu0
        %12370 = vmatprep.mubr.f32.mxu0 0.0
        %12371 = vmatmul.mubr.f32.gmra.mrb[0].mxu0 %v11909
        %v12372 = vpop.f32.mrb[0].mxu0
        %v12373 = vadd.f32 0.0, %v12372
        %v12374 = vpop.f32.mrb[0].mxu0
        %12375 = vmatprep.mubr.f32.mxu0 0.0
        %12376 = vmatmul.mubr.f32.gmra.mrb[0].mxu0 %v11912
        %v12377 = vpop.f32.mrb[0].mxu0
        %v12378 = vadd.f32 0.0, %v12377
        %v12379 = vpop.f32.mrb[0].mxu0
        %12380 = vmatprep.mubr.f32.mxu0 0.0
        %12381 = vmatmul.mubr.f32.gmra.mrb[0].mxu0 %v11915
        %v12382 = vpop.f32.mrb[0].mxu0
        %v12383 = vadd.f32 0.0, %v12382
        %v12384 = vpop.f32.mrb[0].mxu0
        %12385 = vmatprep.mubr.f32.mxu0 0.0
        %12386 = vmatmul.mubr.f32.gmra.mrb[0].mxu0 %v11918
        %v12387 = vpop.f32.mrb[0].mxu0
        %v12388 = vadd.f32 0.0, %v12387
        %v12389 = vpop.f32.mrb[0].mxu0
        %12390 = vmatprep.mubr.f32.mxu0 0.0
        %12391 = vmatmul.mubr.f32.gmra.mrb[0].mxu0 %v11921
        %v12392 = vpop.f32.mrb[0].mxu0
        %v12393 = vadd.f32 0.0, %v12392
        %v12394 = vpop.f32.mrb[0].mxu0
        %12395 = vmatprep.mubr.f32.mxu0 0.0
        %12396 = vmatmul.mubr.f32.gmra.mrb[0].mxu0 %v11924
        %v12397 = vpop.f32.mrb[0].mxu0
        %v12398 = vadd.f32 0.0, %v12397
        %v12399 = vpop.f32.mrb[0].mxu0
        %12400 = vmatprep.mubr.f32.mxu0 0.0
        %12401 = vmatmul.mubr.f32.gmra.mrb[0].mxu0 %v11927
        %v12402 = vpop.f32.mrb[0].mxu0
        %v12403 = vadd.f32 0.0, %v12402
        %v12404 = vpop.f32.mrb[0].mxu0
        %12405 = vmatprep.mubr.f32.mxu0 0.0
        %12406 = vmatmul.mubr.f32.gmra.mrb[0].mxu0 %v11930
        %v12407 = vpop.f32.mrb[0].mxu0
        %v12408 = vadd.f32 0.0, %v12407
        %v12409 = vpop.f32.mrb[0].mxu0
        %12410 = vmatprep.mubr.f32.mxu0 0.0
        %12411 = vmatmul.mubr.f32.gmra.mrb[0].mxu0 %v11933
        %v12412 = vpop.f32.mrb[0].mxu0
        %v12413 = vadd.f32 0.0, %v12412
        %v12414 = vpop.f32.mrb[0].mxu0
        %12415 = vmatprep.mubr.f32.mxu0 0.0
        %12416 = vmatmul.mubr.f32.gmra.mrb[0].mxu0 %v11936
        %v12417 = vpop.f32.mrb[0].mxu0
        %v12418 = vadd.f32 0.0, %v12417
        %v12419 = vpop.f32.mrb[0].mxu0
        %12420 = vmatprep.mubr.f32.mxu0 0.0
        %12421 = vmatmul.mubr.f32.gmra.mrb[0].mxu0 %v11939
        %v12422 = vpop.f32.mrb[0].mxu0
        %v12423 = vadd.f32 0.0, %v12422
        %v12424 = vpop.f32.mrb[0].mxu0
        %12425 = vmatprep.mubr.f32.mxu0 0.0
        %12426 = vmatmul.mubr.f32.gmra.mrb[0].mxu0 %v11942
        %v12427 = vpop.f32.mrb[0].mxu0
        %v12428 = vadd.f32 0.0, %v12427
        %v12429 = vpop.f32.mrb[0].mxu0
        %12430 = vmatprep.mubr.f32.mxu0 0.0
        %12431 = vmatmul.mubr.f32.gmra.mrb[0].mxu0 %v11945
        %v12432 = vpop.f32.mrb[0].mxu0
        %v12433 = vadd.f32 0.0, %v12432
        %v12434 = vpop.f32.mrb[0].mxu0
        %12435 = vmatprep.mubr.f32.mxu0 0.0
        %12436 = vmatmul.mubr.f32.gmra.mrb[0].mxu0 %v11948
        %v12437 = vpop.f32.mrb[0].mxu0
        %v12438 = vadd.f32 0.0, %v12437
        %v12439 = vpop.f32.mrb[0].mxu0
        %12440 = vmatprep.mubr.f32.mxu0 0.0
        %12441 = vmatmul.mubr.f32.gmra.mrb[0].mxu0 %v11951
        %v12442 = vpop.f32.mrb[0].mxu0
        %v12443 = vadd.f32 0.0, %v12442
        %v12444 = vpop.f32.mrb[0].mxu0
        %12445 = vmatprep.mubr.f32.mxu0 0.0
        %12446 = vmatmul.mubr.f32.gmra.mrb[0].mxu0 %v11954
        %v12447 = vpop.f32.mrb[0].mxu0
        %v12448 = vadd.f32 0.0, %v12447
        %v12449 = vpop.f32.mrb[0].mxu0
        %12450 = vmatprep.mubr.f32.mxu0 0.0
        %12451 = vmatmul.mubr.f32.gmra.mrb[0].mxu0 %v11957
        %v12452 = vpop.f32.mrb[0].mxu0
        %v12453 = vadd.f32 0.0, %v12452
        %v12454 = vpop.f32.mrb[0].mxu0
        %12455 = vmatprep.mubr.f32.mxu0 0.0
        %12456 = vmatmul.mubr.f32.gmra.mrb[0].mxu0 %v11960
        %v12457 = vpop.f32.mrb[0].mxu0
        %v12458 = vadd.f32 0.0, %v12457
        %v12459 = vpop.f32.mrb[0].mxu0
        %12460 = vmatprep.mubr.f32.mxu0 0.0
        %12461 = vmatmul.mubr.f32.gmra.mrb[0].mxu0 %v11963
        %v12462 = vpop.f32.mrb[0].mxu0
        %v12463 = vadd.f32 0.0, %v12462
        %v12464 = vpop.f32.mrb[0].mxu0
        %12465 = vmatprep.mubr.f32.mxu0 0.0
        %12466 = vmatmul.mubr.f32.gmra.mrb[0].mxu0 %v11966
        %v12467 = vpop.f32.mrb[0].mxu0
        %v12468 = vadd.f32 0.0, %v12467
        %v12469 = vpop.f32.mrb[0].mxu0
        %12470 = vmatprep.mubr.f32.mxu0 0.0
        %12471 = vmatmul.mubr.f32.gmra.mrb[0].mxu0 %v11969
        %v12472 = vpop.f32.mrb[0].mxu0
        %v12473 = vadd.f32 0.0, %v12472
        %v12474 = vpop.f32.mrb[0].mxu0
        %12475 = vmatprep.mubr.f32.mxu0 0.0
        %12476 = vmatmul.mubr.f32.gmra.mrb[0].mxu0 %v11972
        %v12477 = vpop.f32.mrb[0].mxu0
        %v12478 = vadd.f32 0.0, %v12477
        %v12479 = vpop.f32.mrb[0].mxu0
        %12480 = vmatprep.mubr.f32.mxu0 0.0
        %12481 = vmatmul.mubr.f32.gmra.mrb[0].mxu0 %v11975
        %v12482 = vpop.f32.mrb[0].mxu0
        %v12483 = vadd.f32 0.0, %v12482
        %v12484 = vpop.f32.mrb[0].mxu0
        %12485 = vmatprep.mubr.f32.mxu0 0.0
        %12486 = vmatmul.mubr.f32.gmra.mrb[0].mxu0 %v11978
        %v12487 = vpop.f32.mrb[0].mxu0
        %v12488 = vadd.f32 0.0, %v12487
        %v12489 = vpop.f32.mrb[0].mxu0
        %12490 = vmatprep.mubr.f32.mxu0 0.0
        %12491 = vmatmul.mubr.f32.gmra.mrb[0].mxu0 %v11981
        %v12492 = vpop.f32.mrb[0].mxu0
        %v12493 = vadd.f32 0.0, %v12492
        %v12494 = vpop.f32.mrb[0].mxu0
        %12495 = vmatprep.mubr.f32.mxu0 0.0
        %12496 = vmatmul.mubr.f32.gmra.mrb[0].mxu0 %v11984
        %v12497 = vpop.f32.mrb[0].mxu0
        %v12498 = vadd.f32 0.0, %v12497
        %v12499 = vpop.f32.mrb[0].mxu0
        %12500 = vmatprep.mubr.f32.mxu0 0.0
        %12501 = vmatmul.mubr.f32.gmra.mrb[0].mxu0 %v11987
        %v12502 = vpop.f32.mrb[0].mxu0
        %v12503 = vadd.f32 0.0, %v12502
        %v12504 = vpop.f32.mrb[0].mxu0
        %12505 = vmatprep.mubr.f32.mxu0 0.0
        %12506 = vmatmul.mubr.f32.gmra.mrb[0].mxu0 %v11990
        %v12507 = vpop.f32.mrb[0].mxu0
        %v12508 = vadd.f32 0.0, %v12507
        %v12509 = vpop.f32.mrb[0].mxu0
        %12510 = vmatprep.mubr.f32.mxu0 0.0
        %12511 = vmatmul.mubr.f32.gmra.mrb[0].mxu0 %v11993
        %v12512 = vpop.f32.mrb[0].mxu0
        %v12513 = vadd.f32 0.0, %v12512
        %v12514 = vpop.f32.mrb[0].mxu0
        %12515 = vmatprep.mubr.f32.mxu0 0.0
        %12516 = vmatmul.mubr.f32.gmra.mrb[0].mxu0 %v11996
        %v12517 = vpop.f32.mrb[0].mxu0
        %v12518 = vadd.f32 0.0, %v12517
        %v12519 = vpop.f32.mrb[0].mxu0
        %12520 = vmatprep.mubr.f32.mxu0 0.0
        %12521 = vmatmul.mubr.f32.gmra.mrb[0].mxu0 %v11999
        %v12522 = vpop.f32.mrb[0].mxu0
        %v12523 = vadd.f32 0.0, %v12522
        %v12524 = vpop.f32.mrb[0].mxu0
        %12525 = vmatprep.mubr.f32.mxu0 0.0
        %12526 = vmatmul.mubr.f32.gmra.mrb[0].mxu0 %v12002
        %v12527 = vpop.f32.mrb[0].mxu0
        %v12528 = vadd.f32 0.0, %v12527
        %v12529 = vpop.f32.mrb[0].mxu0
        %12530 = vmatprep.mubr.f32.mxu0 0.0
        %12531 = vmatmul.mubr.f32.gmra.mrb[0].mxu0 %v12005
        %v12532 = vpop.f32.mrb[0].mxu0
        %v12533 = vadd.f32 0.0, %v12532
        %v12534 = vpop.f32.mrb[0].mxu0
        %12535 = vmatprep.mubr.f32.mxu0 0.0
        %12536 = vmatmul.mubr.f32.gmra.mrb[0].mxu0 %v12008
        %v12537 = vpop.f32.mrb[0].mxu0
        %v12538 = vadd.f32 0.0, %v12537
        %v12539 = vpop.f32.mrb[0].mxu0
        %12540 = vmatprep.mubr.f32.mxu0 0.0
        %12541 = vmatmul.mubr.f32.gmra.mrb[0].mxu0 %v12011
        %v12542 = vpop.f32.mrb[0].mxu0
        %v12543 = vadd.f32 0.0, %v12542
        %v12544 = vpop.f32.mrb[0].mxu0
        %12545 = vmatprep.mubr.f32.mxu0 0.0
        %12546 = vmatmul.mubr.f32.gmra.mrb[0].mxu0 %v12014
        %v12547 = vpop.f32.mrb[0].mxu0
        %v12548 = vadd.f32 0.0, %v12547
        %v12549 = vpop.f32.mrb[0].mxu0
        %12550 = vmatprep.mubr.f32.mxu0 0.0
        %12551 = vmatmul.mubr.f32.gmra.mrb[0].mxu0 %v12017
        %v12552 = vpop.f32.mrb[0].mxu0
        %v12553 = vadd.f32 0.0, %v12552
        %v12554 = vpop.f32.mrb[0].mxu0
        %12555 = vmatprep.mubr.f32.mxu0 0.0
        %12556 = vmatmul.mubr.f32.gmra.mrb[0].mxu0 %v12020
        %v12557 = vpop.f32.mrb[0].mxu0
        %v12558 = vadd.f32 0.0, %v12557
        %v12559 = vpop.f32.mrb[0].mxu0
        %12560 = vmatprep.mubr.f32.mxu0 0.0
        %12561 = vmatmul.mubr.f32.gmra.mrb[0].mxu0 %v12023
        %v12562 = vpop.f32.mrb[0].mxu0
        %v12563 = vadd.f32 0.0, %v12562
        %v12564 = vpop.f32.mrb[0].mxu0
        %12565 = vmatprep.mubr.f32.mxu0 0.0
        %12566 = vmatmul.mubr.f32.gmra.mrb[0].mxu0 %v12026
        %v12567 = vpop.f32.mrb[0].mxu0
        %v12568 = vadd.f32 0.0, %v12567
        %v12569 = vpop.f32.mrb[0].mxu0
        %12570 = vmatprep.mubr.f32.mxu0 0.0
        %12571 = vmatmul.mubr.f32.gmra.mrb[0].mxu0 %v12029
        %v12572 = vpop.f32.mrb[0].mxu0
        %v12573 = vadd.f32 0.0, %v12572
        %v12574 = vpop.f32.mrb[0].mxu0
        %12575 = vmatprep.mubr.f32.mxu0 0.0
        %12576 = vmatmul.mubr.f32.gmra.mrb[0].mxu0 %v12032
        %v12577 = vpop.f32.mrb[0].mxu0
        %v12578 = vadd.f32 0.0, %v12577
        %v12579 = vpop.f32.mrb[0].mxu0
        %12580 = vmatprep.mubr.f32.mxu0 0.0
        %12581 = vmatmul.mubr.f32.gmra.mrb[0].mxu0 %v12035
        %v12582 = vpop.f32.mrb[0].mxu0
        %v12583 = vadd.f32 0.0, %v12582
        %v12584 = vpop.f32.mrb[0].mxu0
        %12585 = vmatprep.mubr.f32.mxu0 0.0
        %12586 = vmatmul.mubr.f32.gmra.mrb[0].mxu0 %v12038
        %v12587 = vpop.f32.mrb[0].mxu0
        %v12588 = vadd.f32 0.0, %v12587
        %v12589 = vpop.f32.mrb[0].mxu0
        %12590 = vmatprep.mubr.f32.mxu0 0.0
        %12591 = vmatmul.mubr.f32.gmra.mrb[0].mxu0 %v12041
        %v12592 = vpop.f32.mrb[0].mxu0
        %v12593 = vadd.f32 0.0, %v12592
        %v12594 = vpop.f32.mrb[0].mxu0
        %12595 = vmatprep.mubr.f32.mxu0 0.0
        %12596 = vmatmul.mubr.f32.gmra.mrb[0].mxu0 %v12044
        %v12597 = vpop.f32.mrb[0].mxu0
        %v12598 = vadd.f32 0.0, %v12597
        %v12599 = vpop.f32.mrb[0].mxu0
        %12600 = vmatprep.mubr.f32.mxu0 0.0
        %12601 = vmatmul.mubr.f32.gmra.mrb[0].mxu0 %v12047
        %v12602 = vpop.f32.mrb[0].mxu0
        %v12603 = vadd.f32 0.0, %v12602
        %v12604 = vpop.f32.mrb[0].mxu0
        %12605 = vmatprep.mubr.f32.mxu0 0.0
        %12606 = vmatmul.mubr.f32.gmra.mrb[0].mxu0 %v12050
        %v12607 = vpop.f32.mrb[0].mxu0
        %v12608 = vadd.f32 0.0, %v12607
        %v12609 = vpop.f32.mrb[0].mxu0
        %12610 = vmatprep.mubr.f32.mxu0 0.0
        %12611 = vmatmul.mubr.f32.gmra.mrb[0].mxu0 %v12053
        %v12612 = vpop.f32.mrb[0].mxu0
        %v12613 = vadd.f32 0.0, %v12612
        %v12614 = vpop.f32.mrb[0].mxu0
        %12615 = vmatprep.mubr.f32.mxu0 0.0
        %12616 = vmatmul.mubr.f32.gmra.mrb[0].mxu0 %v12056
        %v12617 = vpop.f32.mrb[0].mxu0
        %v12618 = vadd.f32 0.0, %v12617
        %v12619 = vpop.f32.mrb[0].mxu0
        %12620 = vmatprep.mubr.f32.mxu0 0.0
        %12621 = vmatmul.mubr.f32.gmra.mrb[0].mxu0 %v12059
        %v12622 = vpop.f32.mrb[0].mxu0
        %v12623 = vadd.f32 0.0, %v12622
        %v12624 = vpop.f32.mrb[0].mxu0
        %12625 = vmatprep.mubr.f32.mxu0 0.0
        %12626 = vmatmul.mubr.f32.gmra.mrb[0].mxu0 %v12062
        %v12627 = vpop.f32.mrb[0].mxu0
        %v12628 = vadd.f32 0.0, %v12627
        %v12629 = vpop.f32.mrb[0].mxu0
        %12630 = vmatprep.mubr.f32.mxu0 0.0
        %12631 = vmatmul.mubr.f32.gmra.mrb[0].mxu0 %v12065
        %v12632 = vpop.f32.mrb[0].mxu0
        %v12633 = vadd.f32 0.0, %v12632
        %v12634 = vpop.f32.mrb[0].mxu0
        %12635 = vmatprep.mubr.f32.mxu0 0.0
        %12636 = vmatmul.mubr.f32.gmra.mrb[0].mxu0 %v12068
        %v12637 = vpop.f32.mrb[0].mxu0
        %v12638 = vadd.f32 0.0, %v12637
        %v12639 = vpop.f32.mrb[0].mxu0
        %12640 = vmatprep.mubr.f32.mxu0 0.0
        %12641 = vmatmul.mubr.f32.gmra.mrb[0].mxu0 %v12071
        %v12642 = vpop.f32.mrb[0].mxu0
        %v12643 = vadd.f32 0.0, %v12642
        %v12644 = vpop.f32.mrb[0].mxu0
        %12645 = vmatprep.mubr.f32.mxu0 0.0
        %12646 = vmatmul.mubr.f32.gmra.mrb[0].mxu0 %v12074
        %v12647 = vpop.f32.mrb[0].mxu0
        %v12648 = vadd.f32 0.0, %v12647
        %v12649 = vpop.f32.mrb[0].mxu0
        %12650 = vmatprep.mubr.f32.mxu0 0.0
        %12651 = vmatmul.mubr.f32.gmra.mrb[0].mxu0 %v12077
        %v12652 = vpop.f32.mrb[0].mxu0
        %v12653 = vadd.f32 0.0, %v12652
        %v12654 = vpop.f32.mrb[0].mxu0
        %12655 = vmatprep.mubr.f32.mxu0 0.0
        %12656 = vmatmul.mubr.f32.gmra.mrb[0].mxu0 %v12080
        %v12657 = vpop.f32.mrb[0].mxu0
        %v12658 = vadd.f32 0.0, %v12657
        %v12659 = vpop.f32.mrb[0].mxu0
        %12660 = vmatprep.mubr.f32.mxu0 0.0
        %12661 = vmatmul.mubr.f32.gmra.mrb[0].mxu0 %v12083
        %v12662 = vpop.f32.mrb[0].mxu0
        %v12663 = vadd.f32 0.0, %v12662
        %v12664 = vpop.f32.mrb[0].mxu0
        %12665 = vmatprep.mubr.f32.mxu0 0.0
        %12666 = vmatmul.mubr.f32.gmra.mrb[0].mxu0 %v12086
        %v12667 = vpop.f32.mrb[0].mxu0
        %v12668 = vadd.f32 0.0, %v12667
        %v12669 = vpop.f32.mrb[0].mxu0
        %12670 = vmatprep.mubr.f32.mxu0 0.0
        %12671 = vmatmul.mubr.f32.gmra.mrb[0].mxu0 %v12089
        %v12672 = vpop.f32.mrb[0].mxu0
        %v12673 = vadd.f32 0.0, %v12672
        %v12674 = vpop.f32.mrb[0].mxu0
        %12675 = vmatprep.mubr.f32.mxu0 0.0
        %12676 = vmatmul.mubr.f32.gmra.mrb[0].mxu0 %v12092
        %v12677 = vpop.f32.mrb[0].mxu0
        %v12678 = vadd.f32 0.0, %v12677
        %v12679 = vpop.f32.mrb[0].mxu0
        %12680 = vmatprep.mubr.f32.mxu0 0.0
        %12681 = vmatmul.mubr.f32.gmra.mrb[0].mxu0 %v12095
        %v12682 = vpop.f32.mrb[0].mxu0
        %v12683 = vadd.f32 0.0, %v12682
        %v12684 = vpop.f32.mrb[0].mxu0
        %12685 = vmatprep.mubr.f32.mxu0 0.0
        %12686 = vmatmul.mubr.f32.gmra.mrb[0].mxu0 %v12098
        %v12687 = vpop.f32.mrb[0].mxu0
        %v12688 = vadd.f32 0.0, %v12687
        %v12689 = vpop.f32.mrb[0].mxu0
        %12690 = vmatprep.mubr.f32.mxu0 0.0
        %12691 = vmatmul.mubr.f32.gmra.mrb[0].mxu0 %v12101
        %v12692 = vpop.f32.mrb[0].mxu0
        %v12693 = vadd.f32 0.0, %v12692
        %v12694 = vpop.f32.mrb[0].mxu0
        %12695 = vmatprep.mubr.f32.mxu0 0.0
        %12696 = vmatmul.mubr.f32.gmra.mrb[0].mxu0 %v12104
        %v12697 = vpop.f32.mrb[0].mxu0
        %v12698 = vadd.f32 0.0, %v12697
        %v12699 = vpop.f32.mrb[0].mxu0
        %12700 = vmatprep.mubr.f32.mxu0 0.0
        %12701 = vmatmul.mubr.f32.gmra.mrb[0].mxu0 %v12107
        %v12702 = vpop.f32.mrb[0].mxu0
        %v12703 = vadd.f32 0.0, %v12702
        %v12704 = vpop.f32.mrb[0].mxu0
        %12705 = vmatprep.mubr.f32.mxu0 0.0
        %12706 = vmatmul.mubr.f32.gmra.mrb[0].mxu0 %v12110
        %v12707 = vpop.f32.mrb[0].mxu0
        %v12708 = vadd.f32 0.0, %v12707
        %v12709 = vpop.f32.mrb[0].mxu0
        %12710 = vmatprep.mubr.f32.mxu0 0.0
        %12711 = vmatmul.mubr.f32.gmra.mrb[0].mxu0 %v12113
        %v12712 = vpop.f32.mrb[0].mxu0
        %v12713 = vadd.f32 0.0, %v12712
        %v12714 = vpop.f32.mrb[0].mxu0
        %12715 = vmatprep.mubr.f32.mxu0 0.0
        %12716 = vmatmul.mubr.f32.gmra.mrb[0].mxu0 %v12116
        %v12717 = vpop.f32.mrb[0].mxu0
        %v12718 = vadd.f32 0.0, %v12717
        %v12719 = vpop.f32.mrb[0].mxu0
        %12720 = vmatprep.mubr.f32.mxu0 0.0
        %12721 = vmatmul.mubr.f32.gmra.mrb[0].mxu0 %v12119
        %v12722 = vpop.f32.mrb[0].mxu0
        %v12723 = vadd.f32 0.0, %v12722
        %v12724 = vpop.f32.mrb[0].mxu0
        %12725 = vmatprep.mubr.f32.mxu0 0.0
        %12726 = vmatmul.mubr.f32.gmra.mrb[0].mxu0 %v12122
        %v12727 = vpop.f32.mrb[0].mxu0
        %v12728 = vadd.f32 0.0, %v12727
        %v12729 = vpop.f32.mrb[0].mxu0
        %12730 = vmatprep.mubr.f32.mxu0 0.0
        %12731 = vmatmul.mubr.f32.gmra.mrb[0].mxu0 %v12125
        %v12732 = vpop.f32.mrb[0].mxu0
        %v12733 = vadd.f32 0.0, %v12732
        %v12734 = vpop.f32.mrb[0].mxu0
        %12735 = vmatprep.mubr.f32.mxu0 0.0
        %12736 = vmatmul.mubr.f32.gmra.mrb[0].mxu0 %v12128
        %v12737 = vpop.f32.mrb[0].mxu0
        %v12738 = vadd.f32 0.0, %v12737
        %v12739 = vpop.f32.mrb[0].mxu0
        %12740 = vmatprep.mubr.f32.mxu0 0.0
        %12741 = vmatmul.mubr.f32.gmra.mrb[0].mxu0 %v12131
        %v12742 = vpop.f32.mrb[0].mxu0
        %v12743 = vadd.f32 0.0, %v12742
        %v12744 = vpop.f32.mrb[0].mxu0
        %12745 = vmatprep.mubr.f32.mxu0 0.0
        %12746 = vmatmul.mubr.f32.gmra.mrb[0].mxu0 %v12134
        %v12747 = vpop.f32.mrb[0].mxu0
        %v12748 = vadd.f32 0.0, %v12747
        %v12749 = vpop.f32.mrb[0].mxu0
        %12750 = vmatprep.mubr.f32.mxu0 0.0
        %12751 = vmatmul.mubr.f32.gmra.mrb[0].mxu0 %v12137
        %v12752 = vpop.f32.mrb[0].mxu0
        %v12753 = vadd.f32 0.0, %v12752
        %v12754 = vpop.f32.mrb[0].mxu0
        %12755 = vmatprep.mubr.f32.mxu0 0.0
        %12756 = vmatmul.mubr.f32.gmra.mrb[0].mxu0 %v12140
        %v12757 = vpop.f32.mrb[0].mxu0
        %v12758 = vadd.f32 0.0, %v12757
        %v12759 = vpop.f32.mrb[0].mxu0
        %12760 = vmatprep.mubr.f32.mxu0 0.0
        %12761 = vmatmul.mubr.f32.gmra.mrb[0].mxu0 %v12143
        %v12762 = vpop.f32.mrb[0].mxu0
        %v12763 = vadd.f32 0.0, %v12762
        %v12764 = vpop.f32.mrb[0].mxu0
        %12765 = vmatprep.mubr.f32.mxu0 0.0
        %12766 = vmatmul.mubr.f32.gmra.mrb[0].mxu0 %v12146
        %v12767 = vpop.f32.mrb[0].mxu0
        %v12768 = vadd.f32 0.0, %v12767
        %v12769 = vpop.f32.mrb[0].mxu0
        %12770 = vmatprep.mubr.f32.mxu0 0.0
        %12771 = vmatmul.mubr.f32.gmra.mrb[0].mxu0 %v12149
        %v12772 = vpop.f32.mrb[0].mxu0
        %v12773 = vadd.f32 0.0, %v12772
        %v12774 = vpop.f32.mrb[0].mxu0
        %12775 = vmatprep.mubr.f32.mxu0 0.0
        %12776 = vmatmul.mubr.f32.gmra.mrb[0].mxu0 %v12152
        %v12777 = vpop.f32.mrb[0].mxu0
        %v12778 = vadd.f32 0.0, %v12777
        %v12779 = vpop.f32.mrb[0].mxu0
        %12780 = vmatprep.mubr.f32.mxu0 0.0
        %12781 = vmatmul.mubr.f32.gmra.mrb[0].mxu0 %v12155
        %v12782 = vpop.f32.mrb[0].mxu0
        %v12783 = vadd.f32 0.0, %v12782
        %v12784 = vpop.f32.mrb[0].mxu0
        %12785 = vmatprep.mubr.f32.mxu0 0.0
        %12786 = vmatmul.mubr.f32.gmra.mrb[0].mxu0 %v12158
        %v12787 = vpop.f32.mrb[0].mxu0
        %v12788 = vadd.f32 0.0, %v12787
        %v12789 = vpop.f32.mrb[0].mxu0
        %12790 = vmatprep.mubr.f32.mxu0 0.0
        %12791 = vmatmul.mubr.f32.gmra.mrb[0].mxu0 %v12161
        %v12792 = vpop.f32.mrb[0].mxu0
        %v12793 = vadd.f32 0.0, %v12792
        %v12794 = vpop.f32.mrb[0].mxu0
        %12795 = vmatprep.mubr.f32.mxu0 0.0
        %12796 = vmatmul.mubr.f32.gmra.mrb[0].mxu0 %v12164
        %v12797 = vpop.f32.mrb[0].mxu0
        %v12798 = vadd.f32 0.0, %v12797
        %v12799 = vpop.f32.mrb[0].mxu0
        %12800 = vmatprep.mubr.f32.mxu0 0.0
        %12801 = vmatmul.mubr.f32.gmra.mrb[0].mxu0 %v12167
        %v12802 = vpop.f32.mrb[0].mxu0
        %v12803 = vadd.f32 0.0, %v12802
        %v12804 = vpop.f32.mrb[0].mxu0
        %12805 = vmatprep.mubr.f32.mxu0 0.0
        %12806 = vmatmul.mubr.f32.gmra.mrb[0].mxu0 %v12170
        %v12807 = vpop.f32.mrb[0].mxu0
        %v12808 = vadd.f32 0.0, %v12807
        %v12809 = vpop.f32.mrb[0].mxu0
        %12810 = vmatprep.mubr.f32.mxu0 0.0
        %12811 = vmatmul.mubr.f32.gmra.mrb[0].mxu0 %v12173
        %v12812 = vpop.f32.mrb[0].mxu0
        %v12813 = vadd.f32 0.0, %v12812
        %v12814 = vpop.f32.mrb[0].mxu0
        %12815 = vmatprep.mubr.f32.mxu0 0.0
        %12816 = vmatmul.mubr.f32.gmra.mrb[0].mxu0 %v12176
        %v12817 = vpop.f32.mrb[0].mxu0
        %v12818 = vadd.f32 0.0, %v12817
        %v12819 = vpop.f32.mrb[0].mxu0
        %12820 = vmatprep.mubr.f32.mxu0 0.0
        %12821 = vmatmul.mubr.f32.gmra.mrb[0].mxu0 %v12179
        %v12822 = vpop.f32.mrb[0].mxu0
        %v12823 = vadd.f32 0.0, %v12822
        %v12824 = vpop.f32.mrb[0].mxu0
        %12825 = vmatprep.mubr.f32.mxu0 0.0
        %12826 = vmatmul.mubr.f32.gmra.mrb[0].mxu0 %v12182
        %v12827 = vpop.f32.mrb[0].mxu0
        %v12828 = vadd.f32 0.0, %v12827
        %v12829 = vpop.f32.mrb[0].mxu0
        %12830 = vmatprep.mubr.f32.mxu0 0.0
        %12831 = vmatmul.mubr.f32.gmra.mrb[0].mxu0 %v12185
        %v12832 = vpop.f32.mrb[0].mxu0
        %v12833 = vadd.f32 0.0, %v12832
        %v12834 = vpop.f32.mrb[0].mxu0
        %12835 = vmatprep.mubr.f32.mxu0 0.0
        %12836 = vmatmul.mubr.f32.gmra.mrb[0].mxu0 %v12188
        %v12837 = vpop.f32.mrb[0].mxu0
        %v12838 = vadd.f32 0.0, %v12837
        %v12839 = vpop.f32.mrb[0].mxu0
        %12840 = vmatprep.mubr.f32.mxu0 0.0
        %12841 = vmatmul.mubr.f32.gmra.mrb[0].mxu0 %v12191
        %v12842 = vpop.f32.mrb[0].mxu0
        %v12843 = vadd.f32 0.0, %v12842
        %v12844 = vpop.f32.mrb[0].mxu0
        %12845 = vmatprep.mubr.f32.mxu0 0.0
        %12846 = vmatmul.mubr.f32.gmra.mrb[0].mxu0 %v12194
        %v12847 = vpop.f32.mrb[0].mxu0
        %v12848 = vadd.f32 0.0, %v12847
        %v12849 = vpop.f32.mrb[0].mxu0
        %12850 = vmatprep.mubr.f32.mxu0 0.0
        %12851 = vmatmul.mubr.f32.gmra.mrb[0].mxu0 %v12197
        %v12852 = vpop.f32.mrb[0].mxu0
        %v12853 = vadd.f32 0.0, %v12852
        %v12854 = vpop.f32.mrb[0].mxu0
        %12855 = vmatprep.mubr.f32.mxu0 0.0
        %12856 = vmatmul.mubr.f32.gmra.mrb[0].mxu0 %v12200
        %v12857 = vpop.f32.mrb[0].mxu0
        %v12858 = vadd.f32 0.0, %v12857
        %v12859 = vpop.f32.mrb[0].mxu0
        %12860 = vmatprep.mubr.f32.mxu0 0.0
        %12861 = vmatmul.mubr.f32.gmra.mrb[0].mxu0 %v12203
        %v12862 = vpop.f32.mrb[0].mxu0
        %v12863 = vadd.f32 0.0, %v12862
        %v12864 = vpop.f32.mrb[0].mxu0
        %12865 = vmatprep.mubr.f32.mxu0 0.0
        %12866 = vmatmul.mubr.f32.gmra.mrb[0].mxu0 %v12206
        %v12867 = vpop.f32.mrb[0].mxu0
        %v12868 = vadd.f32 0.0, %v12867
        %v12869 = vpop.f32.mrb[0].mxu0
        %12870 = vmatprep.mubr.f32.mxu0 0.0
        %12871 = vmatmul.mubr.f32.gmra.mrb[0].mxu0 %v12209
        %v12872 = vpop.f32.mrb[0].mxu0
        %v12873 = vadd.f32 0.0, %v12872
        %v12874 = vpop.f32.mrb[0].mxu0
        %12875 = vmatprep.mubr.f32.mxu0 0.0
        %12876 = vmatmul.mubr.f32.gmra.mrb[0].mxu0 %v12212
        %v12877 = vpop.f32.mrb[0].mxu0
        %v12878 = vadd.f32 0.0, %v12877
        %v12879 = vpop.f32.mrb[0].mxu0
        %12880 = vmatprep.mubr.f32.mxu0 0.0
        %12881 = vmatmul.mubr.f32.gmra.mrb[0].mxu0 %v12215
        %v12882 = vpop.f32.mrb[0].mxu0
        %v12883 = vadd.f32 0.0, %v12882
        %v12884 = vpop.f32.mrb[0].mxu0
        %12885 = vmatprep.mubr.f32.mxu0 0.0
        %12886 = vmatmul.mubr.f32.gmra.mrb[0].mxu0 %v12218
        %v12887 = vpop.f32.mrb[0].mxu0
        %v12888 = vadd.f32 0.0, %v12887
        %v12889 = vpop.f32.mrb[0].mxu0
        %12890 = vmatprep.mubr.f32.mxu0 0.0
        %12891 = vmatmul.mubr.f32.gmra.mrb[0].mxu0 %v12221
        %v12892 = vpop.f32.mrb[0].mxu0
        %v12893 = vadd.f32 0.0, %v12892
        %v12894 = vpop.f32.mrb[0].mxu0
        %12895 = vmatprep.mubr.f32.mxu0 0.0
        %12896 = vmatmul.mubr.f32.gmra.mrb[0].mxu0 %v12224
        %v12897 = vpop.f32.mrb[0].mxu0
        %v12898 = vadd.f32 0.0, %v12897
        %v12899 = vpop.f32.mrb[0].mxu0
        %12900 = vmatprep.mubr.f32.mxu0 0.0
        %12901 = vmatmul.mubr.f32.gmra.mrb[0].mxu0 %v12227
        %v12902 = vpop.f32.mrb[0].mxu0
        %v12903 = vadd.f32 0.0, %v12902
        %v12904 = vpop.f32.mrb[0].mxu0
        %12905 = vmatprep.mubr.f32.mxu0 0.0
        %12906 = vmatmul.mubr.f32.gmra.mrb[0].mxu0 %v12230
        %v12907 = vpop.f32.mrb[0].mxu0
        %v12908 = vadd.f32 0.0, %v12907
        %v12909 = vpop.f32.mrb[0].mxu0
        %12910 = vmatprep.mubr.f32.mxu0 0.0
        %12911 = vmatmul.mubr.f32.gmra.mrb[0].mxu0 %v12233
        %v12912 = vpop.f32.mrb[0].mxu0
        %v12913 = vadd.f32 0.0, %v12912
        %v12914 = vpop.f32.mrb[0].mxu0
        %12915 = vmatprep.mubr.f32.mxu0 0.0
        %12916 = vmatmul.mubr.f32.gmra.mrb[0].mxu0 %v12236
        %v12917 = vpop.f32.mrb[0].mxu0
        %v12918 = vadd.f32 0.0, %v12917
        %v12919 = vpop.f32.mrb[0].mxu0
        %12920 = vmatprep.mubr.f32.mxu0 0.0
        %12921 = vmatmul.mubr.f32.gmra.mrb[0].mxu0 %v12239
        %v12922 = vpop.f32.mrb[0].mxu0
        %v12923 = vadd.f32 0.0, %v12922
        %v12924 = vpop.f32.mrb[0].mxu0
        %12925 = vmatprep.mubr.f32.mxu0 0.0
        %12926 = vmatmul.mubr.f32.gmra.mrb[0].mxu0 %v12242
        %v12927 = vpop.f32.mrb[0].mxu0
        %v12928 = vadd.f32 0.0, %v12927
        %v12929 = vpop.f32.mrb[0].mxu0
        %12930 = vmatprep.mubr.f32.mxu0 0.0
        %12931 = vmatmul.mubr.f32.gmra.mrb[0].mxu0 %v12245
        %v12932 = vpop.f32.mrb[0].mxu0
        %v12933 = vadd.f32 0.0, %v12932
        %v12934 = vpop.f32.mrb[0].mxu0
        %12935 = vmatprep.mubr.f32.mxu0 0.0
        %12936 = vmatmul.mubr.f32.gmra.mrb[0].mxu0 %v12248
        %v12937 = vpop.f32.mrb[0].mxu0
        %v12938 = vadd.f32 0.0, %v12937
        %v12939 = vpop.f32.mrb[0].mxu0
        %12940 = vmatprep.mubr.f32.mxu0 0.0
        %12941 = vmatmul.mubr.f32.gmra.mrb[0].mxu0 %v12251
        %v12942 = vpop.f32.mrb[0].mxu0
        %v12943 = vadd.f32 0.0, %v12942
        %v12944 = vpop.f32.mrb[0].mxu0
        %12945 = vmatprep.mubr.f32.mxu0 0.0
        %12946 = vmatmul.mubr.f32.gmra.mrb[0].mxu0 %v12254
        %v12947 = vpop.f32.mrb[0].mxu0
        %v12948 = vadd.f32 0.0, %v12947
        %v12949 = vpop.f32.mrb[0].mxu0
        %12950 = vmatprep.mubr.f32.mxu0 0.0
        %12951 = vmatmul.mubr.f32.gmra.mrb[0].mxu0 %v12257
        %v12952 = vpop.f32.mrb[0].mxu0
        %v12953 = vadd.f32 0.0, %v12952
        %v12954 = vpop.f32.mrb[0].mxu0
        %12955 = vmatprep.mubr.f32.mxu0 0.0
        %12956 = vmatmul.mubr.f32.gmra.mrb[0].mxu0 %v12260
        %v12957 = vpop.f32.mrb[0].mxu0
        %v12958 = vadd.f32 0.0, %v12957
        %v12959 = vpop.f32.mrb[0].mxu0
        %12960 = vmatprep.mubr.f32.mxu0 0.0
        %12961 = vmatmul.mubr.f32.gmra.mrb[0].mxu0 %v12263
        %v12962 = vpop.f32.mrb[0].mxu0
        %v12963 = vadd.f32 0.0, %v12962
        %v12964 = vpop.f32.mrb[0].mxu0
        %12965 = vmatprep.mubr.f32.mxu0 0.0
        %12966 = vmatmul.mubr.f32.gmra.mrb[0].mxu0 %v12266
        %v12967 = vpop.f32.mrb[0].mxu0
        %v12968 = vadd.f32 0.0, %v12967
        %v12969 = vpop.f32.mrb[0].mxu0
        %12970 = vmatprep.mubr.f32.mxu0 0.0
        %12971 = vmatmul.mubr.f32.gmra.mrb[0].mxu0 %v12269
        %v12972 = vpop.f32.mrb[0].mxu0
        %v12973 = vadd.f32 0.0, %v12972
        %v12974 = vpop.f32.mrb[0].mxu0
        %12975 = vdwg.mxu0
        %v12976 = vsel %vm10072, %v12338, 0.0
        %v12977 = vsel %vm10072, %v12343, 0.0
        %v12978 = vadd.f32 %v12976, %v12977
        %v12979 = vsel %vm10072, %v12348, 0.0
        %v12980 = vadd.f32 %v12978, %v12979
        %v12981 = vsel %vm10072, %v12353, 0.0
        %v12982 = vadd.f32 %v12980, %v12981
        %v12983 = vsel %vm10072, %v12358, 0.0
        %v12984 = vadd.f32 %v12982, %v12983
        %v12985 = vsel %vm10072, %v12363, 0.0
        %v12986 = vadd.f32 %v12984, %v12985
        %v12987 = vsel %vm10072, %v12368, 0.0
        %v12988 = vadd.f32 %v12986, %v12987
        %v12989 = vsel %vm10072, %v12373, 0.0
        %v12990 = vadd.f32 %v12988, %v12989
        %v12991 = vsel %vm10072, %v12378, 0.0
        %v12992 = vadd.f32 %v12990, %v12991
        %v12993 = vsel %vm10072, %v12383, 0.0
        %v12994 = vadd.f32 %v12992, %v12993
        %v12995 = vsel %vm10072, %v12388, 0.0
        %v12996 = vadd.f32 %v12994, %v12995
        %v12997 = vsel %vm10072, %v12393, 0.0
        %v12998 = vadd.f32 %v12996, %v12997
        %v12999 = vsel %vm10072, %v12398, 0.0
        %v13000 = vadd.f32 %v12998, %v12999
        %v13001 = vsel %vm10072, %v12403, 0.0
        %v13002 = vadd.f32 %v13000, %v13001
        %v13003 = vsel %vm10072, %v12408, 0.0
        %v13004 = vadd.f32 %v13002, %v13003
        %v13005 = vsel %vm10072, %v12413, 0.0
        %v13006 = vadd.f32 %v13004, %v13005
        %v13007 = vsel %vm10072, %v12418, 0.0
        %v13008 = vadd.f32 %v13006, %v13007
        %v13009 = vsel %vm10072, %v12423, 0.0
        %v13010 = vadd.f32 %v13008, %v13009
        %v13011 = vsel %vm10072, %v12428, 0.0
        %v13012 = vadd.f32 %v13010, %v13011
        %v13013 = vsel %vm10072, %v12433, 0.0
        %v13014 = vadd.f32 %v13012, %v13013
        %v13015 = vsel %vm10072, %v12438, 0.0
        %v13016 = vadd.f32 %v13014, %v13015
        %v13017 = vsel %vm10072, %v12443, 0.0
        %v13018 = vadd.f32 %v13016, %v13017
        %v13019 = vsel %vm10072, %v12448, 0.0
        %v13020 = vadd.f32 %v13018, %v13019
        %v13021 = vsel %vm10072, %v12453, 0.0
        %v13022 = vadd.f32 %v13020, %v13021
        %v13023 = vsel %vm10072, %v12458, 0.0
        %v13024 = vadd.f32 %v13022, %v13023
        %v13025 = vsel %vm10072, %v12463, 0.0
        %v13026 = vadd.f32 %v13024, %v13025
        %v13027 = vsel %vm10072, %v12468, 0.0
        %v13028 = vadd.f32 %v13026, %v13027
        %v13029 = vsel %vm10072, %v12473, 0.0
        %v13030 = vadd.f32 %v13028, %v13029
        %v13031 = vsel %vm10072, %v12478, 0.0
        %v13032 = vadd.f32 %v13030, %v13031
        %v13033 = vsel %vm10072, %v12483, 0.0
        %v13034 = vadd.f32 %v13032, %v13033
        %v13035 = vsel %vm10072, %v12488, 0.0
        %v13036 = vadd.f32 %v13034, %v13035
        %v13037 = vsel %vm10072, %v12493, 0.0
        %v13038 = vadd.f32 %v13036, %v13037
        %v13039 = vsel %vm10072, %v12498, 0.0
        %v13040 = vadd.f32 %v13038, %v13039
        %v13041 = vsel %vm10072, %v12503, 0.0
        %v13042 = vadd.f32 %v13040, %v13041
        %v13043 = vsel %vm10072, %v12508, 0.0
        %v13044 = vadd.f32 %v13042, %v13043
        %v13045 = vsel %vm10072, %v12513, 0.0
        %v13046 = vadd.f32 %v13044, %v13045
        %v13047 = vsel %vm10072, %v12518, 0.0
        %v13048 = vadd.f32 %v13046, %v13047
        %v13049 = vsel %vm10072, %v12523, 0.0
        %v13050 = vadd.f32 %v13048, %v13049
        %v13051 = vsel %vm10072, %v12528, 0.0
        %v13052 = vadd.f32 %v13050, %v13051
        %v13053 = vsel %vm10072, %v12533, 0.0
        %v13054 = vadd.f32 %v13052, %v13053
        %v13055 = vsel %vm10072, %v12538, 0.0
        %v13056 = vadd.f32 %v13054, %v13055
        %v13057 = vsel %vm10072, %v12543, 0.0
        %v13058 = vadd.f32 %v13056, %v13057
        %v13059 = vsel %vm10072, %v12548, 0.0
        %v13060 = vadd.f32 %v13058, %v13059
        %v13061 = vsel %vm10072, %v12553, 0.0
        %v13062 = vadd.f32 %v13060, %v13061
        %v13063 = vsel %vm10072, %v12558, 0.0
        %v13064 = vadd.f32 %v13062, %v13063
        %v13065 = vsel %vm10072, %v12563, 0.0
        %v13066 = vadd.f32 %v13064, %v13065
        %v13067 = vsel %vm10072, %v12568, 0.0
        %v13068 = vadd.f32 %v13066, %v13067
        %v13069 = vsel %vm10072, %v12573, 0.0
        %v13070 = vadd.f32 %v13068, %v13069
        %v13071 = vsel %vm10072, %v12578, 0.0
        %v13072 = vadd.f32 %v13070, %v13071
        %v13073 = vsel %vm10072, %v12583, 0.0
        %v13074 = vadd.f32 %v13072, %v13073
        %v13075 = vsel %vm10072, %v12588, 0.0
        %v13076 = vadd.f32 %v13074, %v13075
        %v13077 = vsel %vm10072, %v12593, 0.0
        %v13078 = vadd.f32 %v13076, %v13077
        %v13079 = vsel %vm10072, %v12598, 0.0
        %v13080 = vadd.f32 %v13078, %v13079
        %v13081 = vsel %vm10072, %v12603, 0.0
        %v13082 = vadd.f32 %v13080, %v13081
        %v13083 = vsel %vm10072, %v12608, 0.0
        %v13084 = vadd.f32 %v13082, %v13083
        %v13085 = vsel %vm10072, %v12613, 0.0
        %v13086 = vadd.f32 %v13084, %v13085
        %v13087 = vsel %vm10072, %v12618, 0.0
        %v13088 = vadd.f32 %v13086, %v13087
        %v13089 = vsel %vm10072, %v12623, 0.0
        %v13090 = vadd.f32 %v13088, %v13089
        %v13091 = vsel %vm10072, %v12628, 0.0
        %v13092 = vadd.f32 %v13090, %v13091
        %v13093 = vsel %vm10072, %v12633, 0.0
        %v13094 = vadd.f32 %v13092, %v13093
        %v13095 = vsel %vm10072, %v12638, 0.0
        %v13096 = vadd.f32 %v13094, %v13095
        %v13097 = vsel %vm10072, %v12643, 0.0
        %v13098 = vadd.f32 %v13096, %v13097
        %v13099 = vsel %vm10072, %v12648, 0.0
        %v13100 = vadd.f32 %v13098, %v13099
        %v13101 = vsel %vm10072, %v12653, 0.0
        %v13102 = vadd.f32 %v13100, %v13101
        %v13103 = vsel %vm10072, %v12658, 0.0
        %v13104 = vadd.f32 %v13102, %v13103
        %v13105 = vsel %vm10072, %v12663, 0.0
        %v13106 = vadd.f32 %v13104, %v13105
        %v13107 = vsel %vm10072, %v12668, 0.0
        %v13108 = vadd.f32 %v13106, %v13107
        %v13109 = vsel %vm10072, %v12673, 0.0
        %v13110 = vadd.f32 %v13108, %v13109
        %v13111 = vsel %vm10072, %v12678, 0.0
        %v13112 = vadd.f32 %v13110, %v13111
        %v13113 = vsel %vm10072, %v12683, 0.0
        %v13114 = vadd.f32 %v13112, %v13113
        %v13115 = vsel %vm10072, %v12688, 0.0
        %v13116 = vadd.f32 %v13114, %v13115
        %v13117 = vsel %vm10072, %v12693, 0.0
        %v13118 = vadd.f32 %v13116, %v13117
        %v13119 = vsel %vm10072, %v12698, 0.0
        %v13120 = vadd.f32 %v13118, %v13119
        %v13121 = vsel %vm10072, %v12703, 0.0
        %v13122 = vadd.f32 %v13120, %v13121
        %v13123 = vsel %vm10072, %v12708, 0.0
        %v13124 = vadd.f32 %v13122, %v13123
        %v13125 = vsel %vm10072, %v12713, 0.0
        %v13126 = vadd.f32 %v13124, %v13125
        %v13127 = vsel %vm10072, %v12718, 0.0
        %v13128 = vadd.f32 %v13126, %v13127
        %v13129 = vsel %vm10072, %v12723, 0.0
        %v13130 = vadd.f32 %v13128, %v13129
        %v13131 = vsel %vm10072, %v12728, 0.0
        %v13132 = vadd.f32 %v13130, %v13131
        %v13133 = vsel %vm10072, %v12733, 0.0
        %v13134 = vadd.f32 %v13132, %v13133
        %v13135 = vsel %vm10072, %v12738, 0.0
        %v13136 = vadd.f32 %v13134, %v13135
        %v13137 = vsel %vm10072, %v12743, 0.0
        %v13138 = vadd.f32 %v13136, %v13137
        %v13139 = vsel %vm10072, %v12748, 0.0
        %v13140 = vadd.f32 %v13138, %v13139
        %v13141 = vsel %vm10072, %v12753, 0.0
        %v13142 = vadd.f32 %v13140, %v13141
        %v13143 = vsel %vm10072, %v12758, 0.0
        %v13144 = vadd.f32 %v13142, %v13143
        %v13145 = vsel %vm10072, %v12763, 0.0
        %v13146 = vadd.f32 %v13144, %v13145
        %v13147 = vsel %vm10072, %v12768, 0.0
        %v13148 = vadd.f32 %v13146, %v13147
        %v13149 = vsel %vm10072, %v12773, 0.0
        %v13150 = vadd.f32 %v13148, %v13149
        %v13151 = vsel %vm10072, %v12778, 0.0
        %v13152 = vadd.f32 %v13150, %v13151
        %v13153 = vsel %vm10072, %v12783, 0.0
        %v13154 = vadd.f32 %v13152, %v13153
        %v13155 = vsel %vm10072, %v12788, 0.0
        %v13156 = vadd.f32 %v13154, %v13155
        %v13157 = vsel %vm10072, %v12793, 0.0
        %v13158 = vadd.f32 %v13156, %v13157
        %v13159 = vsel %vm10072, %v12798, 0.0
        %v13160 = vadd.f32 %v13158, %v13159
        %v13161 = vsel %vm10072, %v12803, 0.0
        %v13162 = vadd.f32 %v13160, %v13161
        %v13163 = vsel %vm10072, %v12808, 0.0
        %v13164 = vadd.f32 %v13162, %v13163
        %v13165 = vsel %vm10072, %v12813, 0.0
        %v13166 = vadd.f32 %v13164, %v13165
        %v13167 = vsel %vm10072, %v12818, 0.0
        %v13168 = vadd.f32 %v13166, %v13167
        %v13169 = vsel %vm10072, %v12823, 0.0
        %v13170 = vadd.f32 %v13168, %v13169
        %v13171 = vsel %vm10072, %v12828, 0.0
        %v13172 = vadd.f32 %v13170, %v13171
        %v13173 = vsel %vm10072, %v12833, 0.0
        %v13174 = vadd.f32 %v13172, %v13173
        %v13175 = vsel %vm10072, %v12838, 0.0
        %v13176 = vadd.f32 %v13174, %v13175
        %v13177 = vsel %vm10072, %v12843, 0.0
        %v13178 = vadd.f32 %v13176, %v13177
        %v13179 = vsel %vm10072, %v12848, 0.0
        %v13180 = vadd.f32 %v13178, %v13179
        %v13181 = vsel %vm10072, %v12853, 0.0
        %v13182 = vadd.f32 %v13180, %v13181
        %v13183 = vsel %vm10072, %v12858, 0.0
        %v13184 = vadd.f32 %v13182, %v13183
        %v13185 = vsel %vm10072, %v12863, 0.0
        %v13186 = vadd.f32 %v13184, %v13185
        %v13187 = vsel %vm10072, %v12868, 0.0
        %v13188 = vadd.f32 %v13186, %v13187
        %v13189 = vsel %vm10072, %v12873, 0.0
        %v13190 = vadd.f32 %v13188, %v13189
        %v13191 = vsel %vm10072, %v12878, 0.0
        %v13192 = vadd.f32 %v13190, %v13191
        %v13193 = vsel %vm10072, %v12883, 0.0
        %v13194 = vadd.f32 %v13192, %v13193
        %v13195 = vsel %vm10072, %v12888, 0.0
        %v13196 = vadd.f32 %v13194, %v13195
        %v13197 = vsel %vm10072, %v12893, 0.0
        %v13198 = vadd.f32 %v13196, %v13197
        %v13199 = vsel %vm10072, %v12898, 0.0
        %v13200 = vadd.f32 %v13198, %v13199
        %v13201 = vsel %vm10072, %v12903, 0.0
        %v13202 = vadd.f32 %v13200, %v13201
        %v13203 = vsel %vm10072, %v12908, 0.0
        %v13204 = vadd.f32 %v13202, %v13203
        %v13205 = vsel %vm10072, %v12913, 0.0
        %v13206 = vadd.f32 %v13204, %v13205
        %v13207 = vsel %vm10072, %v12918, 0.0
        %v13208 = vadd.f32 %v13206, %v13207
        %v13209 = vsel %vm10072, %v12923, 0.0
        %v13210 = vadd.f32 %v13208, %v13209
        %v13211 = vsel %vm10072, %v12928, 0.0
        %v13212 = vadd.f32 %v13210, %v13211
        %v13213 = vsel %vm10072, %v12933, 0.0
        %v13214 = vadd.f32 %v13212, %v13213
        %v13215 = vsel %vm10072, %v12938, 0.0
        %v13216 = vadd.f32 %v13214, %v13215
        %v13217 = vsel %vm10072, %v12943, 0.0
        %v13218 = vadd.f32 %v13216, %v13217
        %v13219 = vsel %vm10072, %v12948, 0.0
        %v13220 = vadd.f32 %v13218, %v13219
        %v13221 = vsel %vm10072, %v12953, 0.0
        %v13222 = vadd.f32 %v13220, %v13221
        %v13223 = vsel %vm10072, %v12958, 0.0
        %v13224 = vadd.f32 %v13222, %v13223
        %v13225 = vsel %vm10072, %v12963, 0.0
        %v13226 = vadd.f32 %v13224, %v13225
        %v13227 = vsel %vm10072, %v12968, 0.0
        %v13228 = vadd.f32 %v13226, %v13227
        %v13229 = vsel %vm10072, %v12973, 0.0
        %v13230 = vadd.f32 %v13228, %v13229
        %v13231 = vrot.slane %v13230, 4
        %v13232 = vadd.f32 %v13230, %v13231
        %v13233 = vrot.slane %v13232, 2
        %v13234 = vadd.f32 %v13232, %v13233
        %v13235 = vrot.slane %v13234, 1
        %v13236 = vadd.f32 %v13234, %v13235
        %vm13237 = vcmask 57344
        %13238 = vst.msk [vmem:[%s200] sm:$0x1] %vm13237, %v13236
        %v13239 = vmul.f32 %v12338, %v12338
        %v13240 = vmul.f32 %v12343, %v12343
        %v13241 = vmul.f32 %v12348, %v12348
        %v13242 = vmul.f32 %v12353, %v12353
        %v13243 = vmul.f32 %v12358, %v12358
        %v13244 = vmul.f32 %v12363, %v12363
        %v13245 = vmul.f32 %v12368, %v12368
        %v13246 = vmul.f32 %v12373, %v12373
        %v13247 = vmul.f32 %v12378, %v12378
        %v13248 = vmul.f32 %v12383, %v12383
        %v13249 = vmul.f32 %v12388, %v12388
        %v13250 = vmul.f32 %v12393, %v12393
        %v13251 = vmul.f32 %v12398, %v12398
        %v13252 = vmul.f32 %v12403, %v12403
        %v13253 = vmul.f32 %v12408, %v12408
        %v13254 = vmul.f32 %v12413, %v12413
        %v13255 = vmul.f32 %v12418, %v12418
        %v13256 = vmul.f32 %v12423, %v12423
        %v13257 = vmul.f32 %v12428, %v12428
        %v13258 = vmul.f32 %v12433, %v12433
        %v13259 = vmul.f32 %v12438, %v12438
        %v13260 = vmul.f32 %v12443, %v12443
        %v13261 = vmul.f32 %v12448, %v12448
        %v13262 = vmul.f32 %v12453, %v12453
        %v13263 = vmul.f32 %v12458, %v12458
        %v13264 = vmul.f32 %v12463, %v12463
        %v13265 = vmul.f32 %v12468, %v12468
        %v13266 = vmul.f32 %v12473, %v12473
        %v13267 = vmul.f32 %v12478, %v12478
        %v13268 = vmul.f32 %v12483, %v12483
        %v13269 = vmul.f32 %v12488, %v12488
        %v13270 = vmul.f32 %v12493, %v12493
        %v13271 = vmul.f32 %v12498, %v12498
        %v13272 = vmul.f32 %v12503, %v12503
        %v13273 = vmul.f32 %v12508, %v12508
        %v13274 = vmul.f32 %v12513, %v12513
        %v13275 = vmul.f32 %v12518, %v12518
        %v13276 = vmul.f32 %v12523, %v12523
        %v13277 = vmul.f32 %v12528, %v12528
        %v13278 = vmul.f32 %v12533, %v12533
        %v13279 = vmul.f32 %v12538, %v12538
        %v13280 = vmul.f32 %v12543, %v12543
        %v13281 = vmul.f32 %v12548, %v12548
        %v13282 = vmul.f32 %v12553, %v12553
        %v13283 = vmul.f32 %v12558, %v12558
        %v13284 = vmul.f32 %v12563, %v12563
        %v13285 = vmul.f32 %v12568, %v12568
        %v13286 = vmul.f32 %v12573, %v12573
        %v13287 = vmul.f32 %v12578, %v12578
        %v13288 = vmul.f32 %v12583, %v12583
        %v13289 = vmul.f32 %v12588, %v12588
        %v13290 = vmul.f32 %v12593, %v12593
        %v13291 = vmul.f32 %v12598, %v12598
        %v13292 = vmul.f32 %v12603, %v12603
        %v13293 = vmul.f32 %v12608, %v12608
        %v13294 = vmul.f32 %v12613, %v12613
        %v13295 = vmul.f32 %v12618, %v12618
        %v13296 = vmul.f32 %v12623, %v12623
        %v13297 = vmul.f32 %v12628, %v12628
        %v13298 = vmul.f32 %v12633, %v12633
        %v13299 = vmul.f32 %v12638, %v12638
        %v13300 = vmul.f32 %v12643, %v12643
        %v13301 = vmul.f32 %v12648, %v12648
        %v13302 = vmul.f32 %v12653, %v12653
        %v13303 = vmul.f32 %v12658, %v12658
        %v13304 = vmul.f32 %v12663, %v12663
        %v13305 = vmul.f32 %v12668, %v12668
        %v13306 = vmul.f32 %v12673, %v12673
        %v13307 = vmul.f32 %v12678, %v12678
        %v13308 = vmul.f32 %v12683, %v12683
        %v13309 = vmul.f32 %v12688, %v12688
        %v13310 = vmul.f32 %v12693, %v12693
        %v13311 = vmul.f32 %v12698, %v12698
        %v13312 = vmul.f32 %v12703, %v12703
        %v13313 = vmul.f32 %v12708, %v12708
        %v13314 = vmul.f32 %v12713, %v12713
        %v13315 = vmul.f32 %v12718, %v12718
        %v13316 = vmul.f32 %v12723, %v12723
        %v13317 = vmul.f32 %v12728, %v12728
        %v13318 = vmul.f32 %v12733, %v12733
        %v13319 = vmul.f32 %v12738, %v12738
        %v13320 = vmul.f32 %v12743, %v12743
        %v13321 = vmul.f32 %v12748, %v12748
        %v13322 = vmul.f32 %v12753, %v12753
        %v13323 = vmul.f32 %v12758, %v12758
        %v13324 = vmul.f32 %v12763, %v12763
        %v13325 = vmul.f32 %v12768, %v12768
        %v13326 = vmul.f32 %v12773, %v12773
        %v13327 = vmul.f32 %v12778, %v12778
        %v13328 = vmul.f32 %v12783, %v12783
        %v13329 = vmul.f32 %v12788, %v12788
        %v13330 = vmul.f32 %v12793, %v12793
        %v13331 = vmul.f32 %v12798, %v12798
        %v13332 = vmul.f32 %v12803, %v12803
        %v13333 = vmul.f32 %v12808, %v12808
        %v13334 = vmul.f32 %v12813, %v12813
        %v13335 = vmul.f32 %v12818, %v12818
        %v13336 = vmul.f32 %v12823, %v12823
        %v13337 = vmul.f32 %v12828, %v12828
        %v13338 = vmul.f32 %v12833, %v12833
        %v13339 = vmul.f32 %v12838, %v12838
        %v13340 = vmul.f32 %v12843, %v12843
        %v13341 = vmul.f32 %v12848, %v12848
        %v13342 = vmul.f32 %v12853, %v12853
        %v13343 = vmul.f32 %v12858, %v12858
        %v13344 = vmul.f32 %v12863, %v12863
        %v13345 = vmul.f32 %v12868, %v12868
        %v13346 = vmul.f32 %v12873, %v12873
        %v13347 = vmul.f32 %v12878, %v12878
        %v13348 = vmul.f32 %v12883, %v12883
        %v13349 = vmul.f32 %v12888, %v12888
        %v13350 = vmul.f32 %v12893, %v12893
        %v13351 = vmul.f32 %v12898, %v12898
        %v13352 = vmul.f32 %v12903, %v12903
        %v13353 = vmul.f32 %v12908, %v12908
        %v13354 = vmul.f32 %v12913, %v12913
        %v13355 = vmul.f32 %v12918, %v12918
        %v13356 = vmul.f32 %v12923, %v12923
        %v13357 = vmul.f32 %v12928, %v12928
        %v13358 = vmul.f32 %v12933, %v12933
        %v13359 = vmul.f32 %v12938, %v12938
        %v13360 = vmul.f32 %v12943, %v12943
        %v13361 = vmul.f32 %v12948, %v12948
        %v13362 = vmul.f32 %v12953, %v12953
        %v13363 = vmul.f32 %v12958, %v12958
        %v13364 = vmul.f32 %v12963, %v12963
        %v13365 = vmul.f32 %v12968, %v12968
        %v13366 = vmul.f32 %v12973, %v12973
        %v13367 = vsel %vm10072, %v13239, 0.0
        %v13368 = vsel %vm10072, %v13240, 0.0
        %v13369 = vadd.f32 %v13367, %v13368
        %v13370 = vsel %vm10072, %v13241, 0.0
        %v13371 = vadd.f32 %v13369, %v13370
        %v13372 = vsel %vm10072, %v13242, 0.0
        %v13373 = vadd.f32 %v13371, %v13372
        %v13374 = vsel %vm10072, %v13243, 0.0
        %v13375 = vadd.f32 %v13373, %v13374
        %v13376 = vsel %vm10072, %v13244, 0.0
        %v13377 = vadd.f32 %v13375, %v13376
        %v13378 = vsel %vm10072, %v13245, 0.0
        %v13379 = vadd.f32 %v13377, %v13378
        %v13380 = vsel %vm10072, %v13246, 0.0
        %v13381 = vadd.f32 %v13379, %v13380
        %v13382 = vsel %vm10072, %v13247, 0.0
        %v13383 = vadd.f32 %v13381, %v13382
        %v13384 = vsel %vm10072, %v13248, 0.0
        %v13385 = vadd.f32 %v13383, %v13384
        %v13386 = vsel %vm10072, %v13249, 0.0
        %v13387 = vadd.f32 %v13385, %v13386
        %v13388 = vsel %vm10072, %v13250, 0.0
        %v13389 = vadd.f32 %v13387, %v13388
        %v13390 = vsel %vm10072, %v13251, 0.0
        %v13391 = vadd.f32 %v13389, %v13390
        %v13392 = vsel %vm10072, %v13252, 0.0
        %v13393 = vadd.f32 %v13391, %v13392
        %v13394 = vsel %vm10072, %v13253, 0.0
        %v13395 = vadd.f32 %v13393, %v13394
        %v13396 = vsel %vm10072, %v13254, 0.0
        %v13397 = vadd.f32 %v13395, %v13396
        %v13398 = vsel %vm10072, %v13255, 0.0
        %v13399 = vadd.f32 %v13397, %v13398
        %v13400 = vsel %vm10072, %v13256, 0.0
        %v13401 = vadd.f32 %v13399, %v13400
        %v13402 = vsel %vm10072, %v13257, 0.0
        %v13403 = vadd.f32 %v13401, %v13402
        %v13404 = vsel %vm10072, %v13258, 0.0
        %v13405 = vadd.f32 %v13403, %v13404
        %v13406 = vsel %vm10072, %v13259, 0.0
        %v13407 = vadd.f32 %v13405, %v13406
        %v13408 = vsel %vm10072, %v13260, 0.0
        %v13409 = vadd.f32 %v13407, %v13408
        %v13410 = vsel %vm10072, %v13261, 0.0
        %v13411 = vadd.f32 %v13409, %v13410
        %v13412 = vsel %vm10072, %v13262, 0.0
        %v13413 = vadd.f32 %v13411, %v13412
        %v13414 = vsel %vm10072, %v13263, 0.0
        %v13415 = vadd.f32 %v13413, %v13414
        %v13416 = vsel %vm10072, %v13264, 0.0
        %v13417 = vadd.f32 %v13415, %v13416
        %v13418 = vsel %vm10072, %v13265, 0.0
        %v13419 = vadd.f32 %v13417, %v13418
        %v13420 = vsel %vm10072, %v13266, 0.0
        %v13421 = vadd.f32 %v13419, %v13420
        %v13422 = vsel %vm10072, %v13267, 0.0
        %v13423 = vadd.f32 %v13421, %v13422
        %v13424 = vsel %vm10072, %v13268, 0.0
        %v13425 = vadd.f32 %v13423, %v13424
        %v13426 = vsel %vm10072, %v13269, 0.0
        %v13427 = vadd.f32 %v13425, %v13426
        %v13428 = vsel %vm10072, %v13270, 0.0
        %v13429 = vadd.f32 %v13427, %v13428
        %v13430 = vsel %vm10072, %v13271, 0.0
        %v13431 = vadd.f32 %v13429, %v13430
        %v13432 = vsel %vm10072, %v13272, 0.0
        %v13433 = vadd.f32 %v13431, %v13432
        %v13434 = vsel %vm10072, %v13273, 0.0
        %v13435 = vadd.f32 %v13433, %v13434
        %v13436 = vsel %vm10072, %v13274, 0.0
        %v13437 = vadd.f32 %v13435, %v13436
        %v13438 = vsel %vm10072, %v13275, 0.0
        %v13439 = vadd.f32 %v13437, %v13438
        %v13440 = vsel %vm10072, %v13276, 0.0
        %v13441 = vadd.f32 %v13439, %v13440
        %v13442 = vsel %vm10072, %v13277, 0.0
        %v13443 = vadd.f32 %v13441, %v13442
        %v13444 = vsel %vm10072, %v13278, 0.0
        %v13445 = vadd.f32 %v13443, %v13444
        %v13446 = vsel %vm10072, %v13279, 0.0
        %v13447 = vadd.f32 %v13445, %v13446
        %v13448 = vsel %vm10072, %v13280, 0.0
        %v13449 = vadd.f32 %v13447, %v13448
        %v13450 = vsel %vm10072, %v13281, 0.0
        %v13451 = vadd.f32 %v13449, %v13450
        %v13452 = vsel %vm10072, %v13282, 0.0
        %v13453 = vadd.f32 %v13451, %v13452
        %v13454 = vsel %vm10072, %v13283, 0.0
        %v13455 = vadd.f32 %v13453, %v13454
        %v13456 = vsel %vm10072, %v13284, 0.0
        %v13457 = vadd.f32 %v13455, %v13456
        %v13458 = vsel %vm10072, %v13285, 0.0
        %v13459 = vadd.f32 %v13457, %v13458
        %v13460 = vsel %vm10072, %v13286, 0.0
        %v13461 = vadd.f32 %v13459, %v13460
        %v13462 = vsel %vm10072, %v13287, 0.0
        %v13463 = vadd.f32 %v13461, %v13462
        %v13464 = vsel %vm10072, %v13288, 0.0
        %v13465 = vadd.f32 %v13463, %v13464
        %v13466 = vsel %vm10072, %v13289, 0.0
        %v13467 = vadd.f32 %v13465, %v13466
        %v13468 = vsel %vm10072, %v13290, 0.0
        %v13469 = vadd.f32 %v13467, %v13468
        %v13470 = vsel %vm10072, %v13291, 0.0
        %v13471 = vadd.f32 %v13469, %v13470
        %v13472 = vsel %vm10072, %v13292, 0.0
        %v13473 = vadd.f32 %v13471, %v13472
        %v13474 = vsel %vm10072, %v13293, 0.0
        %v13475 = vadd.f32 %v13473, %v13474
        %v13476 = vsel %vm10072, %v13294, 0.0
        %v13477 = vadd.f32 %v13475, %v13476
        %v13478 = vsel %vm10072, %v13295, 0.0
        %v13479 = vadd.f32 %v13477, %v13478
        %v13480 = vsel %vm10072, %v13296, 0.0
        %v13481 = vadd.f32 %v13479, %v13480
        %v13482 = vsel %vm10072, %v13297, 0.0
        %v13483 = vadd.f32 %v13481, %v13482
        %v13484 = vsel %vm10072, %v13298, 0.0
        %v13485 = vadd.f32 %v13483, %v13484
        %v13486 = vsel %vm10072, %v13299, 0.0
        %v13487 = vadd.f32 %v13485, %v13486
        %v13488 = vsel %vm10072, %v13300, 0.0
        %v13489 = vadd.f32 %v13487, %v13488
        %v13490 = vsel %vm10072, %v13301, 0.0
        %v13491 = vadd.f32 %v13489, %v13490
        %v13492 = vsel %vm10072, %v13302, 0.0
        %v13493 = vadd.f32 %v13491, %v13492
        %v13494 = vsel %vm10072, %v13303, 0.0
        %v13495 = vadd.f32 %v13493, %v13494
        %v13496 = vsel %vm10072, %v13304, 0.0
        %v13497 = vadd.f32 %v13495, %v13496
        %v13498 = vsel %vm10072, %v13305, 0.0
        %v13499 = vadd.f32 %v13497, %v13498
        %v13500 = vsel %vm10072, %v13306, 0.0
        %v13501 = vadd.f32 %v13499, %v13500
        %v13502 = vsel %vm10072, %v13307, 0.0
        %v13503 = vadd.f32 %v13501, %v13502
        %v13504 = vsel %vm10072, %v13308, 0.0
        %v13505 = vadd.f32 %v13503, %v13504
        %v13506 = vsel %vm10072, %v13309, 0.0
        %v13507 = vadd.f32 %v13505, %v13506
        %v13508 = vsel %vm10072, %v13310, 0.0
        %v13509 = vadd.f32 %v13507, %v13508
        %v13510 = vsel %vm10072, %v13311, 0.0
        %v13511 = vadd.f32 %v13509, %v13510
        %v13512 = vsel %vm10072, %v13312, 0.0
        %v13513 = vadd.f32 %v13511, %v13512
        %v13514 = vsel %vm10072, %v13313, 0.0
        %v13515 = vadd.f32 %v13513, %v13514
        %v13516 = vsel %vm10072, %v13314, 0.0
        %v13517 = vadd.f32 %v13515, %v13516
        %v13518 = vsel %vm10072, %v13315, 0.0
        %v13519 = vadd.f32 %v13517, %v13518
        %v13520 = vsel %vm10072, %v13316, 0.0
        %v13521 = vadd.f32 %v13519, %v13520
        %v13522 = vsel %vm10072, %v13317, 0.0
        %v13523 = vadd.f32 %v13521, %v13522
        %v13524 = vsel %vm10072, %v13318, 0.0
        %v13525 = vadd.f32 %v13523, %v13524
        %v13526 = vsel %vm10072, %v13319, 0.0
        %v13527 = vadd.f32 %v13525, %v13526
        %v13528 = vsel %vm10072, %v13320, 0.0
        %v13529 = vadd.f32 %v13527, %v13528
        %v13530 = vsel %vm10072, %v13321, 0.0
        %v13531 = vadd.f32 %v13529, %v13530
        %v13532 = vsel %vm10072, %v13322, 0.0
        %v13533 = vadd.f32 %v13531, %v13532
        %v13534 = vsel %vm10072, %v13323, 0.0
        %v13535 = vadd.f32 %v13533, %v13534
        %v13536 = vsel %vm10072, %v13324, 0.0
        %v13537 = vadd.f32 %v13535, %v13536
        %v13538 = vsel %vm10072, %v13325, 0.0
        %v13539 = vadd.f32 %v13537, %v13538
        %v13540 = vsel %vm10072, %v13326, 0.0
        %v13541 = vadd.f32 %v13539, %v13540
        %v13542 = vsel %vm10072, %v13327, 0.0
        %v13543 = vadd.f32 %v13541, %v13542
        %v13544 = vsel %vm10072, %v13328, 0.0
        %v13545 = vadd.f32 %v13543, %v13544
        %v13546 = vsel %vm10072, %v13329, 0.0
        %v13547 = vadd.f32 %v13545, %v13546
        %v13548 = vsel %vm10072, %v13330, 0.0
        %v13549 = vadd.f32 %v13547, %v13548
        %v13550 = vsel %vm10072, %v13331, 0.0
        %v13551 = vadd.f32 %v13549, %v13550
        %v13552 = vsel %vm10072, %v13332, 0.0
        %v13553 = vadd.f32 %v13551, %v13552
        %v13554 = vsel %vm10072, %v13333, 0.0
        %v13555 = vadd.f32 %v13553, %v13554
        %v13556 = vsel %vm10072, %v13334, 0.0
        %v13557 = vadd.f32 %v13555, %v13556
        %v13558 = vsel %vm10072, %v13335, 0.0
        %v13559 = vadd.f32 %v13557, %v13558
        %v13560 = vsel %vm10072, %v13336, 0.0
        %v13561 = vadd.f32 %v13559, %v13560
        %v13562 = vsel %vm10072, %v13337, 0.0
        %v13563 = vadd.f32 %v13561, %v13562
        %v13564 = vsel %vm10072, %v13338, 0.0
        %v13565 = vadd.f32 %v13563, %v13564
        %v13566 = vsel %vm10072, %v13339, 0.0
        %v13567 = vadd.f32 %v13565, %v13566
        %v13568 = vsel %vm10072, %v13340, 0.0
        %v13569 = vadd.f32 %v13567, %v13568
        %v13570 = vsel %vm10072, %v13341, 0.0
        %v13571 = vadd.f32 %v13569, %v13570
        %v13572 = vsel %vm10072, %v13342, 0.0
        %v13573 = vadd.f32 %v13571, %v13572
        %v13574 = vsel %vm10072, %v13343, 0.0
        %v13575 = vadd.f32 %v13573, %v13574
        %v13576 = vsel %vm10072, %v13344, 0.0
        %v13577 = vadd.f32 %v13575, %v13576
        %v13578 = vsel %vm10072, %v13345, 0.0
        %v13579 = vadd.f32 %v13577, %v13578
        %v13580 = vsel %vm10072, %v13346, 0.0
        %v13581 = vadd.f32 %v13579, %v13580
        %v13582 = vsel %vm10072, %v13347, 0.0
        %v13583 = vadd.f32 %v13581, %v13582
        %v13584 = vsel %vm10072, %v13348, 0.0
        %v13585 = vadd.f32 %v13583, %v13584
        %v13586 = vsel %vm10072, %v13349, 0.0
        %v13587 = vadd.f32 %v13585, %v13586
        %v13588 = vsel %vm10072, %v13350, 0.0
        %v13589 = vadd.f32 %v13587, %v13588
        %v13590 = vsel %vm10072, %v13351, 0.0
        %v13591 = vadd.f32 %v13589, %v13590
        %v13592 = vsel %vm10072, %v13352, 0.0
        %v13593 = vadd.f32 %v13591, %v13592
        %v13594 = vsel %vm10072, %v13353, 0.0
        %v13595 = vadd.f32 %v13593, %v13594
        %v13596 = vsel %vm10072, %v13354, 0.0
        %v13597 = vadd.f32 %v13595, %v13596
        %v13598 = vsel %vm10072, %v13355, 0.0
        %v13599 = vadd.f32 %v13597, %v13598
        %v13600 = vsel %vm10072, %v13356, 0.0
        %v13601 = vadd.f32 %v13599, %v13600
        %v13602 = vsel %vm10072, %v13357, 0.0
        %v13603 = vadd.f32 %v13601, %v13602
        %v13604 = vsel %vm10072, %v13358, 0.0
        %v13605 = vadd.f32 %v13603, %v13604
        %v13606 = vsel %vm10072, %v13359, 0.0
        %v13607 = vadd.f32 %v13605, %v13606
        %v13608 = vsel %vm10072, %v13360, 0.0
        %v13609 = vadd.f32 %v13607, %v13608
        %v13610 = vsel %vm10072, %v13361, 0.0
        %v13611 = vadd.f32 %v13609, %v13610
        %v13612 = vsel %vm10072, %v13362, 0.0
        %v13613 = vadd.f32 %v13611, %v13612
        %v13614 = vsel %vm10072, %v13363, 0.0
        %v13615 = vadd.f32 %v13613, %v13614
        %v13616 = vsel %vm10072, %v13364, 0.0
        %v13617 = vadd.f32 %v13615, %v13616
        %v13618 = vsel %vm10072, %v13365, 0.0
        %v13619 = vadd.f32 %v13617, %v13618
        %v13620 = vsel %vm10072, %v13366, 0.0
        %v13621 = vadd.f32 %v13619, %v13620
        %v13622 = vrot.slane %v13621, 4
        %v13623 = vadd.f32 %v13621, %v13622
        %v13624 = vrot.slane %v13623, 2
        %v13625 = vadd.f32 %v13623, %v13624
        %v13626 = vrot.slane %v13625, 1
        %v13627 = vadd.f32 %v13625, %v13626
        %13628 = vst.msk [vmem:[%s206] sm:$0x1] %vm13237, %v13627
        %13629 = vxpose.xlu0.b32.start [1/16] %v12338, 128
        %13630 = vxpose.xlu0.b32.cont [2/16] %v12343, 128
        %13631 = vxpose.xlu0.b32.cont [3/16] %v12348, 128
        %13632 = vxpose.xlu0.b32.cont [4/16] %v12353, 128
        %13633 = vxpose.xlu0.b32.cont [5/16] %v12358, 128
        %13634 = vxpose.xlu0.b32.cont [6/16] %v12363, 128
        %13635 = vxpose.xlu0.b32.cont [7/16] %v12368, 128
        %13636 = vxpose.xlu0.b32.cont [8/16] %v12373, 128
        %13637 = vxpose.xlu0.b32.cont [9/16] %v12378, 128
        %13638 = vxpose.xlu0.b32.cont [10/16] %v12383, 128
        %13639 = vxpose.xlu0.b32.cont [11/16] %v12388, 128
        %13640 = vxpose.xlu0.b32.cont [12/16] %v12393, 128
        %13641 = vxpose.xlu0.b32.cont [13/16] %v12398, 128
        %13642 = vxpose.xlu0.b32.cont [14/16] %v12403, 128
        %13643 = vxpose.xlu0.b32.cont [15/16] %v12408, 128
        %13644 = vxpose.xlu0.b32.end [16/16] %v12413, 128
        %v13645 = vpop.trf.xlu0
        %v13646 = vpop.trf.xlu0
        %v13647 = vpop.trf.xlu0
        %v13648 = vpop.trf.xlu0
        %v13649 = vpop.trf.xlu0
        %v13650 = vpop.trf.xlu0
        %v13651 = vpop.trf.xlu0
        %v13652 = vpop.trf.xlu0
        %v13653 = vpop.trf.xlu0
        %v13654 = vpop.trf.xlu0
        %v13655 = vpop.trf.xlu0
        %v13656 = vpop.trf.xlu0
        %v13657 = vpop.trf.xlu0
        %v13658 = vpop.trf.xlu0
        %v13659 = vpop.trf.xlu0
        %v13660 = vpop.trf.xlu0
        %13661 = vxpose.xlu0.b32.start [1/16] %v12418, 128
        %13662 = vxpose.xlu0.b32.cont [2/16] %v12423, 128
        %13663 = vxpose.xlu0.b32.cont [3/16] %v12428, 128
        %13664 = vxpose.xlu0.b32.cont [4/16] %v12433, 128
        %13665 = vxpose.xlu0.b32.cont [5/16] %v12438, 128
        %13666 = vxpose.xlu0.b32.cont [6/16] %v12443, 128
        %13667 = vxpose.xlu0.b32.cont [7/16] %v12448, 128
        %13668 = vxpose.xlu0.b32.cont [8/16] %v12453, 128
        %13669 = vxpose.xlu0.b32.cont [9/16] %v12458, 128
        %13670 = vxpose.xlu0.b32.cont [10/16] %v12463, 128
        %13671 = vxpose.xlu0.b32.cont [11/16] %v12468, 128
        %13672 = vxpose.xlu0.b32.cont [12/16] %v12473, 128
        %13673 = vxpose.xlu0.b32.cont [13/16] %v12478, 128
        %13674 = vxpose.xlu0.b32.cont [14/16] %v12483, 128
        %13675 = vxpose.xlu0.b32.cont [15/16] %v12488, 128
        %13676 = vxpose.xlu0.b32.end [16/16] %v12493, 128
        %v13677 = vpop.trf.xlu0
        %v13678 = vpop.trf.xlu0
        %v13679 = vpop.trf.xlu0
        %v13680 = vpop.trf.xlu0
        %v13681 = vpop.trf.xlu0
        %v13682 = vpop.trf.xlu0
        %v13683 = vpop.trf.xlu0
        %v13684 = vpop.trf.xlu0
        %v13685 = vpop.trf.xlu0
        %v13686 = vpop.trf.xlu0
        %v13687 = vpop.trf.xlu0
        %v13688 = vpop.trf.xlu0
        %v13689 = vpop.trf.xlu0
        %v13690 = vpop.trf.xlu0
        %v13691 = vpop.trf.xlu0
        %v13692 = vpop.trf.xlu0
        %13693 = vxpose.xlu0.b32.start [1/16] %v12498, 128
        %13694 = vxpose.xlu0.b32.cont [2/16] %v12503, 128
        %13695 = vxpose.xlu0.b32.cont [3/16] %v12508, 128
        %13696 = vxpose.xlu0.b32.cont [4/16] %v12513, 128
        %13697 = vxpose.xlu0.b32.cont [5/16] %v12518, 128
        %13698 = vxpose.xlu0.b32.cont [6/16] %v12523, 128
        %13699 = vxpose.xlu0.b32.cont [7/16] %v12528, 128
        %13700 = vxpose.xlu0.b32.cont [8/16] %v12533, 128
        %13701 = vxpose.xlu0.b32.cont [9/16] %v12538, 128
        %13702 = vxpose.xlu0.b32.cont [10/16] %v12543, 128
        %13703 = vxpose.xlu0.b32.cont [11/16] %v12548, 128
        %13704 = vxpose.xlu0.b32.cont [12/16] %v12553, 128
        %13705 = vxpose.xlu0.b32.cont [13/16] %v12558, 128
        %13706 = vxpose.xlu0.b32.cont [14/16] %v12563, 128
        %13707 = vxpose.xlu0.b32.cont [15/16] %v12568, 128
        %13708 = vxpose.xlu0.b32.end [16/16] %v12573, 128
        %v13709 = vpop.trf.xlu0
        %v13710 = vpop.trf.xlu0
        %v13711 = vpop.trf.xlu0
        %v13712 = vpop.trf.xlu0
        %v13713 = vpop.trf.xlu0
        %v13714 = vpop.trf.xlu0
        %v13715 = vpop.trf.xlu0
        %v13716 = vpop.trf.xlu0
        %v13717 = vpop.trf.xlu0
        %v13718 = vpop.trf.xlu0
        %v13719 = vpop.trf.xlu0
        %v13720 = vpop.trf.xlu0
        %v13721 = vpop.trf.xlu0
        %v13722 = vpop.trf.xlu0
        %v13723 = vpop.trf.xlu0
        %v13724 = vpop.trf.xlu0
        %13725 = vxpose.xlu0.b32.start [1/16] %v12578, 128
        %13726 = vxpose.xlu0.b32.cont [2/16] %v12583, 128
        %13727 = vxpose.xlu0.b32.cont [3/16] %v12588, 128
        %13728 = vxpose.xlu0.b32.cont [4/16] %v12593, 128
        %13729 = vxpose.xlu0.b32.cont [5/16] %v12598, 128
        %13730 = vxpose.xlu0.b32.cont [6/16] %v12603, 128
        %13731 = vxpose.xlu0.b32.cont [7/16] %v12608, 128
        %13732 = vxpose.xlu0.b32.cont [8/16] %v12613, 128
        %13733 = vxpose.xlu0.b32.cont [9/16] %v12618, 128
        %13734 = vxpose.xlu0.b32.cont [10/16] %v12623, 128
        %13735 = vxpose.xlu0.b32.cont [11/16] %v12628, 128
        %13736 = vxpose.xlu0.b32.cont [12/16] %v12633, 128
        %13737 = vxpose.xlu0.b32.cont [13/16] %v12638, 128
        %13738 = vxpose.xlu0.b32.cont [14/16] %v12643, 128
        %13739 = vxpose.xlu0.b32.cont [15/16] %v12648, 128
        %13740 = vxpose.xlu0.b32.end [16/16] %v12653, 128
        %v13741 = vpop.trf.xlu0
        %v13742 = vpop.trf.xlu0
        %v13743 = vpop.trf.xlu0
        %v13744 = vpop.trf.xlu0
        %v13745 = vpop.trf.xlu0
        %v13746 = vpop.trf.xlu0
        %v13747 = vpop.trf.xlu0
        %v13748 = vpop.trf.xlu0
        %v13749 = vpop.trf.xlu0
        %v13750 = vpop.trf.xlu0
        %v13751 = vpop.trf.xlu0
        %v13752 = vpop.trf.xlu0
        %v13753 = vpop.trf.xlu0
        %v13754 = vpop.trf.xlu0
        %v13755 = vpop.trf.xlu0
        %v13756 = vpop.trf.xlu0
        %13757 = vxpose.xlu0.b32.start [1/16] %v12658, 128
        %13758 = vxpose.xlu0.b32.cont [2/16] %v12663, 128
        %13759 = vxpose.xlu0.b32.cont [3/16] %v12668, 128
        %13760 = vxpose.xlu0.b32.cont [4/16] %v12673, 128
        %13761 = vxpose.xlu0.b32.cont [5/16] %v12678, 128
        %13762 = vxpose.xlu0.b32.cont [6/16] %v12683, 128
        %13763 = vxpose.xlu0.b32.cont [7/16] %v12688, 128
        %13764 = vxpose.xlu0.b32.cont [8/16] %v12693, 128
        %13765 = vxpose.xlu0.b32.cont [9/16] %v12698, 128
        %13766 = vxpose.xlu0.b32.cont [10/16] %v12703, 128
        %13767 = vxpose.xlu0.b32.cont [11/16] %v12708, 128
        %13768 = vxpose.xlu0.b32.cont [12/16] %v12713, 128
        %13769 = vxpose.xlu0.b32.cont [13/16] %v12718, 128
        %13770 = vxpose.xlu0.b32.cont [14/16] %v12723, 128
        %13771 = vxpose.xlu0.b32.cont [15/16] %v12728, 128
        %13772 = vxpose.xlu0.b32.end [16/16] %v12733, 128
        %v13773 = vpop.trf.xlu0
        %v13774 = vpop.trf.xlu0
        %v13775 = vpop.trf.xlu0
        %v13776 = vpop.trf.xlu0
        %v13777 = vpop.trf.xlu0
        %v13778 = vpop.trf.xlu0
        %v13779 = vpop.trf.xlu0
        %v13780 = vpop.trf.xlu0
        %v13781 = vpop.trf.xlu0
        %v13782 = vpop.trf.xlu0
        %v13783 = vpop.trf.xlu0
        %v13784 = vpop.trf.xlu0
        %v13785 = vpop.trf.xlu0
        %v13786 = vpop.trf.xlu0
        %v13787 = vpop.trf.xlu0
        %v13788 = vpop.trf.xlu0
        %13789 = vxpose.xlu0.b32.start [1/16] %v12738, 128
        %13790 = vxpose.xlu0.b32.cont [2/16] %v12743, 128
        %13791 = vxpose.xlu0.b32.cont [3/16] %v12748, 128
        %13792 = vxpose.xlu0.b32.cont [4/16] %v12753, 128
        %13793 = vxpose.xlu0.b32.cont [5/16] %v12758, 128
        %13794 = vxpose.xlu0.b32.cont [6/16] %v12763, 128
        %13795 = vxpose.xlu0.b32.cont [7/16] %v12768, 128
        %13796 = vxpose.xlu0.b32.cont [8/16] %v12773, 128
        %13797 = vxpose.xlu0.b32.cont [9/16] %v12778, 128
        %13798 = vxpose.xlu0.b32.cont [10/16] %v12783, 128
        %13799 = vxpose.xlu0.b32.cont [11/16] %v12788, 128
        %13800 = vxpose.xlu0.b32.cont [12/16] %v12793, 128
        %13801 = vxpose.xlu0.b32.cont [13/16] %v12798, 128
        %13802 = vxpose.xlu0.b32.cont [14/16] %v12803, 128
        %13803 = vxpose.xlu0.b32.cont [15/16] %v12808, 128
        %13804 = vxpose.xlu0.b32.end [16/16] %v12813, 128
        %v13805 = vpop.trf.xlu0
        %v13806 = vpop.trf.xlu0
        %v13807 = vpop.trf.xlu0
        %v13808 = vpop.trf.xlu0
        %v13809 = vpop.trf.xlu0
        %v13810 = vpop.trf.xlu0
        %v13811 = vpop.trf.xlu0
        %v13812 = vpop.trf.xlu0
        %v13813 = vpop.trf.xlu0
        %v13814 = vpop.trf.xlu0
        %v13815 = vpop.trf.xlu0
        %v13816 = vpop.trf.xlu0
        %v13817 = vpop.trf.xlu0
        %v13818 = vpop.trf.xlu0
        %v13819 = vpop.trf.xlu0
        %v13820 = vpop.trf.xlu0
        %13821 = vxpose.xlu0.b32.start [1/16] %v12818, 128
        %13822 = vxpose.xlu0.b32.cont [2/16] %v12823, 128
        %13823 = vxpose.xlu0.b32.cont [3/16] %v12828, 128
        %13824 = vxpose.xlu0.b32.cont [4/16] %v12833, 128
        %13825 = vxpose.xlu0.b32.cont [5/16] %v12838, 128
        %13826 = vxpose.xlu0.b32.cont [6/16] %v12843, 128
        %13827 = vxpose.xlu0.b32.cont [7/16] %v12848, 128
        %13828 = vxpose.xlu0.b32.cont [8/16] %v12853, 128
        %13829 = vxpose.xlu0.b32.cont [9/16] %v12858, 128
        %13830 = vxpose.xlu0.b32.cont [10/16] %v12863, 128
        %13831 = vxpose.xlu0.b32.cont [11/16] %v12868, 128
        %13832 = vxpose.xlu0.b32.cont [12/16] %v12873, 128
        %13833 = vxpose.xlu0.b32.cont [13/16] %v12878, 128
        %13834 = vxpose.xlu0.b32.cont [14/16] %v12883, 128
        %13835 = vxpose.xlu0.b32.cont [15/16] %v12888, 128
        %13836 = vxpose.xlu0.b32.end [16/16] %v12893, 128
        %v13837 = vpop.trf.xlu0
        %v13838 = vpop.trf.xlu0
        %v13839 = vpop.trf.xlu0
        %v13840 = vpop.trf.xlu0
        %v13841 = vpop.trf.xlu0
        %v13842 = vpop.trf.xlu0
        %v13843 = vpop.trf.xlu0
        %v13844 = vpop.trf.xlu0
        %v13845 = vpop.trf.xlu0
        %v13846 = vpop.trf.xlu0
        %v13847 = vpop.trf.xlu0
        %v13848 = vpop.trf.xlu0
        %v13849 = vpop.trf.xlu0
        %v13850 = vpop.trf.xlu0
        %v13851 = vpop.trf.xlu0
        %v13852 = vpop.trf.xlu0
        %13853 = vxpose.xlu0.b32.start [1/16] %v12898, 128
        %13854 = vxpose.xlu0.b32.cont [2/16] %v12903, 128
        %13855 = vxpose.xlu0.b32.cont [3/16] %v12908, 128
        %13856 = vxpose.xlu0.b32.cont [4/16] %v12913, 128
        %13857 = vxpose.xlu0.b32.cont [5/16] %v12918, 128
        %13858 = vxpose.xlu0.b32.cont [6/16] %v12923, 128
        %13859 = vxpose.xlu0.b32.cont [7/16] %v12928, 128
        %13860 = vxpose.xlu0.b32.cont [8/16] %v12933, 128
        %13861 = vxpose.xlu0.b32.cont [9/16] %v12938, 128
        %13862 = vxpose.xlu0.b32.cont [10/16] %v12943, 128
        %13863 = vxpose.xlu0.b32.cont [11/16] %v12948, 128
        %13864 = vxpose.xlu0.b32.cont [12/16] %v12953, 128
        %13865 = vxpose.xlu0.b32.cont [13/16] %v12958, 128
        %13866 = vxpose.xlu0.b32.cont [14/16] %v12963, 128
        %13867 = vxpose.xlu0.b32.cont [15/16] %v12968, 128
        %13868 = vxpose.xlu0.b32.end [16/16] %v12973, 128
        %v13869 = vpop.trf.xlu0
        %v13870 = vpop.trf.xlu0
        %v13871 = vpop.trf.xlu0
        %v13872 = vpop.trf.xlu0
        %v13873 = vpop.trf.xlu0
        %v13874 = vpop.trf.xlu0
        %v13875 = vpop.trf.xlu0
        %v13876 = vpop.trf.xlu0
        %v13877 = vpop.trf.xlu0
        %v13878 = vpop.trf.xlu0
        %v13879 = vpop.trf.xlu0
        %v13880 = vpop.trf.xlu0
        %v13881 = vpop.trf.xlu0
        %v13882 = vpop.trf.xlu0
        %v13883 = vpop.trf.xlu0
        %v13884 = vpop.trf.xlu0
        %13885 = vst [vmem:[%s194] sm:$0xff] %v13645
        %13886 = vst [vmem:[%s194 + $0x8] sm:$0xff] %v13677
        %13887 = vst [vmem:[%s194 + $0x10] sm:$0xff] %v13709
        %13888 = vst [vmem:[%s194 + $0x18] sm:$0xff] %v13741
        %13889 = vst [vmem:[%s194 + $0x20] sm:$0xff] %v13773
        %13890 = vst [vmem:[%s194 + $0x28] sm:$0xff] %v13805
        %13891 = vst [vmem:[%s194 + $0x30] sm:$0xff] %v13837
        %13892 = vst [vmem:[%s194 + $0x38] sm:$0xff] %v13869
        %s13893 = sand.u32 %s77, 1
        %s13894 = scalar_lea.sflag [#allocation3], %s13893
        %s13895 = sand.u32 %s77, 1
        %s13896 = smul.addr %s13895, 64
        %s13897 = scalar_lea.vmem [#allocation2], %s13896
        %s13898 = sand.u32 %s22, 1
        %s13899 = scalar_lea.sflag [#allocation5], %s13898
        %s13900 = sand.u32 %s103, 1
        %s13901 = scalar_lea.vmem [#allocation4], %s13900
        %s13902 = sand.u32 %s22, 1
        %s13903 = scalar_lea.sflag [#allocation5], %s13902
        %s13904 = sand.u32 %s129, 1
        %s13905 = scalar_lea.vmem [#allocation6], %s13904
        // Predicated region
        $region29: #{tpu_custom_call.1} parent=27 // pred_check
          %p13906 = pneg %p87
        $region30: #{tpu_custom_call.1} parent=27 // pred_check_branch
          %13908 = sbr.rel (%p13906) target = $region32
        $region31: #{tpu_custom_call.1} parent=27 // pred_region
          %s13910 = ssub.s32 1024, 1024
          %13911 = vsyncadd %s13894, %s13910
          %s13912 = smul.addr %s22, 8
          %s13913 = smul.addr %s13912, 128
          %s13914 = scalar_lea.hbm %s2, %s13913
          %s13916 = sshll.u32 %s13897, 4
          %s13917 = int_to_ptr.vmem [resolvable:$true] %s13916
          %13919 = dma.vmem_to_hbm [thread:$0]  %s13917, 1024, %s13914, %s13894
        $region32: #{tpu_custom_call.1} parent=27 // pred_fallthru
          _
        // Predicated region
        $region33: #{tpu_custom_call.1} parent=27 // pred_check
          %p13920 = pneg %p113
        $region34: #{tpu_custom_call.1} parent=27 // pred_check_branch
          %13922 = sbr.rel (%p13920) target = $region36
        $region35: #{tpu_custom_call.1} parent=27 // pred_region
          %s13924 = ssub.s32 16, 16
          %13925 = vsyncadd %s13899, %s13924
          %s13926 = smul.addr %s22, 16
          %s13927 = scalar_lea.hbm %s3, %s13926
          %s13929 = sshll.u32 %s13901, 4
          %s13930 = int_to_ptr.vmem [resolvable:$true] %s13929
          %13932 = dma.vmem_to_hbm [thread:$0]  %s13930, 16, %s13927, %s13899
        $region36: #{tpu_custom_call.1} parent=27 // pred_fallthru
          _
        // Predicated region
        $region37: #{tpu_custom_call.1} parent=27 // pred_check
          %p13933 = pneg %p139
        $region38: #{tpu_custom_call.1} parent=27 // pred_check_branch
          %13935 = sbr.rel (%p13933) target = $region40
        $region39: #{tpu_custom_call.1} parent=27 // pred_region
          %s13937 = ssub.s32 16, 16
          %13938 = vsyncadd %s13903, %s13937
          %s13939 = smul.addr %s22, 16
          %s13940 = scalar_lea.hbm %s4, %s13939
          %s13942 = sshll.u32 %s13905, 4
          %s13943 = int_to_ptr.vmem [resolvable:$true] %s13942
          %13945 = dma.vmem_to_hbm [thread:$0]  %s13943, 16, %s13940, %s13903
        $region40: #{tpu_custom_call.1} parent=27 // pred_fallthru
          _
      $region28: #{tpu_custom_call.1} parent=5 // pred_fallthru
        _
      %p13946 = scmp.le.s32.totalorder 2, %s17
      // Predicated region
      $region41: #{tpu_custom_call.1} parent=5 // pred_check
        %p13947 = pneg %p13946
      $region42: #{tpu_custom_call.1} parent=5 // pred_check_branch
        %13949 = sbr.rel (%p13947) target = $region44
      $region43: #{tpu_custom_call.1} parent=5 // pred_region
        %s13950 = ssub.s32 %s17, 2
        // Predicated region
        $region45: #{tpu_custom_call.1} parent=43 // pred_check
          %p13951 = pneg %p93
        $region46: #{tpu_custom_call.1} parent=43 // pred_check_branch
          %13953 = sbr.rel (%p13951) target = $region48
        $region47: #{tpu_custom_call.1} parent=43 // pred_region
          %s13954 = sand.u32 %s78, 1
          %s13955 = scalar_lea.sflag [#allocation3], %s13954
          %s13956 = sand.u32 %s78, 1
          %s13957 = smul.addr %s13956, 64
          %s13958 = scalar_lea.vmem [#allocation2], %s13957
          %13959 = dma.done %s13955, 1024
        $region48: #{tpu_custom_call.1} parent=43 // pred_fallthru
          _
        // Predicated region
        $region49: #{tpu_custom_call.1} parent=43 // pred_check
          %p13960 = pneg %p119
        $region50: #{tpu_custom_call.1} parent=43 // pred_check_branch
          %13962 = sbr.rel (%p13960) target = $region52
        $region51: #{tpu_custom_call.1} parent=43 // pred_region
          %s13963 = sand.u32 %s23, 1
          %s13964 = scalar_lea.sflag [#allocation5], %s13963
          %s13965 = sand.u32 %s104, 1
          %s13966 = scalar_lea.vmem [#allocation4], %s13965
          %13967 = dma.done %s13964, 16
        $region52: #{tpu_custom_call.1} parent=43 // pred_fallthru
          _
        // Predicated region
        $region53: #{tpu_custom_call.1} parent=43 // pred_check
          %p13968 = pneg %p145
        $region54: #{tpu_custom_call.1} parent=43 // pred_check_branch
          %13970 = sbr.rel (%p13968) target = $region56
        $region55: #{tpu_custom_call.1} parent=43 // pred_region
          %s13971 = sand.u32 %s23, 1
          %s13972 = scalar_lea.sflag [#allocation5], %s13971
          %s13973 = sand.u32 %s130, 1
          %s13974 = scalar_lea.vmem [#allocation6], %s13973
          %13975 = dma.done %s13972, 16
        $region56: #{tpu_custom_call.1} parent=43 // pred_fallthru
          _
      $region44: #{tpu_custom_call.1} parent=5 // pred_fallthru
        _
    $region6: #{tpu_custom_call.1} parent=1 // loop_footer
      %s21 = sadd.s32 1, %s17
    $region7: #{tpu_custom_call.1} parent=1 // loop_footer_branch
      %16 = sbr.rel target = $region3
    $region8: #{tpu_custom_call.1} parent=1 // loop_exit
      _
    %13976 = vsyncpa [#allocation3], 1
    %s13977 = scalar_lea.sflag [#allocation3], 1
    %13978 = vsyncpa %s13977, 1
    %13979 = vsyncpa [#allocation5], 1
    %s13980 = scalar_lea.sflag [#allocation5], 1
    %13981 = vsyncpa %s13980, 1

</llo_original>
